<compile_context>
chip_gen: v7x
topology: tpu7x:2x2x1
jax: 0.10.0
libtpu: 0.0.40
codegen_flags: <defaults>
</compile_context>

<pallas_src>
import functools

import numpy as np
import jax
import jax.numpy as jnp
from jax.experimental import pallas as pl
from jax.experimental.pallas import tpu as pltpu


_IN_H, _IN_W = 128, 32   # spatial input size implied by Linear(864, 2048)


def _dims():
    """Static per-stage spatial sizes of the network (input 1x128x32)."""
    hp, wp = _IN_H + 2, _IN_W + 2                        # conv1 pad=1 -> 130, 34
    h1, w1 = hp - 32 + 1, wp - 2 + 1                     # conv1       -> 99, 33
    hp1, wp1 = (h1 - 4) // 2 + 1, (w1 - 2) // 2 + 1      # pool (4,2)/2-> 48, 16
    h2, w2 = hp1 - 16 + 1, wp1 - 2 + 1                   # conv2       -> 33, 15
    hp2, wp2 = (h2 - 2) // 2 + 1, (w2 - 2) // 2 + 1      # pool (2,2)/2-> 16, 7
    h3, w3 = hp2 - 8 + 1, wp2 - 2 + 1                    # conv3       -> 9, 6
    return dict(hp=hp, wp=wp, h1=h1, w1=w1, hp1=hp1, wp1=wp1,
                h2=h2, w2=w2, hp2=hp2, wp2=wp2, h3=h3, w3=w3)


# ----------------------------------------------------------------------------
# One-time weight repacking (outside jit): conv -> Toeplitz matmul operators,
# maxpool decimation -> 0/1 selection matmuls, FC1 -> flatten-order-absorbed.
# ----------------------------------------------------------------------------
def _toeplitz_T(w, hi):
    """Per-tap transposed Toeplitz operator for a stride-1 'valid' conv.

    w: (Cout, Cin, KH, KW).  Returns T of shape (KW, Cin*Hi, Cout*Ho), with
    Ho = Hi - KH + 1 and T[dj, ci*Hi + i + di, co*Ho + i] = w[co, ci, di, dj].
    For a width-major input X (rows = width, lanes = ci*Hi + h):
        conv_preact[j, co*Ho + i] = sum_dj (X @ T[dj])[j + dj, co*Ho + i].
    """
    w = np.asarray(w, np.float32)
    cout, cin, kh, kw = w.shape
    ho = hi - kh + 1
    t = np.zeros((kw, cin * hi, cout * ho), np.float32)
    ii = np.arange(ho)
    for dj in range(kw):
        for di in range(kh):
            for ci in range(cin):
                for co in range(cout):
                    t[dj, ci * hi + ii + di, co * ho + ii] = w[co, ci, di, dj]
    return t


def _row_decimate(batch, slot, rows_in, wo, sw):
    """(batch*wo, rows_in) 0/1 matrix: output row n*wo + q picks input row
    n*slot + sw*q (width decimation of the batch-stacked width-major layout)."""
    s = np.zeros((batch * wo, rows_in), np.float32)
    q = np.arange(wo)
    for n in range(batch):
        s[n * wo + q, n * slot + sw * q] = 1.0
    return s


def _col_decimate(c, hin, hout, sh, kh):
    """(c*hin - kh + 1, c*hout) 0/1 matrix: output lane ci*hout + p picks input
    lane ci*hin + sh*p (height decimation; stays inside each channel block)."""
    s = np.zeros((c * hin - kh + 1, c * hout), np.float32)
    p = np.arange(hout)
    for ci in range(c):
        s[ci * hin + sh * p, ci * hout + p] = 1.0
    return s


def _fc_select(batch, slot, rows_in, w3):
    """(w3, batch, rows_in) 0/1 matrices: sfc[j] picks conv3 width-column j
    (row n*slot + j) of every batch element as row n."""
    s = np.zeros((w3, batch, rows_in), np.float32)
    for j in range(w3):
        for n in range(batch):
            s[j, n, n * slot + j] = 1.0
    return s


def prepare_params(params, batch):
    """One-time (outside jit) repack of PyTorch-layout params into the matmul
    operators consumed by the fused kernel.  `batch` is baked into the tiny
    row-decimation / row-selection matrices."""
    d = _dims()
    w1 = np.asarray(params["w1"], np.float32)
    w2 = np.asarray(params["w2"], np.float32)
    w3 = np.asarray(params["w3"], np.float32)
    wf1 = np.asarray(params["wf1"], np.float32)
    wf2 = np.asarray(params["wf2"], np.float32)
    c1, c2, c3 = w1.shape[0], w2.shape[0], w3.shape[0]   # 4, 8, 16
    nfc = wf1.shape[0]                                   # 2048

    prep = {
        "t1": _toeplitz_T(w1, d["hp"]),                  # (2, 130, 396)
        "b1v": np.repeat(np.asarray(params["b1"], np.float32), d["h1"])[None, :],
        "sr1": _row_decimate(batch, d["wp"], batch * d["wp"] - 2, d["wp1"], 2),
        "sc1": _col_decimate(c1, d["h1"], d["hp1"], 2, 4),
        "t2": _toeplitz_T(w2, d["hp1"]),                 # (2, 192, 264)
        "b2v": np.repeat(np.asarray(params["b2"], np.float32), d["h2"])[None, :],
        "sr2": _row_decimate(batch, d["wp1"], batch * d["wp1"] - 2, d["wp2"], 2),
        "sc2": _col_decimate(c2, d["h2"], d["hp2"], 2, 2),
        "t3": _toeplitz_T(w3, d["hp2"]),                 # (2, 128, 144)
        "b3v": np.repeat(np.asarray(params["b3"], np.float32), d["h3"])[None, :],
        "sfc": _fc_select(batch, d["wp2"], batch * d["wp2"] - 1, d["w3"]),
        # wf1r[j, c*9+h, m] = wf1[m, c*54 + h*6 + j]: torch flatten order absorbed.
        "wf1r": np.transpose(wf1.reshape(nfc, c3 * d["h3"], d["w3"]), (2, 1, 0)).copy(),
        "bf1v": np.asarray(params["bf1"], np.float32)[None, :],
        "wf2t": wf2.T.copy(),                            # (2048, 2)
        "bf2v": np.asarray(params["bf2"], np.float32)[None, :],
    }
    return {k: jnp.asarray(v) for k, v in prep.items()}


# ----------------------------------------------------------------------------
# The single fused Pallas kernel (no grid: everything resident in VMEM)
# ----------------------------------------------------------------------------
def _fused_cnn_kernel(x_ref, t1_ref, b1_ref, sr1_ref, sc1_ref,
                      t2_ref, b2_ref, sr2_ref, sc2_ref,
                      t3_ref, b3_ref, sfc_ref, wf1_ref, bf1_ref,
                      wf2_ref, bf2_ref, out_ref, fea_ref, *, batch, dims):
    d = dims

    def mm(a, b):
        return jnp.dot(a, b, preferred_element_type=jnp.float32)

    # ---- conv1 + ReLU: width-major Toeplitz form (rows = N*W, lanes = Cout*H)
    x = x_ref[...]                                       # (N*34, 130)
    p0 = mm(x, t1_ref[0])                                # (N*34, 396)
    p1 = mm(x, t1_ref[1])
    r1 = batch * d["wp"] - 1                             # 67 rows (some junk, unused)
    a1 = jnp.maximum(p0[0:r1, :] + p1[1:r1 + 1, :] + b1_ref[...], 0.0)

    # ---- maxpool (4,2), stride 2: shifted maxes + 0/1 decimation matmuls
    l1 = sc1_ref.shape[0]                                # 4*99 - 3 = 393
    m1 = jnp.maximum(jnp.maximum(a1[:, 0:l1], a1[:, 1:l1 + 1]),
                     jnp.maximum(a1[:, 2:l1 + 2], a1[:, 3:l1 + 3]))
    m1 = jnp.maximum(m1[0:r1 - 1, :], m1[1:r1, :])       # (N*34-2, 393)
    x1 = mm(mm(sr1_ref[...], m1), sc1_ref[...])          # (N*16, 192)

    # ---- conv2 + ReLU
    q0 = mm(x1, t2_ref[0])                               # (N*16, 264)
    q1 = mm(x1, t2_ref[1])
    r2 = batch * d["wp1"] - 1                            # 31
    a2 = jnp.maximum(q0[0:r2, :] + q1[1:r2 + 1, :] + b2_ref[...], 0.0)

    # ---- maxpool (2,2), stride 2
    l2 = sc2_ref.shape[0]                                # 8*33 - 1 = 263
    m2 = jnp.maximum(a2[:, 0:l2], a2[:, 1:l2 + 1])
    m2 = jnp.maximum(m2[0:r2 - 1, :], m2[1:r2, :])       # (N*16-2, 263)
    x2 = mm(mm(sr2_ref[...], m2), sc2_ref[...])          # (N*7, 128)

    # ---- conv3 + ReLU
    s0 = mm(x2, t3_ref[0])                               # (N*7, 144)
    s1 = mm(x2, t3_ref[1])
    r3 = batch * d["wp2"] - 1                            # 13
    a3 = jnp.maximum(s0[0:r3, :] + s1[1:r3 + 1, :] + b3_ref[...], 0.0)

    # ---- input_layer (FC1): flatten order already folded into wf1r
    pre = bf1_ref[...]                                   # (1, 2048), broadcasts
    for j in range(d["w3"]):                             # 6 conv3 width columns
        aj = mm(sfc_ref[j], a3)                          # (N, 144): width col j
        pre = pre + mm(aj, wf1_ref[j])                   # (N, 2048)

    # dropout(p=0.25) is identity in eval mode.
    fea_ref[...] = jnp.maximum(pre, 0.0)                 # fea = relu(pre)
    # layer_output consumes the (dropout of the) pre-activation, as in PyTorch.
    out_ref[...] = mm(pre, wf2_ref[...]) + bf2_ref[...]


# ----------------------------------------------------------------------------
# Forward wrapper
# ----------------------------------------------------------------------------
def cnn_forward(x, prep):
    """Fused forward.  x: (N, 1, 128, 32) float32; prep = prepare_params(...)."""
    n = x.shape[0]
    d = _dims()
    assert x.shape[1:] == (1, _IN_H, _IN_W), x.shape
    assert prep["sr1"].shape[0] == n * d["wp1"], "prep built for a different batch"

    # conv1 padding=1, then switch to the width-major layout used in-kernel.
    xp = jnp.pad(x.astype(jnp.float32), ((0, 0), (0, 0), (1, 1), (1, 1)))
    xt = xp[:, 0, :, :].transpose(0, 2, 1).reshape(n * d["wp"], d["hp"])

    nfc = prep["wf1r"].shape[2]
    ncls = prep["wf2t"].shape[1]
    out, fea = pl.pallas_call(
        functools.partial(_fused_cnn_kernel, batch=n, dims=d),
        out_shape=(jax.ShapeDtypeStruct((n, ncls), jnp.float32),
                   jax.ShapeDtypeStruct((n, nfc), jnp.float32)),
        compiler_params=pltpu.CompilerParams(vmem_limit_bytes=32 * 1024 * 1024),
    )(xt, prep["t1"], prep["b1v"], prep["sr1"], prep["sc1"],
      prep["t2"], prep["b2v"], prep["sr2"], prep["sc2"],
      prep["t3"], prep["b3v"], prep["sfc"], prep["wf1r"], prep["bf1v"],
      prep["wf2t"], prep["bf2v"])
    return out, fea


# ----------------------------------------------------------------------------
# Pure-JAX reference (eval-mode PyTorch semantics) and parameter init
# ----------------------------------------------------------------------------
def cnn_reference(x, p):
    dn = ("NCHW", "OIHW", "NCHW")
    hi = jax.lax.Precision.HIGHEST
    y = jax.lax.conv_general_dilated(x, p["w1"], (1, 1), ((1, 1), (1, 1)),
                                     dimension_numbers=dn, precision=hi)
    y = jax.nn.relu(y + p["b1"].reshape(1, -1, 1, 1))
    y = jax.lax.reduce_window(y, -jnp.inf, jax.lax.max,
                              (1, 1, 4, 2), (1, 1, 2, 2), "VALID")
    y = jax.lax.conv_general_dilated(y, p["w2"], (1, 1), "VALID",
                                     dimension_numbers=dn, precision=hi)
    y = jax.nn.relu(y + p["b2"].reshape(1, -1, 1, 1))
    y = jax.lax.reduce_window(y, -jnp.inf, jax.lax.max,
                              (1, 1, 2, 2), (1, 1, 2, 2), "VALID")
    y = jax.lax.conv_general_dilated(y, p["w3"], (1, 1), "VALID",
                                     dimension_numbers=dn, precision=hi)
    y = jax.nn.relu(y + p["b3"].reshape(1, -1, 1, 1))
    flat = y.reshape(y.shape[0], -1)
    pre = jnp.dot(flat, p["wf1"].T, precision=hi) + p["bf1"]
    fea = jax.nn.relu(pre)
    out = jnp.dot(pre, p["wf2"].T, precision=hi) + p["bf2"]
    return out, fea


def init_params(key):
    ks = jax.random.split(key, 10)

    def u(k, shape, fan_in):
        bound = 1.0 / jnp.sqrt(jnp.float32(fan_in))
        return jax.random.uniform(k, shape, jnp.float32, -bound, bound)

    return {
        "w1": u(ks[0], (4, 1, 32, 2), 1 * 32 * 2),
        "b1": u(ks[1], (4,), 1 * 32 * 2),
        "w2": u(ks[2], (8, 4, 16, 2), 4 * 16 * 2),
        "b2": u(ks[3], (8,), 4 * 16 * 2),
        "w3": u(ks[4], (16, 8, 8, 2), 8 * 8 * 2),
        "b3": u(ks[5], (16,), 8 * 8 * 2),
        "wf1": u(ks[6], (2048, 864), 864),
        "bf1": u(ks[7], (2048,), 864),
        "wf2": u(ks[8], (2, 2048), 2048),
        "bf2": u(ks[9], (2,), 2048),
    }


if __name__ == "__main__":
    key = jax.random.PRNGKey(0)
    pkey, xkey = jax.random.split(key)
    params = init_params(pkey)

    # batch=2, channels=1, H=128, W=32  ->  conv stack output 16x9x6 = 864 features
    x = jax.random.normal(xkey, (2, 1, 128, 32), jnp.float32)

    prep = prepare_params(params, batch=x.shape[0])      # one-time weight repack
    fwd = jax.jit(cnn_forward)
    out, fea = fwd(x, prep)
    jax.block_until_ready((out, fea))

    assert out.shape == (2, 2) and fea.shape == (2, 2048)
    assert out.dtype == jnp.float32 and fea.dtype == jnp.float32

    # Numerical check against a pure-JAX reference of the PyTorch module.
    ref_out, ref_fea = jax.jit(cnn_reference)(x, params)
    err = max(float(jnp.max(jnp.abs(out - ref_out))),
              float(jnp.max(jnp.abs(fea - ref_fea))))
    assert err < 5e-2, f"numerical mismatch vs reference: max abs err = {err}"

    print("KERNEL_OK")
</pallas_src>

<mosaic_0001>
module attributes {stable_mosaic.version = 11 : i64} {
  func.func @_fused_cnn_kernel(%arg0: memref<68x130xf32, #tpu.memory_space<vmem>>, %arg1: memref<2x130x396xf32, #tpu.memory_space<vmem>>, %arg2: memref<1x396xf32, #tpu.memory_space<vmem>>, %arg3: memref<32x66xf32, #tpu.memory_space<vmem>>, %arg4: memref<393x192xf32, #tpu.memory_space<vmem>>, %arg5: memref<2x192x264xf32, #tpu.memory_space<vmem>>, %arg6: memref<1x264xf32, #tpu.memory_space<vmem>>, %arg7: memref<14x30xf32, #tpu.memory_space<vmem>>, %arg8: memref<263x128xf32, #tpu.memory_space<vmem>>, %arg9: memref<2x128x144xf32, #tpu.memory_space<vmem>>, %arg10: memref<1x144xf32, #tpu.memory_space<vmem>>, %arg11: memref<6x2x13xf32, #tpu.memory_space<vmem>>, %arg12: memref<6x144x2048xf32, #tpu.memory_space<vmem>>, %arg13: memref<1x2048xf32, #tpu.memory_space<vmem>>, %arg14: memref<2048x2xf32, #tpu.memory_space<vmem>>, %arg15: memref<1x2xf32, #tpu.memory_space<vmem>>, %arg16: memref<2x2xf32, #tpu.memory_space<vmem>>, %arg17: memref<2x2048xf32, #tpu.memory_space<vmem>>) attributes {dimension_semantics = [], scalar_prefetch = 0 : i64, scratch_operands = 0 : i64, tpu.core_type = #tpu.core_type<tc>} {
    %c0 = arith.constant 0 : index
    %c0_0 = arith.constant 0 : index
    %0 = vector.load %arg0[%c0, %c0_0] : memref<68x130xf32, #tpu.memory_space<vmem>>, vector<68x130xf32>
    %c0_1 = arith.constant 0 : index
    %c0_2 = arith.constant 0 : index
    %c0_3 = arith.constant 0 : index
    %1 = vector.load %arg1[%c0_1, %c0_2, %c0_3] : memref<2x130x396xf32, #tpu.memory_space<vmem>>, vector<1x130x396xf32>
    %2 = vector.shape_cast %1 : vector<1x130x396xf32> to vector<130x396xf32>
    %cst = arith.constant dense<0.000000e+00> : vector<68x396xf32>
    %3 = tpu.matmul %0, %2, %cst {dimension_numbers = #tpu.dot_dimension_numbers<[1], [0], [0], [1], [0, 0, 1, 1], [], []>} : vector<68x130xf32>, vector<130x396xf32>, vector<68x396xf32> -> vector<68x396xf32>
    %c1 = arith.constant 1 : index
    %c0_4 = arith.constant 0 : index
    %c0_5 = arith.constant 0 : index
    %4 = vector.load %arg1[%c1, %c0_4, %c0_5] : memref<2x130x396xf32, #tpu.memory_space<vmem>>, vector<1x130x396xf32>
    %5 = vector.shape_cast %4 : vector<1x130x396xf32> to vector<130x396xf32>
    %cst_6 = arith.constant dense<0.000000e+00> : vector<68x396xf32>
    %6 = tpu.matmul %0, %5, %cst_6 {dimension_numbers = #tpu.dot_dimension_numbers<[1], [0], [0], [1], [0, 0, 1, 1], [], []>} : vector<68x130xf32>, vector<130x396xf32>, vector<68x396xf32> -> vector<68x396xf32>
    %7 = vector.extract_strided_slice %3 {offsets = [0, 0], sizes = [67, 396], strides = [1, 1]} : vector<68x396xf32> to vector<67x396xf32>
    %8 = vector.extract_strided_slice %6 {offsets = [1, 0], sizes = [67, 396], strides = [1, 1]} : vector<68x396xf32> to vector<67x396xf32>
    %9 = arith.addf %7, %8 : vector<67x396xf32>
    %c0_7 = arith.constant 0 : index
    %c0_8 = arith.constant 0 : index
    %10 = vector.load %arg2[%c0_7, %c0_8] : memref<1x396xf32, #tpu.memory_space<vmem>>, vector<1x396xf32>
    %11 = vector.broadcast %10 : vector<1x396xf32> to vector<67x396xf32>
    %12 = arith.addf %9, %11 : vector<67x396xf32>
    %cst_9 = arith.constant 0.000000e+00 : f32
    %13 = vector.broadcast %cst_9 : f32 to vector<67x396xf32>
    %14 = arith.maximumf %12, %13 : vector<67x396xf32>
    %15 = vector.extract_strided_slice %14 {offsets = [0, 0], sizes = [67, 393], strides = [1, 1]} : vector<67x396xf32> to vector<67x393xf32>
    %16 = vector.extract_strided_slice %14 {offsets = [0, 1], sizes = [67, 393], strides = [1, 1]} : vector<67x396xf32> to vector<67x393xf32>
    %17 = arith.maximumf %15, %16 : vector<67x393xf32>
    %18 = vector.extract_strided_slice %14 {offsets = [0, 2], sizes = [67, 393], strides = [1, 1]} : vector<67x396xf32> to vector<67x393xf32>
    %19 = vector.extract_strided_slice %14 {offsets = [0, 3], sizes = [67, 393], strides = [1, 1]} : vector<67x396xf32> to vector<67x393xf32>
    %20 = arith.maximumf %18, %19 : vector<67x393xf32>
    %21 = arith.maximumf %17, %20 : vector<67x393xf32>
    %22 = vector.extract_strided_slice %21 {offsets = [0, 0], sizes = [66, 393], strides = [1, 1]} : vector<67x393xf32> to vector<66x393xf32>
    %23 = vector.extract_strided_slice %21 {offsets = [1, 0], sizes = [66, 393], strides = [1, 1]} : vector<67x393xf32> to vector<66x393xf32>
    %24 = arith.maximumf %22, %23 : vector<66x393xf32>
    %c0_10 = arith.constant 0 : index
    %c0_11 = arith.constant 0 : index
    %25 = vector.load %arg3[%c0_10, %c0_11] : memref<32x66xf32, #tpu.memory_space<vmem>>, vector<32x66xf32>
    %cst_12 = arith.constant dense<0.000000e+00> : vector<32x393xf32>
    %26 = tpu.matmul %25, %24, %cst_12 {dimension_numbers = #tpu.dot_dimension_numbers<[1], [0], [0], [1], [0, 0, 1, 1], [], []>} : vector<32x66xf32>, vector<66x393xf32>, vector<32x393xf32> -> vector<32x393xf32>
    %c0_13 = arith.constant 0 : index
    %c0_14 = arith.constant 0 : index
    %27 = vector.load %arg4[%c0_13, %c0_14] : memref<393x192xf32, #tpu.memory_space<vmem>>, vector<393x192xf32>
    %cst_15 = arith.constant dense<0.000000e+00> : vector<32x192xf32>
    %28 = tpu.matmul %26, %27, %cst_15 {dimension_numbers = #tpu.dot_dimension_numbers<[1], [0], [0], [1], [0, 0, 1, 1], [], []>} : vector<32x393xf32>, vector<393x192xf32>, vector<32x192xf32> -> vector<32x192xf32>
    %c0_16 = arith.constant 0 : index
    %c0_17 = arith.constant 0 : index
    %c0_18 = arith.constant 0 : index
    %29 = vector.load %arg5[%c0_16, %c0_17, %c0_18] : memref<2x192x264xf32, #tpu.memory_space<vmem>>, vector<1x192x264xf32>
    %30 = vector.shape_cast %29 : vector<1x192x264xf32> to vector<192x264xf32>
    %cst_19 = arith.constant dense<0.000000e+00> : vector<32x264xf32>
    %31 = tpu.matmul %28, %30, %cst_19 {dimension_numbers = #tpu.dot_dimension_numbers<[1], [0], [0], [1], [0, 0, 1, 1], [], []>} : vector<32x192xf32>, vector<192x264xf32>, vector<32x264xf32> -> vector<32x264xf32>
    %c1_20 = arith.constant 1 : index
    %c0_21 = arith.constant 0 : index
    %c0_22 = arith.constant 0 : index
    %32 = vector.load %arg5[%c1_20, %c0_21, %c0_22] : memref<2x192x264xf32, #tpu.memory_space<vmem>>, vector<1x192x264xf32>
    %33 = vector.shape_cast %32 : vector<1x192x264xf32> to vector<192x264xf32>
    %cst_23 = arith.constant dense<0.000000e+00> : vector<32x264xf32>
    %34 = tpu.matmul %28, %33, %cst_23 {dimension_numbers = #tpu.dot_dimension_numbers<[1], [0], [0], [1], [0, 0, 1, 1], [], []>} : vector<32x192xf32>, vector<192x264xf32>, vector<32x264xf32> -> vector<32x264xf32>
    %35 = vector.extract_strided_slice %31 {offsets = [0, 0], sizes = [31, 264], strides = [1, 1]} : vector<32x264xf32> to vector<31x264xf32>
    %36 = vector.extract_strided_slice %34 {offsets = [1, 0], sizes = [31, 264], strides = [1, 1]} : vector<32x264xf32> to vector<31x264xf32>
    %37 = arith.addf %35, %36 : vector<31x264xf32>
    %c0_24 = arith.constant 0 : index
    %c0_25 = arith.constant 0 : index
    %38 = vector.load %arg6[%c0_24, %c0_25] : memref<1x264xf32, #tpu.memory_space<vmem>>, vector<1x264xf32>
    %39 = vector.broadcast %38 : vector<1x264xf32> to vector<31x264xf32>
    %40 = arith.addf %37, %39 : vector<31x264xf32>
    %cst_26 = arith.constant 0.000000e+00 : f32
    %41 = vector.broadcast %cst_26 : f32 to vector<31x264xf32>
    %42 = arith.maximumf %40, %41 : vector<31x264xf32>
    %43 = vector.extract_strided_slice %42 {offsets = [0, 0], sizes = [31, 263], strides = [1, 1]} : vector<31x264xf32> to vector<31x263xf32>
    %44 = vector.extract_strided_slice %42 {offsets = [0, 1], sizes = [31, 263], strides = [1, 1]} : vector<31x264xf32> to vector<31x263xf32>
    %45 = arith.maximumf %43, %44 : vector<31x263xf32>
    %46 = vector.extract_strided_slice %45 {offsets = [0, 0], sizes = [30, 263], strides = [1, 1]} : vector<31x263xf32> to vector<30x263xf32>
    %47 = vector.extract_strided_slice %45 {offsets = [1, 0], sizes = [30, 263], strides = [1, 1]} : vector<31x263xf32> to vector<30x263xf32>
    %48 = arith.maximumf %46, %47 : vector<30x263xf32>
    %c0_27 = arith.constant 0 : index
    %c0_28 = arith.constant 0 : index
    %49 = vector.load %arg7[%c0_27, %c0_28] : memref<14x30xf32, #tpu.memory_space<vmem>>, vector<14x30xf32>
    %cst_29 = arith.constant dense<0.000000e+00> : vector<14x263xf32>
    %50 = tpu.matmul %49, %48, %cst_29 {dimension_numbers = #tpu.dot_dimension_numbers<[1], [0], [0], [1], [0, 0, 1, 1], [], []>} : vector<14x30xf32>, vector<30x263xf32>, vector<14x263xf32> -> vector<14x263xf32>
    %c0_30 = arith.constant 0 : index
    %c0_31 = arith.constant 0 : index
    %51 = vector.load %arg8[%c0_30, %c0_31] : memref<263x128xf32, #tpu.memory_space<vmem>>, vector<263x128xf32>
    %cst_32 = arith.constant dense<0.000000e+00> : vector<14x128xf32>
    %52 = tpu.matmul %50, %51, %cst_32 {dimension_numbers = #tpu.dot_dimension_numbers<[1], [0], [0], [1], [0, 0, 1, 1], [], []>} : vector<14x263xf32>, vector<263x128xf32>, vector<14x128xf32> -> vector<14x128xf32>
    %c0_33 = arith.constant 0 : index
    %c0_34 = arith.constant 0 : index
    %c0_35 = arith.constant 0 : index
    %53 = vector.load %arg9[%c0_33, %c0_34, %c0_35] : memref<2x128x144xf32, #tpu.memory_space<vmem>>, vector<1x128x144xf32>
    %54 = vector.shape_cast %53 : vector<1x128x144xf32> to vector<128x144xf32>
    %cst_36 = arith.constant dense<0.000000e+00> : vector<14x144xf32>
    %55 = tpu.matmul %52, %54, %cst_36 {dimension_numbers = #tpu.dot_dimension_numbers<[1], [0], [0], [1], [0, 0, 1, 1], [], []>} : vector<14x128xf32>, vector<128x144xf32>, vector<14x144xf32> -> vector<14x144xf32>
    %c1_37 = arith.constant 1 : index
    %c0_38 = arith.constant 0 : index
    %c0_39 = arith.constant 0 : index
    %56 = vector.load %arg9[%c1_37, %c0_38, %c0_39] : memref<2x128x144xf32, #tpu.memory_space<vmem>>, vector<1x128x144xf32>
    %57 = vector.shape_cast %56 : vector<1x128x144xf32> to vector<128x144xf32>
    %cst_40 = arith.constant dense<0.000000e+00> : vector<14x144xf32>
    %58 = tpu.matmul %52, %57, %cst_40 {dimension_numbers = #tpu.dot_dimension_numbers<[1], [0], [0], [1], [0, 0, 1, 1], [], []>} : vector<14x128xf32>, vector<128x144xf32>, vector<14x144xf32> -> vector<14x144xf32>
    %59 = vector.extract_strided_slice %55 {offsets = [0, 0], sizes = [13, 144], strides = [1, 1]} : vector<14x144xf32> to vector<13x144xf32>
    %60 = vector.extract_strided_slice %58 {offsets = [1, 0], sizes = [13, 144], strides = [1, 1]} : vector<14x144xf32> to vector<13x144xf32>
    %61 = arith.addf %59, %60 : vector<13x144xf32>
    %c0_41 = arith.constant 0 : index
    %c0_42 = arith.constant 0 : index
    %62 = vector.load %arg10[%c0_41, %c0_42] : memref<1x144xf32, #tpu.memory_space<vmem>>, vector<1x144xf32>
    %63 = vector.broadcast %62 : vector<1x144xf32> to vector<13x144xf32>
    %64 = arith.addf %61, %63 : vector<13x144xf32>
    %cst_43 = arith.constant 0.000000e+00 : f32
    %65 = vector.broadcast %cst_43 : f32 to vector<13x144xf32>
    %66 = arith.maximumf %64, %65 : vector<13x144xf32>
    %c0_44 = arith.constant 0 : index
    %c0_45 = arith.constant 0 : index
    %67 = vector.load %arg13[%c0_44, %c0_45] : memref<1x2048xf32, #tpu.memory_space<vmem>>, vector<1x2048xf32>
    %c0_46 = arith.constant 0 : index
    %c0_47 = arith.constant 0 : index
    %c0_48 = arith.constant 0 : index
    %68 = vector.load %arg11[%c0_46, %c0_47, %c0_48] : memref<6x2x13xf32, #tpu.memory_space<vmem>>, vector<1x2x13xf32>
    %69 = vector.shape_cast %68 : vector<1x2x13xf32> to vector<2x13xf32>
    %cst_49 = arith.constant dense<0.000000e+00> : vector<2x144xf32>
    %70 = tpu.matmul %69, %66, %cst_49 {dimension_numbers = #tpu.dot_dimension_numbers<[1], [0], [0], [1], [0, 0, 1, 1], [], []>} : vector<2x13xf32>, vector<13x144xf32>, vector<2x144xf32> -> vector<2x144xf32>
    %c0_50 = arith.constant 0 : index
    %c0_51 = arith.constant 0 : index
    %c0_52 = arith.constant 0 : index
    %71 = vector.load %arg12[%c0_50, %c0_51, %c0_52] : memref<6x144x2048xf32, #tpu.memory_space<vmem>>, vector<1x144x2048xf32>
    %72 = vector.shape_cast %71 : vector<1x144x2048xf32> to vector<144x2048xf32>
    %cst_53 = arith.constant dense<0.000000e+00> : vector<2x2048xf32>
    %73 = tpu.matmul %70, %72, %cst_53 {dimension_numbers = #tpu.dot_dimension_numbers<[1], [0], [0], [1], [0, 0, 1, 1], [], []>} : vector<2x144xf32>, vector<144x2048xf32>, vector<2x2048xf32> -> vector<2x2048xf32>
    %74 = vector.broadcast %67 : vector<1x2048xf32> to vector<2x2048xf32>
    %75 = arith.addf %74, %73 : vector<2x2048xf32>
    %c1_54 = arith.constant 1 : index
    %c0_55 = arith.constant 0 : index
    %c0_56 = arith.constant 0 : index
    %76 = vector.load %arg11[%c1_54, %c0_55, %c0_56] : memref<6x2x13xf32, #tpu.memory_space<vmem>>, vector<1x2x13xf32>
    %77 = vector.shape_cast %76 : vector<1x2x13xf32> to vector<2x13xf32>
    %cst_57 = arith.constant dense<0.000000e+00> : vector<2x144xf32>
    %78 = tpu.matmul %77, %66, %cst_57 {dimension_numbers = #tpu.dot_dimension_numbers<[1], [0], [0], [1], [0, 0, 1, 1], [], []>} : vector<2x13xf32>, vector<13x144xf32>, vector<2x144xf32> -> vector<2x144xf32>
    %c1_58 = arith.constant 1 : index
    %c0_59 = arith.constant 0 : index
    %c0_60 = arith.constant 0 : index
    %79 = vector.load %arg12[%c1_58, %c0_59, %c0_60] : memref<6x144x2048xf32, #tpu.memory_space<vmem>>, vector<1x144x2048xf32>
    %80 = vector.shape_cast %79 : vector<1x144x2048xf32> to vector<144x2048xf32>
    %cst_61 = arith.constant dense<0.000000e+00> : vector<2x2048xf32>
    %81 = tpu.matmul %78, %80, %cst_61 {dimension_numbers = #tpu.dot_dimension_numbers<[1], [0], [0], [1], [0, 0, 1, 1], [], []>} : vector<2x144xf32>, vector<144x2048xf32>, vector<2x2048xf32> -> vector<2x2048xf32>
    %82 = arith.addf %75, %81 : vector<2x2048xf32>
    %c2 = arith.constant 2 : index
    %c0_62 = arith.constant 0 : index
    %c0_63 = arith.constant 0 : index
    %83 = vector.load %arg11[%c2, %c0_62, %c0_63] : memref<6x2x13xf32, #tpu.memory_space<vmem>>, vector<1x2x13xf32>
    %84 = vector.shape_cast %83 : vector<1x2x13xf32> to vector<2x13xf32>
    %cst_64 = arith.constant dense<0.000000e+00> : vector<2x144xf32>
    %85 = tpu.matmul %84, %66, %cst_64 {dimension_numbers = #tpu.dot_dimension_numbers<[1], [0], [0], [1], [0, 0, 1, 1], [], []>} : vector<2x13xf32>, vector<13x144xf32>, vector<2x144xf32> -> vector<2x144xf32>
    %c2_65 = arith.constant 2 : index
    %c0_66 = arith.constant 0 : index
    %c0_67 = arith.constant 0 : index
    %86 = vector.load %arg12[%c2_65, %c0_66, %c0_67] : memref<6x144x2048xf32, #tpu.memory_space<vmem>>, vector<1x144x2048xf32>
    %87 = vector.shape_cast %86 : vector<1x144x2048xf32> to vector<144x2048xf32>
    %cst_68 = arith.constant dense<0.000000e+00> : vector<2x2048xf32>
    %88 = tpu.matmul %85, %87, %cst_68 {dimension_numbers = #tpu.dot_dimension_numbers<[1], [0], [0], [1], [0, 0, 1, 1], [], []>} : vector<2x144xf32>, vector<144x2048xf32>, vector<2x2048xf32> -> vector<2x2048xf32>
    %89 = arith.addf %82, %88 : vector<2x2048xf32>
    %c3 = arith.constant 3 : index
    %c0_69 = arith.constant 0 : index
    %c0_70 = arith.constant 0 : index
    %90 = vector.load %arg11[%c3, %c0_69, %c0_70] : memref<6x2x13xf32, #tpu.memory_space<vmem>>, vector<1x2x13xf32>
    %91 = vector.shape_cast %90 : vector<1x2x13xf32> to vector<2x13xf32>
    %cst_71 = arith.constant dense<0.000000e+00> : vector<2x144xf32>
    %92 = tpu.matmul %91, %66, %cst_71 {dimension_numbers = #tpu.dot_dimension_numbers<[1], [0], [0], [1], [0, 0, 1, 1], [], []>} : vector<2x13xf32>, vector<13x144xf32>, vector<2x144xf32> -> vector<2x144xf32>
    %c3_72 = arith.constant 3 : index
    %c0_73 = arith.constant 0 : index
    %c0_74 = arith.constant 0 : index
    %93 = vector.load %arg12[%c3_72, %c0_73, %c0_74] : memref<6x144x2048xf32, #tpu.memory_space<vmem>>, vector<1x144x2048xf32>
    %94 = vector.shape_cast %93 : vector<1x144x2048xf32> to vector<144x2048xf32>
    %cst_75 = arith.constant dense<0.000000e+00> : vector<2x2048xf32>
    %95 = tpu.matmul %92, %94, %cst_75 {dimension_numbers = #tpu.dot_dimension_numbers<[1], [0], [0], [1], [0, 0, 1, 1], [], []>} : vector<2x144xf32>, vector<144x2048xf32>, vector<2x2048xf32> -> vector<2x2048xf32>
    %96 = arith.addf %89, %95 : vector<2x2048xf32>
    %c4 = arith.constant 4 : index
    %c0_76 = arith.constant 0 : index
    %c0_77 = arith.constant 0 : index
    %97 = vector.load %arg11[%c4, %c0_76, %c0_77] : memref<6x2x13xf32, #tpu.memory_space<vmem>>, vector<1x2x13xf32>
    %98 = vector.shape_cast %97 : vector<1x2x13xf32> to vector<2x13xf32>
    %cst_78 = arith.constant dense<0.000000e+00> : vector<2x144xf32>
    %99 = tpu.matmul %98, %66, %cst_78 {dimension_numbers = #tpu.dot_dimension_numbers<[1], [0], [0], [1], [0, 0, 1, 1], [], []>} : vector<2x13xf32>, vector<13x144xf32>, vector<2x144xf32> -> vector<2x144xf32>
    %c4_79 = arith.constant 4 : index
    %c0_80 = arith.constant 0 : index
    %c0_81 = arith.constant 0 : index
    %100 = vector.load %arg12[%c4_79, %c0_80, %c0_81] : memref<6x144x2048xf32, #tpu.memory_space<vmem>>, vector<1x144x2048xf32>
    %101 = vector.shape_cast %100 : vector<1x144x2048xf32> to vector<144x2048xf32>
    %cst_82 = arith.constant dense<0.000000e+00> : vector<2x2048xf32>
    %102 = tpu.matmul %99, %101, %cst_82 {dimension_numbers = #tpu.dot_dimension_numbers<[1], [0], [0], [1], [0, 0, 1, 1], [], []>} : vector<2x144xf32>, vector<144x2048xf32>, vector<2x2048xf32> -> vector<2x2048xf32>
    %103 = arith.addf %96, %102 : vector<2x2048xf32>
    %c5 = arith.constant 5 : index
    %c0_83 = arith.constant 0 : index
    %c0_84 = arith.constant 0 : index
    %104 = vector.load %arg11[%c5, %c0_83, %c0_84] : memref<6x2x13xf32, #tpu.memory_space<vmem>>, vector<1x2x13xf32>
    %105 = vector.shape_cast %104 : vector<1x2x13xf32> to vector<2x13xf32>
    %cst_85 = arith.constant dense<0.000000e+00> : vector<2x144xf32>
    %106 = tpu.matmul %105, %66, %cst_85 {dimension_numbers = #tpu.dot_dimension_numbers<[1], [0], [0], [1], [0, 0, 1, 1], [], []>} : vector<2x13xf32>, vector<13x144xf32>, vector<2x144xf32> -> vector<2x144xf32>
    %c5_86 = arith.constant 5 : index
    %c0_87 = arith.constant 0 : index
    %c0_88 = arith.constant 0 : index
    %107 = vector.load %arg12[%c5_86, %c0_87, %c0_88] : memref<6x144x2048xf32, #tpu.memory_space<vmem>>, vector<1x144x2048xf32>
    %108 = vector.shape_cast %107 : vector<1x144x2048xf32> to vector<144x2048xf32>
    %cst_89 = arith.constant dense<0.000000e+00> : vector<2x2048xf32>
    %109 = tpu.matmul %106, %108, %cst_89 {dimension_numbers = #tpu.dot_dimension_numbers<[1], [0], [0], [1], [0, 0, 1, 1], [], []>} : vector<2x144xf32>, vector<144x2048xf32>, vector<2x2048xf32> -> vector<2x2048xf32>
    %110 = arith.addf %103, %109 : vector<2x2048xf32>
    %cst_90 = arith.constant 0.000000e+00 : f32
    %111 = vector.broadcast %cst_90 : f32 to vector<2x2048xf32>
    %112 = arith.maximumf %110, %111 : vector<2x2048xf32>
    %c0_91 = arith.constant 0 : index
    %c0_92 = arith.constant 0 : index
    %113 = vector.load %arg17[%c0_91, %c0_92] : memref<2x2048xf32, #tpu.memory_space<vmem>>, vector<2x2048xf32>
    tpu.vector_store %arg17[%c0_91, %c0_92], %112 {strides = array<i32>} : memref<2x2048xf32, #tpu.memory_space<vmem>>, vector<2x2048xf32>,
    %c0_93 = arith.constant 0 : index
    %c0_94 = arith.constant 0 : index
    %114 = vector.load %arg14[%c0_93, %c0_94] : memref<2048x2xf32, #tpu.memory_space<vmem>>, vector<2048x2xf32>
    %cst_95 = arith.constant dense<0.000000e+00> : vector<2x2xf32>
    %115 = tpu.matmul %110, %114, %cst_95 {dimension_numbers = #tpu.dot_dimension_numbers<[1], [0], [0], [1], [0, 0, 1, 1], [], []>} : vector<2x2048xf32>, vector<2048x2xf32>, vector<2x2xf32> -> vector<2x2xf32>
    %c0_96 = arith.constant 0 : index
    %c0_97 = arith.constant 0 : index
    %116 = vector.load %arg15[%c0_96, %c0_97] : memref<1x2xf32, #tpu.memory_space<vmem>>, vector<1x2xf32>
    %117 = vector.broadcast %116 : vector<1x2xf32> to vector<2x2xf32>
    %118 = arith.addf %115, %117 : vector<2x2xf32>
    %c0_98 = arith.constant 0 : index
    %c0_99 = arith.constant 0 : index
    %119 = vector.load %arg16[%c0_98, %c0_99] : memref<2x2xf32, #tpu.memory_space<vmem>>, vector<2x2xf32>
    tpu.vector_store %arg16[%c0_98, %c0_99], %118 {strides = array<i32>} : memref<2x2xf32, #tpu.memory_space<vmem>>, vector<2x2xf32>,
    return
  }
}

</mosaic_0001>

<llo_original>
// kernel: cnn_forward.1
$region0: #{cnn_forward.1}
  #allocation0 [shape = 'u32[]', space=smem, size = 0x4, offset = 0x4, fixed_abs, tag = 'smem constant byte address 0x4 - core index']
  #allocation1 [shape = 'u32[144,128]{1,0:T(1,128)}', space=vmem, size = 0x12000, scoped, tag = 'internal scratch']
  %s0 = inlined_call_operand.vmem [shape: f32[68,130], index: 0, kind: input, shape index: {}]
  %s1 = inlined_call_operand.vmem [shape: f32[2,130,396], index: 1, kind: input, shape index: {}]
  %s2 = inlined_call_operand.hbm [shape: f32[1,396], index: 2, kind: input, shape index: {}]
  %s3 = inlined_call_operand.hbm [shape: f32[32,66], index: 3, kind: input, shape index: {}]
  %s4 = inlined_call_operand.vmem [shape: f32[393,192], index: 4, kind: input, shape index: {}]
  %s5 = inlined_call_operand.vmem [shape: f32[2,192,264], index: 5, kind: input, shape index: {}]
  %s6 = inlined_call_operand.hbm [shape: f32[1,264], index: 6, kind: input, shape index: {}]
  %s7 = inlined_call_operand.hbm [shape: f32[14,30], index: 7, kind: input, shape index: {}]
  %s8 = inlined_call_operand.hbm [shape: f32[263,128], index: 8, kind: input, shape index: {}]
  %s9 = inlined_call_operand.vmem [shape: f32[2,128,144], index: 9, kind: input, shape index: {}]
  %s10 = inlined_call_operand.hbm [shape: f32[1,144], index: 10, kind: input, shape index: {}]
  %s11 = inlined_call_operand.hbm [shape: f32[6,2,13], index: 11, kind: input, shape index: {}]
  %s12 = inlined_call_operand.hbm [shape: f32[6,144,2048], index: 12, kind: input, shape index: {}]
  %s13 = inlined_call_operand.hbm [shape: f32[1,2048], index: 13, kind: input, shape index: {}]
  %s14 = inlined_call_operand.vmem [shape: f32[2048,2], index: 14, kind: input, shape index: {}]
  %s15 = inlined_call_operand.hbm [shape: f32[1,2], index: 15, kind: input, shape index: {}]
  %s16 = inlined_call_operand.hbm [shape: f32[2,2], index: 16, kind: output, shape index: {0}]
  %s17 = inlined_call_operand.hbm [shape: f32[2,2048], index: 17, kind: output, shape index: {1}]
  %18 = xla_tuple %s16, %s17
  %s19 = sld [smem:[#allocation0]]
  $region122: #{cnn_forward.1} parent=0
    _
  %s21 = ssub.s32 1, %s19
  %s22 = scalar_select 0, %s21, %s19
  $region1: #{cnn_forward.1} parent=0
    #allocation2 [shape = 'u8[2048]{0}', space=vmem, size = 0x800, scoped, tag = 'input window, operand 2, single buffered']
    #allocation3 [shape = 's32[1]{0}', space=sflag, size = 0x4, scoped, tag = 'scoped memory for cnn_forward.1']
    #allocation4 [shape = 's32[1]{0}', space=sflag, size = 0x4, scoped, tag = 'scoped memory for cnn_forward.1']
    #allocation5 [shape = 'u8[16384]{0}', space=vmem, size = 0x4000, scoped, tag = 'input window, operand 3, single buffered']
    #allocation6 [shape = 's32[1]{0}', space=sflag, size = 0x4, scoped, tag = 'scoped memory for cnn_forward.1']
    #allocation7 [shape = 'u8[1536]{0}', space=vmem, size = 0x800, scoped, tag = 'input window, operand 6, single buffered']
    #allocation8 [shape = 'u8[8192]{0}', space=vmem, size = 0x2000, scoped, tag = 'input window, operand 7, single buffered']
    #allocation9 [shape = 's32[1]{0}', space=sflag, size = 0x4, scoped, tag = 'scoped memory for cnn_forward.1']
    #allocation10 [shape = 'u8[135168]{0}', space=vmem, size = 0x21000, scoped, tag = 'input window, operand 8, single buffered']
    #allocation11 [shape = 'u8[1024]{0}', space=vmem, size = 0x400, scoped, tag = 'input window, operand 10, single buffered']
    #allocation12 [shape = 's32[1]{0}', space=sflag, size = 0x4, scoped, tag = 'scoped memory for cnn_forward.1']
    #allocation13 [shape = 'u8[6144]{0}', space=vmem, size = 0x1800, scoped, tag = 'input window, operand 11, single buffered']
    #allocation14 [shape = 'u8[7077888]{0}', space=vmem, size = 0x6c0000, scoped, tag = 'input window, operand 12, single buffered']
    #allocation15 [shape = 's32[1]{0}', space=sflag, size = 0x4, scoped, tag = 'scoped memory for cnn_forward.1']
    #allocation16 [shape = 'u8[8192]{0}', space=vmem, size = 0x2000, scoped, tag = 'input window, operand 13, single buffered']
    #allocation17 [shape = 'u8[512]{0}', space=vmem, size = 0x400, scoped, tag = 'input window, operand 15, single buffered']
    #allocation18 [shape = 's32[1]{0}', space=sflag, size = 0x4, scoped, tag = 'scoped memory for cnn_forward.1']
    #allocation19 [shape = 'u8[1024]{0}', space=vmem, size = 0x400, scoped, tag = 'output window, operand 0, single buffered']
    #allocation20 [shape = 'u8[16384]{0}', space=vmem, size = 0x4000, scoped, tag = 'output window, operand 1, single buffered']
    #allocation21 [shape = 's32[1]{0}', space=sflag, size = 0x4, scoped, tag = 'scoped memory for cnn_forward.1']
    %23 = vsyncpa [#allocation3], 0
    %24 = vsyncpa [#allocation6], 0
    %25 = vsyncpa [#allocation9], 0
    %26 = vsyncpa [#allocation12], 0
    %27 = vsyncpa [#allocation15], 0
    %28 = vsyncpa [#allocation18], 0
    %29 = vsyncpa [#allocation4], 0
    %30 = vsyncpa [#allocation21], 0
    // Predicated region
    $region2: #{cnn_forward.1} parent=1 // pred_check
      _
    $region3: #{cnn_forward.1} parent=1 // pred_check_branch
      %32 = sbr.rel (0) target = $region5
    $region4: #{cnn_forward.1} parent=1 // pred_region
      _
    $region5: #{cnn_forward.1} parent=1 // pred_fallthru
      _
    // Predicated region
    $region6: #{cnn_forward.1} parent=1 // pred_check
      _
    $region7: #{cnn_forward.1} parent=1 // pred_check_branch
      %34 = sbr.rel (0) target = $region9
    $region8: #{cnn_forward.1} parent=1 // pred_region
      _
    $region9: #{cnn_forward.1} parent=1 // pred_fallthru
      _
    // Predicated region
    $region10: #{cnn_forward.1} parent=1 // pred_check
      _
    $region11: #{cnn_forward.1} parent=1 // pred_check_branch
      %36 = sbr.rel (0) target = $region13
    $region12: #{cnn_forward.1} parent=1 // pred_region
      %s38 = ssub.s32 64, 64
      %39 = vsyncadd [#allocation3], %s38
      %s41 = sshll.u32 [#allocation2], 4
      %s42 = int_to_ptr.vmem [resolvable:$true] %s41
      %44 = dma.hbm_to_vmem [thread:$0]  %s2, 64, %s42, [#allocation3]
    $region13: #{cnn_forward.1} parent=1 // pred_fallthru
      _
    // Predicated region
    $region14: #{cnn_forward.1} parent=1 // pred_check
      _
    $region15: #{cnn_forward.1} parent=1 // pred_check_branch
      %46 = sbr.rel (0) target = $region17
    $region16: #{cnn_forward.1} parent=1 // pred_region
      %s48 = ssub.s32 512, 512
      %49 = vsyncadd [#allocation6], %s48
      %s50 = sshll.u32 [#allocation5], 4
      %s51 = int_to_ptr.vmem [resolvable:$true] %s50
      %56 = dma.hbm_to_vmem [thread:$0]  %s3, 512, %s51, [#allocation6], 128, 128, 8
    $region17: #{cnn_forward.1} parent=1 // pred_fallthru
      _
    // Predicated region
    $region18: #{cnn_forward.1} parent=1 // pred_check
      _
    $region19: #{cnn_forward.1} parent=1 // pred_check_branch
      %58 = sbr.rel (0) target = $region21
    $region20: #{cnn_forward.1} parent=1 // pred_region
      _
    $region21: #{cnn_forward.1} parent=1 // pred_fallthru
      _
    // Predicated region
    $region22: #{cnn_forward.1} parent=1 // pred_check
      _
    $region23: #{cnn_forward.1} parent=1 // pred_check_branch
      %60 = sbr.rel (0) target = $region25
    $region24: #{cnn_forward.1} parent=1 // pred_region
      _
    $region25: #{cnn_forward.1} parent=1 // pred_fallthru
      _
    // Predicated region
    $region26: #{cnn_forward.1} parent=1 // pred_check
      _
    $region27: #{cnn_forward.1} parent=1 // pred_check_branch
      %62 = sbr.rel (0) target = $region29
    $region28: #{cnn_forward.1} parent=1 // pred_region
      %s64 = ssub.s32 48, 48
      %65 = vsyncadd [#allocation6], %s64
      %s67 = sshll.u32 [#allocation7], 4
      %s68 = int_to_ptr.vmem [resolvable:$true] %s67
      %70 = dma.hbm_to_vmem [thread:$0]  %s6, 48, %s68, [#allocation6]
    $region29: #{cnn_forward.1} parent=1 // pred_fallthru
      _
    // Predicated region
    $region30: #{cnn_forward.1} parent=1 // pred_check
      _
    $region31: #{cnn_forward.1} parent=1 // pred_check_branch
      %72 = sbr.rel (0) target = $region33
    $region32: #{cnn_forward.1} parent=1 // pred_region
      %s74 = ssub.s32 256, 256
      %75 = vsyncadd [#allocation9], %s74
      %s76 = sshll.u32 [#allocation8], 4
      %s77 = int_to_ptr.vmem [resolvable:$true] %s76
      %82 = dma.hbm_to_vmem [thread:$0]  %s7, 256, %s77, [#allocation9], 128, 128, 8
    $region33: #{cnn_forward.1} parent=1 // pred_fallthru
      _
    // Predicated region
    $region34: #{cnn_forward.1} parent=1 // pred_check
      _
    $region35: #{cnn_forward.1} parent=1 // pred_check_branch
      %84 = sbr.rel (0) target = $region37
    $region36: #{cnn_forward.1} parent=1 // pred_region
      %s86 = ssub.s32 4224, 4224
      %87 = vsyncadd [#allocation9], %s86
      %s88 = sshll.u32 [#allocation10], 4
      %s89 = int_to_ptr.vmem [resolvable:$true] %s88
      %94 = dma.hbm_to_vmem [thread:$0]  %s8, 4224, %s89, [#allocation9], 128, 128, 8
    $region37: #{cnn_forward.1} parent=1 // pred_fallthru
      _
    // Predicated region
    $region38: #{cnn_forward.1} parent=1 // pred_check
      _
    $region39: #{cnn_forward.1} parent=1 // pred_check_branch
      %96 = sbr.rel (0) target = $region41
    $region40: #{cnn_forward.1} parent=1 // pred_region
      _
    $region41: #{cnn_forward.1} parent=1 // pred_fallthru
      _
    // Predicated region
    $region42: #{cnn_forward.1} parent=1 // pred_check
      _
    $region43: #{cnn_forward.1} parent=1 // pred_check_branch
      %98 = sbr.rel (0) target = $region45
    $region44: #{cnn_forward.1} parent=1 // pred_region
      %s100 = ssub.s32 32, 32
      %101 = vsyncadd [#allocation12], %s100
      %s103 = sshll.u32 [#allocation11], 4
      %s104 = int_to_ptr.vmem [resolvable:$true] %s103
      %106 = dma.hbm_to_vmem [thread:$0]  %s10, 32, %s104, [#allocation12]
    $region45: #{cnn_forward.1} parent=1 // pred_fallthru
      _
    // Predicated region
    $region46: #{cnn_forward.1} parent=1 // pred_check
      _
    $region47: #{cnn_forward.1} parent=1 // pred_check_branch
      %108 = sbr.rel (0) target = $region49
    $region48: #{cnn_forward.1} parent=1 // pred_region
      %s110 = ssub.s32 192, 192
      %111 = vsyncadd [#allocation12], %s110
      %s112 = sshll.u32 [#allocation13], 4
      %s113 = int_to_ptr.vmem [resolvable:$true] %s112
      %118 = dma.hbm_to_vmem [thread:$0]  %s11, 192, %s113, [#allocation12], 32, 32, 2
    $region49: #{cnn_forward.1} parent=1 // pred_fallthru
      _
    // Predicated region
    $region50: #{cnn_forward.1} parent=1 // pred_check
      _
    $region51: #{cnn_forward.1} parent=1 // pred_check_branch
      %120 = sbr.rel (0) target = $region53
    $region52: #{cnn_forward.1} parent=1 // pred_region
      %s122 = ssub.s32 221184, 221184
      %123 = vsyncadd [#allocation15], %s122
      %s124 = sshll.u32 [#allocation14], 4
      %s125 = int_to_ptr.vmem [resolvable:$true] %s124
      %130 = dma.hbm_to_vmem [thread:$0]  %s12, 221184, %s125, [#allocation15], 2048, 2048, 128
    $region53: #{cnn_forward.1} parent=1 // pred_fallthru
      _
    // Predicated region
    $region54: #{cnn_forward.1} parent=1 // pred_check
      _
    $region55: #{cnn_forward.1} parent=1 // pred_check_branch
      %132 = sbr.rel (0) target = $region57
    $region56: #{cnn_forward.1} parent=1 // pred_region
      %s134 = ssub.s32 256, 256
      %135 = vsyncadd [#allocation15], %s134
      %s137 = sshll.u32 [#allocation16], 4
      %s138 = int_to_ptr.vmem [resolvable:$true] %s137
      %140 = dma.hbm_to_vmem [thread:$0]  %s13, 256, %s138, [#allocation15]
    $region57: #{cnn_forward.1} parent=1 // pred_fallthru
      _
    // Predicated region
    $region58: #{cnn_forward.1} parent=1 // pred_check
      _
    $region59: #{cnn_forward.1} parent=1 // pred_check_branch
      %142 = sbr.rel (0) target = $region61
    $region60: #{cnn_forward.1} parent=1 // pred_region
      _
    $region61: #{cnn_forward.1} parent=1 // pred_fallthru
      _
    // Predicated region
    $region62: #{cnn_forward.1} parent=1 // pred_check
      _
    $region63: #{cnn_forward.1} parent=1 // pred_check_branch
      %144 = sbr.rel (0) target = $region65
    $region64: #{cnn_forward.1} parent=1 // pred_region
      %s146 = ssub.s32 16, 16
      %147 = vsyncadd [#allocation18], %s146
      %s149 = sshll.u32 [#allocation17], 4
      %s150 = int_to_ptr.vmem [resolvable:$true] %s149
      %152 = dma.hbm_to_vmem [thread:$0]  %s15, 16, %s150, [#allocation18]
    $region65: #{cnn_forward.1} parent=1 // pred_fallthru
      _
    // Predicated region
    $region66: #{cnn_forward.1} parent=1 // pred_check
      _
    $region67: #{cnn_forward.1} parent=1 // pred_check_branch
      %154 = sbr.rel (0) target = $region69
    $region68: #{cnn_forward.1} parent=1 // pred_region
      %155 = dma.done [#allocation3], 64
    $region69: #{cnn_forward.1} parent=1 // pred_fallthru
      _
    // Predicated region
    $region70: #{cnn_forward.1} parent=1 // pred_check
      _
    $region71: #{cnn_forward.1} parent=1 // pred_check_branch
      %157 = sbr.rel (0) target = $region73
    $region72: #{cnn_forward.1} parent=1 // pred_region
      %158 = dma.done [#allocation6], 512
    $region73: #{cnn_forward.1} parent=1 // pred_fallthru
      _
    // Predicated region
    $region74: #{cnn_forward.1} parent=1 // pred_check
      _
    $region75: #{cnn_forward.1} parent=1 // pred_check_branch
      %160 = sbr.rel (0) target = $region77
    $region76: #{cnn_forward.1} parent=1 // pred_region
      %161 = dma.done [#allocation6], 48
    $region77: #{cnn_forward.1} parent=1 // pred_fallthru
      _
    // Predicated region
    $region78: #{cnn_forward.1} parent=1 // pred_check
      _
    $region79: #{cnn_forward.1} parent=1 // pred_check_branch
      %163 = sbr.rel (0) target = $region81
    $region80: #{cnn_forward.1} parent=1 // pred_region
      %164 = dma.done [#allocation9], 256
    $region81: #{cnn_forward.1} parent=1 // pred_fallthru
      _
    // Predicated region
    $region82: #{cnn_forward.1} parent=1 // pred_check
      _
    $region83: #{cnn_forward.1} parent=1 // pred_check_branch
      %166 = sbr.rel (0) target = $region85
    $region84: #{cnn_forward.1} parent=1 // pred_region
      %167 = dma.done [#allocation9], 4224
    $region85: #{cnn_forward.1} parent=1 // pred_fallthru
      _
    // Predicated region
    $region86: #{cnn_forward.1} parent=1 // pred_check
      _
    $region87: #{cnn_forward.1} parent=1 // pred_check_branch
      %169 = sbr.rel (0) target = $region89
    $region88: #{cnn_forward.1} parent=1 // pred_region
      %170 = dma.done [#allocation12], 32
    $region89: #{cnn_forward.1} parent=1 // pred_fallthru
      _
    // Predicated region
    $region90: #{cnn_forward.1} parent=1 // pred_check
      _
    $region91: #{cnn_forward.1} parent=1 // pred_check_branch
      %172 = sbr.rel (0) target = $region93
    $region92: #{cnn_forward.1} parent=1 // pred_region
      %173 = dma.done [#allocation12], 192
    $region93: #{cnn_forward.1} parent=1 // pred_fallthru
      _
    // Predicated region
    $region94: #{cnn_forward.1} parent=1 // pred_check
      _
    $region95: #{cnn_forward.1} parent=1 // pred_check_branch
      %175 = sbr.rel (0) target = $region97
    $region96: #{cnn_forward.1} parent=1 // pred_region
      %176 = dma.done [#allocation15], 221184
    $region97: #{cnn_forward.1} parent=1 // pred_fallthru
      _
    // Predicated region
    $region98: #{cnn_forward.1} parent=1 // pred_check
      _
    $region99: #{cnn_forward.1} parent=1 // pred_check_branch
      %178 = sbr.rel (0) target = $region101
    $region100: #{cnn_forward.1} parent=1 // pred_region
      %179 = dma.done [#allocation15], 256
    $region101: #{cnn_forward.1} parent=1 // pred_fallthru
      _
    // Predicated region
    $region102: #{cnn_forward.1} parent=1 // pred_check
      _
    $region103: #{cnn_forward.1} parent=1 // pred_check_branch
      %181 = sbr.rel (0) target = $region105
    $region104: #{cnn_forward.1} parent=1 // pred_region
      %182 = dma.done [#allocation18], 16
    $region105: #{cnn_forward.1} parent=1 // pred_fallthru
      _
    %v183 = vld [vmem:[%s0] sm:$0xff]
    %v184 = vld [vmem:[%s0 + $0x8] sm:$0xff]
    %v185 = vld [vmem:[%s0 + $0x10] sm:$0xff]
    %v186 = vld [vmem:[%s0 + $0x18] sm:$0xff]
    %v187 = vld [vmem:[%s0 + $0x20] sm:$0xff]
    %v188 = vld [vmem:[%s0 + $0x28] sm:$0xff]
    %v189 = vld [vmem:[%s0 + $0x30] sm:$0xff]
    %v190 = vld [vmem:[%s0 + $0x38] sm:$0xff]
    %v191 = vld [vmem:[%s0 + $0x40] sm:$0xff]
    %v192 = vld [vmem:[%s0 + $0x48] sm:$0xff]
    %v193 = vld [vmem:[%s0 + $0x50] sm:$0xff]
    %v194 = vld [vmem:[%s0 + $0x58] sm:$0xff]
    %v195 = vld [vmem:[%s0 + $0x60] sm:$0xff]
    %v196 = vld [vmem:[%s0 + $0x68] sm:$0xff]
    %v197 = vld [vmem:[%s0 + $0x70] sm:$0xff]
    %v198 = vld [vmem:[%s0 + $0x78] sm:$0xff]
    %v199 = vld [vmem:[%s0 + $0x80] sm:$0xf]
    %v200 = vld [vmem:[%s0 + $0x88] sm:$0xf]
    %v201 = vld [vmem:[%s1] sm:$0xff]
    %v202 = vld [vmem:[%s1 + $0x8] sm:$0xff]
    %v203 = vld [vmem:[%s1 + $0x10] sm:$0xff]
    %v204 = vld [vmem:[%s1 + $0x18] sm:$0xff]
    %v205 = vld [vmem:[%s1 + $0x20] sm:$0xff]
    %v206 = vld [vmem:[%s1 + $0x28] sm:$0xff]
    %v207 = vld [vmem:[%s1 + $0x30] sm:$0xff]
    %v208 = vld [vmem:[%s1 + $0x38] sm:$0xff]
    %v209 = vld [vmem:[%s1 + $0x40] sm:$0xff]
    %v210 = vld [vmem:[%s1 + $0x48] sm:$0xff]
    %v211 = vld [vmem:[%s1 + $0x50] sm:$0xff]
    %v212 = vld [vmem:[%s1 + $0x58] sm:$0xff]
    %v213 = vld [vmem:[%s1 + $0x60] sm:$0xff]
    %v214 = vld [vmem:[%s1 + $0x68] sm:$0xff]
    %v215 = vld [vmem:[%s1 + $0x70] sm:$0xff]
    %v216 = vld [vmem:[%s1 + $0x78] sm:$0xff]
    %v217 = vld [vmem:[%s1 + $0x80] sm:$0xff]
    %v218 = vld [vmem:[%s1 + $0x88] sm:$0xff]
    %v219 = vld [vmem:[%s1 + $0x90] sm:$0xff]
    %v220 = vld [vmem:[%s1 + $0x98] sm:$0xff]
    %v221 = vld [vmem:[%s1 + $0xa0] sm:$0xff]
    %v222 = vld [vmem:[%s1 + $0xa8] sm:$0xff]
    %v223 = vld [vmem:[%s1 + $0xb0] sm:$0xff]
    %v224 = vld [vmem:[%s1 + $0xb8] sm:$0xff]
    %v225 = vld [vmem:[%s1 + $0xc0] sm:$0xff]
    %v226 = vld [vmem:[%s1 + $0xc8] sm:$0xff]
    %v227 = vld [vmem:[%s1 + $0xd0] sm:$0xff]
    %v228 = vld [vmem:[%s1 + $0xd8] sm:$0xff]
    %v229 = vld [vmem:[%s1 + $0xe0] sm:$0xff]
    %v230 = vld [vmem:[%s1 + $0xe8] sm:$0xff]
    %v231 = vld [vmem:[%s1 + $0xf0] sm:$0xff]
    %v232 = vld [vmem:[%s1 + $0xf8] sm:$0xff]
    %v233 = vld [vmem:[%s1 + $0x100] sm:$0xff]
    %v234 = vld [vmem:[%s1 + $0x108] sm:$0xff]
    %v235 = vld [vmem:[%s1 + $0x110] sm:$0xff]
    %v236 = vld [vmem:[%s1 + $0x118] sm:$0xff]
    %v237 = vld [vmem:[%s1 + $0x120] sm:$0xff]
    %v238 = vld [vmem:[%s1 + $0x128] sm:$0xff]
    %v239 = vld [vmem:[%s1 + $0x130] sm:$0xff]
    %v240 = vld [vmem:[%s1 + $0x138] sm:$0xff]
    %v241 = vld [vmem:[%s1 + $0x140] sm:$0xff]
    %v242 = vld [vmem:[%s1 + $0x148] sm:$0xff]
    %v243 = vld [vmem:[%s1 + $0x150] sm:$0xff]
    %v244 = vld [vmem:[%s1 + $0x158] sm:$0xff]
    %v245 = vld [vmem:[%s1 + $0x160] sm:$0xff]
    %v246 = vld [vmem:[%s1 + $0x168] sm:$0xff]
    %v247 = vld [vmem:[%s1 + $0x170] sm:$0xff]
    %v248 = vld [vmem:[%s1 + $0x178] sm:$0xff]
    %v249 = vld [vmem:[%s1 + $0x180] sm:$0xff]
    %v250 = vld [vmem:[%s1 + $0x188] sm:$0xff]
    %v251 = vld [vmem:[%s1 + $0x190] sm:$0xff]
    %v252 = vld [vmem:[%s1 + $0x198] sm:$0xff]
    %v253 = vld [vmem:[%s1 + $0x1a0] sm:$0xff]
    %v254 = vld [vmem:[%s1 + $0x1a8] sm:$0xff]
    %v255 = vld [vmem:[%s1 + $0x1b0] sm:$0xff]
    %v256 = vld [vmem:[%s1 + $0x1b8] sm:$0xff]
    %v257 = vld [vmem:[%s1 + $0x1c0] sm:$0xff]
    %v258 = vld [vmem:[%s1 + $0x1c8] sm:$0xff]
    %v259 = vld [vmem:[%s1 + $0x1d0] sm:$0xff]
    %v260 = vld [vmem:[%s1 + $0x1d8] sm:$0xff]
    %v261 = vld [vmem:[%s1 + $0x1e0] sm:$0xff]
    %v262 = vld [vmem:[%s1 + $0x1e8] sm:$0xff]
    %v263 = vld [vmem:[%s1 + $0x1f0] sm:$0xff]
    %v264 = vld [vmem:[%s1 + $0x1f8] sm:$0xff]
    %v265 = vld [vmem:[%s1 + $0x200] sm:$0x3]
    %v266 = vld [vmem:[%s1 + $0x208] sm:$0x3]
    %v267 = vld [vmem:[%s1 + $0x210] sm:$0x3]
    %v268 = vld [vmem:[%s1 + $0x218] sm:$0x3]
    %vm269 = vcmask 15360
    %v271 = vsel %vm269, %v184, 0
    %v274 = vsel %vm269, %v186, 0
    %v277 = vsel %vm269, %v188, 0
    %v280 = vsel %vm269, %v190, 0
    %v283 = vsel %vm269, %v192, 0
    %v286 = vsel %vm269, %v194, 0
    %v289 = vsel %vm269, %v196, 0
    %v292 = vsel %vm269, %v198, 0
    %v295 = vsel %vm269, %v200, 0
    %vm297 = vcmask 1041408
    %v299 = vsel %vm297, %v265, 0
    %v302 = vsel %vm297, %v266, 0
    %v305 = vsel %vm297, %v267, 0
    %v308 = vsel %vm297, %v268, 0
    %310 = vmatprep.subr.mxu0 %v202
    %311 = vmatpush1.msra.mxu0 %v201
    %312 = vmatprep.subr.mxu0 %v206
    %313 = vmatpush1.msra.mxu0 %v205
    %314 = vmatprep.subr.mxu0 %v210
    %315 = vmatpush1.msra.mxu0 %v209
    %316 = vmatprep.subr.mxu0 %v214
    %317 = vmatpush1.msra.mxu0 %v213
    %318 = vmatprep.subr.mxu0 %v218
    %319 = vmatpush1.msra.mxu0 %v217
    %320 = vmatprep.subr.mxu0 %v222
    %321 = vmatpush1.msra.mxu0 %v221
    %322 = vmatprep.subr.mxu0 %v226
    %323 = vmatpush1.msra.mxu0 %v225
    %324 = vmatprep.subr.mxu0 %v230
    %325 = vmatpush1.msra.mxu0 %v229
    %326 = vmatprep.subr.mxu0 %v234
    %327 = vmatpush1.msra.mxu0 %v233
    %328 = vmatprep.subr.mxu0 %v238
    %329 = vmatpush1.msra.mxu0 %v237
    %330 = vmatprep.subr.mxu0 %v242
    %331 = vmatpush1.msra.mxu0 %v241
    %332 = vmatprep.subr.mxu0 %v246
    %333 = vmatpush1.msra.mxu0 %v245
    %334 = vmatprep.subr.mxu0 %v250
    %335 = vmatpush1.msra.mxu0 %v249
    %336 = vmatprep.subr.mxu0 %v254
    %337 = vmatpush1.msra.mxu0 %v253
    %338 = vmatprep.subr.mxu0 %v258
    %339 = vmatpush1.msra.mxu0 %v257
    %340 = vmatprep.subr.mxu0 %v262
    %341 = vmatpush1.msra.mxu0 %v261
    %342 = vmatprep.subr.mxu0 %v302
    %343 = vmatpush1.msra.mxu0 %v299
    %344 = vmatprep.subr.mxu0 0.0
    %345 = vmatpush1.msra.mxu0 0.0
    %346 = vmatprep.subr.mxu0 0.0
    %347 = vmatpush1.msra.mxu0 0.0
    %348 = vmatprep.subr.mxu0 0.0
    %349 = vmatpush1.msra.mxu0 0.0
    %350 = vmatprep.subr.mxu0 0.0
    %351 = vmatpush1.msra.mxu0 0.0
    %352 = vmatprep.subr.mxu0 0.0
    %353 = vmatpush1.msra.mxu0 0.0
    %354 = vmatprep.subr.mxu0 0.0
    %355 = vmatpush1.msra.mxu0 0.0
    %356 = vmatprep.subr.mxu0 0.0
    %357 = vmatpush1.msra.mxu0 0.0
    %358 = vmatprep.subr.mxu0 0.0
    %359 = vmatpush1.msra.mxu0 0.0
    %360 = vmatprep.subr.mxu0 0.0
    %361 = vmatpush1.msra.mxu0 0.0
    %362 = vmatprep.subr.mxu0 0.0
    %363 = vmatpush1.msra.mxu0 0.0
    %364 = vmatprep.subr.mxu0 0.0
    %365 = vmatpush1.msra.mxu0 0.0
    %366 = vmatprep.subr.mxu0 0.0
    %367 = vmatpush1.msra.mxu0 0.0
    %368 = vmatprep.subr.mxu0 0.0
    %369 = vmatpush1.msra.mxu0 0.0
    %370 = vmatprep.subr.mxu0 0.0
    %371 = vmatpush1.msra.mxu0 0.0
    %372 = vmatprep.subr.mxu0 0.0
    %373 = vmatpush1.msra.mxu0 0.0
    %374 = vmatprep.mubr.f32.mxu0 %v271
    %375 = vmatmul.mubr.f32.gmra.mrb[0].mxu0 %v183
    %v376 = vpop.f32.mrb[0].mxu0
    %v377 = vadd.f32 0.0, %v376
    %v378 = vpop.f32.mrb[0].mxu0
    %v379 = vadd.f32 0.0, %v378
    %380 = vmatprep.mubr.f32.mxu0 %v274
    %381 = vmatmul.mubr.f32.gmra.mrb[0].mxu0 %v185
    %v382 = vpop.f32.mrb[0].mxu0
    %v383 = vadd.f32 0.0, %v382
    %v384 = vpop.f32.mrb[0].mxu0
    %v385 = vadd.f32 0.0, %v384
    %386 = vmatprep.mubr.f32.mxu0 %v277
    %387 = vmatmul.mubr.f32.gmra.mrb[0].mxu0 %v187
    %v388 = vpop.f32.mrb[0].mxu0
    %v389 = vadd.f32 0.0, %v388
    %v390 = vpop.f32.mrb[0].mxu0
    %v391 = vadd.f32 0.0, %v390
    %392 = vmatprep.mubr.f32.mxu0 %v280
    %393 = vmatmul.mubr.f32.gmra.mrb[0].mxu0 %v189
    %v394 = vpop.f32.mrb[0].mxu0
    %v395 = vadd.f32 0.0, %v394
    %v396 = vpop.f32.mrb[0].mxu0
    %v397 = vadd.f32 0.0, %v396
    %398 = vmatprep.mubr.f32.mxu0 %v283
    %399 = vmatmul.mubr.f32.gmra.mrb[0].mxu0 %v191
    %v400 = vpop.f32.mrb[0].mxu0
    %v401 = vadd.f32 0.0, %v400
    %v402 = vpop.f32.mrb[0].mxu0
    %v403 = vadd.f32 0.0, %v402
    %404 = vmatprep.mubr.f32.mxu0 %v286
    %405 = vmatmul.mubr.f32.gmra.mrb[0].mxu0 %v193
    %v406 = vpop.f32.mrb[0].mxu0
    %v407 = vadd.f32 0.0, %v406
    %v408 = vpop.f32.mrb[0].mxu0
    %v409 = vadd.f32 0.0, %v408
    %410 = vmatprep.mubr.f32.mxu0 %v289
    %411 = vmatmul.mubr.f32.gmra.mrb[0].mxu0 %v195
    %v412 = vpop.f32.mrb[0].mxu0
    %v413 = vadd.f32 0.0, %v412
    %v414 = vpop.f32.mrb[0].mxu0
    %v415 = vadd.f32 0.0, %v414
    %416 = vmatprep.mubr.f32.mxu0 %v292
    %417 = vmatmul.mubr.f32.gmra.mrb[0].mxu0 %v197
    %v418 = vpop.f32.mrb[0].mxu0
    %v419 = vadd.f32 0.0, %v418
    %v420 = vpop.f32.mrb[0].mxu0
    %v421 = vadd.f32 0.0, %v420
    %422 = vmatprep.mubr.f32.mxu0 %v295
    %423 = vmatmul.mubr.f32.gmra.mrb[0].mxu0 %v199
    %v424 = vpop.f32.mrb[0].mxu0
    %v425 = vadd.f32 0.0, %v424
    %v426 = vpop.f32.mrb[0].mxu0
    %v427 = vadd.f32 0.0, %v426
    %428 = vdwg.mxu0
    %429 = vmatprep.subr.mxu0 %v204
    %430 = vmatpush1.msra.mxu0 %v203
    %431 = vmatprep.subr.mxu0 %v208
    %432 = vmatpush1.msra.mxu0 %v207
    %433 = vmatprep.subr.mxu0 %v212
    %434 = vmatpush1.msra.mxu0 %v211
    %435 = vmatprep.subr.mxu0 %v216
    %436 = vmatpush1.msra.mxu0 %v215
    %437 = vmatprep.subr.mxu0 %v220
    %438 = vmatpush1.msra.mxu0 %v219
    %439 = vmatprep.subr.mxu0 %v224
    %440 = vmatpush1.msra.mxu0 %v223
    %441 = vmatprep.subr.mxu0 %v228
    %442 = vmatpush1.msra.mxu0 %v227
    %443 = vmatprep.subr.mxu0 %v232
    %444 = vmatpush1.msra.mxu0 %v231
    %445 = vmatprep.subr.mxu0 %v236
    %446 = vmatpush1.msra.mxu0 %v235
    %447 = vmatprep.subr.mxu0 %v240
    %448 = vmatpush1.msra.mxu0 %v239
    %449 = vmatprep.subr.mxu0 %v244
    %450 = vmatpush1.msra.mxu0 %v243
    %451 = vmatprep.subr.mxu0 %v248
    %452 = vmatpush1.msra.mxu0 %v247
    %453 = vmatprep.subr.mxu0 %v252
    %454 = vmatpush1.msra.mxu0 %v251
    %455 = vmatprep.subr.mxu0 %v256
    %456 = vmatpush1.msra.mxu0 %v255
    %457 = vmatprep.subr.mxu0 %v260
    %458 = vmatpush1.msra.mxu0 %v259
    %459 = vmatprep.subr.mxu0 %v264
    %460 = vmatpush1.msra.mxu0 %v263
    %461 = vmatprep.subr.mxu0 %v308
    %462 = vmatpush1.msra.mxu0 %v305
    %463 = vmatprep.subr.mxu0 0.0
    %464 = vmatpush1.msra.mxu0 0.0
    %465 = vmatprep.subr.mxu0 0.0
    %466 = vmatpush1.msra.mxu0 0.0
    %467 = vmatprep.subr.mxu0 0.0
    %468 = vmatpush1.msra.mxu0 0.0
    %469 = vmatprep.subr.mxu0 0.0
    %470 = vmatpush1.msra.mxu0 0.0
    %471 = vmatprep.subr.mxu0 0.0
    %472 = vmatpush1.msra.mxu0 0.0
    %473 = vmatprep.subr.mxu0 0.0
    %474 = vmatpush1.msra.mxu0 0.0
    %475 = vmatprep.subr.mxu0 0.0
    %476 = vmatpush1.msra.mxu0 0.0
    %477 = vmatprep.subr.mxu0 0.0
    %478 = vmatpush1.msra.mxu0 0.0
    %479 = vmatprep.subr.mxu0 0.0
    %480 = vmatpush1.msra.mxu0 0.0
    %481 = vmatprep.subr.mxu0 0.0
    %482 = vmatpush1.msra.mxu0 0.0
    %483 = vmatprep.subr.mxu0 0.0
    %484 = vmatpush1.msra.mxu0 0.0
    %485 = vmatprep.subr.mxu0 0.0
    %486 = vmatpush1.msra.mxu0 0.0
    %487 = vmatprep.subr.mxu0 0.0
    %488 = vmatpush1.msra.mxu0 0.0
    %489 = vmatprep.subr.mxu0 0.0
    %490 = vmatpush1.msra.mxu0 0.0
    %491 = vmatprep.subr.mxu0 0.0
    %492 = vmatpush1.msra.mxu0 0.0
    %493 = vmatprep.mubr.f32.mxu0 %v271
    %494 = vmatmul.mubr.f32.gmra.mrb[0].mxu0 %v183
    %v495 = vpop.f32.mrb[0].mxu0
    %v496 = vadd.f32 0.0, %v495
    %v497 = vpop.f32.mrb[0].mxu0
    %v498 = vadd.f32 0.0, %v497
    %499 = vmatprep.mubr.f32.mxu0 %v274
    %500 = vmatmul.mubr.f32.gmra.mrb[0].mxu0 %v185
    %v501 = vpop.f32.mrb[0].mxu0
    %v502 = vadd.f32 0.0, %v501
    %v503 = vpop.f32.mrb[0].mxu0
    %v504 = vadd.f32 0.0, %v503
    %505 = vmatprep.mubr.f32.mxu0 %v277
    %506 = vmatmul.mubr.f32.gmra.mrb[0].mxu0 %v187
    %v507 = vpop.f32.mrb[0].mxu0
    %v508 = vadd.f32 0.0, %v507
    %v509 = vpop.f32.mrb[0].mxu0
    %v510 = vadd.f32 0.0, %v509
    %511 = vmatprep.mubr.f32.mxu0 %v280
    %512 = vmatmul.mubr.f32.gmra.mrb[0].mxu0 %v189
    %v513 = vpop.f32.mrb[0].mxu0
    %v514 = vadd.f32 0.0, %v513
    %v515 = vpop.f32.mrb[0].mxu0
    %v516 = vadd.f32 0.0, %v515
    %517 = vmatprep.mubr.f32.mxu0 %v283
    %518 = vmatmul.mubr.f32.gmra.mrb[0].mxu0 %v191
    %v519 = vpop.f32.mrb[0].mxu0
    %v520 = vadd.f32 0.0, %v519
    %v521 = vpop.f32.mrb[0].mxu0
    %v522 = vadd.f32 0.0, %v521
    %523 = vmatprep.mubr.f32.mxu0 %v286
    %524 = vmatmul.mubr.f32.gmra.mrb[0].mxu0 %v193
    %v525 = vpop.f32.mrb[0].mxu0
    %v526 = vadd.f32 0.0, %v525
    %v527 = vpop.f32.mrb[0].mxu0
    %v528 = vadd.f32 0.0, %v527
    %529 = vmatprep.mubr.f32.mxu0 %v289
    %530 = vmatmul.mubr.f32.gmra.mrb[0].mxu0 %v195
    %v531 = vpop.f32.mrb[0].mxu0
    %v532 = vadd.f32 0.0, %v531
    %v533 = vpop.f32.mrb[0].mxu0
    %v534 = vadd.f32 0.0, %v533
    %535 = vmatprep.mubr.f32.mxu0 %v292
    %536 = vmatmul.mubr.f32.gmra.mrb[0].mxu0 %v197
    %v537 = vpop.f32.mrb[0].mxu0
    %v538 = vadd.f32 0.0, %v537
    %v539 = vpop.f32.mrb[0].mxu0
    %v540 = vadd.f32 0.0, %v539
    %541 = vmatprep.mubr.f32.mxu0 %v295
    %542 = vmatmul.mubr.f32.gmra.mrb[0].mxu0 %v199
    %v543 = vpop.f32.mrb[0].mxu0
    %v544 = vadd.f32 0.0, %v543
    %v545 = vpop.f32.mrb[0].mxu0
    %v546 = vadd.f32 0.0, %v545
    %547 = vdwg.mxu0
    %s548 = scalar_lea.vmem %s1, 544
    %v549 = vld [vmem:[%s548] sm:$0xff]
    %v550 = vld [vmem:[%s548 + $0x8] sm:$0xff]
    %v551 = vld [vmem:[%s548 + $0x10] sm:$0xff]
    %v552 = vld [vmem:[%s548 + $0x18] sm:$0xff]
    %v553 = vld [vmem:[%s548 + $0x20] sm:$0xff]
    %v554 = vld [vmem:[%s548 + $0x28] sm:$0xff]
    %v555 = vld [vmem:[%s548 + $0x30] sm:$0xff]
    %v556 = vld [vmem:[%s548 + $0x38] sm:$0xff]
    %v557 = vld [vmem:[%s548 + $0x40] sm:$0xff]
    %v558 = vld [vmem:[%s548 + $0x48] sm:$0xff]
    %v559 = vld [vmem:[%s548 + $0x50] sm:$0xff]
    %v560 = vld [vmem:[%s548 + $0x58] sm:$0xff]
    %v561 = vld [vmem:[%s548 + $0x60] sm:$0xff]
    %v562 = vld [vmem:[%s548 + $0x68] sm:$0xff]
    %v563 = vld [vmem:[%s548 + $0x70] sm:$0xff]
    %v564 = vld [vmem:[%s548 + $0x78] sm:$0xff]
    %v565 = vld [vmem:[%s548 + $0x80] sm:$0xff]
    %v566 = vld [vmem:[%s548 + $0x88] sm:$0xff]
    %v567 = vld [vmem:[%s548 + $0x90] sm:$0xff]
    %v568 = vld [vmem:[%s548 + $0x98] sm:$0xff]
    %v569 = vld [vmem:[%s548 + $0xa0] sm:$0xff]
    %v570 = vld [vmem:[%s548 + $0xa8] sm:$0xff]
    %v571 = vld [vmem:[%s548 + $0xb0] sm:$0xff]
    %v572 = vld [vmem:[%s548 + $0xb8] sm:$0xff]
    %v573 = vld [vmem:[%s548 + $0xc0] sm:$0xff]
    %v574 = vld [vmem:[%s548 + $0xc8] sm:$0xff]
    %v575 = vld [vmem:[%s548 + $0xd0] sm:$0xff]
    %v576 = vld [vmem:[%s548 + $0xd8] sm:$0xff]
    %v577 = vld [vmem:[%s548 + $0xe0] sm:$0xff]
    %v578 = vld [vmem:[%s548 + $0xe8] sm:$0xff]
    %v579 = vld [vmem:[%s548 + $0xf0] sm:$0xff]
    %v580 = vld [vmem:[%s548 + $0xf8] sm:$0xff]
    %v581 = vld [vmem:[%s548 + $0x100] sm:$0xff]
    %v582 = vld [vmem:[%s548 + $0x108] sm:$0xff]
    %v583 = vld [vmem:[%s548 + $0x110] sm:$0xff]
    %v584 = vld [vmem:[%s548 + $0x118] sm:$0xff]
    %v585 = vld [vmem:[%s548 + $0x120] sm:$0xff]
    %v586 = vld [vmem:[%s548 + $0x128] sm:$0xff]
    %v587 = vld [vmem:[%s548 + $0x130] sm:$0xff]
    %v588 = vld [vmem:[%s548 + $0x138] sm:$0xff]
    %v589 = vld [vmem:[%s548 + $0x140] sm:$0xff]
    %v590 = vld [vmem:[%s548 + $0x148] sm:$0xff]
    %v591 = vld [vmem:[%s548 + $0x150] sm:$0xff]
    %v592 = vld [vmem:[%s548 + $0x158] sm:$0xff]
    %v593 = vld [vmem:[%s548 + $0x160] sm:$0xff]
    %v594 = vld [vmem:[%s548 + $0x168] sm:$0xff]
    %v595 = vld [vmem:[%s548 + $0x170] sm:$0xff]
    %v596 = vld [vmem:[%s548 + $0x178] sm:$0xff]
    %v597 = vld [vmem:[%s548 + $0x180] sm:$0xff]
    %v598 = vld [vmem:[%s548 + $0x188] sm:$0xff]
    %v599 = vld [vmem:[%s548 + $0x190] sm:$0xff]
    %v600 = vld [vmem:[%s548 + $0x198] sm:$0xff]
    %v601 = vld [vmem:[%s548 + $0x1a0] sm:$0xff]
    %v602 = vld [vmem:[%s548 + $0x1a8] sm:$0xff]
    %v603 = vld [vmem:[%s548 + $0x1b0] sm:$0xff]
    %v604 = vld [vmem:[%s548 + $0x1b8] sm:$0xff]
    %v605 = vld [vmem:[%s548 + $0x1c0] sm:$0xff]
    %v606 = vld [vmem:[%s548 + $0x1c8] sm:$0xff]
    %v607 = vld [vmem:[%s548 + $0x1d0] sm:$0xff]
    %v608 = vld [vmem:[%s548 + $0x1d8] sm:$0xff]
    %v609 = vld [vmem:[%s548 + $0x1e0] sm:$0xff]
    %v610 = vld [vmem:[%s548 + $0x1e8] sm:$0xff]
    %v611 = vld [vmem:[%s548 + $0x1f0] sm:$0xff]
    %v612 = vld [vmem:[%s548 + $0x1f8] sm:$0xff]
    %v613 = vld [vmem:[%s548 + $0x200] sm:$0x3]
    %v614 = vld [vmem:[%s548 + $0x208] sm:$0x3]
    %v615 = vld [vmem:[%s548 + $0x210] sm:$0x3]
    %v616 = vld [vmem:[%s548 + $0x218] sm:$0x3]
    %v618 = vsel %vm297, %v613, 0
    %v621 = vsel %vm297, %v614, 0
    %v624 = vsel %vm297, %v615, 0
    %v627 = vsel %vm297, %v616, 0
    %629 = vmatprep.subr.mxu0 %v550
    %630 = vmatpush1.msra.mxu0 %v549
    %631 = vmatprep.subr.mxu0 %v554
    %632 = vmatpush1.msra.mxu0 %v553
    %633 = vmatprep.subr.mxu0 %v558
    %634 = vmatpush1.msra.mxu0 %v557
    %635 = vmatprep.subr.mxu0 %v562
    %636 = vmatpush1.msra.mxu0 %v561
    %637 = vmatprep.subr.mxu0 %v566
    %638 = vmatpush1.msra.mxu0 %v565
    %639 = vmatprep.subr.mxu0 %v570
    %640 = vmatpush1.msra.mxu0 %v569
    %641 = vmatprep.subr.mxu0 %v574
    %642 = vmatpush1.msra.mxu0 %v573
    %643 = vmatprep.subr.mxu0 %v578
    %644 = vmatpush1.msra.mxu0 %v577
    %645 = vmatprep.subr.mxu0 %v582
    %646 = vmatpush1.msra.mxu0 %v581
    %647 = vmatprep.subr.mxu0 %v586
    %648 = vmatpush1.msra.mxu0 %v585
    %649 = vmatprep.subr.mxu0 %v590
    %650 = vmatpush1.msra.mxu0 %v589
    %651 = vmatprep.subr.mxu0 %v594
    %652 = vmatpush1.msra.mxu0 %v593
    %653 = vmatprep.subr.mxu0 %v598
    %654 = vmatpush1.msra.mxu0 %v597
    %655 = vmatprep.subr.mxu0 %v602
    %656 = vmatpush1.msra.mxu0 %v601
    %657 = vmatprep.subr.mxu0 %v606
    %658 = vmatpush1.msra.mxu0 %v605
    %659 = vmatprep.subr.mxu0 %v610
    %660 = vmatpush1.msra.mxu0 %v609
    %661 = vmatprep.subr.mxu0 %v621
    %662 = vmatpush1.msra.mxu0 %v618
    %663 = vmatprep.subr.mxu0 0.0
    %664 = vmatpush1.msra.mxu0 0.0
    %665 = vmatprep.subr.mxu0 0.0
    %666 = vmatpush1.msra.mxu0 0.0
    %667 = vmatprep.subr.mxu0 0.0
    %668 = vmatpush1.msra.mxu0 0.0
    %669 = vmatprep.subr.mxu0 0.0
    %670 = vmatpush1.msra.mxu0 0.0
    %671 = vmatprep.subr.mxu0 0.0
    %672 = vmatpush1.msra.mxu0 0.0
    %673 = vmatprep.subr.mxu0 0.0
    %674 = vmatpush1.msra.mxu0 0.0
    %675 = vmatprep.subr.mxu0 0.0
    %676 = vmatpush1.msra.mxu0 0.0
    %677 = vmatprep.subr.mxu0 0.0
    %678 = vmatpush1.msra.mxu0 0.0
    %679 = vmatprep.subr.mxu0 0.0
    %680 = vmatpush1.msra.mxu0 0.0
    %681 = vmatprep.subr.mxu0 0.0
    %682 = vmatpush1.msra.mxu0 0.0
    %683 = vmatprep.subr.mxu0 0.0
    %684 = vmatpush1.msra.mxu0 0.0
    %685 = vmatprep.subr.mxu0 0.0
    %686 = vmatpush1.msra.mxu0 0.0
    %687 = vmatprep.subr.mxu0 0.0
    %688 = vmatpush1.msra.mxu0 0.0
    %689 = vmatprep.subr.mxu0 0.0
    %690 = vmatpush1.msra.mxu0 0.0
    %691 = vmatprep.subr.mxu0 0.0
    %692 = vmatpush1.msra.mxu0 0.0
    %693 = vmatprep.mubr.f32.mxu0 %v271
    %694 = vmatmul.mubr.f32.gmra.mrb[0].mxu0 %v183
    %v695 = vpop.f32.mrb[0].mxu0
    %v696 = vadd.f32 0.0, %v695
    %v697 = vpop.f32.mrb[0].mxu0
    %v698 = vadd.f32 0.0, %v697
    %699 = vmatprep.mubr.f32.mxu0 %v274
    %700 = vmatmul.mubr.f32.gmra.mrb[0].mxu0 %v185
    %v701 = vpop.f32.mrb[0].mxu0
    %v702 = vadd.f32 0.0, %v701
    %v703 = vpop.f32.mrb[0].mxu0
    %v704 = vadd.f32 0.0, %v703
    %705 = vmatprep.mubr.f32.mxu0 %v277
    %706 = vmatmul.mubr.f32.gmra.mrb[0].mxu0 %v187
    %v707 = vpop.f32.mrb[0].mxu0
    %v708 = vadd.f32 0.0, %v707
    %v709 = vpop.f32.mrb[0].mxu0
    %v710 = vadd.f32 0.0, %v709
    %711 = vmatprep.mubr.f32.mxu0 %v280
    %712 = vmatmul.mubr.f32.gmra.mrb[0].mxu0 %v189
    %v713 = vpop.f32.mrb[0].mxu0
    %v714 = vadd.f32 0.0, %v713
    %v715 = vpop.f32.mrb[0].mxu0
    %v716 = vadd.f32 0.0, %v715
    %717 = vmatprep.mubr.f32.mxu0 %v283
    %718 = vmatmul.mubr.f32.gmra.mrb[0].mxu0 %v191
    %v719 = vpop.f32.mrb[0].mxu0
    %v720 = vadd.f32 0.0, %v719
    %v721 = vpop.f32.mrb[0].mxu0
    %v722 = vadd.f32 0.0, %v721
    %723 = vmatprep.mubr.f32.mxu0 %v286
    %724 = vmatmul.mubr.f32.gmra.mrb[0].mxu0 %v193
    %v725 = vpop.f32.mrb[0].mxu0
    %v726 = vadd.f32 0.0, %v725
    %v727 = vpop.f32.mrb[0].mxu0
    %v728 = vadd.f32 0.0, %v727
    %729 = vmatprep.mubr.f32.mxu0 %v289
    %730 = vmatmul.mubr.f32.gmra.mrb[0].mxu0 %v195
    %v731 = vpop.f32.mrb[0].mxu0
    %v732 = vadd.f32 0.0, %v731
    %v733 = vpop.f32.mrb[0].mxu0
    %v734 = vadd.f32 0.0, %v733
    %735 = vmatprep.mubr.f32.mxu0 %v292
    %736 = vmatmul.mubr.f32.gmra.mrb[0].mxu0 %v197
    %v737 = vpop.f32.mrb[0].mxu0
    %v738 = vadd.f32 0.0, %v737
    %v739 = vpop.f32.mrb[0].mxu0
    %v740 = vadd.f32 0.0, %v739
    %741 = vmatprep.mubr.f32.mxu0 %v295
    %742 = vmatmul.mubr.f32.gmra.mrb[0].mxu0 %v199
    %v743 = vpop.f32.mrb[0].mxu0
    %v744 = vadd.f32 0.0, %v743
    %v745 = vpop.f32.mrb[0].mxu0
    %v746 = vadd.f32 0.0, %v745
    %747 = vdwg.mxu0
    %748 = vmatprep.subr.mxu0 %v552
    %749 = vmatpush1.msra.mxu0 %v551
    %750 = vmatprep.subr.mxu0 %v556
    %751 = vmatpush1.msra.mxu0 %v555
    %752 = vmatprep.subr.mxu0 %v560
    %753 = vmatpush1.msra.mxu0 %v559
    %754 = vmatprep.subr.mxu0 %v564
    %755 = vmatpush1.msra.mxu0 %v563
    %756 = vmatprep.subr.mxu0 %v568
    %757 = vmatpush1.msra.mxu0 %v567
    %758 = vmatprep.subr.mxu0 %v572
    %759 = vmatpush1.msra.mxu0 %v571
    %760 = vmatprep.subr.mxu0 %v576
    %761 = vmatpush1.msra.mxu0 %v575
    %762 = vmatprep.subr.mxu0 %v580
    %763 = vmatpush1.msra.mxu0 %v579
    %764 = vmatprep.subr.mxu0 %v584
    %765 = vmatpush1.msra.mxu0 %v583
    %766 = vmatprep.subr.mxu0 %v588
    %767 = vmatpush1.msra.mxu0 %v587
    %768 = vmatprep.subr.mxu0 %v592
    %769 = vmatpush1.msra.mxu0 %v591
    %770 = vmatprep.subr.mxu0 %v596
    %771 = vmatpush1.msra.mxu0 %v595
    %772 = vmatprep.subr.mxu0 %v600
    %773 = vmatpush1.msra.mxu0 %v599
    %774 = vmatprep.subr.mxu0 %v604
    %775 = vmatpush1.msra.mxu0 %v603
    %776 = vmatprep.subr.mxu0 %v608
    %777 = vmatpush1.msra.mxu0 %v607
    %778 = vmatprep.subr.mxu0 %v612
    %779 = vmatpush1.msra.mxu0 %v611
    %780 = vmatprep.subr.mxu0 %v627
    %781 = vmatpush1.msra.mxu0 %v624
    %782 = vmatprep.subr.mxu0 0.0
    %783 = vmatpush1.msra.mxu0 0.0
    %784 = vmatprep.subr.mxu0 0.0
    %785 = vmatpush1.msra.mxu0 0.0
    %786 = vmatprep.subr.mxu0 0.0
    %787 = vmatpush1.msra.mxu0 0.0
    %788 = vmatprep.subr.mxu0 0.0
    %789 = vmatpush1.msra.mxu0 0.0
    %790 = vmatprep.subr.mxu0 0.0
    %791 = vmatpush1.msra.mxu0 0.0
    %792 = vmatprep.subr.mxu0 0.0
    %793 = vmatpush1.msra.mxu0 0.0
    %794 = vmatprep.subr.mxu0 0.0
    %795 = vmatpush1.msra.mxu0 0.0
    %796 = vmatprep.subr.mxu0 0.0
    %797 = vmatpush1.msra.mxu0 0.0
    %798 = vmatprep.subr.mxu0 0.0
    %799 = vmatpush1.msra.mxu0 0.0
    %800 = vmatprep.subr.mxu0 0.0
    %801 = vmatpush1.msra.mxu0 0.0
    %802 = vmatprep.subr.mxu0 0.0
    %803 = vmatpush1.msra.mxu0 0.0
    %804 = vmatprep.subr.mxu0 0.0
    %805 = vmatpush1.msra.mxu0 0.0
    %806 = vmatprep.subr.mxu0 0.0
    %807 = vmatpush1.msra.mxu0 0.0
    %808 = vmatprep.subr.mxu0 0.0
    %809 = vmatpush1.msra.mxu0 0.0
    %810 = vmatprep.subr.mxu0 0.0
    %811 = vmatpush1.msra.mxu0 0.0
    %812 = vmatprep.mubr.f32.mxu0 %v271
    %813 = vmatmul.mubr.f32.gmra.mrb[0].mxu0 %v183
    %v814 = vpop.f32.mrb[0].mxu0
    %v815 = vadd.f32 0.0, %v814
    %v816 = vpop.f32.mrb[0].mxu0
    %v817 = vadd.f32 0.0, %v816
    %818 = vmatprep.mubr.f32.mxu0 %v274
    %819 = vmatmul.mubr.f32.gmra.mrb[0].mxu0 %v185
    %v820 = vpop.f32.mrb[0].mxu0
    %v821 = vadd.f32 0.0, %v820
    %v822 = vpop.f32.mrb[0].mxu0
    %v823 = vadd.f32 0.0, %v822
    %824 = vmatprep.mubr.f32.mxu0 %v277
    %825 = vmatmul.mubr.f32.gmra.mrb[0].mxu0 %v187
    %v826 = vpop.f32.mrb[0].mxu0
    %v827 = vadd.f32 0.0, %v826
    %v828 = vpop.f32.mrb[0].mxu0
    %v829 = vadd.f32 0.0, %v828
    %830 = vmatprep.mubr.f32.mxu0 %v280
    %831 = vmatmul.mubr.f32.gmra.mrb[0].mxu0 %v189
    %v832 = vpop.f32.mrb[0].mxu0
    %v833 = vadd.f32 0.0, %v832
    %v834 = vpop.f32.mrb[0].mxu0
    %v835 = vadd.f32 0.0, %v834
    %836 = vmatprep.mubr.f32.mxu0 %v283
    %837 = vmatmul.mubr.f32.gmra.mrb[0].mxu0 %v191
    %v838 = vpop.f32.mrb[0].mxu0
    %v839 = vadd.f32 0.0, %v838
    %v840 = vpop.f32.mrb[0].mxu0
    %v841 = vadd.f32 0.0, %v840
    %842 = vmatprep.mubr.f32.mxu0 %v286
    %843 = vmatmul.mubr.f32.gmra.mrb[0].mxu0 %v193
    %v844 = vpop.f32.mrb[0].mxu0
    %v845 = vadd.f32 0.0, %v844
    %v846 = vpop.f32.mrb[0].mxu0
    %v847 = vadd.f32 0.0, %v846
    %848 = vmatprep.mubr.f32.mxu0 %v289
    %849 = vmatmul.mubr.f32.gmra.mrb[0].mxu0 %v195
    %v850 = vpop.f32.mrb[0].mxu0
    %v851 = vadd.f32 0.0, %v850
    %v852 = vpop.f32.mrb[0].mxu0
    %v853 = vadd.f32 0.0, %v852
    %854 = vmatprep.mubr.f32.mxu0 %v292
    %855 = vmatmul.mubr.f32.gmra.mrb[0].mxu0 %v197
    %v856 = vpop.f32.mrb[0].mxu0
    %v857 = vadd.f32 0.0, %v856
    %v858 = vpop.f32.mrb[0].mxu0
    %v859 = vadd.f32 0.0, %v858
    %860 = vmatprep.mubr.f32.mxu0 %v295
    %861 = vmatmul.mubr.f32.gmra.mrb[0].mxu0 %v199
    %v862 = vpop.f32.mrb[0].mxu0
    %v863 = vadd.f32 0.0, %v862
    %v864 = vpop.f32.mrb[0].mxu0
    %v865 = vadd.f32 0.0, %v864
    %866 = vdwg.mxu0
    %vm903 = vcmask 1046528
    %v904 = vrot.slane %v696, 1
    %v905 = vrot.slane %v702, 1
    %v906 = vsel %vm903, %v904, %v905
    %v907 = vrot.slane %v698, 1
    %v908 = vrot.slane %v704, 1
    %v909 = vsel %vm903, %v907, %v908
    %v910 = vrot.slane %v815, 1
    %v911 = vrot.slane %v821, 1
    %v912 = vsel %vm903, %v910, %v911
    %v913 = vrot.slane %v817, 1
    %v914 = vrot.slane %v823, 1
    %v915 = vsel %vm903, %v913, %v914
    %v916 = vrot.slane %v708, 1
    %v917 = vsel %vm903, %v905, %v916
    %v918 = vrot.slane %v710, 1
    %v919 = vsel %vm903, %v908, %v918
    %v920 = vrot.slane %v827, 1
    %v921 = vsel %vm903, %v911, %v920
    %v922 = vrot.slane %v829, 1
    %v923 = vsel %vm903, %v914, %v922
    %v924 = vrot.slane %v714, 1
    %v925 = vsel %vm903, %v916, %v924
    %v926 = vrot.slane %v716, 1
    %v927 = vsel %vm903, %v918, %v926
    %v928 = vrot.slane %v833, 1
    %v929 = vsel %vm903, %v920, %v928
    %v930 = vrot.slane %v835, 1
    %v931 = vsel %vm903, %v922, %v930
    %v932 = vrot.slane %v720, 1
    %v933 = vsel %vm903, %v924, %v932
    %v934 = vrot.slane %v722, 1
    %v935 = vsel %vm903, %v926, %v934
    %v936 = vrot.slane %v839, 1
    %v937 = vsel %vm903, %v928, %v936
    %v938 = vrot.slane %v841, 1
    %v939 = vsel %vm903, %v930, %v938
    %v940 = vrot.slane %v726, 1
    %v941 = vsel %vm903, %v932, %v940
    %v942 = vrot.slane %v728, 1
    %v943 = vsel %vm903, %v934, %v942
    %v944 = vrot.slane %v845, 1
    %v945 = vsel %vm903, %v936, %v944
    %v946 = vrot.slane %v847, 1
    %v947 = vsel %vm903, %v938, %v946
    %v948 = vrot.slane %v732, 1
    %v949 = vsel %vm903, %v940, %v948
    %v950 = vrot.slane %v734, 1
    %v951 = vsel %vm903, %v942, %v950
    %v952 = vrot.slane %v851, 1
    %v953 = vsel %vm903, %v944, %v952
    %v954 = vrot.slane %v853, 1
    %v955 = vsel %vm903, %v946, %v954
    %v956 = vrot.slane %v738, 1
    %v957 = vsel %vm903, %v948, %v956
    %v958 = vrot.slane %v740, 1
    %v959 = vsel %vm903, %v950, %v958
    %v960 = vrot.slane %v857, 1
    %v961 = vsel %vm903, %v952, %v960
    %v962 = vrot.slane %v859, 1
    %v963 = vsel %vm903, %v954, %v962
    %v964 = vrot.slane %v744, 1
    %v965 = vsel %vm903, %v956, %v964
    %v966 = vrot.slane %v746, 1
    %v967 = vsel %vm903, %v958, %v966
    %v968 = vrot.slane %v863, 1
    %v969 = vsel %vm903, %v960, %v968
    %v970 = vrot.slane %v865, 1
    %v971 = vsel %vm903, %v962, %v970
    %v1008 = vadd.f32 %v377, %v906
    %v1009 = vadd.f32 %v379, %v909
    %v1010 = vadd.f32 %v496, %v912
    %v1011 = vadd.f32 %v498, %v915
    %v1012 = vadd.f32 %v383, %v917
    %v1013 = vadd.f32 %v385, %v919
    %v1014 = vadd.f32 %v502, %v921
    %v1015 = vadd.f32 %v504, %v923
    %v1016 = vadd.f32 %v389, %v925
    %v1017 = vadd.f32 %v391, %v927
    %v1018 = vadd.f32 %v508, %v929
    %v1019 = vadd.f32 %v510, %v931
    %v1020 = vadd.f32 %v395, %v933
    %v1021 = vadd.f32 %v397, %v935
    %v1022 = vadd.f32 %v514, %v937
    %v1023 = vadd.f32 %v516, %v939
    %v1024 = vadd.f32 %v401, %v941
    %v1025 = vadd.f32 %v403, %v943
    %v1026 = vadd.f32 %v520, %v945
    %v1027 = vadd.f32 %v522, %v947
    %v1028 = vadd.f32 %v407, %v949
    %v1029 = vadd.f32 %v409, %v951
    %v1030 = vadd.f32 %v526, %v953
    %v1031 = vadd.f32 %v528, %v955
    %v1032 = vadd.f32 %v413, %v957
    %v1033 = vadd.f32 %v415, %v959
    %v1034 = vadd.f32 %v532, %v961
    %v1035 = vadd.f32 %v534, %v963
    %v1036 = vadd.f32 %v419, %v965
    %v1037 = vadd.f32 %v421, %v967
    %v1038 = vadd.f32 %v538, %v969
    %v1039 = vadd.f32 %v540, %v971
    %v1040 = vadd.f32 %v425, %v964
    %v1041 = vadd.f32 %v427, %v966
    %v1042 = vadd.f32 %v544, %v968
    %v1043 = vadd.f32 %v546, %v970
    %v1044 = vld [vmem:[#allocation2] sm:$0xf]
    %v1046 = vlaneseq
    %v1047 = vshrl.u32 %v1046, 7
    %v1048 = vsub.s32 0, %v1047
    %v1049 = vrot.slane %v1044, %v1048
    %v1050 = vlaneseq
    %v1051 = vshrl.u32 %v1050, 7
    %v1052 = vsub.s32 1, %v1051
    %v1053 = vrot.slane %v1044, %v1052
    %v1054 = vlaneseq
    %v1055 = vshrl.u32 %v1054, 7
    %v1056 = vsub.s32 2, %v1055
    %v1057 = vrot.slane %v1044, %v1056
    %v1058 = vlaneseq
    %v1059 = vshrl.u32 %v1058, 7
    %v1060 = vsub.s32 3, %v1059
    %v1061 = vrot.slane %v1044, %v1060
    %v1066 = vadd.f32 %v1008, %v1049
    %v1067 = vadd.f32 %v1009, %v1053
    %v1068 = vadd.f32 %v1010, %v1057
    %v1069 = vadd.f32 %v1011, %v1061
    %v1070 = vadd.f32 %v1012, %v1049
    %v1071 = vadd.f32 %v1013, %v1053
    %v1072 = vadd.f32 %v1014, %v1057
    %v1073 = vadd.f32 %v1015, %v1061
    %v1074 = vadd.f32 %v1016, %v1049
    %v1075 = vadd.f32 %v1017, %v1053
    %v1076 = vadd.f32 %v1018, %v1057
    %v1077 = vadd.f32 %v1019, %v1061
    %v1078 = vadd.f32 %v1020, %v1049
    %v1079 = vadd.f32 %v1021, %v1053
    %v1080 = vadd.f32 %v1022, %v1057
    %v1081 = vadd.f32 %v1023, %v1061
    %v1082 = vadd.f32 %v1024, %v1049
    %v1083 = vadd.f32 %v1025, %v1053
    %v1084 = vadd.f32 %v1026, %v1057
    %v1085 = vadd.f32 %v1027, %v1061
    %v1086 = vadd.f32 %v1028, %v1049
    %v1087 = vadd.f32 %v1029, %v1053
    %v1088 = vadd.f32 %v1030, %v1057
    %v1089 = vadd.f32 %v1031, %v1061
    %v1090 = vadd.f32 %v1032, %v1049
    %v1091 = vadd.f32 %v1033, %v1053
    %v1092 = vadd.f32 %v1034, %v1057
    %v1093 = vadd.f32 %v1035, %v1061
    %v1094 = vadd.f32 %v1036, %v1049
    %v1095 = vadd.f32 %v1037, %v1053
    %v1096 = vadd.f32 %v1038, %v1057
    %v1097 = vadd.f32 %v1039, %v1061
    %v1098 = vadd.f32 %v1040, %v1049
    %v1099 = vadd.f32 %v1041, %v1053
    %v1100 = vadd.f32 %v1042, %v1057
    %v1101 = vadd.f32 %v1043, %v1061
    %v1102 = vmax.f32 %v1066, 0.0
    %v1103 = vmax.f32 %v1067, 0.0
    %v1104 = vmax.f32 %v1068, 0.0
    %v1105 = vmax.f32 %v1069, 0.0
    %v1106 = vmax.f32 %v1070, 0.0
    %v1107 = vmax.f32 %v1071, 0.0
    %v1108 = vmax.f32 %v1072, 0.0
    %v1109 = vmax.f32 %v1073, 0.0
    %v1110 = vmax.f32 %v1074, 0.0
    %v1111 = vmax.f32 %v1075, 0.0
    %v1112 = vmax.f32 %v1076, 0.0
    %v1113 = vmax.f32 %v1077, 0.0
    %v1114 = vmax.f32 %v1078, 0.0
    %v1115 = vmax.f32 %v1079, 0.0
    %v1116 = vmax.f32 %v1080, 0.0
    %v1117 = vmax.f32 %v1081, 0.0
    %v1118 = vmax.f32 %v1082, 0.0
    %v1119 = vmax.f32 %v1083, 0.0
    %v1120 = vmax.f32 %v1084, 0.0
    %v1121 = vmax.f32 %v1085, 0.0
    %v1122 = vmax.f32 %v1086, 0.0
    %v1123 = vmax.f32 %v1087, 0.0
    %v1124 = vmax.f32 %v1088, 0.0
    %v1125 = vmax.f32 %v1089, 0.0
    %v1126 = vmax.f32 %v1090, 0.0
    %v1127 = vmax.f32 %v1091, 0.0
    %v1128 = vmax.f32 %v1092, 0.0
    %v1129 = vmax.f32 %v1093, 0.0
    %v1130 = vmax.f32 %v1094, 0.0
    %v1131 = vmax.f32 %v1095, 0.0
    %v1132 = vmax.f32 %v1096, 0.0
    %v1133 = vmax.f32 %v1097, 0.0
    %v1134 = vmax.f32 %v1098, 0.0
    %v1135 = vmax.f32 %v1099, 0.0
    %v1136 = vmax.f32 %v1100, 0.0
    %v1137 = vmax.f32 %v1101, 0.0
    %1174 = vrot.lane.b32.xlu0 %v1102, 127
    %v1175 = vpop.permute.xlu0 %1174
    %1176 = vrot.lane.b32.xlu0 %v1103, 127
    %v1177 = vpop.permute.xlu0 %1176
    %1178 = vrot.lane.b32.xlu0 %v1104, 127
    %v1179 = vpop.permute.xlu0 %1178
    %1180 = vrot.lane.b32.xlu0 %v1105, 127
    %v1181 = vpop.permute.xlu0 %1180
    %1182 = vrot.lane.b32.xlu0 %v1106, 127
    %v1183 = vpop.permute.xlu0 %1182
    %1184 = vrot.lane.b32.xlu0 %v1107, 127
    %v1185 = vpop.permute.xlu0 %1184
    %1186 = vrot.lane.b32.xlu0 %v1108, 127
    %v1187 = vpop.permute.xlu0 %1186
    %1188 = vrot.lane.b32.xlu0 %v1109, 127
    %v1189 = vpop.permute.xlu0 %1188
    %1190 = vrot.lane.b32.xlu0 %v1110, 127
    %v1191 = vpop.permute.xlu0 %1190
    %1192 = vrot.lane.b32.xlu0 %v1111, 127
    %v1193 = vpop.permute.xlu0 %1192
    %1194 = vrot.lane.b32.xlu0 %v1112, 127
    %v1195 = vpop.permute.xlu0 %1194
    %1196 = vrot.lane.b32.xlu0 %v1113, 127
    %v1197 = vpop.permute.xlu0 %1196
    %1198 = vrot.lane.b32.xlu0 %v1114, 127
    %v1199 = vpop.permute.xlu0 %1198
    %1200 = vrot.lane.b32.xlu0 %v1115, 127
    %v1201 = vpop.permute.xlu0 %1200
    %1202 = vrot.lane.b32.xlu0 %v1116, 127
    %v1203 = vpop.permute.xlu0 %1202
    %1204 = vrot.lane.b32.xlu0 %v1117, 127
    %v1205 = vpop.permute.xlu0 %1204
    %1206 = vrot.lane.b32.xlu0 %v1118, 127
    %v1207 = vpop.permute.xlu0 %1206
    %1208 = vrot.lane.b32.xlu0 %v1119, 127
    %v1209 = vpop.permute.xlu0 %1208
    %1210 = vrot.lane.b32.xlu0 %v1120, 127
    %v1211 = vpop.permute.xlu0 %1210
    %1212 = vrot.lane.b32.xlu0 %v1121, 127
    %v1213 = vpop.permute.xlu0 %1212
    %1214 = vrot.lane.b32.xlu0 %v1122, 127
    %v1215 = vpop.permute.xlu0 %1214
    %1216 = vrot.lane.b32.xlu0 %v1123, 127
    %v1217 = vpop.permute.xlu0 %1216
    %1218 = vrot.lane.b32.xlu0 %v1124, 127
    %v1219 = vpop.permute.xlu0 %1218
    %1220 = vrot.lane.b32.xlu0 %v1125, 127
    %v1221 = vpop.permute.xlu0 %1220
    %1222 = vrot.lane.b32.xlu0 %v1126, 127
    %v1223 = vpop.permute.xlu0 %1222
    %1224 = vrot.lane.b32.xlu0 %v1127, 127
    %v1225 = vpop.permute.xlu0 %1224
    %1226 = vrot.lane.b32.xlu0 %v1128, 127
    %v1227 = vpop.permute.xlu0 %1226
    %1228 = vrot.lane.b32.xlu0 %v1129, 127
    %v1229 = vpop.permute.xlu0 %1228
    %1230 = vrot.lane.b32.xlu0 %v1130, 127
    %v1231 = vpop.permute.xlu0 %1230
    %1232 = vrot.lane.b32.xlu0 %v1131, 127
    %v1233 = vpop.permute.xlu0 %1232
    %1234 = vrot.lane.b32.xlu0 %v1132, 127
    %v1235 = vpop.permute.xlu0 %1234
    %1236 = vrot.lane.b32.xlu0 %v1133, 127
    %v1237 = vpop.permute.xlu0 %1236
    %1238 = vrot.lane.b32.xlu0 %v1134, 127
    %v1239 = vpop.permute.xlu0 %1238
    %1240 = vrot.lane.b32.xlu0 %v1135, 127
    %v1241 = vpop.permute.xlu0 %1240
    %1242 = vrot.lane.b32.xlu0 %v1136, 127
    %v1243 = vpop.permute.xlu0 %1242
    %1244 = vrot.lane.b32.xlu0 %v1137, 127
    %v1245 = vpop.permute.xlu0 %1244
    %vm1246 = vcmask 1039360
    %v1247 = vsel %vm1246, %v1175, %v1177
    %v1248 = vsel %vm1246, %v1177, %v1179
    %v1249 = vsel %vm1246, %v1179, %v1181
    %v1250 = vsel %vm1246, %v1183, %v1185
    %v1251 = vsel %vm1246, %v1185, %v1187
    %v1252 = vsel %vm1246, %v1187, %v1189
    %v1253 = vsel %vm1246, %v1191, %v1193
    %v1254 = vsel %vm1246, %v1193, %v1195
    %v1255 = vsel %vm1246, %v1195, %v1197
    %v1256 = vsel %vm1246, %v1199, %v1201
    %v1257 = vsel %vm1246, %v1201, %v1203
    %v1258 = vsel %vm1246, %v1203, %v1205
    %v1259 = vsel %vm1246, %v1207, %v1209
    %v1260 = vsel %vm1246, %v1209, %v1211
    %v1261 = vsel %vm1246, %v1211, %v1213
    %v1262 = vsel %vm1246, %v1215, %v1217
    %v1263 = vsel %vm1246, %v1217, %v1219
    %v1264 = vsel %vm1246, %v1219, %v1221
    %v1265 = vsel %vm1246, %v1223, %v1225
    %v1266 = vsel %vm1246, %v1225, %v1227
    %v1267 = vsel %vm1246, %v1227, %v1229
    %v1268 = vsel %vm1246, %v1231, %v1233
    %v1269 = vsel %vm1246, %v1233, %v1235
    %v1270 = vsel %vm1246, %v1235, %v1237
    %v1271 = vsel %vm1246, %v1239, %v1241
    %v1272 = vsel %vm1246, %v1241, %v1243
    %v1273 = vsel %vm1246, %v1243, %v1245
    %v1310 = vmax.f32 %v1102, %v1247
    %v1311 = vmax.f32 %v1103, %v1248
    %v1312 = vmax.f32 %v1104, %v1249
    %v1313 = vmax.f32 %v1105, %v1181
    %v1314 = vmax.f32 %v1106, %v1250
    %v1315 = vmax.f32 %v1107, %v1251
    %v1316 = vmax.f32 %v1108, %v1252
    %v1317 = vmax.f32 %v1109, %v1189
    %v1318 = vmax.f32 %v1110, %v1253
    %v1319 = vmax.f32 %v1111, %v1254
    %v1320 = vmax.f32 %v1112, %v1255
    %v1321 = vmax.f32 %v1113, %v1197
    %v1322 = vmax.f32 %v1114, %v1256
    %v1323 = vmax.f32 %v1115, %v1257
    %v1324 = vmax.f32 %v1116, %v1258
    %v1325 = vmax.f32 %v1117, %v1205
    %v1326 = vmax.f32 %v1118, %v1259
    %v1327 = vmax.f32 %v1119, %v1260
    %v1328 = vmax.f32 %v1120, %v1261
    %v1329 = vmax.f32 %v1121, %v1213
    %v1330 = vmax.f32 %v1122, %v1262
    %v1331 = vmax.f32 %v1123, %v1263
    %v1332 = vmax.f32 %v1124, %v1264
    %v1333 = vmax.f32 %v1125, %v1221
    %v1334 = vmax.f32 %v1126, %v1265
    %v1335 = vmax.f32 %v1127, %v1266
    %v1336 = vmax.f32 %v1128, %v1267
    %v1337 = vmax.f32 %v1129, %v1229
    %v1338 = vmax.f32 %v1130, %v1268
    %v1339 = vmax.f32 %v1131, %v1269
    %v1340 = vmax.f32 %v1132, %v1270
    %v1341 = vmax.f32 %v1133, %v1237
    %v1342 = vmax.f32 %v1134, %v1271
    %v1343 = vmax.f32 %v1135, %v1272
    %v1344 = vmax.f32 %v1136, %v1273
    %v1345 = vmax.f32 %v1137, %v1245
    %1382 = vrot.lane.b32.xlu0 %v1310, 126
    %v1383 = vpop.permute.xlu0 %1382
    %1384 = vrot.lane.b32.xlu0 %v1311, 126
    %v1385 = vpop.permute.xlu0 %1384
    %1386 = vrot.lane.b32.xlu0 %v1312, 126
    %v1387 = vpop.permute.xlu0 %1386
    %1388 = vrot.lane.b32.xlu0 %v1313, 126
    %v1389 = vpop.permute.xlu0 %1388
    %1390 = vrot.lane.b32.xlu0 %v1314, 126
    %v1391 = vpop.permute.xlu0 %1390
    %1392 = vrot.lane.b32.xlu0 %v1315, 126
    %v1393 = vpop.permute.xlu0 %1392
    %1394 = vrot.lane.b32.xlu0 %v1316, 126
    %v1395 = vpop.permute.xlu0 %1394
    %1396 = vrot.lane.b32.xlu0 %v1317, 126
    %v1397 = vpop.permute.xlu0 %1396
    %1398 = vrot.lane.b32.xlu0 %v1318, 126
    %v1399 = vpop.permute.xlu0 %1398
    %1400 = vrot.lane.b32.xlu0 %v1319, 126
    %v1401 = vpop.permute.xlu0 %1400
    %1402 = vrot.lane.b32.xlu0 %v1320, 126
    %v1403 = vpop.permute.xlu0 %1402
    %1404 = vrot.lane.b32.xlu0 %v1321, 126
    %v1405 = vpop.permute.xlu0 %1404
    %1406 = vrot.lane.b32.xlu0 %v1322, 126
    %v1407 = vpop.permute.xlu0 %1406
    %1408 = vrot.lane.b32.xlu0 %v1323, 126
    %v1409 = vpop.permute.xlu0 %1408
    %1410 = vrot.lane.b32.xlu0 %v1324, 126
    %v1411 = vpop.permute.xlu0 %1410
    %1412 = vrot.lane.b32.xlu0 %v1325, 126
    %v1413 = vpop.permute.xlu0 %1412
    %1414 = vrot.lane.b32.xlu0 %v1326, 126
    %v1415 = vpop.permute.xlu0 %1414
    %1416 = vrot.lane.b32.xlu0 %v1327, 126
    %v1417 = vpop.permute.xlu0 %1416
    %1418 = vrot.lane.b32.xlu0 %v1328, 126
    %v1419 = vpop.permute.xlu0 %1418
    %1420 = vrot.lane.b32.xlu0 %v1329, 126
    %v1421 = vpop.permute.xlu0 %1420
    %1422 = vrot.lane.b32.xlu0 %v1330, 126
    %v1423 = vpop.permute.xlu0 %1422
    %1424 = vrot.lane.b32.xlu0 %v1331, 126
    %v1425 = vpop.permute.xlu0 %1424
    %1426 = vrot.lane.b32.xlu0 %v1332, 126
    %v1427 = vpop.permute.xlu0 %1426
    %1428 = vrot.lane.b32.xlu0 %v1333, 126
    %v1429 = vpop.permute.xlu0 %1428
    %1430 = vrot.lane.b32.xlu0 %v1334, 126
    %v1431 = vpop.permute.xlu0 %1430
    %1432 = vrot.lane.b32.xlu0 %v1335, 126
    %v1433 = vpop.permute.xlu0 %1432
    %1434 = vrot.lane.b32.xlu0 %v1336, 126
    %v1435 = vpop.permute.xlu0 %1434
    %1436 = vrot.lane.b32.xlu0 %v1337, 126
    %v1437 = vpop.permute.xlu0 %1436
    %1438 = vrot.lane.b32.xlu0 %v1338, 126
    %v1439 = vpop.permute.xlu0 %1438
    %1440 = vrot.lane.b32.xlu0 %v1339, 126
    %v1441 = vpop.permute.xlu0 %1440
    %1442 = vrot.lane.b32.xlu0 %v1340, 126
    %v1443 = vpop.permute.xlu0 %1442
    %1444 = vrot.lane.b32.xlu0 %v1341, 126
    %v1445 = vpop.permute.xlu0 %1444
    %1446 = vrot.lane.b32.xlu0 %v1342, 126
    %v1447 = vpop.permute.xlu0 %1446
    %1448 = vrot.lane.b32.xlu0 %v1343, 126
    %v1449 = vpop.permute.xlu0 %1448
    %1450 = vrot.lane.b32.xlu0 %v1344, 126
    %v1451 = vpop.permute.xlu0 %1450
    %1452 = vrot.lane.b32.xlu0 %v1345, 126
    %v1453 = vpop.permute.xlu0 %1452
    %vm1454 = vcmask 1031168
    %v1455 = vsel %vm1454, %v1383, %v1385
    %v1456 = vsel %vm1454, %v1385, %v1387
    %v1457 = vsel %vm1454, %v1387, %v1389
    %v1458 = vsel %vm1454, %v1391, %v1393
    %v1459 = vsel %vm1454, %v1393, %v1395
    %v1460 = vsel %vm1454, %v1395, %v1397
    %v1461 = vsel %vm1454, %v1399, %v1401
    %v1462 = vsel %vm1454, %v1401, %v1403
    %v1463 = vsel %vm1454, %v1403, %v1405
    %v1464 = vsel %vm1454, %v1407, %v1409
    %v1465 = vsel %vm1454, %v1409, %v1411
    %v1466 = vsel %vm1454, %v1411, %v1413
    %v1467 = vsel %vm1454, %v1415, %v1417
    %v1468 = vsel %vm1454, %v1417, %v1419
    %v1469 = vsel %vm1454, %v1419, %v1421
    %v1470 = vsel %vm1454, %v1423, %v1425
    %v1471 = vsel %vm1454, %v1425, %v1427
    %v1472 = vsel %vm1454, %v1427, %v1429
    %v1473 = vsel %vm1454, %v1431, %v1433
    %v1474 = vsel %vm1454, %v1433, %v1435
    %v1475 = vsel %vm1454, %v1435, %v1437
    %v1476 = vsel %vm1454, %v1439, %v1441
    %v1477 = vsel %vm1454, %v1441, %v1443
    %v1478 = vsel %vm1454, %v1443, %v1445
    %v1479 = vsel %vm1454, %v1447, %v1449
    %v1480 = vsel %vm1454, %v1449, %v1451
    %v1481 = vsel %vm1454, %v1451, %v1453
    %v1518 = vmax.f32 %v1310, %v1455
    %v1519 = vmax.f32 %v1311, %v1456
    %v1520 = vmax.f32 %v1312, %v1457
    %v1521 = vmax.f32 %v1313, %v1389
    %v1522 = vmax.f32 %v1314, %v1458
    %v1523 = vmax.f32 %v1315, %v1459
    %v1524 = vmax.f32 %v1316, %v1460
    %v1525 = vmax.f32 %v1317, %v1397
    %v1526 = vmax.f32 %v1318, %v1461
    %v1527 = vmax.f32 %v1319, %v1462
    %v1528 = vmax.f32 %v1320, %v1463
    %v1529 = vmax.f32 %v1321, %v1405
    %v1530 = vmax.f32 %v1322, %v1464
    %v1531 = vmax.f32 %v1323, %v1465
    %v1532 = vmax.f32 %v1324, %v1466
    %v1533 = vmax.f32 %v1325, %v1413
    %v1534 = vmax.f32 %v1326, %v1467
    %v1535 = vmax.f32 %v1327, %v1468
    %v1536 = vmax.f32 %v1328, %v1469
    %v1537 = vmax.f32 %v1329, %v1421
    %v1538 = vmax.f32 %v1330, %v1470
    %v1539 = vmax.f32 %v1331, %v1471
    %v1540 = vmax.f32 %v1332, %v1472
    %v1541 = vmax.f32 %v1333, %v1429
    %v1542 = vmax.f32 %v1334, %v1473
    %v1543 = vmax.f32 %v1335, %v1474
    %v1544 = vmax.f32 %v1336, %v1475
    %v1545 = vmax.f32 %v1337, %v1437
    %v1546 = vmax.f32 %v1338, %v1476
    %v1547 = vmax.f32 %v1339, %v1477
    %v1548 = vmax.f32 %v1340, %v1478
    %v1549 = vmax.f32 %v1341, %v1445
    %v1550 = vmax.f32 %v1342, %v1479
    %v1551 = vmax.f32 %v1343, %v1480
    %v1552 = vmax.f32 %v1344, %v1481
    %v1553 = vmax.f32 %v1345, %v1453
    %v1590 = vrot.slane %v1518, 1
    %v1591 = vrot.slane %v1522, 1
    %v1592 = vsel %vm903, %v1590, %v1591
    %v1593 = vrot.slane %v1519, 1
    %v1594 = vrot.slane %v1523, 1
    %v1595 = vsel %vm903, %v1593, %v1594
    %v1596 = vrot.slane %v1520, 1
    %v1597 = vrot.slane %v1524, 1
    %v1598 = vsel %vm903, %v1596, %v1597
    %v1599 = vrot.slane %v1521, 1
    %v1600 = vrot.slane %v1525, 1
    %v1601 = vsel %vm903, %v1599, %v1600
    %v1602 = vrot.slane %v1526, 1
    %v1603 = vsel %vm903, %v1591, %v1602
    %v1604 = vrot.slane %v1527, 1
    %v1605 = vsel %vm903, %v1594, %v1604
    %v1606 = vrot.slane %v1528, 1
    %v1607 = vsel %vm903, %v1597, %v1606
    %v1608 = vrot.slane %v1529, 1
    %v1609 = vsel %vm903, %v1600, %v1608
    %v1610 = vrot.slane %v1530, 1
    %v1611 = vsel %vm903, %v1602, %v1610
    %v1612 = vrot.slane %v1531, 1
    %v1613 = vsel %vm903, %v1604, %v1612
    %v1614 = vrot.slane %v1532, 1
    %v1615 = vsel %vm903, %v1606, %v1614
    %v1616 = vrot.slane %v1533, 1
    %v1617 = vsel %vm903, %v1608, %v1616
    %v1618 = vrot.slane %v1534, 1
    %v1619 = vsel %vm903, %v1610, %v1618
    %v1620 = vrot.slane %v1535, 1
    %v1621 = vsel %vm903, %v1612, %v1620
    %v1622 = vrot.slane %v1536, 1
    %v1623 = vsel %vm903, %v1614, %v1622
    %v1624 = vrot.slane %v1537, 1
    %v1625 = vsel %vm903, %v1616, %v1624
    %v1626 = vrot.slane %v1538, 1
    %v1627 = vsel %vm903, %v1618, %v1626
    %v1628 = vrot.slane %v1539, 1
    %v1629 = vsel %vm903, %v1620, %v1628
    %v1630 = vrot.slane %v1540, 1
    %v1631 = vsel %vm903, %v1622, %v1630
    %v1632 = vrot.slane %v1541, 1
    %v1633 = vsel %vm903, %v1624, %v1632
    %v1634 = vrot.slane %v1542, 1
    %v1635 = vsel %vm903, %v1626, %v1634
    %v1636 = vrot.slane %v1543, 1
    %v1637 = vsel %vm903, %v1628, %v1636
    %v1638 = vrot.slane %v1544, 1
    %v1639 = vsel %vm903, %v1630, %v1638
    %v1640 = vrot.slane %v1545, 1
    %v1641 = vsel %vm903, %v1632, %v1640
    %v1642 = vrot.slane %v1546, 1
    %v1643 = vsel %vm903, %v1634, %v1642
    %v1644 = vrot.slane %v1547, 1
    %v1645 = vsel %vm903, %v1636, %v1644
    %v1646 = vrot.slane %v1548, 1
    %v1647 = vsel %vm903, %v1638, %v1646
    %v1648 = vrot.slane %v1549, 1
    %v1649 = vsel %vm903, %v1640, %v1648
    %v1650 = vrot.slane %v1550, 1
    %v1651 = vsel %vm903, %v1642, %v1650
    %v1652 = vrot.slane %v1551, 1
    %v1653 = vsel %vm903, %v1644, %v1652
    %v1654 = vrot.slane %v1552, 1
    %v1655 = vsel %vm903, %v1646, %v1654
    %v1656 = vrot.slane %v1553, 1
    %v1657 = vsel %vm903, %v1648, %v1656
    %v1694 = vmax.f32 %v1518, %v1592
    %v1695 = vmax.f32 %v1519, %v1595
    %v1696 = vmax.f32 %v1520, %v1598
    %v1697 = vmax.f32 %v1521, %v1601
    %v1698 = vmax.f32 %v1522, %v1603
    %v1699 = vmax.f32 %v1523, %v1605
    %v1700 = vmax.f32 %v1524, %v1607
    %v1701 = vmax.f32 %v1525, %v1609
    %v1702 = vmax.f32 %v1526, %v1611
    %v1703 = vmax.f32 %v1527, %v1613
    %v1704 = vmax.f32 %v1528, %v1615
    %v1705 = vmax.f32 %v1529, %v1617
    %v1706 = vmax.f32 %v1530, %v1619
    %v1707 = vmax.f32 %v1531, %v1621
    %v1708 = vmax.f32 %v1532, %v1623
    %v1709 = vmax.f32 %v1533, %v1625
    %v1710 = vmax.f32 %v1534, %v1627
    %v1711 = vmax.f32 %v1535, %v1629
    %v1712 = vmax.f32 %v1536, %v1631
    %v1713 = vmax.f32 %v1537, %v1633
    %v1714 = vmax.f32 %v1538, %v1635
    %v1715 = vmax.f32 %v1539, %v1637
    %v1716 = vmax.f32 %v1540, %v1639
    %v1717 = vmax.f32 %v1541, %v1641
    %v1718 = vmax.f32 %v1542, %v1643
    %v1719 = vmax.f32 %v1543, %v1645
    %v1720 = vmax.f32 %v1544, %v1647
    %v1721 = vmax.f32 %v1545, %v1649
    %v1722 = vmax.f32 %v1546, %v1651
    %v1723 = vmax.f32 %v1547, %v1653
    %v1724 = vmax.f32 %v1548, %v1655
    %v1725 = vmax.f32 %v1549, %v1657
    %v1726 = vmax.f32 %v1550, %v1650
    %v1727 = vmax.f32 %v1551, %v1652
    %v1728 = vmax.f32 %v1552, %v1654
    %v1729 = vmax.f32 %v1553, %v1656
    %v1730 = vld [vmem:[#allocation5] sm:$0xff]
    %v1731 = vld [vmem:[#allocation5 + $0x8] sm:$0xff]
    %v1732 = vld [vmem:[#allocation5 + $0x10] sm:$0xff]
    %v1733 = vld [vmem:[#allocation5 + $0x18] sm:$0xff]
    %vm1734 = vcmask 539648
    %v1736 = vsel %vm1734, %v1730, 0
    %v1739 = vsel %vm1734, %v1731, 0
    %v1742 = vsel %vm1734, %v1732, 0
    %v1745 = vsel %vm1734, %v1733, 0
    %v1748 = vsel %vm297, %v1726, 0
    %v1751 = vsel %vm297, %v1727, 0
    %v1754 = vsel %vm297, %v1728, 0
    %v1757 = vsel %vm297, %v1729, 0
    %1759 = vmatprep.subr.mxu0 %v1695
    %1760 = vmatpush1.msra.mxu0 %v1694
    %1761 = vmatprep.subr.mxu0 %v1699
    %1762 = vmatpush1.msra.mxu0 %v1698
    %1763 = vmatprep.subr.mxu0 %v1703
    %1764 = vmatpush1.msra.mxu0 %v1702
    %1765 = vmatprep.subr.mxu0 %v1707
    %1766 = vmatpush1.msra.mxu0 %v1706
    %1767 = vmatprep.subr.mxu0 %v1711
    %1768 = vmatpush1.msra.mxu0 %v1710
    %1769 = vmatprep.subr.mxu0 %v1715
    %1770 = vmatpush1.msra.mxu0 %v1714
    %1771 = vmatprep.subr.mxu0 %v1719
    %1772 = vmatpush1.msra.mxu0 %v1718
    %1773 = vmatprep.subr.mxu0 %v1723
    %1774 = vmatpush1.msra.mxu0 %v1722
    %1775 = vmatprep.subr.mxu0 %v1751
    %1776 = vmatpush1.msra.mxu0 %v1748
    %1777 = vmatprep.subr.mxu0 0.0
    %1778 = vmatpush1.msra.mxu0 0.0
    %1779 = vmatprep.subr.mxu0 0.0
    %1780 = vmatpush1.msra.mxu0 0.0
    %1781 = vmatprep.subr.mxu0 0.0
    %1782 = vmatpush1.msra.mxu0 0.0
    %1783 = vmatprep.subr.mxu0 0.0
    %1784 = vmatpush1.msra.mxu0 0.0
    %1785 = vmatprep.subr.mxu0 0.0
    %1786 = vmatpush1.msra.mxu0 0.0
    %1787 = vmatprep.subr.mxu0 0.0
    %1788 = vmatpush1.msra.mxu0 0.0
    %1789 = vmatprep.subr.mxu0 0.0
    %1790 = vmatpush1.msra.mxu0 0.0
    %1791 = vmatprep.subr.mxu0 0.0
    %1792 = vmatpush1.msra.mxu0 0.0
    %1793 = vmatprep.subr.mxu0 0.0
    %1794 = vmatpush1.msra.mxu0 0.0
    %1795 = vmatprep.subr.mxu0 0.0
    %1796 = vmatpush1.msra.mxu0 0.0
    %1797 = vmatprep.subr.mxu0 0.0
    %1798 = vmatpush1.msra.mxu0 0.0
    %1799 = vmatprep.subr.mxu0 0.0
    %1800 = vmatpush1.msra.mxu0 0.0
    %1801 = vmatprep.subr.mxu0 0.0
    %1802 = vmatpush1.msra.mxu0 0.0
    %1803 = vmatprep.subr.mxu0 0.0
    %1804 = vmatpush1.msra.mxu0 0.0
    %1805 = vmatprep.subr.mxu0 0.0
    %1806 = vmatpush1.msra.mxu0 0.0
    %1807 = vmatprep.subr.mxu0 0.0
    %1808 = vmatpush1.msra.mxu0 0.0
    %1809 = vmatprep.subr.mxu0 0.0
    %1810 = vmatpush1.msra.mxu0 0.0
    %1811 = vmatprep.subr.mxu0 0.0
    %1812 = vmatpush1.msra.mxu0 0.0
    %1813 = vmatprep.subr.mxu0 0.0
    %1814 = vmatpush1.msra.mxu0 0.0
    %1815 = vmatprep.subr.mxu0 0.0
    %1816 = vmatpush1.msra.mxu0 0.0
    %1817 = vmatprep.subr.mxu0 0.0
    %1818 = vmatpush1.msra.mxu0 0.0
    %1819 = vmatprep.subr.mxu0 0.0
    %1820 = vmatpush1.msra.mxu0 0.0
    %1821 = vmatprep.subr.mxu0 0.0
    %1822 = vmatpush1.msra.mxu0 0.0
    %1823 = vmatprep.mubr.f32.mxu0 0.0
    %1824 = vmatmul.mubr.f32.gmra.mrb[0].mxu0 %v1736
    %v1825 = vpop.f32.mrb[0].mxu0
    %v1826 = vadd.f32 0.0, %v1825
    %v1827 = vpop.f32.mrb[0].mxu0
    %v1828 = vadd.f32 0.0, %v1827
    %1829 = vmatprep.mubr.f32.mxu0 0.0
    %1830 = vmatmul.mubr.f32.gmra.mrb[0].mxu0 %v1739
    %v1831 = vpop.f32.mrb[0].mxu0
    %v1832 = vadd.f32 0.0, %v1831
    %v1833 = vpop.f32.mrb[0].mxu0
    %v1834 = vadd.f32 0.0, %v1833
    %1835 = vmatprep.mubr.f32.mxu0 0.0
    %1836 = vmatmul.mubr.f32.gmra.mrb[0].mxu0 %v1742
    %v1837 = vpop.f32.mrb[0].mxu0
    %v1838 = vadd.f32 0.0, %v1837
    %v1839 = vpop.f32.mrb[0].mxu0
    %v1840 = vadd.f32 0.0, %v1839
    %1841 = vmatprep.mubr.f32.mxu0 0.0
    %1842 = vmatmul.mubr.f32.gmra.mrb[0].mxu0 %v1745
    %v1843 = vpop.f32.mrb[0].mxu0
    %v1844 = vadd.f32 0.0, %v1843
    %v1845 = vpop.f32.mrb[0].mxu0
    %v1846 = vadd.f32 0.0, %v1845
    %1847 = vdwg.mxu0
    %1848 = vmatprep.subr.mxu0 %v1697
    %1849 = vmatpush1.msra.mxu0 %v1696
    %1850 = vmatprep.subr.mxu0 %v1701
    %1851 = vmatpush1.msra.mxu0 %v1700
    %1852 = vmatprep.subr.mxu0 %v1705
    %1853 = vmatpush1.msra.mxu0 %v1704
    %1854 = vmatprep.subr.mxu0 %v1709
    %1855 = vmatpush1.msra.mxu0 %v1708
    %1856 = vmatprep.subr.mxu0 %v1713
    %1857 = vmatpush1.msra.mxu0 %v1712
    %1858 = vmatprep.subr.mxu0 %v1717
    %1859 = vmatpush1.msra.mxu0 %v1716
    %1860 = vmatprep.subr.mxu0 %v1721
    %1861 = vmatpush1.msra.mxu0 %v1720
    %1862 = vmatprep.subr.mxu0 %v1725
    %1863 = vmatpush1.msra.mxu0 %v1724
    %1864 = vmatprep.subr.mxu0 %v1757
    %1865 = vmatpush1.msra.mxu0 %v1754
    %1866 = vmatprep.subr.mxu0 0.0
    %1867 = vmatpush1.msra.mxu0 0.0
    %1868 = vmatprep.subr.mxu0 0.0
    %1869 = vmatpush1.msra.mxu0 0.0
    %1870 = vmatprep.subr.mxu0 0.0
    %1871 = vmatpush1.msra.mxu0 0.0
    %1872 = vmatprep.subr.mxu0 0.0
    %1873 = vmatpush1.msra.mxu0 0.0
    %1874 = vmatprep.subr.mxu0 0.0
    %1875 = vmatpush1.msra.mxu0 0.0
    %1876 = vmatprep.subr.mxu0 0.0
    %1877 = vmatpush1.msra.mxu0 0.0
    %1878 = vmatprep.subr.mxu0 0.0
    %1879 = vmatpush1.msra.mxu0 0.0
    %1880 = vmatprep.subr.mxu0 0.0
    %1881 = vmatpush1.msra.mxu0 0.0
    %1882 = vmatprep.subr.mxu0 0.0
    %1883 = vmatpush1.msra.mxu0 0.0
    %1884 = vmatprep.subr.mxu0 0.0
    %1885 = vmatpush1.msra.mxu0 0.0
    %1886 = vmatprep.subr.mxu0 0.0
    %1887 = vmatpush1.msra.mxu0 0.0
    %1888 = vmatprep.subr.mxu0 0.0
    %1889 = vmatpush1.msra.mxu0 0.0
    %1890 = vmatprep.subr.mxu0 0.0
    %1891 = vmatpush1.msra.mxu0 0.0
    %1892 = vmatprep.subr.mxu0 0.0
    %1893 = vmatpush1.msra.mxu0 0.0
    %1894 = vmatprep.subr.mxu0 0.0
    %1895 = vmatpush1.msra.mxu0 0.0
    %1896 = vmatprep.subr.mxu0 0.0
    %1897 = vmatpush1.msra.mxu0 0.0
    %1898 = vmatprep.subr.mxu0 0.0
    %1899 = vmatpush1.msra.mxu0 0.0
    %1900 = vmatprep.subr.mxu0 0.0
    %1901 = vmatpush1.msra.mxu0 0.0
    %1902 = vmatprep.subr.mxu0 0.0
    %1903 = vmatpush1.msra.mxu0 0.0
    %1904 = vmatprep.subr.mxu0 0.0
    %1905 = vmatpush1.msra.mxu0 0.0
    %1906 = vmatprep.subr.mxu0 0.0
    %1907 = vmatpush1.msra.mxu0 0.0
    %1908 = vmatprep.subr.mxu0 0.0
    %1909 = vmatpush1.msra.mxu0 0.0
    %1910 = vmatprep.subr.mxu0 0.0
    %1911 = vmatpush1.msra.mxu0 0.0
    %1912 = vmatprep.mubr.f32.mxu0 0.0
    %1913 = vmatmul.mubr.f32.gmra.mrb[0].mxu0 %v1736
    %v1914 = vpop.f32.mrb[0].mxu0
    %v1915 = vadd.f32 0.0, %v1914
    %v1916 = vpop.f32.mrb[0].mxu0
    %v1917 = vadd.f32 0.0, %v1916
    %1918 = vmatprep.mubr.f32.mxu0 0.0
    %1919 = vmatmul.mubr.f32.gmra.mrb[0].mxu0 %v1739
    %v1920 = vpop.f32.mrb[0].mxu0
    %v1921 = vadd.f32 0.0, %v1920
    %v1922 = vpop.f32.mrb[0].mxu0
    %v1923 = vadd.f32 0.0, %v1922
    %1924 = vmatprep.mubr.f32.mxu0 0.0
    %1925 = vmatmul.mubr.f32.gmra.mrb[0].mxu0 %v1742
    %v1926 = vpop.f32.mrb[0].mxu0
    %v1927 = vadd.f32 0.0, %v1926
    %v1928 = vpop.f32.mrb[0].mxu0
    %v1929 = vadd.f32 0.0, %v1928
    %1930 = vmatprep.mubr.f32.mxu0 0.0
    %1931 = vmatmul.mubr.f32.gmra.mrb[0].mxu0 %v1745
    %v1932 = vpop.f32.mrb[0].mxu0
    %v1933 = vadd.f32 0.0, %v1932
    %v1934 = vpop.f32.mrb[0].mxu0
    %v1935 = vadd.f32 0.0, %v1934
    %1936 = vdwg.mxu0
    %v1937 = vld [vmem:[%s4] sm:$0xff]
    %v1938 = vld [vmem:[%s4 + $0x8] sm:$0xff]
    %v1939 = vld [vmem:[%s4 + $0x10] sm:$0xff]
    %v1940 = vld [vmem:[%s4 + $0x18] sm:$0xff]
    %v1941 = vld [vmem:[%s4 + $0x20] sm:$0xff]
    %v1942 = vld [vmem:[%s4 + $0x28] sm:$0xff]
    %v1943 = vld [vmem:[%s4 + $0x30] sm:$0xff]
    %v1944 = vld [vmem:[%s4 + $0x38] sm:$0xff]
    %v1945 = vld [vmem:[%s4 + $0x40] sm:$0xff]
    %v1946 = vld [vmem:[%s4 + $0x48] sm:$0xff]
    %v1947 = vld [vmem:[%s4 + $0x50] sm:$0xff]
    %v1948 = vld [vmem:[%s4 + $0x58] sm:$0xff]
    %v1949 = vld [vmem:[%s4 + $0x60] sm:$0xff]
    %v1950 = vld [vmem:[%s4 + $0x68] sm:$0xff]
    %v1951 = vld [vmem:[%s4 + $0x70] sm:$0xff]
    %v1952 = vld [vmem:[%s4 + $0x78] sm:$0xff]
    %v1953 = vld [vmem:[%s4 + $0x80] sm:$0xff]
    %v1954 = vld [vmem:[%s4 + $0x88] sm:$0xff]
    %v1955 = vld [vmem:[%s4 + $0x90] sm:$0xff]
    %v1956 = vld [vmem:[%s4 + $0x98] sm:$0xff]
    %v1957 = vld [vmem:[%s4 + $0xa0] sm:$0xff]
    %v1958 = vld [vmem:[%s4 + $0xa8] sm:$0xff]
    %v1959 = vld [vmem:[%s4 + $0xb0] sm:$0xff]
    %v1960 = vld [vmem:[%s4 + $0xb8] sm:$0xff]
    %v1961 = vld [vmem:[%s4 + $0xc0] sm:$0xff]
    %v1962 = vld [vmem:[%s4 + $0xc8] sm:$0xff]
    %v1963 = vld [vmem:[%s4 + $0xd0] sm:$0xff]
    %v1964 = vld [vmem:[%s4 + $0xd8] sm:$0xff]
    %v1965 = vld [vmem:[%s4 + $0xe0] sm:$0xff]
    %v1966 = vld [vmem:[%s4 + $0xe8] sm:$0xff]
    %v1967 = vld [vmem:[%s4 + $0xf0] sm:$0xff]
    %v1968 = vld [vmem:[%s4 + $0xf8] sm:$0xff]
    %v1969 = vld [vmem:[%s4 + $0x100] sm:$0xff]
    %v1970 = vld [vmem:[%s4 + $0x108] sm:$0xff]
    %v1971 = vld [vmem:[%s4 + $0x110] sm:$0xff]
    %v1972 = vld [vmem:[%s4 + $0x118] sm:$0xff]
    %v1973 = vld [vmem:[%s4 + $0x120] sm:$0xff]
    %v1974 = vld [vmem:[%s4 + $0x128] sm:$0xff]
    %v1975 = vld [vmem:[%s4 + $0x130] sm:$0xff]
    %v1976 = vld [vmem:[%s4 + $0x138] sm:$0xff]
    %v1977 = vld [vmem:[%s4 + $0x140] sm:$0xff]
    %v1978 = vld [vmem:[%s4 + $0x148] sm:$0xff]
    %v1979 = vld [vmem:[%s4 + $0x150] sm:$0xff]
    %v1980 = vld [vmem:[%s4 + $0x158] sm:$0xff]
    %v1981 = vld [vmem:[%s4 + $0x160] sm:$0xff]
    %v1982 = vld [vmem:[%s4 + $0x168] sm:$0xff]
    %v1983 = vld [vmem:[%s4 + $0x170] sm:$0xff]
    %v1984 = vld [vmem:[%s4 + $0x178] sm:$0xff]
    %v1985 = vld [vmem:[%s4 + $0x180] sm:$0xff]
    %v1986 = vld [vmem:[%s4 + $0x188] sm:$0xff]
    %v1987 = vld [vmem:[%s4 + $0x190] sm:$0xff]
    %v1988 = vld [vmem:[%s4 + $0x198] sm:$0xff]
    %v1989 = vld [vmem:[%s4 + $0x1a0] sm:$0xff]
    %v1990 = vld [vmem:[%s4 + $0x1a8] sm:$0xff]
    %v1991 = vld [vmem:[%s4 + $0x1b0] sm:$0xff]
    %v1992 = vld [vmem:[%s4 + $0x1b8] sm:$0xff]
    %v1993 = vld [vmem:[%s4 + $0x1c0] sm:$0xff]
    %v1994 = vld [vmem:[%s4 + $0x1c8] sm:$0xff]
    %v1995 = vld [vmem:[%s4 + $0x1d0] sm:$0xff]
    %v1996 = vld [vmem:[%s4 + $0x1d8] sm:$0xff]
    %v1997 = vld [vmem:[%s4 + $0x1e0] sm:$0xff]
    %v1998 = vld [vmem:[%s4 + $0x1e8] sm:$0xff]
    %v1999 = vld [vmem:[%s4 + $0x1f0] sm:$0xff]
    %v2000 = vld [vmem:[%s4 + $0x1f8] sm:$0xff]
    %v2001 = vld [vmem:[%s4 + $0x200] sm:$0xff]
    %v2002 = vld [vmem:[%s4 + $0x208] sm:$0xff]
    %v2003 = vld [vmem:[%s4 + $0x210] sm:$0xff]
    %v2004 = vld [vmem:[%s4 + $0x218] sm:$0xff]
    %v2005 = vld [vmem:[%s4 + $0x220] sm:$0xff]
    %v2006 = vld [vmem:[%s4 + $0x228] sm:$0xff]
    %v2007 = vld [vmem:[%s4 + $0x230] sm:$0xff]
    %v2008 = vld [vmem:[%s4 + $0x238] sm:$0xff]
    %v2009 = vld [vmem:[%s4 + $0x240] sm:$0xff]
    %v2010 = vld [vmem:[%s4 + $0x248] sm:$0xff]
    %v2011 = vld [vmem:[%s4 + $0x250] sm:$0xff]
    %v2012 = vld [vmem:[%s4 + $0x258] sm:$0xff]
    %v2013 = vld [vmem:[%s4 + $0x260] sm:$0xff]
    %v2014 = vld [vmem:[%s4 + $0x268] sm:$0xff]
    %v2015 = vld [vmem:[%s4 + $0x270] sm:$0xff]
    %v2016 = vld [vmem:[%s4 + $0x278] sm:$0xff]
    %v2017 = vld [vmem:[%s4 + $0x280] sm:$0xff]
    %v2018 = vld [vmem:[%s4 + $0x288] sm:$0xff]
    %v2019 = vld [vmem:[%s4 + $0x290] sm:$0xff]
    %v2020 = vld [vmem:[%s4 + $0x298] sm:$0xff]
    %v2021 = vld [vmem:[%s4 + $0x2a0] sm:$0xff]
    %v2022 = vld [vmem:[%s4 + $0x2a8] sm:$0xff]
    %v2023 = vld [vmem:[%s4 + $0x2b0] sm:$0xff]
    %v2024 = vld [vmem:[%s4 + $0x2b8] sm:$0xff]
    %v2025 = vld [vmem:[%s4 + $0x2c0] sm:$0xff]
    %v2026 = vld [vmem:[%s4 + $0x2c8] sm:$0xff]
    %v2027 = vld [vmem:[%s4 + $0x2d0] sm:$0xff]
    %v2028 = vld [vmem:[%s4 + $0x2d8] sm:$0xff]
    %v2029 = vld [vmem:[%s4 + $0x2e0] sm:$0xff]
    %v2030 = vld [vmem:[%s4 + $0x2e8] sm:$0xff]
    %v2031 = vld [vmem:[%s4 + $0x2f0] sm:$0xff]
    %v2032 = vld [vmem:[%s4 + $0x2f8] sm:$0xff]
    %v2033 = vld [vmem:[%s4 + $0x300] sm:$0xff]
    %v2034 = vld [vmem:[%s4 + $0x308] sm:$0xff]
    %v2035 = vld [vmem:[%s4 + $0x310] sm:$0x1]
    %v2036 = vld [vmem:[%s4 + $0x318] sm:$0x1]
    %vm2037 = vcmask 72704
    %v2039 = vsel %vm2037, %v1917, 0
    %v2042 = vsel %vm2037, %v1923, 0
    %v2045 = vsel %vm2037, %v1929, 0
    %v2048 = vsel %vm2037, %v1935, 0
    %vm2050 = vcmask 1040384
    %v2052 = vsel %vm2050, %v2035, 0
    %v2055 = vsel %vm2050, %v2036, 0
    %2057 = vmatprep.subr.mxu0 %v1938
    %2058 = vmatpush1.msra.mxu0 %v1937
    %2059 = vmatprep.subr.mxu0 %v1940
    %2060 = vmatpush1.msra.mxu0 %v1939
    %2061 = vmatprep.subr.mxu0 %v1942
    %2062 = vmatpush1.msra.mxu0 %v1941
    %2063 = vmatprep.subr.mxu0 %v1944
    %2064 = vmatpush1.msra.mxu0 %v1943
    %2065 = vmatprep.subr.mxu0 %v1946
    %2066 = vmatpush1.msra.mxu0 %v1945
    %2067 = vmatprep.subr.mxu0 %v1948
    %2068 = vmatpush1.msra.mxu0 %v1947
    %2069 = vmatprep.subr.mxu0 %v1950
    %2070 = vmatpush1.msra.mxu0 %v1949
    %2071 = vmatprep.subr.mxu0 %v1952
    %2072 = vmatpush1.msra.mxu0 %v1951
    %2073 = vmatprep.subr.mxu0 %v1954
    %2074 = vmatpush1.msra.mxu0 %v1953
    %2075 = vmatprep.subr.mxu0 %v1956
    %2076 = vmatpush1.msra.mxu0 %v1955
    %2077 = vmatprep.subr.mxu0 %v1958
    %2078 = vmatpush1.msra.mxu0 %v1957
    %2079 = vmatprep.subr.mxu0 %v1960
    %2080 = vmatpush1.msra.mxu0 %v1959
    %2081 = vmatprep.subr.mxu0 %v1962
    %2082 = vmatpush1.msra.mxu0 %v1961
    %2083 = vmatprep.subr.mxu0 %v1964
    %2084 = vmatpush1.msra.mxu0 %v1963
    %2085 = vmatprep.subr.mxu0 %v1966
    %2086 = vmatpush1.msra.mxu0 %v1965
    %2087 = vmatprep.subr.mxu0 %v1968
    %2088 = vmatpush1.msra.mxu0 %v1967
    %2089 = vmatprep.subr.mxu0 %v1970
    %2090 = vmatpush1.msra.mxu0 %v1969
    %2091 = vmatprep.subr.mxu0 %v1972
    %2092 = vmatpush1.msra.mxu0 %v1971
    %2093 = vmatprep.subr.mxu0 %v1974
    %2094 = vmatpush1.msra.mxu0 %v1973
    %2095 = vmatprep.subr.mxu0 %v1976
    %2096 = vmatpush1.msra.mxu0 %v1975
    %2097 = vmatprep.subr.mxu0 %v1978
    %2098 = vmatpush1.msra.mxu0 %v1977
    %2099 = vmatprep.subr.mxu0 %v1980
    %2100 = vmatpush1.msra.mxu0 %v1979
    %2101 = vmatprep.subr.mxu0 %v1982
    %2102 = vmatpush1.msra.mxu0 %v1981
    %2103 = vmatprep.subr.mxu0 %v1984
    %2104 = vmatpush1.msra.mxu0 %v1983
    %2105 = vmatprep.subr.mxu0 %v1986
    %2106 = vmatpush1.msra.mxu0 %v1985
    %2107 = vmatprep.subr.mxu0 %v1988
    %2108 = vmatpush1.msra.mxu0 %v1987
    %2109 = vmatprep.subr.mxu0 %v1990
    %2110 = vmatpush1.msra.mxu0 %v1989
    %2111 = vmatprep.subr.mxu0 %v1992
    %2112 = vmatpush1.msra.mxu0 %v1991
    %2113 = vmatprep.subr.mxu0 %v1994
    %2114 = vmatpush1.msra.mxu0 %v1993
    %2115 = vmatprep.subr.mxu0 %v1996
    %2116 = vmatpush1.msra.mxu0 %v1995
    %2117 = vmatprep.subr.mxu0 %v1998
    %2118 = vmatpush1.msra.mxu0 %v1997
    %2119 = vmatprep.subr.mxu0 %v2000
    %2120 = vmatpush1.msra.mxu0 %v1999
    %2121 = vmatprep.mubr.f32.mxu0 %v1828
    %2122 = vmatmul.mubr.f32.gmra.mrb[0].mxu0 %v1826
    %v2123 = vpop.f32.mrb[0].mxu0
    %v2124 = vadd.f32 0.0, %v2123
    %v2125 = vpop.f32.mrb[0].mxu0
    %v2126 = vadd.f32 0.0, %v2125
    %2127 = vmatprep.mubr.f32.mxu0 %v1834
    %2128 = vmatmul.mubr.f32.gmra.mrb[0].mxu0 %v1832
    %v2129 = vpop.f32.mrb[0].mxu0
    %v2130 = vadd.f32 0.0, %v2129
    %v2131 = vpop.f32.mrb[0].mxu0
    %v2132 = vadd.f32 0.0, %v2131
    %2133 = vmatprep.mubr.f32.mxu0 %v1840
    %2134 = vmatmul.mubr.f32.gmra.mrb[0].mxu0 %v1838
    %v2135 = vpop.f32.mrb[0].mxu0
    %v2136 = vadd.f32 0.0, %v2135
    %v2137 = vpop.f32.mrb[0].mxu0
    %v2138 = vadd.f32 0.0, %v2137
    %2139 = vmatprep.mubr.f32.mxu0 %v1846
    %2140 = vmatmul.mubr.f32.gmra.mrb[0].mxu0 %v1844
    %v2141 = vpop.f32.mrb[0].mxu0
    %v2142 = vadd.f32 0.0, %v2141
    %v2143 = vpop.f32.mrb[0].mxu0
    %v2144 = vadd.f32 0.0, %v2143
    %2145 = vdwg.mxu0
    %2146 = vmatprep.subr.mxu0 %v2002
    %2147 = vmatpush1.msra.mxu0 %v2001
    %2148 = vmatprep.subr.mxu0 %v2004
    %2149 = vmatpush1.msra.mxu0 %v2003
    %2150 = vmatprep.subr.mxu0 %v2006
    %2151 = vmatpush1.msra.mxu0 %v2005
    %2152 = vmatprep.subr.mxu0 %v2008
    %2153 = vmatpush1.msra.mxu0 %v2007
    %2154 = vmatprep.subr.mxu0 %v2010
    %2155 = vmatpush1.msra.mxu0 %v2009
    %2156 = vmatprep.subr.mxu0 %v2012
    %2157 = vmatpush1.msra.mxu0 %v2011
    %2158 = vmatprep.subr.mxu0 %v2014
    %2159 = vmatpush1.msra.mxu0 %v2013
    %2160 = vmatprep.subr.mxu0 %v2016
    %2161 = vmatpush1.msra.mxu0 %v2015
    %2162 = vmatprep.subr.mxu0 %v2018
    %2163 = vmatpush1.msra.mxu0 %v2017
    %2164 = vmatprep.subr.mxu0 %v2020
    %2165 = vmatpush1.msra.mxu0 %v2019
    %2166 = vmatprep.subr.mxu0 %v2022
    %2167 = vmatpush1.msra.mxu0 %v2021
    %2168 = vmatprep.subr.mxu0 %v2024
    %2169 = vmatpush1.msra.mxu0 %v2023
    %2170 = vmatprep.subr.mxu0 %v2026
    %2171 = vmatpush1.msra.mxu0 %v2025
    %2172 = vmatprep.subr.mxu0 %v2028
    %2173 = vmatpush1.msra.mxu0 %v2027
    %2174 = vmatprep.subr.mxu0 %v2030
    %2175 = vmatpush1.msra.mxu0 %v2029
    %2176 = vmatprep.subr.mxu0 %v2032
    %2177 = vmatpush1.msra.mxu0 %v2031
    %2178 = vmatprep.subr.mxu0 %v2034
    %2179 = vmatpush1.msra.mxu0 %v2033
    %2180 = vmatprep.subr.mxu0 %v2055
    %2181 = vmatpush1.msra.mxu0 %v2052
    %2182 = vmatprep.subr.mxu0 0.0
    %2183 = vmatpush1.msra.mxu0 0.0
    %2184 = vmatprep.subr.mxu0 0.0
    %2185 = vmatpush1.msra.mxu0 0.0
    %2186 = vmatprep.subr.mxu0 0.0
    %2187 = vmatpush1.msra.mxu0 0.0
    %2188 = vmatprep.subr.mxu0 0.0
    %2189 = vmatpush1.msra.mxu0 0.0
    %2190 = vmatprep.subr.mxu0 0.0
    %2191 = vmatpush1.msra.mxu0 0.0
    %2192 = vmatprep.subr.mxu0 0.0
    %2193 = vmatpush1.msra.mxu0 0.0
    %2194 = vmatprep.subr.mxu0 0.0
    %2195 = vmatpush1.msra.mxu0 0.0
    %2196 = vmatprep.subr.mxu0 0.0
    %2197 = vmatpush1.msra.mxu0 0.0
    %2198 = vmatprep.subr.mxu0 0.0
    %2199 = vmatpush1.msra.mxu0 0.0
    %2200 = vmatprep.subr.mxu0 0.0
    %2201 = vmatpush1.msra.mxu0 0.0
    %2202 = vmatprep.subr.mxu0 0.0
    %2203 = vmatpush1.msra.mxu0 0.0
    %2204 = vmatprep.subr.mxu0 0.0
    %2205 = vmatpush1.msra.mxu0 0.0
    %2206 = vmatprep.subr.mxu0 0.0
    %2207 = vmatpush1.msra.mxu0 0.0
    %2208 = vmatprep.subr.mxu0 0.0
    %2209 = vmatpush1.msra.mxu0 0.0
    %2210 = vmatprep.mubr.f32.mxu0 %v2039
    %2211 = vmatmul.mubr.f32.gmra.mrb[0].mxu0 %v1915
    %v2212 = vpop.f32.mrb[0].mxu0
    %v2213 = vadd.f32 %v2124, %v2212
    %v2214 = vpop.f32.mrb[0].mxu0
    %v2215 = vadd.f32 %v2126, %v2214
    %2216 = vmatprep.mubr.f32.mxu0 %v2042
    %2217 = vmatmul.mubr.f32.gmra.mrb[0].mxu0 %v1921
    %v2218 = vpop.f32.mrb[0].mxu0
    %v2219 = vadd.f32 %v2130, %v2218
    %v2220 = vpop.f32.mrb[0].mxu0
    %v2221 = vadd.f32 %v2132, %v2220
    %2222 = vmatprep.mubr.f32.mxu0 %v2045
    %2223 = vmatmul.mubr.f32.gmra.mrb[0].mxu0 %v1927
    %v2224 = vpop.f32.mrb[0].mxu0
    %v2225 = vadd.f32 %v2136, %v2224
    %v2226 = vpop.f32.mrb[0].mxu0
    %v2227 = vadd.f32 %v2138, %v2226
    %2228 = vmatprep.mubr.f32.mxu0 %v2048
    %2229 = vmatmul.mubr.f32.gmra.mrb[0].mxu0 %v1933
    %v2230 = vpop.f32.mrb[0].mxu0
    %v2231 = vadd.f32 %v2142, %v2230
    %v2232 = vpop.f32.mrb[0].mxu0
    %v2233 = vadd.f32 %v2144, %v2232
    %2234 = vdwg.mxu0
    %v2235 = vld [vmem:[%s5] sm:$0xff]
    %v2236 = vld [vmem:[%s5 + $0x8] sm:$0xff]
    %v2237 = vld [vmem:[%s5 + $0x10] sm:$0xff]
    %v2238 = vld [vmem:[%s5 + $0x18] sm:$0xff]
    %v2239 = vld [vmem:[%s5 + $0x20] sm:$0xff]
    %v2240 = vld [vmem:[%s5 + $0x28] sm:$0xff]
    %v2241 = vld [vmem:[%s5 + $0x30] sm:$0xff]
    %v2242 = vld [vmem:[%s5 + $0x38] sm:$0xff]
    %v2243 = vld [vmem:[%s5 + $0x40] sm:$0xff]
    %v2244 = vld [vmem:[%s5 + $0x48] sm:$0xff]
    %v2245 = vld [vmem:[%s5 + $0x50] sm:$0xff]
    %v2246 = vld [vmem:[%s5 + $0x58] sm:$0xff]
    %v2247 = vld [vmem:[%s5 + $0x60] sm:$0xff]
    %v2248 = vld [vmem:[%s5 + $0x68] sm:$0xff]
    %v2249 = vld [vmem:[%s5 + $0x70] sm:$0xff]
    %v2250 = vld [vmem:[%s5 + $0x78] sm:$0xff]
    %v2251 = vld [vmem:[%s5 + $0x80] sm:$0xff]
    %v2252 = vld [vmem:[%s5 + $0x88] sm:$0xff]
    %v2253 = vld [vmem:[%s5 + $0x90] sm:$0xff]
    %v2254 = vld [vmem:[%s5 + $0x98] sm:$0xff]
    %v2255 = vld [vmem:[%s5 + $0xa0] sm:$0xff]
    %v2256 = vld [vmem:[%s5 + $0xa8] sm:$0xff]
    %v2257 = vld [vmem:[%s5 + $0xb0] sm:$0xff]
    %v2258 = vld [vmem:[%s5 + $0xb8] sm:$0xff]
    %v2259 = vld [vmem:[%s5 + $0xc0] sm:$0xff]
    %v2260 = vld [vmem:[%s5 + $0xc8] sm:$0xff]
    %v2261 = vld [vmem:[%s5 + $0xd0] sm:$0xff]
    %v2262 = vld [vmem:[%s5 + $0xd8] sm:$0xff]
    %v2263 = vld [vmem:[%s5 + $0xe0] sm:$0xff]
    %v2264 = vld [vmem:[%s5 + $0xe8] sm:$0xff]
    %v2265 = vld [vmem:[%s5 + $0xf0] sm:$0xff]
    %v2266 = vld [vmem:[%s5 + $0xf8] sm:$0xff]
    %v2267 = vld [vmem:[%s5 + $0x100] sm:$0xff]
    %v2268 = vld [vmem:[%s5 + $0x108] sm:$0xff]
    %v2269 = vld [vmem:[%s5 + $0x110] sm:$0xff]
    %v2270 = vld [vmem:[%s5 + $0x118] sm:$0xff]
    %v2271 = vld [vmem:[%s5 + $0x120] sm:$0xff]
    %v2272 = vld [vmem:[%s5 + $0x128] sm:$0xff]
    %v2273 = vld [vmem:[%s5 + $0x130] sm:$0xff]
    %v2274 = vld [vmem:[%s5 + $0x138] sm:$0xff]
    %v2275 = vld [vmem:[%s5 + $0x140] sm:$0xff]
    %v2276 = vld [vmem:[%s5 + $0x148] sm:$0xff]
    %v2277 = vld [vmem:[%s5 + $0x150] sm:$0xff]
    %v2278 = vld [vmem:[%s5 + $0x158] sm:$0xff]
    %v2279 = vld [vmem:[%s5 + $0x160] sm:$0xff]
    %v2280 = vld [vmem:[%s5 + $0x168] sm:$0xff]
    %v2281 = vld [vmem:[%s5 + $0x170] sm:$0xff]
    %v2282 = vld [vmem:[%s5 + $0x178] sm:$0xff]
    %v2283 = vld [vmem:[%s5 + $0x180] sm:$0xff]
    %v2284 = vld [vmem:[%s5 + $0x188] sm:$0xff]
    %v2285 = vld [vmem:[%s5 + $0x190] sm:$0xff]
    %v2286 = vld [vmem:[%s5 + $0x198] sm:$0xff]
    %v2287 = vld [vmem:[%s5 + $0x1a0] sm:$0xff]
    %v2288 = vld [vmem:[%s5 + $0x1a8] sm:$0xff]
    %v2289 = vld [vmem:[%s5 + $0x1b0] sm:$0xff]
    %v2290 = vld [vmem:[%s5 + $0x1b8] sm:$0xff]
    %v2291 = vld [vmem:[%s5 + $0x1c0] sm:$0xff]
    %v2292 = vld [vmem:[%s5 + $0x1c8] sm:$0xff]
    %v2293 = vld [vmem:[%s5 + $0x1d0] sm:$0xff]
    %v2294 = vld [vmem:[%s5 + $0x1d8] sm:$0xff]
    %v2295 = vld [vmem:[%s5 + $0x1e0] sm:$0xff]
    %v2296 = vld [vmem:[%s5 + $0x1e8] sm:$0xff]
    %v2297 = vld [vmem:[%s5 + $0x1f0] sm:$0xff]
    %v2298 = vld [vmem:[%s5 + $0x1f8] sm:$0xff]
    %v2299 = vld [vmem:[%s5 + $0x200] sm:$0xff]
    %v2300 = vld [vmem:[%s5 + $0x208] sm:$0xff]
    %v2301 = vld [vmem:[%s5 + $0x210] sm:$0xff]
    %v2302 = vld [vmem:[%s5 + $0x218] sm:$0xff]
    %v2303 = vld [vmem:[%s5 + $0x220] sm:$0xff]
    %v2304 = vld [vmem:[%s5 + $0x228] sm:$0xff]
    %v2305 = vld [vmem:[%s5 + $0x230] sm:$0xff]
    %v2306 = vld [vmem:[%s5 + $0x238] sm:$0xff]
    %vm2307 = vcmask 523264
    %v2309 = vsel %vm2307, %v2215, 0
    %v2312 = vsel %vm2307, %v2221, 0
    %v2315 = vsel %vm2307, %v2227, 0
    %v2318 = vsel %vm2307, %v2233, 0
    %2320 = vmatprep.subr.mxu0 %v2236
    %2321 = vmatpush1.msra.mxu0 %v2235
    %2322 = vmatprep.subr.mxu0 %v2239
    %2323 = vmatpush1.msra.mxu0 %v2238
    %2324 = vmatprep.subr.mxu0 %v2242
    %2325 = vmatpush1.msra.mxu0 %v2241
    %2326 = vmatprep.subr.mxu0 %v2245
    %2327 = vmatpush1.msra.mxu0 %v2244
    %2328 = vmatprep.subr.mxu0 %v2248
    %2329 = vmatpush1.msra.mxu0 %v2247
    %2330 = vmatprep.subr.mxu0 %v2251
    %2331 = vmatpush1.msra.mxu0 %v2250
    %2332 = vmatprep.subr.mxu0 %v2254
    %2333 = vmatpush1.msra.mxu0 %v2253
    %2334 = vmatprep.subr.mxu0 %v2257
    %2335 = vmatpush1.msra.mxu0 %v2256
    %2336 = vmatprep.subr.mxu0 %v2260
    %2337 = vmatpush1.msra.mxu0 %v2259
    %2338 = vmatprep.subr.mxu0 %v2263
    %2339 = vmatpush1.msra.mxu0 %v2262
    %2340 = vmatprep.subr.mxu0 %v2266
    %2341 = vmatpush1.msra.mxu0 %v2265
    %2342 = vmatprep.subr.mxu0 %v2269
    %2343 = vmatpush1.msra.mxu0 %v2268
    %2344 = vmatprep.subr.mxu0 %v2272
    %2345 = vmatpush1.msra.mxu0 %v2271
    %2346 = vmatprep.subr.mxu0 %v2275
    %2347 = vmatpush1.msra.mxu0 %v2274
    %2348 = vmatprep.subr.mxu0 %v2278
    %2349 = vmatpush1.msra.mxu0 %v2277
    %2350 = vmatprep.subr.mxu0 %v2281
    %2351 = vmatpush1.msra.mxu0 %v2280
    %2352 = vmatprep.subr.mxu0 %v2284
    %2353 = vmatpush1.msra.mxu0 %v2283
    %2354 = vmatprep.subr.mxu0 %v2287
    %2355 = vmatpush1.msra.mxu0 %v2286
    %2356 = vmatprep.subr.mxu0 %v2290
    %2357 = vmatpush1.msra.mxu0 %v2289
    %2358 = vmatprep.subr.mxu0 %v2293
    %2359 = vmatpush1.msra.mxu0 %v2292
    %2360 = vmatprep.subr.mxu0 %v2296
    %2361 = vmatpush1.msra.mxu0 %v2295
    %2362 = vmatprep.subr.mxu0 %v2299
    %2363 = vmatpush1.msra.mxu0 %v2298
    %2364 = vmatprep.subr.mxu0 %v2302
    %2365 = vmatpush1.msra.mxu0 %v2301
    %2366 = vmatprep.subr.mxu0 %v2305
    %2367 = vmatpush1.msra.mxu0 %v2304
    %2368 = vmatprep.subr.mxu0 0.0
    %2369 = vmatpush1.msra.mxu0 0.0
    %2370 = vmatprep.subr.mxu0 0.0
    %2371 = vmatpush1.msra.mxu0 0.0
    %2372 = vmatprep.subr.mxu0 0.0
    %2373 = vmatpush1.msra.mxu0 0.0
    %2374 = vmatprep.subr.mxu0 0.0
    %2375 = vmatpush1.msra.mxu0 0.0
    %2376 = vmatprep.subr.mxu0 0.0
    %2377 = vmatpush1.msra.mxu0 0.0
    %2378 = vmatprep.subr.mxu0 0.0
    %2379 = vmatpush1.msra.mxu0 0.0
    %2380 = vmatprep.subr.mxu0 0.0
    %2381 = vmatpush1.msra.mxu0 0.0
    %2382 = vmatprep.subr.mxu0 0.0
    %2383 = vmatpush1.msra.mxu0 0.0
    %2384 = vmatprep.mubr.f32.mxu0 %v2309
    %2385 = vmatmul.mubr.f32.gmra.mrb[0].mxu0 %v2213
    %v2386 = vpop.f32.mrb[0].mxu0
    %v2387 = vadd.f32 0.0, %v2386
    %v2388 = vpop.f32.mrb[0].mxu0
    %v2389 = vadd.f32 0.0, %v2388
    %2390 = vmatprep.mubr.f32.mxu0 %v2312
    %2391 = vmatmul.mubr.f32.gmra.mrb[0].mxu0 %v2219
    %v2392 = vpop.f32.mrb[0].mxu0
    %v2393 = vadd.f32 0.0, %v2392
    %v2394 = vpop.f32.mrb[0].mxu0
    %v2395 = vadd.f32 0.0, %v2394
    %2396 = vmatprep.mubr.f32.mxu0 %v2315
    %2397 = vmatmul.mubr.f32.gmra.mrb[0].mxu0 %v2225
    %v2398 = vpop.f32.mrb[0].mxu0
    %v2399 = vadd.f32 0.0, %v2398
    %v2400 = vpop.f32.mrb[0].mxu0
    %v2401 = vadd.f32 0.0, %v2400
    %2402 = vmatprep.mubr.f32.mxu0 %v2318
    %2403 = vmatmul.mubr.f32.gmra.mrb[0].mxu0 %v2231
    %v2404 = vpop.f32.mrb[0].mxu0
    %v2405 = vadd.f32 0.0, %v2404
    %v2406 = vpop.f32.mrb[0].mxu0
    %v2407 = vadd.f32 0.0, %v2406
    %2408 = vdwg.mxu0
    %2409 = vmatprep.subr.mxu0 0.0
    %2410 = vmatpush1.msra.mxu0 %v2237
    %2411 = vmatprep.subr.mxu0 0.0
    %2412 = vmatpush1.msra.mxu0 %v2240
    %2413 = vmatprep.subr.mxu0 0.0
    %2414 = vmatpush1.msra.mxu0 %v2243
    %2415 = vmatprep.subr.mxu0 0.0
    %2416 = vmatpush1.msra.mxu0 %v2246
    %2417 = vmatprep.subr.mxu0 0.0
    %2418 = vmatpush1.msra.mxu0 %v2249
    %2419 = vmatprep.subr.mxu0 0.0
    %2420 = vmatpush1.msra.mxu0 %v2252
    %2421 = vmatprep.subr.mxu0 0.0
    %2422 = vmatpush1.msra.mxu0 %v2255
    %2423 = vmatprep.subr.mxu0 0.0
    %2424 = vmatpush1.msra.mxu0 %v2258
    %2425 = vmatprep.subr.mxu0 0.0
    %2426 = vmatpush1.msra.mxu0 %v2261
    %2427 = vmatprep.subr.mxu0 0.0
    %2428 = vmatpush1.msra.mxu0 %v2264
    %2429 = vmatprep.subr.mxu0 0.0
    %2430 = vmatpush1.msra.mxu0 %v2267
    %2431 = vmatprep.subr.mxu0 0.0
    %2432 = vmatpush1.msra.mxu0 %v2270
    %2433 = vmatprep.subr.mxu0 0.0
    %2434 = vmatpush1.msra.mxu0 %v2273
    %2435 = vmatprep.subr.mxu0 0.0
    %2436 = vmatpush1.msra.mxu0 %v2276
    %2437 = vmatprep.subr.mxu0 0.0
    %2438 = vmatpush1.msra.mxu0 %v2279
    %2439 = vmatprep.subr.mxu0 0.0
    %2440 = vmatpush1.msra.mxu0 %v2282
    %2441 = vmatprep.subr.mxu0 0.0
    %2442 = vmatpush1.msra.mxu0 %v2285
    %2443 = vmatprep.subr.mxu0 0.0
    %2444 = vmatpush1.msra.mxu0 %v2288
    %2445 = vmatprep.subr.mxu0 0.0
    %2446 = vmatpush1.msra.mxu0 %v2291
    %2447 = vmatprep.subr.mxu0 0.0
    %2448 = vmatpush1.msra.mxu0 %v2294
    %2449 = vmatprep.subr.mxu0 0.0
    %2450 = vmatpush1.msra.mxu0 %v2297
    %2451 = vmatprep.subr.mxu0 0.0
    %2452 = vmatpush1.msra.mxu0 %v2300
    %2453 = vmatprep.subr.mxu0 0.0
    %2454 = vmatpush1.msra.mxu0 %v2303
    %2455 = vmatprep.subr.mxu0 0.0
    %2456 = vmatpush1.msra.mxu0 %v2306
    %2457 = vmatprep.subr.mxu0 0.0
    %2458 = vmatpush1.msra.mxu0 0.0
    %2459 = vmatprep.subr.mxu0 0.0
    %2460 = vmatpush1.msra.mxu0 0.0
    %2461 = vmatprep.subr.mxu0 0.0
    %2462 = vmatpush1.msra.mxu0 0.0
    %2463 = vmatprep.subr.mxu0 0.0
    %2464 = vmatpush1.msra.mxu0 0.0
    %2465 = vmatprep.subr.mxu0 0.0
    %2466 = vmatpush1.msra.mxu0 0.0
    %2467 = vmatprep.subr.mxu0 0.0
    %2468 = vmatpush1.msra.mxu0 0.0
    %2469 = vmatprep.subr.mxu0 0.0
    %2470 = vmatpush1.msra.mxu0 0.0
    %2471 = vmatprep.subr.mxu0 0.0
    %2472 = vmatpush1.msra.mxu0 0.0
    %2473 = vmatprep.mubr.f32.mxu0 %v2309
    %2474 = vmatmul.mubr.f32.gmra.mrb[0].mxu0 %v2213
    %v2475 = vpop.f32.mrb[0].mxu0
    %v2476 = vadd.f32 0.0, %v2475
    %v2477 = vpop.f32.mrb[0].mxu0
    %2478 = vmatprep.mubr.f32.mxu0 %v2312
    %2479 = vmatmul.mubr.f32.gmra.mrb[0].mxu0 %v2219
    %v2480 = vpop.f32.mrb[0].mxu0
    %v2481 = vadd.f32 0.0, %v2480
    %v2482 = vpop.f32.mrb[0].mxu0
    %2483 = vmatprep.mubr.f32.mxu0 %v2315
    %2484 = vmatmul.mubr.f32.gmra.mrb[0].mxu0 %v2225
    %v2485 = vpop.f32.mrb[0].mxu0
    %v2486 = vadd.f32 0.0, %v2485
    %v2487 = vpop.f32.mrb[0].mxu0
    %2488 = vmatprep.mubr.f32.mxu0 %v2318
    %2489 = vmatmul.mubr.f32.gmra.mrb[0].mxu0 %v2231
    %v2490 = vpop.f32.mrb[0].mxu0
    %v2491 = vadd.f32 0.0, %v2490
    %v2492 = vpop.f32.mrb[0].mxu0
    %2493 = vdwg.mxu0
    %s2494 = scalar_lea.vmem %s5, 576
    %v2495 = vld [vmem:[%s2494] sm:$0xff]
    %v2496 = vld [vmem:[%s2494 + $0x8] sm:$0xff]
    %v2497 = vld [vmem:[%s2494 + $0x10] sm:$0xff]
    %v2498 = vld [vmem:[%s2494 + $0x18] sm:$0xff]
    %v2499 = vld [vmem:[%s2494 + $0x20] sm:$0xff]
    %v2500 = vld [vmem:[%s2494 + $0x28] sm:$0xff]
    %v2501 = vld [vmem:[%s2494 + $0x30] sm:$0xff]
    %v2502 = vld [vmem:[%s2494 + $0x38] sm:$0xff]
    %v2503 = vld [vmem:[%s2494 + $0x40] sm:$0xff]
    %v2504 = vld [vmem:[%s2494 + $0x48] sm:$0xff]
    %v2505 = vld [vmem:[%s2494 + $0x50] sm:$0xff]
    %v2506 = vld [vmem:[%s2494 + $0x58] sm:$0xff]
    %v2507 = vld [vmem:[%s2494 + $0x60] sm:$0xff]
    %v2508 = vld [vmem:[%s2494 + $0x68] sm:$0xff]
    %v2509 = vld [vmem:[%s2494 + $0x70] sm:$0xff]
    %v2510 = vld [vmem:[%s2494 + $0x78] sm:$0xff]
    %v2511 = vld [vmem:[%s2494 + $0x80] sm:$0xff]
    %v2512 = vld [vmem:[%s2494 + $0x88] sm:$0xff]
    %v2513 = vld [vmem:[%s2494 + $0x90] sm:$0xff]
    %v2514 = vld [vmem:[%s2494 + $0x98] sm:$0xff]
    %v2515 = vld [vmem:[%s2494 + $0xa0] sm:$0xff]
    %v2516 = vld [vmem:[%s2494 + $0xa8] sm:$0xff]
    %v2517 = vld [vmem:[%s2494 + $0xb0] sm:$0xff]
    %v2518 = vld [vmem:[%s2494 + $0xb8] sm:$0xff]
    %v2519 = vld [vmem:[%s2494 + $0xc0] sm:$0xff]
    %v2520 = vld [vmem:[%s2494 + $0xc8] sm:$0xff]
    %v2521 = vld [vmem:[%s2494 + $0xd0] sm:$0xff]
    %v2522 = vld [vmem:[%s2494 + $0xd8] sm:$0xff]
    %v2523 = vld [vmem:[%s2494 + $0xe0] sm:$0xff]
    %v2524 = vld [vmem:[%s2494 + $0xe8] sm:$0xff]
    %v2525 = vld [vmem:[%s2494 + $0xf0] sm:$0xff]
    %v2526 = vld [vmem:[%s2494 + $0xf8] sm:$0xff]
    %v2527 = vld [vmem:[%s2494 + $0x100] sm:$0xff]
    %v2528 = vld [vmem:[%s2494 + $0x108] sm:$0xff]
    %v2529 = vld [vmem:[%s2494 + $0x110] sm:$0xff]
    %v2530 = vld [vmem:[%s2494 + $0x118] sm:$0xff]
    %v2531 = vld [vmem:[%s2494 + $0x120] sm:$0xff]
    %v2532 = vld [vmem:[%s2494 + $0x128] sm:$0xff]
    %v2533 = vld [vmem:[%s2494 + $0x130] sm:$0xff]
    %v2534 = vld [vmem:[%s2494 + $0x138] sm:$0xff]
    %v2535 = vld [vmem:[%s2494 + $0x140] sm:$0xff]
    %v2536 = vld [vmem:[%s2494 + $0x148] sm:$0xff]
    %v2537 = vld [vmem:[%s2494 + $0x150] sm:$0xff]
    %v2538 = vld [vmem:[%s2494 + $0x158] sm:$0xff]
    %v2539 = vld [vmem:[%s2494 + $0x160] sm:$0xff]
    %v2540 = vld [vmem:[%s2494 + $0x168] sm:$0xff]
    %v2541 = vld [vmem:[%s2494 + $0x170] sm:$0xff]
    %v2542 = vld [vmem:[%s2494 + $0x178] sm:$0xff]
    %v2543 = vld [vmem:[%s2494 + $0x180] sm:$0xff]
    %v2544 = vld [vmem:[%s2494 + $0x188] sm:$0xff]
    %v2545 = vld [vmem:[%s2494 + $0x190] sm:$0xff]
    %v2546 = vld [vmem:[%s2494 + $0x198] sm:$0xff]
    %v2547 = vld [vmem:[%s2494 + $0x1a0] sm:$0xff]
    %v2548 = vld [vmem:[%s2494 + $0x1a8] sm:$0xff]
    %v2549 = vld [vmem:[%s2494 + $0x1b0] sm:$0xff]
    %v2550 = vld [vmem:[%s2494 + $0x1b8] sm:$0xff]
    %v2551 = vld [vmem:[%s2494 + $0x1c0] sm:$0xff]
    %v2552 = vld [vmem:[%s2494 + $0x1c8] sm:$0xff]
    %v2553 = vld [vmem:[%s2494 + $0x1d0] sm:$0xff]
    %v2554 = vld [vmem:[%s2494 + $0x1d8] sm:$0xff]
    %v2555 = vld [vmem:[%s2494 + $0x1e0] sm:$0xff]
    %v2556 = vld [vmem:[%s2494 + $0x1e8] sm:$0xff]
    %v2557 = vld [vmem:[%s2494 + $0x1f0] sm:$0xff]
    %v2558 = vld [vmem:[%s2494 + $0x1f8] sm:$0xff]
    %v2559 = vld [vmem:[%s2494 + $0x200] sm:$0xff]
    %v2560 = vld [vmem:[%s2494 + $0x208] sm:$0xff]
    %v2561 = vld [vmem:[%s2494 + $0x210] sm:$0xff]
    %v2562 = vld [vmem:[%s2494 + $0x218] sm:$0xff]
    %v2563 = vld [vmem:[%s2494 + $0x220] sm:$0xff]
    %v2564 = vld [vmem:[%s2494 + $0x228] sm:$0xff]
    %v2565 = vld [vmem:[%s2494 + $0x230] sm:$0xff]
    %v2566 = vld [vmem:[%s2494 + $0x238] sm:$0xff]
    %2567 = vmatprep.subr.mxu0 %v2496
    %2568 = vmatpush1.msra.mxu0 %v2495
    %2569 = vmatprep.subr.mxu0 %v2499
    %2570 = vmatpush1.msra.mxu0 %v2498
    %2571 = vmatprep.subr.mxu0 %v2502
    %2572 = vmatpush1.msra.mxu0 %v2501
    %2573 = vmatprep.subr.mxu0 %v2505
    %2574 = vmatpush1.msra.mxu0 %v2504
    %2575 = vmatprep.subr.mxu0 %v2508
    %2576 = vmatpush1.msra.mxu0 %v2507
    %2577 = vmatprep.subr.mxu0 %v2511
    %2578 = vmatpush1.msra.mxu0 %v2510
    %2579 = vmatprep.subr.mxu0 %v2514
    %2580 = vmatpush1.msra.mxu0 %v2513
    %2581 = vmatprep.subr.mxu0 %v2517
    %2582 = vmatpush1.msra.mxu0 %v2516
    %2583 = vmatprep.subr.mxu0 %v2520
    %2584 = vmatpush1.msra.mxu0 %v2519
    %2585 = vmatprep.subr.mxu0 %v2523
    %2586 = vmatpush1.msra.mxu0 %v2522
    %2587 = vmatprep.subr.mxu0 %v2526
    %2588 = vmatpush1.msra.mxu0 %v2525
    %2589 = vmatprep.subr.mxu0 %v2529
    %2590 = vmatpush1.msra.mxu0 %v2528
    %2591 = vmatprep.subr.mxu0 %v2532
    %2592 = vmatpush1.msra.mxu0 %v2531
    %2593 = vmatprep.subr.mxu0 %v2535
    %2594 = vmatpush1.msra.mxu0 %v2534
    %2595 = vmatprep.subr.mxu0 %v2538
    %2596 = vmatpush1.msra.mxu0 %v2537
    %2597 = vmatprep.subr.mxu0 %v2541
    %2598 = vmatpush1.msra.mxu0 %v2540
    %2599 = vmatprep.subr.mxu0 %v2544
    %2600 = vmatpush1.msra.mxu0 %v2543
    %2601 = vmatprep.subr.mxu0 %v2547
    %2602 = vmatpush1.msra.mxu0 %v2546
    %2603 = vmatprep.subr.mxu0 %v2550
    %2604 = vmatpush1.msra.mxu0 %v2549
    %2605 = vmatprep.subr.mxu0 %v2553
    %2606 = vmatpush1.msra.mxu0 %v2552
    %2607 = vmatprep.subr.mxu0 %v2556
    %2608 = vmatpush1.msra.mxu0 %v2555
    %2609 = vmatprep.subr.mxu0 %v2559
    %2610 = vmatpush1.msra.mxu0 %v2558
    %2611 = vmatprep.subr.mxu0 %v2562
    %2612 = vmatpush1.msra.mxu0 %v2561
    %2613 = vmatprep.subr.mxu0 %v2565
    %2614 = vmatpush1.msra.mxu0 %v2564
    %2615 = vmatprep.subr.mxu0 0.0
    %2616 = vmatpush1.msra.mxu0 0.0
    %2617 = vmatprep.subr.mxu0 0.0
    %2618 = vmatpush1.msra.mxu0 0.0
    %2619 = vmatprep.subr.mxu0 0.0
    %2620 = vmatpush1.msra.mxu0 0.0
    %2621 = vmatprep.subr.mxu0 0.0
    %2622 = vmatpush1.msra.mxu0 0.0
    %2623 = vmatprep.subr.mxu0 0.0
    %2624 = vmatpush1.msra.mxu0 0.0
    %2625 = vmatprep.subr.mxu0 0.0
    %2626 = vmatpush1.msra.mxu0 0.0
    %2627 = vmatprep.subr.mxu0 0.0
    %2628 = vmatpush1.msra.mxu0 0.0
    %2629 = vmatprep.subr.mxu0 0.0
    %2630 = vmatpush1.msra.mxu0 0.0
    %2631 = vmatprep.mubr.f32.mxu0 %v2309
    %2632 = vmatmul.mubr.f32.gmra.mrb[0].mxu0 %v2213
    %v2633 = vpop.f32.mrb[0].mxu0
    %v2634 = vadd.f32 0.0, %v2633
    %v2635 = vpop.f32.mrb[0].mxu0
    %v2636 = vadd.f32 0.0, %v2635
    %2637 = vmatprep.mubr.f32.mxu0 %v2312
    %2638 = vmatmul.mubr.f32.gmra.mrb[0].mxu0 %v2219
    %v2639 = vpop.f32.mrb[0].mxu0
    %v2640 = vadd.f32 0.0, %v2639
    %v2641 = vpop.f32.mrb[0].mxu0
    %v2642 = vadd.f32 0.0, %v2641
    %2643 = vmatprep.mubr.f32.mxu0 %v2315
    %2644 = vmatmul.mubr.f32.gmra.mrb[0].mxu0 %v2225
    %v2645 = vpop.f32.mrb[0].mxu0
    %v2646 = vadd.f32 0.0, %v2645
    %v2647 = vpop.f32.mrb[0].mxu0
    %v2648 = vadd.f32 0.0, %v2647
    %2649 = vmatprep.mubr.f32.mxu0 %v2318
    %2650 = vmatmul.mubr.f32.gmra.mrb[0].mxu0 %v2231
    %v2651 = vpop.f32.mrb[0].mxu0
    %v2652 = vadd.f32 0.0, %v2651
    %v2653 = vpop.f32.mrb[0].mxu0
    %v2654 = vadd.f32 0.0, %v2653
    %2655 = vdwg.mxu0
    %2656 = vmatprep.subr.mxu0 0.0
    %2657 = vmatpush1.msra.mxu0 %v2497
    %2658 = vmatprep.subr.mxu0 0.0
    %2659 = vmatpush1.msra.mxu0 %v2500
    %2660 = vmatprep.subr.mxu0 0.0
    %2661 = vmatpush1.msra.mxu0 %v2503
    %2662 = vmatprep.subr.mxu0 0.0
    %2663 = vmatpush1.msra.mxu0 %v2506
    %2664 = vmatprep.subr.mxu0 0.0
    %2665 = vmatpush1.msra.mxu0 %v2509
    %2666 = vmatprep.subr.mxu0 0.0
    %2667 = vmatpush1.msra.mxu0 %v2512
    %2668 = vmatprep.subr.mxu0 0.0
    %2669 = vmatpush1.msra.mxu0 %v2515
    %2670 = vmatprep.subr.mxu0 0.0
    %2671 = vmatpush1.msra.mxu0 %v2518
    %2672 = vmatprep.subr.mxu0 0.0
    %2673 = vmatpush1.msra.mxu0 %v2521
    %2674 = vmatprep.subr.mxu0 0.0
    %2675 = vmatpush1.msra.mxu0 %v2524
    %2676 = vmatprep.subr.mxu0 0.0
    %2677 = vmatpush1.msra.mxu0 %v2527
    %2678 = vmatprep.subr.mxu0 0.0
    %2679 = vmatpush1.msra.mxu0 %v2530
    %2680 = vmatprep.subr.mxu0 0.0
    %2681 = vmatpush1.msra.mxu0 %v2533
    %2682 = vmatprep.subr.mxu0 0.0
    %2683 = vmatpush1.msra.mxu0 %v2536
    %2684 = vmatprep.subr.mxu0 0.0
    %2685 = vmatpush1.msra.mxu0 %v2539
    %2686 = vmatprep.subr.mxu0 0.0
    %2687 = vmatpush1.msra.mxu0 %v2542
    %2688 = vmatprep.subr.mxu0 0.0
    %2689 = vmatpush1.msra.mxu0 %v2545
    %2690 = vmatprep.subr.mxu0 0.0
    %2691 = vmatpush1.msra.mxu0 %v2548
    %2692 = vmatprep.subr.mxu0 0.0
    %2693 = vmatpush1.msra.mxu0 %v2551
    %2694 = vmatprep.subr.mxu0 0.0
    %2695 = vmatpush1.msra.mxu0 %v2554
    %2696 = vmatprep.subr.mxu0 0.0
    %2697 = vmatpush1.msra.mxu0 %v2557
    %2698 = vmatprep.subr.mxu0 0.0
    %2699 = vmatpush1.msra.mxu0 %v2560
    %2700 = vmatprep.subr.mxu0 0.0
    %2701 = vmatpush1.msra.mxu0 %v2563
    %2702 = vmatprep.subr.mxu0 0.0
    %2703 = vmatpush1.msra.mxu0 %v2566
    %2704 = vmatprep.subr.mxu0 0.0
    %2705 = vmatpush1.msra.mxu0 0.0
    %2706 = vmatprep.subr.mxu0 0.0
    %2707 = vmatpush1.msra.mxu0 0.0
    %2708 = vmatprep.subr.mxu0 0.0
    %2709 = vmatpush1.msra.mxu0 0.0
    %2710 = vmatprep.subr.mxu0 0.0
    %2711 = vmatpush1.msra.mxu0 0.0
    %2712 = vmatprep.subr.mxu0 0.0
    %2713 = vmatpush1.msra.mxu0 0.0
    %2714 = vmatprep.subr.mxu0 0.0
    %2715 = vmatpush1.msra.mxu0 0.0
    %2716 = vmatprep.subr.mxu0 0.0
    %2717 = vmatpush1.msra.mxu0 0.0
    %2718 = vmatprep.subr.mxu0 0.0
    %2719 = vmatpush1.msra.mxu0 0.0
    %2720 = vmatprep.mubr.f32.mxu0 %v2309
    %2721 = vmatmul.mubr.f32.gmra.mrb[0].mxu0 %v2213
    %v2722 = vpop.f32.mrb[0].mxu0
    %v2723 = vadd.f32 0.0, %v2722
    %v2724 = vpop.f32.mrb[0].mxu0
    %2725 = vmatprep.mubr.f32.mxu0 %v2312
    %2726 = vmatmul.mubr.f32.gmra.mrb[0].mxu0 %v2219
    %v2727 = vpop.f32.mrb[0].mxu0
    %v2728 = vadd.f32 0.0, %v2727
    %v2729 = vpop.f32.mrb[0].mxu0
    %2730 = vmatprep.mubr.f32.mxu0 %v2315
    %2731 = vmatmul.mubr.f32.gmra.mrb[0].mxu0 %v2225
    %v2732 = vpop.f32.mrb[0].mxu0
    %v2733 = vadd.f32 0.0, %v2732
    %v2734 = vpop.f32.mrb[0].mxu0
    %2735 = vmatprep.mubr.f32.mxu0 %v2318
    %2736 = vmatmul.mubr.f32.gmra.mrb[0].mxu0 %v2231
    %v2737 = vpop.f32.mrb[0].mxu0
    %v2738 = vadd.f32 0.0, %v2737
    %v2739 = vpop.f32.mrb[0].mxu0
    %2740 = vdwg.mxu0
    %v2753 = vrot.slane %v2634, 1
    %v2754 = vrot.slane %v2640, 1
    %v2755 = vsel %vm903, %v2753, %v2754
    %v2756 = vrot.slane %v2636, 1
    %v2757 = vrot.slane %v2642, 1
    %v2758 = vsel %vm903, %v2756, %v2757
    %v2759 = vrot.slane %v2723, 1
    %v2760 = vrot.slane %v2728, 1
    %v2761 = vsel %vm903, %v2759, %v2760
    %v2762 = vrot.slane %v2646, 1
    %v2763 = vsel %vm903, %v2754, %v2762
    %v2764 = vrot.slane %v2648, 1
    %v2765 = vsel %vm903, %v2757, %v2764
    %v2766 = vrot.slane %v2733, 1
    %v2767 = vsel %vm903, %v2760, %v2766
    %v2768 = vrot.slane %v2652, 1
    %v2769 = vsel %vm903, %v2762, %v2768
    %v2770 = vrot.slane %v2654, 1
    %v2771 = vsel %vm903, %v2764, %v2770
    %v2772 = vrot.slane %v2738, 1
    %v2773 = vsel %vm903, %v2766, %v2772
    %v2786 = vadd.f32 %v2387, %v2755
    %v2787 = vadd.f32 %v2389, %v2758
    %v2788 = vadd.f32 %v2476, %v2761
    %v2789 = vadd.f32 %v2393, %v2763
    %v2790 = vadd.f32 %v2395, %v2765
    %v2791 = vadd.f32 %v2481, %v2767
    %v2792 = vadd.f32 %v2399, %v2769
    %v2793 = vadd.f32 %v2401, %v2771
    %v2794 = vadd.f32 %v2486, %v2773
    %v2795 = vadd.f32 %v2405, %v2768
    %v2796 = vadd.f32 %v2407, %v2770
    %v2797 = vadd.f32 %v2491, %v2772
    %v2798 = vld [vmem:[#allocation7] sm:$0x7]
    %v2800 = vlaneseq
    %v2801 = vshrl.u32 %v2800, 7
    %v2802 = vsub.s32 0, %v2801
    %v2803 = vrot.slane %v2798, %v2802
    %v2804 = vlaneseq
    %v2805 = vshrl.u32 %v2804, 7
    %v2806 = vsub.s32 1, %v2805
    %v2807 = vrot.slane %v2798, %v2806
    %v2808 = vlaneseq
    %v2809 = vshrl.u32 %v2808, 7
    %v2810 = vsub.s32 2, %v2809
    %v2811 = vrot.slane %v2798, %v2810
    %v2815 = vadd.f32 %v2786, %v2803
    %v2816 = vadd.f32 %v2787, %v2807
    %v2817 = vadd.f32 %v2788, %v2811
    %v2818 = vadd.f32 %v2789, %v2803
    %v2819 = vadd.f32 %v2790, %v2807
    %v2820 = vadd.f32 %v2791, %v2811
    %v2821 = vadd.f32 %v2792, %v2803
    %v2822 = vadd.f32 %v2793, %v2807
    %v2823 = vadd.f32 %v2794, %v2811
    %v2824 = vadd.f32 %v2795, %v2803
    %v2825 = vadd.f32 %v2796, %v2807
    %v2826 = vadd.f32 %v2797, %v2811
    %v2827 = vmax.f32 %v2815, 0.0
    %v2828 = vmax.f32 %v2816, 0.0
    %v2829 = vmax.f32 %v2817, 0.0
    %v2830 = vmax.f32 %v2818, 0.0
    %v2831 = vmax.f32 %v2819, 0.0
    %v2832 = vmax.f32 %v2820, 0.0
    %v2833 = vmax.f32 %v2821, 0.0
    %v2834 = vmax.f32 %v2822, 0.0
    %v2835 = vmax.f32 %v2823, 0.0
    %v2836 = vmax.f32 %v2824, 0.0
    %v2837 = vmax.f32 %v2825, 0.0
    %v2838 = vmax.f32 %v2826, 0.0
    %2851 = vrot.lane.b32.xlu0 %v2827, 127
    %v2852 = vpop.permute.xlu0 %2851
    %2853 = vrot.lane.b32.xlu0 %v2828, 127
    %v2854 = vpop.permute.xlu0 %2853
    %2855 = vrot.lane.b32.xlu0 %v2829, 127
    %v2856 = vpop.permute.xlu0 %2855
    %2857 = vrot.lane.b32.xlu0 %v2830, 127
    %v2858 = vpop.permute.xlu0 %2857
    %2859 = vrot.lane.b32.xlu0 %v2831, 127
    %v2860 = vpop.permute.xlu0 %2859
    %2861 = vrot.lane.b32.xlu0 %v2832, 127
    %v2862 = vpop.permute.xlu0 %2861
    %2863 = vrot.lane.b32.xlu0 %v2833, 127
    %v2864 = vpop.permute.xlu0 %2863
    %2865 = vrot.lane.b32.xlu0 %v2834, 127
    %v2866 = vpop.permute.xlu0 %2865
    %2867 = vrot.lane.b32.xlu0 %v2835, 127
    %v2868 = vpop.permute.xlu0 %2867
    %2869 = vrot.lane.b32.xlu0 %v2836, 127
    %v2870 = vpop.permute.xlu0 %2869
    %2871 = vrot.lane.b32.xlu0 %v2837, 127
    %v2872 = vpop.permute.xlu0 %2871
    %2873 = vrot.lane.b32.xlu0 %v2838, 127
    %v2874 = vpop.permute.xlu0 %2873
    %v2875 = vsel %vm1246, %v2852, %v2854
    %v2876 = vsel %vm1246, %v2854, %v2856
    %v2877 = vsel %vm1246, %v2858, %v2860
    %v2878 = vsel %vm1246, %v2860, %v2862
    %v2879 = vsel %vm1246, %v2864, %v2866
    %v2880 = vsel %vm1246, %v2866, %v2868
    %v2881 = vsel %vm1246, %v2870, %v2872
    %v2882 = vsel %vm1246, %v2872, %v2874
    %v2895 = vmax.f32 %v2827, %v2875
    %v2896 = vmax.f32 %v2828, %v2876
    %v2897 = vmax.f32 %v2829, %v2856
    %v2898 = vmax.f32 %v2830, %v2877
    %v2899 = vmax.f32 %v2831, %v2878
    %v2900 = vmax.f32 %v2832, %v2862
    %v2901 = vmax.f32 %v2833, %v2879
    %v2902 = vmax.f32 %v2834, %v2880
    %v2903 = vmax.f32 %v2835, %v2868
    %v2904 = vmax.f32 %v2836, %v2881
    %v2905 = vmax.f32 %v2837, %v2882
    %v2906 = vmax.f32 %v2838, %v2874
    %v2919 = vrot.slane %v2895, 1
    %v2920 = vrot.slane %v2898, 1
    %v2921 = vsel %vm903, %v2919, %v2920
    %v2922 = vrot.slane %v2896, 1
    %v2923 = vrot.slane %v2899, 1
    %v2924 = vsel %vm903, %v2922, %v2923
    %v2925 = vrot.slane %v2897, 1
    %v2926 = vrot.slane %v2900, 1
    %v2927 = vsel %vm903, %v2925, %v2926
    %v2928 = vrot.slane %v2901, 1
    %v2929 = vsel %vm903, %v2920, %v2928
    %v2930 = vrot.slane %v2902, 1
    %v2931 = vsel %vm903, %v2923, %v2930
    %v2932 = vrot.slane %v2903, 1
    %v2933 = vsel %vm903, %v2926, %v2932
    %v2934 = vrot.slane %v2904, 1
    %v2935 = vsel %vm903, %v2928, %v2934
    %v2936 = vrot.slane %v2905, 1
    %v2937 = vsel %vm903, %v2930, %v2936
    %v2938 = vrot.slane %v2906, 1
    %v2939 = vsel %vm903, %v2932, %v2938
    %v2952 = vmax.f32 %v2895, %v2921
    %v2953 = vmax.f32 %v2896, %v2924
    %v2954 = vmax.f32 %v2897, %v2927
    %v2955 = vmax.f32 %v2898, %v2929
    %v2956 = vmax.f32 %v2899, %v2931
    %v2957 = vmax.f32 %v2900, %v2933
    %v2958 = vmax.f32 %v2901, %v2935
    %v2959 = vmax.f32 %v2902, %v2937
    %v2960 = vmax.f32 %v2903, %v2939
    %v2961 = vmax.f32 %v2904, %v2934
    %v2962 = vmax.f32 %v2905, %v2936
    %v2963 = vmax.f32 %v2906, %v2938
    %v2964 = vld [vmem:[#allocation8] sm:$0xff]
    %v2965 = vld [vmem:[#allocation8 + $0x8] sm:$0x3f]
    %vm2966 = vcmask 244736
    %v2968 = vsel %vm2966, %v2964, 0
    %v2971 = vsel %vm2966, %v2965, 0
    %vm2973 = vcmask 1045504
    %v2975 = vsel %vm2973, %v2961, 0
    %v2978 = vsel %vm2973, %v2962, 0
    %v2981 = vsel %vm2973, %v2963, 0
    %2983 = vmatprep.subr.mxu0 %v2953
    %2984 = vmatpush1.msra.mxu0 %v2952
    %2985 = vmatprep.subr.mxu0 %v2956
    %2986 = vmatpush1.msra.mxu0 %v2955
    %2987 = vmatprep.subr.mxu0 %v2959
    %2988 = vmatpush1.msra.mxu0 %v2958
    %2989 = vmatprep.subr.mxu0 %v2978
    %2990 = vmatpush1.msra.mxu0 %v2975
    %2991 = vmatprep.subr.mxu0 0.0
    %2992 = vmatpush1.msra.mxu0 0.0
    %2993 = vmatprep.subr.mxu0 0.0
    %2994 = vmatpush1.msra.mxu0 0.0
    %2995 = vmatprep.subr.mxu0 0.0
    %2996 = vmatpush1.msra.mxu0 0.0
    %2997 = vmatprep.subr.mxu0 0.0
    %2998 = vmatpush1.msra.mxu0 0.0
    %2999 = vmatprep.subr.mxu0 0.0
    %3000 = vmatpush1.msra.mxu0 0.0
    %3001 = vmatprep.subr.mxu0 0.0
    %3002 = vmatpush1.msra.mxu0 0.0
    %3003 = vmatprep.subr.mxu0 0.0
    %3004 = vmatpush1.msra.mxu0 0.0
    %3005 = vmatprep.subr.mxu0 0.0
    %3006 = vmatpush1.msra.mxu0 0.0
    %3007 = vmatprep.subr.mxu0 0.0
    %3008 = vmatpush1.msra.mxu0 0.0
    %3009 = vmatprep.subr.mxu0 0.0
    %3010 = vmatpush1.msra.mxu0 0.0
    %3011 = vmatprep.subr.mxu0 0.0
    %3012 = vmatpush1.msra.mxu0 0.0
    %3013 = vmatprep.subr.mxu0 0.0
    %3014 = vmatpush1.msra.mxu0 0.0
    %3015 = vmatprep.subr.mxu0 0.0
    %3016 = vmatpush1.msra.mxu0 0.0
    %3017 = vmatprep.subr.mxu0 0.0
    %3018 = vmatpush1.msra.mxu0 0.0
    %3019 = vmatprep.subr.mxu0 0.0
    %3020 = vmatpush1.msra.mxu0 0.0
    %3021 = vmatprep.subr.mxu0 0.0
    %3022 = vmatpush1.msra.mxu0 0.0
    %3023 = vmatprep.subr.mxu0 0.0
    %3024 = vmatpush1.msra.mxu0 0.0
    %3025 = vmatprep.subr.mxu0 0.0
    %3026 = vmatpush1.msra.mxu0 0.0
    %3027 = vmatprep.subr.mxu0 0.0
    %3028 = vmatpush1.msra.mxu0 0.0
    %3029 = vmatprep.subr.mxu0 0.0
    %3030 = vmatpush1.msra.mxu0 0.0
    %3031 = vmatprep.subr.mxu0 0.0
    %3032 = vmatpush1.msra.mxu0 0.0
    %3033 = vmatprep.subr.mxu0 0.0
    %3034 = vmatpush1.msra.mxu0 0.0
    %3035 = vmatprep.subr.mxu0 0.0
    %3036 = vmatpush1.msra.mxu0 0.0
    %3037 = vmatprep.subr.mxu0 0.0
    %3038 = vmatpush1.msra.mxu0 0.0
    %3039 = vmatprep.subr.mxu0 0.0
    %3040 = vmatpush1.msra.mxu0 0.0
    %3041 = vmatprep.subr.mxu0 0.0
    %3042 = vmatpush1.msra.mxu0 0.0
    %3043 = vmatprep.subr.mxu0 0.0
    %3044 = vmatpush1.msra.mxu0 0.0
    %3045 = vmatprep.subr.mxu0 0.0
    %3046 = vmatpush1.msra.mxu0 0.0
    %3047 = vmatprep.mubr.f32.mxu0 0.0
    %3048 = vmatmul.mubr.f32.gmra.mrb[0].mxu0 %v2968
    %v3049 = vpop.f32.mrb[0].mxu0
    %v3050 = vadd.f32 0.0, %v3049
    %v3051 = vpop.f32.mrb[0].mxu0
    %v3052 = vadd.f32 0.0, %v3051
    %3053 = vmatprep.mubr.f32.mxu0 0.0
    %3054 = vmatmul.mubr.f32.gmra.mrb[0].mxu0 %v2971
    %v3055 = vpop.f32.mrb[0].mxu0
    %v3056 = vadd.f32 0.0, %v3055
    %v3057 = vpop.f32.mrb[0].mxu0
    %v3058 = vadd.f32 0.0, %v3057
    %3059 = vdwg.mxu0
    %3060 = vmatprep.subr.mxu0 0.0
    %3061 = vmatpush1.msra.mxu0 %v2954
    %3062 = vmatprep.subr.mxu0 0.0
    %3063 = vmatpush1.msra.mxu0 %v2957
    %3064 = vmatprep.subr.mxu0 0.0
    %3065 = vmatpush1.msra.mxu0 %v2960
    %3066 = vmatprep.subr.mxu0 0.0
    %3067 = vmatpush1.msra.mxu0 %v2981
    %3068 = vmatprep.subr.mxu0 0.0
    %3069 = vmatpush1.msra.mxu0 0.0
    %3070 = vmatprep.subr.mxu0 0.0
    %3071 = vmatpush1.msra.mxu0 0.0
    %3072 = vmatprep.subr.mxu0 0.0
    %3073 = vmatpush1.msra.mxu0 0.0
    %3074 = vmatprep.subr.mxu0 0.0
    %3075 = vmatpush1.msra.mxu0 0.0
    %3076 = vmatprep.subr.mxu0 0.0
    %3077 = vmatpush1.msra.mxu0 0.0
    %3078 = vmatprep.subr.mxu0 0.0
    %3079 = vmatpush1.msra.mxu0 0.0
    %3080 = vmatprep.subr.mxu0 0.0
    %3081 = vmatpush1.msra.mxu0 0.0
    %3082 = vmatprep.subr.mxu0 0.0
    %3083 = vmatpush1.msra.mxu0 0.0
    %3084 = vmatprep.subr.mxu0 0.0
    %3085 = vmatpush1.msra.mxu0 0.0
    %3086 = vmatprep.subr.mxu0 0.0
    %3087 = vmatpush1.msra.mxu0 0.0
    %3088 = vmatprep.subr.mxu0 0.0
    %3089 = vmatpush1.msra.mxu0 0.0
    %3090 = vmatprep.subr.mxu0 0.0
    %3091 = vmatpush1.msra.mxu0 0.0
    %3092 = vmatprep.subr.mxu0 0.0
    %3093 = vmatpush1.msra.mxu0 0.0
    %3094 = vmatprep.subr.mxu0 0.0
    %3095 = vmatpush1.msra.mxu0 0.0
    %3096 = vmatprep.subr.mxu0 0.0
    %3097 = vmatpush1.msra.mxu0 0.0
    %3098 = vmatprep.subr.mxu0 0.0
    %3099 = vmatpush1.msra.mxu0 0.0
    %3100 = vmatprep.subr.mxu0 0.0
    %3101 = vmatpush1.msra.mxu0 0.0
    %3102 = vmatprep.subr.mxu0 0.0
    %3103 = vmatpush1.msra.mxu0 0.0
    %3104 = vmatprep.subr.mxu0 0.0
    %3105 = vmatpush1.msra.mxu0 0.0
    %3106 = vmatprep.subr.mxu0 0.0
    %3107 = vmatpush1.msra.mxu0 0.0
    %3108 = vmatprep.subr.mxu0 0.0
    %3109 = vmatpush1.msra.mxu0 0.0
    %3110 = vmatprep.subr.mxu0 0.0
    %3111 = vmatpush1.msra.mxu0 0.0
    %3112 = vmatprep.subr.mxu0 0.0
    %3113 = vmatpush1.msra.mxu0 0.0
    %3114 = vmatprep.subr.mxu0 0.0
    %3115 = vmatpush1.msra.mxu0 0.0
    %3116 = vmatprep.subr.mxu0 0.0
    %3117 = vmatpush1.msra.mxu0 0.0
    %3118 = vmatprep.subr.mxu0 0.0
    %3119 = vmatpush1.msra.mxu0 0.0
    %3120 = vmatprep.subr.mxu0 0.0
    %3121 = vmatpush1.msra.mxu0 0.0
    %3122 = vmatprep.subr.mxu0 0.0
    %3123 = vmatpush1.msra.mxu0 0.0
    %3124 = vmatprep.mubr.f32.mxu0 0.0
    %3125 = vmatmul.mubr.f32.gmra.mrb[0].mxu0 %v2968
    %v3126 = vpop.f32.mrb[0].mxu0
    %v3127 = vadd.f32 0.0, %v3126
    %v3128 = vpop.f32.mrb[0].mxu0
    %3129 = vmatprep.mubr.f32.mxu0 0.0
    %3130 = vmatmul.mubr.f32.gmra.mrb[0].mxu0 %v2971
    %v3131 = vpop.f32.mrb[0].mxu0
    %v3132 = vadd.f32 0.0, %v3131
    %v3133 = vpop.f32.mrb[0].mxu0
    %3134 = vdwg.mxu0
    %v3135 = vld [vmem:[#allocation10] sm:$0xff]
    %v3136 = vld [vmem:[#allocation10 + $0x8] sm:$0xff]
    %v3137 = vld [vmem:[#allocation10 + $0x10] sm:$0xff]
    %v3138 = vld [vmem:[#allocation10 + $0x18] sm:$0xff]
    %v3139 = vld [vmem:[#allocation10 + $0x20] sm:$0xff]
    %v3140 = vld [vmem:[#allocation10 + $0x28] sm:$0xff]
    %v3141 = vld [vmem:[#allocation10 + $0x30] sm:$0xff]
    %v3142 = vld [vmem:[#allocation10 + $0x38] sm:$0xff]
    %v3143 = vld [vmem:[#allocation10 + $0x40] sm:$0xff]
    %v3144 = vld [vmem:[#allocation10 + $0x48] sm:$0xff]
    %v3145 = vld [vmem:[#allocation10 + $0x50] sm:$0xff]
    %v3146 = vld [vmem:[#allocation10 + $0x58] sm:$0xff]
    %v3147 = vld [vmem:[#allocation10 + $0x60] sm:$0xff]
    %v3148 = vld [vmem:[#allocation10 + $0x68] sm:$0xff]
    %v3149 = vld [vmem:[#allocation10 + $0x70] sm:$0xff]
    %v3150 = vld [vmem:[#allocation10 + $0x78] sm:$0xff]
    %v3151 = vld [vmem:[#allocation10 + $0x80] sm:$0xff]
    %v3152 = vld [vmem:[#allocation10 + $0x88] sm:$0xff]
    %v3153 = vld [vmem:[#allocation10 + $0x90] sm:$0xff]
    %v3154 = vld [vmem:[#allocation10 + $0x98] sm:$0xff]
    %v3155 = vld [vmem:[#allocation10 + $0xa0] sm:$0xff]
    %v3156 = vld [vmem:[#allocation10 + $0xa8] sm:$0xff]
    %v3157 = vld [vmem:[#allocation10 + $0xb0] sm:$0xff]
    %v3158 = vld [vmem:[#allocation10 + $0xb8] sm:$0xff]
    %v3159 = vld [vmem:[#allocation10 + $0xc0] sm:$0xff]
    %v3160 = vld [vmem:[#allocation10 + $0xc8] sm:$0xff]
    %v3161 = vld [vmem:[#allocation10 + $0xd0] sm:$0xff]
    %v3162 = vld [vmem:[#allocation10 + $0xd8] sm:$0xff]
    %v3163 = vld [vmem:[#allocation10 + $0xe0] sm:$0xff]
    %v3164 = vld [vmem:[#allocation10 + $0xe8] sm:$0xff]
    %v3165 = vld [vmem:[#allocation10 + $0xf0] sm:$0xff]
    %v3166 = vld [vmem:[#allocation10 + $0xf8] sm:$0xff]
    %v3167 = vld [vmem:[#allocation10 + $0x100] sm:$0x7f]
    %vm3168 = vcmask 56320
    %v3170 = vsel %vm3168, %v3127, 0
    %v3173 = vsel %vm3168, %v3132, 0
    %v3176 = vsel %vm903, %v3167, 0
    %3178 = vmatprep.subr.mxu0 0.0
    %3179 = vmatpush1.msra.mxu0 %v3135
    %3180 = vmatprep.subr.mxu0 0.0
    %3181 = vmatpush1.msra.mxu0 %v3136
    %3182 = vmatprep.subr.mxu0 0.0
    %3183 = vmatpush1.msra.mxu0 %v3137
    %3184 = vmatprep.subr.mxu0 0.0
    %3185 = vmatpush1.msra.mxu0 %v3138
    %3186 = vmatprep.subr.mxu0 0.0
    %3187 = vmatpush1.msra.mxu0 %v3139
    %3188 = vmatprep.subr.mxu0 0.0
    %3189 = vmatpush1.msra.mxu0 %v3140
    %3190 = vmatprep.subr.mxu0 0.0
    %3191 = vmatpush1.msra.mxu0 %v3141
    %3192 = vmatprep.subr.mxu0 0.0
    %3193 = vmatpush1.msra.mxu0 %v3142
    %3194 = vmatprep.subr.mxu0 0.0
    %3195 = vmatpush1.msra.mxu0 %v3143
    %3196 = vmatprep.subr.mxu0 0.0
    %3197 = vmatpush1.msra.mxu0 %v3144
    %3198 = vmatprep.subr.mxu0 0.0
    %3199 = vmatpush1.msra.mxu0 %v3145
    %3200 = vmatprep.subr.mxu0 0.0
    %3201 = vmatpush1.msra.mxu0 %v3146
    %3202 = vmatprep.subr.mxu0 0.0
    %3203 = vmatpush1.msra.mxu0 %v3147
    %3204 = vmatprep.subr.mxu0 0.0
    %3205 = vmatpush1.msra.mxu0 %v3148
    %3206 = vmatprep.subr.mxu0 0.0
    %3207 = vmatpush1.msra.mxu0 %v3149
    %3208 = vmatprep.subr.mxu0 0.0
    %3209 = vmatpush1.msra.mxu0 %v3150
    %3210 = vmatprep.subr.mxu0 0.0
    %3211 = vmatpush1.msra.mxu0 %v3151
    %3212 = vmatprep.subr.mxu0 0.0
    %3213 = vmatpush1.msra.mxu0 %v3152
    %3214 = vmatprep.subr.mxu0 0.0
    %3215 = vmatpush1.msra.mxu0 %v3153
    %3216 = vmatprep.subr.mxu0 0.0
    %3217 = vmatpush1.msra.mxu0 %v3154
    %3218 = vmatprep.subr.mxu0 0.0
    %3219 = vmatpush1.msra.mxu0 %v3155
    %3220 = vmatprep.subr.mxu0 0.0
    %3221 = vmatpush1.msra.mxu0 %v3156
    %3222 = vmatprep.subr.mxu0 0.0
    %3223 = vmatpush1.msra.mxu0 %v3157
    %3224 = vmatprep.subr.mxu0 0.0
    %3225 = vmatpush1.msra.mxu0 %v3158
    %3226 = vmatprep.subr.mxu0 0.0
    %3227 = vmatpush1.msra.mxu0 %v3159
    %3228 = vmatprep.subr.mxu0 0.0
    %3229 = vmatpush1.msra.mxu0 %v3160
    %3230 = vmatprep.subr.mxu0 0.0
    %3231 = vmatpush1.msra.mxu0 %v3161
    %3232 = vmatprep.subr.mxu0 0.0
    %3233 = vmatpush1.msra.mxu0 %v3162
    %3234 = vmatprep.subr.mxu0 0.0
    %3235 = vmatpush1.msra.mxu0 %v3163
    %3236 = vmatprep.subr.mxu0 0.0
    %3237 = vmatpush1.msra.mxu0 %v3164
    %3238 = vmatprep.subr.mxu0 0.0
    %3239 = vmatpush1.msra.mxu0 %v3165
    %3240 = vmatprep.subr.mxu0 0.0
    %3241 = vmatpush1.msra.mxu0 %v3166
    %3242 = vmatprep.mubr.f32.mxu0 %v3052
    %3243 = vmatmul.mubr.f32.gmra.mrb[0].mxu0 %v3050
    %v3244 = vpop.f32.mrb[0].mxu0
    %v3245 = vadd.f32 0.0, %v3244
    %v3246 = vpop.f32.mrb[0].mxu0
    %3247 = vmatprep.mubr.f32.mxu0 %v3058
    %3248 = vmatmul.mubr.f32.gmra.mrb[0].mxu0 %v3056
    %v3249 = vpop.f32.mrb[0].mxu0
    %v3250 = vadd.f32 0.0, %v3249
    %v3251 = vpop.f32.mrb[0].mxu0
    %3252 = vdwg.mxu0
    %3253 = vmatprep.subr.mxu0 0.0
    %3254 = vmatpush1.msra.mxu0 %v3176
    %3255 = vmatprep.subr.mxu0 0.0
    %3256 = vmatpush1.msra.mxu0 0.0
    %3257 = vmatprep.subr.mxu0 0.0
    %3258 = vmatpush1.msra.mxu0 0.0
    %3259 = vmatprep.subr.mxu0 0.0
    %3260 = vmatpush1.msra.mxu0 0.0
    %3261 = vmatprep.subr.mxu0 0.0
    %3262 = vmatpush1.msra.mxu0 0.0
    %3263 = vmatprep.subr.mxu0 0.0
    %3264 = vmatpush1.msra.mxu0 0.0
    %3265 = vmatprep.subr.mxu0 0.0
    %3266 = vmatpush1.msra.mxu0 0.0
    %3267 = vmatprep.subr.mxu0 0.0
    %3268 = vmatpush1.msra.mxu0 0.0
    %3269 = vmatprep.subr.mxu0 0.0
    %3270 = vmatpush1.msra.mxu0 0.0
    %3271 = vmatprep.subr.mxu0 0.0
    %3272 = vmatpush1.msra.mxu0 0.0
    %3273 = vmatprep.subr.mxu0 0.0
    %3274 = vmatpush1.msra.mxu0 0.0
    %3275 = vmatprep.subr.mxu0 0.0
    %3276 = vmatpush1.msra.mxu0 0.0
    %3277 = vmatprep.subr.mxu0 0.0
    %3278 = vmatpush1.msra.mxu0 0.0
    %3279 = vmatprep.subr.mxu0 0.0
    %3280 = vmatpush1.msra.mxu0 0.0
    %3281 = vmatprep.subr.mxu0 0.0
    %3282 = vmatpush1.msra.mxu0 0.0
    %3283 = vmatprep.subr.mxu0 0.0
    %3284 = vmatpush1.msra.mxu0 0.0
    %3285 = vmatprep.subr.mxu0 0.0
    %3286 = vmatpush1.msra.mxu0 0.0
    %3287 = vmatprep.subr.mxu0 0.0
    %3288 = vmatpush1.msra.mxu0 0.0
    %3289 = vmatprep.subr.mxu0 0.0
    %3290 = vmatpush1.msra.mxu0 0.0
    %3291 = vmatprep.subr.mxu0 0.0
    %3292 = vmatpush1.msra.mxu0 0.0
    %3293 = vmatprep.subr.mxu0 0.0
    %3294 = vmatpush1.msra.mxu0 0.0
    %3295 = vmatprep.subr.mxu0 0.0
    %3296 = vmatpush1.msra.mxu0 0.0
    %3297 = vmatprep.subr.mxu0 0.0
    %3298 = vmatpush1.msra.mxu0 0.0
    %3299 = vmatprep.subr.mxu0 0.0
    %3300 = vmatpush1.msra.mxu0 0.0
    %3301 = vmatprep.subr.mxu0 0.0
    %3302 = vmatpush1.msra.mxu0 0.0
    %3303 = vmatprep.subr.mxu0 0.0
    %3304 = vmatpush1.msra.mxu0 0.0
    %3305 = vmatprep.subr.mxu0 0.0
    %3306 = vmatpush1.msra.mxu0 0.0
    %3307 = vmatprep.subr.mxu0 0.0
    %3308 = vmatpush1.msra.mxu0 0.0
    %3309 = vmatprep.subr.mxu0 0.0
    %3310 = vmatpush1.msra.mxu0 0.0
    %3311 = vmatprep.subr.mxu0 0.0
    %3312 = vmatpush1.msra.mxu0 0.0
    %3313 = vmatprep.subr.mxu0 0.0
    %3314 = vmatpush1.msra.mxu0 0.0
    %3315 = vmatprep.subr.mxu0 0.0
    %3316 = vmatpush1.msra.mxu0 0.0
    %3317 = vmatprep.mubr.f32.mxu0 0.0
    %3318 = vmatmul.mubr.f32.gmra.mrb[0].mxu0 %v3170
    %v3319 = vpop.f32.mrb[0].mxu0
    %v3320 = vadd.f32 %v3245, %v3319
    %v3321 = vpop.f32.mrb[0].mxu0
    %3322 = vmatprep.mubr.f32.mxu0 0.0
    %3323 = vmatmul.mubr.f32.gmra.mrb[0].mxu0 %v3173
    %v3324 = vpop.f32.mrb[0].mxu0
    %v3325 = vadd.f32 %v3250, %v3324
    %v3326 = vpop.f32.mrb[0].mxu0
    %3327 = vdwg.mxu0
    %v3328 = vld [vmem:[%s9] sm:$0xff]
    %v3329 = vld [vmem:[%s9 + $0x8] sm:$0xff]
    %v3330 = vld [vmem:[%s9 + $0x10] sm:$0xff]
    %v3331 = vld [vmem:[%s9 + $0x18] sm:$0xff]
    %v3332 = vld [vmem:[%s9 + $0x20] sm:$0xff]
    %v3333 = vld [vmem:[%s9 + $0x28] sm:$0xff]
    %v3334 = vld [vmem:[%s9 + $0x30] sm:$0xff]
    %v3335 = vld [vmem:[%s9 + $0x38] sm:$0xff]
    %v3336 = vld [vmem:[%s9 + $0x40] sm:$0xff]
    %v3337 = vld [vmem:[%s9 + $0x48] sm:$0xff]
    %v3338 = vld [vmem:[%s9 + $0x50] sm:$0xff]
    %v3339 = vld [vmem:[%s9 + $0x58] sm:$0xff]
    %v3340 = vld [vmem:[%s9 + $0x60] sm:$0xff]
    %v3341 = vld [vmem:[%s9 + $0x68] sm:$0xff]
    %v3342 = vld [vmem:[%s9 + $0x70] sm:$0xff]
    %v3343 = vld [vmem:[%s9 + $0x78] sm:$0xff]
    %v3344 = vld [vmem:[%s9 + $0x80] sm:$0xff]
    %v3345 = vld [vmem:[%s9 + $0x88] sm:$0xff]
    %v3346 = vld [vmem:[%s9 + $0x90] sm:$0xff]
    %v3347 = vld [vmem:[%s9 + $0x98] sm:$0xff]
    %v3348 = vld [vmem:[%s9 + $0xa0] sm:$0xff]
    %v3349 = vld [vmem:[%s9 + $0xa8] sm:$0xff]
    %v3350 = vld [vmem:[%s9 + $0xb0] sm:$0xff]
    %v3351 = vld [vmem:[%s9 + $0xb8] sm:$0xff]
    %v3352 = vld [vmem:[%s9 + $0xc0] sm:$0xff]
    %v3353 = vld [vmem:[%s9 + $0xc8] sm:$0xff]
    %v3354 = vld [vmem:[%s9 + $0xd0] sm:$0xff]
    %v3355 = vld [vmem:[%s9 + $0xd8] sm:$0xff]
    %v3356 = vld [vmem:[%s9 + $0xe0] sm:$0xff]
    %v3357 = vld [vmem:[%s9 + $0xe8] sm:$0xff]
    %v3358 = vld [vmem:[%s9 + $0xf0] sm:$0xff]
    %v3359 = vld [vmem:[%s9 + $0xf8] sm:$0xff]
    %3360 = vmatprep.subr.mxu0 %v3329
    %3361 = vmatpush1.msra.mxu0 %v3328
    %3362 = vmatprep.subr.mxu0 %v3331
    %3363 = vmatpush1.msra.mxu0 %v3330
    %3364 = vmatprep.subr.mxu0 %v3333
    %3365 = vmatpush1.msra.mxu0 %v3332
    %3366 = vmatprep.subr.mxu0 %v3335
    %3367 = vmatpush1.msra.mxu0 %v3334
    %3368 = vmatprep.subr.mxu0 %v3337
    %3369 = vmatpush1.msra.mxu0 %v3336
    %3370 = vmatprep.subr.mxu0 %v3339
    %3371 = vmatpush1.msra.mxu0 %v3338
    %3372 = vmatprep.subr.mxu0 %v3341
    %3373 = vmatpush1.msra.mxu0 %v3340
    %3374 = vmatprep.subr.mxu0 %v3343
    %3375 = vmatpush1.msra.mxu0 %v3342
    %3376 = vmatprep.subr.mxu0 %v3345
    %3377 = vmatpush1.msra.mxu0 %v3344
    %3378 = vmatprep.subr.mxu0 %v3347
    %3379 = vmatpush1.msra.mxu0 %v3346
    %3380 = vmatprep.subr.mxu0 %v3349
    %3381 = vmatpush1.msra.mxu0 %v3348
    %3382 = vmatprep.subr.mxu0 %v3351
    %3383 = vmatpush1.msra.mxu0 %v3350
    %3384 = vmatprep.subr.mxu0 %v3353
    %3385 = vmatpush1.msra.mxu0 %v3352
    %3386 = vmatprep.subr.mxu0 %v3355
    %3387 = vmatpush1.msra.mxu0 %v3354
    %3388 = vmatprep.subr.mxu0 %v3357
    %3389 = vmatpush1.msra.mxu0 %v3356
    %3390 = vmatprep.subr.mxu0 %v3359
    %3391 = vmatpush1.msra.mxu0 %v3358
    %3392 = vmatprep.subr.mxu0 0.0
    %3393 = vmatpush1.msra.mxu0 0.0
    %3394 = vmatprep.subr.mxu0 0.0
    %3395 = vmatpush1.msra.mxu0 0.0
    %3396 = vmatprep.subr.mxu0 0.0
    %3397 = vmatpush1.msra.mxu0 0.0
    %3398 = vmatprep.subr.mxu0 0.0
    %3399 = vmatpush1.msra.mxu0 0.0
    %3400 = vmatprep.subr.mxu0 0.0
    %3401 = vmatpush1.msra.mxu0 0.0
    %3402 = vmatprep.subr.mxu0 0.0
    %3403 = vmatpush1.msra.mxu0 0.0
    %3404 = vmatprep.subr.mxu0 0.0
    %3405 = vmatpush1.msra.mxu0 0.0
    %3406 = vmatprep.subr.mxu0 0.0
    %3407 = vmatpush1.msra.mxu0 0.0
    %3408 = vmatprep.subr.mxu0 0.0
    %3409 = vmatpush1.msra.mxu0 0.0
    %3410 = vmatprep.subr.mxu0 0.0
    %3411 = vmatpush1.msra.mxu0 0.0
    %3412 = vmatprep.subr.mxu0 0.0
    %3413 = vmatpush1.msra.mxu0 0.0
    %3414 = vmatprep.subr.mxu0 0.0
    %3415 = vmatpush1.msra.mxu0 0.0
    %3416 = vmatprep.subr.mxu0 0.0
    %3417 = vmatpush1.msra.mxu0 0.0
    %3418 = vmatprep.subr.mxu0 0.0
    %3419 = vmatpush1.msra.mxu0 0.0
    %3420 = vmatprep.subr.mxu0 0.0
    %3421 = vmatpush1.msra.mxu0 0.0
    %3422 = vmatprep.subr.mxu0 0.0
    %3423 = vmatpush1.msra.mxu0 0.0
    %3424 = vmatprep.mubr.f32.mxu0 0.0
    %3425 = vmatmul.mubr.f32.gmra.mrb[0].mxu0 %v3320
    %v3426 = vpop.f32.mrb[0].mxu0
    %v3427 = vadd.f32 0.0, %v3426
    %v3428 = vpop.f32.mrb[0].mxu0
    %v3429 = vadd.f32 0.0, %v3428
    %3430 = vmatprep.mubr.f32.mxu0 0.0
    %3431 = vmatmul.mubr.f32.gmra.mrb[0].mxu0 %v3325
    %v3432 = vpop.f32.mrb[0].mxu0
    %v3433 = vadd.f32 0.0, %v3432
    %v3434 = vpop.f32.mrb[0].mxu0
    %v3435 = vadd.f32 0.0, %v3434
    %3436 = vdwg.mxu0
    %s3437 = scalar_lea.vmem %s9, 256
    %v3438 = vld [vmem:[%s3437] sm:$0xff]
    %v3439 = vld [vmem:[%s3437 + $0x8] sm:$0xff]
    %v3440 = vld [vmem:[%s3437 + $0x10] sm:$0xff]
    %v3441 = vld [vmem:[%s3437 + $0x18] sm:$0xff]
    %v3442 = vld [vmem:[%s3437 + $0x20] sm:$0xff]
    %v3443 = vld [vmem:[%s3437 + $0x28] sm:$0xff]
    %v3444 = vld [vmem:[%s3437 + $0x30] sm:$0xff]
    %v3445 = vld [vmem:[%s3437 + $0x38] sm:$0xff]
    %v3446 = vld [vmem:[%s3437 + $0x40] sm:$0xff]
    %v3447 = vld [vmem:[%s3437 + $0x48] sm:$0xff]
    %v3448 = vld [vmem:[%s3437 + $0x50] sm:$0xff]
    %v3449 = vld [vmem:[%s3437 + $0x58] sm:$0xff]
    %v3450 = vld [vmem:[%s3437 + $0x60] sm:$0xff]
    %v3451 = vld [vmem:[%s3437 + $0x68] sm:$0xff]
    %v3452 = vld [vmem:[%s3437 + $0x70] sm:$0xff]
    %v3453 = vld [vmem:[%s3437 + $0x78] sm:$0xff]
    %v3454 = vld [vmem:[%s3437 + $0x80] sm:$0xff]
    %v3455 = vld [vmem:[%s3437 + $0x88] sm:$0xff]
    %v3456 = vld [vmem:[%s3437 + $0x90] sm:$0xff]
    %v3457 = vld [vmem:[%s3437 + $0x98] sm:$0xff]
    %v3458 = vld [vmem:[%s3437 + $0xa0] sm:$0xff]
    %v3459 = vld [vmem:[%s3437 + $0xa8] sm:$0xff]
    %v3460 = vld [vmem:[%s3437 + $0xb0] sm:$0xff]
    %v3461 = vld [vmem:[%s3437 + $0xb8] sm:$0xff]
    %v3462 = vld [vmem:[%s3437 + $0xc0] sm:$0xff]
    %v3463 = vld [vmem:[%s3437 + $0xc8] sm:$0xff]
    %v3464 = vld [vmem:[%s3437 + $0xd0] sm:$0xff]
    %v3465 = vld [vmem:[%s3437 + $0xd8] sm:$0xff]
    %v3466 = vld [vmem:[%s3437 + $0xe0] sm:$0xff]
    %v3467 = vld [vmem:[%s3437 + $0xe8] sm:$0xff]
    %v3468 = vld [vmem:[%s3437 + $0xf0] sm:$0xff]
    %v3469 = vld [vmem:[%s3437 + $0xf8] sm:$0xff]
    %3470 = vmatprep.subr.mxu0 %v3439
    %3471 = vmatpush1.msra.mxu0 %v3438
    %3472 = vmatprep.subr.mxu0 %v3441
    %3473 = vmatpush1.msra.mxu0 %v3440
    %3474 = vmatprep.subr.mxu0 %v3443
    %3475 = vmatpush1.msra.mxu0 %v3442
    %3476 = vmatprep.subr.mxu0 %v3445
    %3477 = vmatpush1.msra.mxu0 %v3444
    %3478 = vmatprep.subr.mxu0 %v3447
    %3479 = vmatpush1.msra.mxu0 %v3446
    %3480 = vmatprep.subr.mxu0 %v3449
    %3481 = vmatpush1.msra.mxu0 %v3448
    %3482 = vmatprep.subr.mxu0 %v3451
    %3483 = vmatpush1.msra.mxu0 %v3450
    %3484 = vmatprep.subr.mxu0 %v3453
    %3485 = vmatpush1.msra.mxu0 %v3452
    %3486 = vmatprep.subr.mxu0 %v3455
    %3487 = vmatpush1.msra.mxu0 %v3454
    %3488 = vmatprep.subr.mxu0 %v3457
    %3489 = vmatpush1.msra.mxu0 %v3456
    %3490 = vmatprep.subr.mxu0 %v3459
    %3491 = vmatpush1.msra.mxu0 %v3458
    %3492 = vmatprep.subr.mxu0 %v3461
    %3493 = vmatpush1.msra.mxu0 %v3460
    %3494 = vmatprep.subr.mxu0 %v3463
    %3495 = vmatpush1.msra.mxu0 %v3462
    %3496 = vmatprep.subr.mxu0 %v3465
    %3497 = vmatpush1.msra.mxu0 %v3464
    %3498 = vmatprep.subr.mxu0 %v3467
    %3499 = vmatpush1.msra.mxu0 %v3466
    %3500 = vmatprep.subr.mxu0 %v3469
    %3501 = vmatpush1.msra.mxu0 %v3468
    %3502 = vmatprep.subr.mxu0 0.0
    %3503 = vmatpush1.msra.mxu0 0.0
    %3504 = vmatprep.subr.mxu0 0.0
    %3505 = vmatpush1.msra.mxu0 0.0
    %3506 = vmatprep.subr.mxu0 0.0
    %3507 = vmatpush1.msra.mxu0 0.0
    %3508 = vmatprep.subr.mxu0 0.0
    %3509 = vmatpush1.msra.mxu0 0.0
    %3510 = vmatprep.subr.mxu0 0.0
    %3511 = vmatpush1.msra.mxu0 0.0
    %3512 = vmatprep.subr.mxu0 0.0
    %3513 = vmatpush1.msra.mxu0 0.0
    %3514 = vmatprep.subr.mxu0 0.0
    %3515 = vmatpush1.msra.mxu0 0.0
    %3516 = vmatprep.subr.mxu0 0.0
    %3517 = vmatpush1.msra.mxu0 0.0
    %3518 = vmatprep.subr.mxu0 0.0
    %3519 = vmatpush1.msra.mxu0 0.0
    %3520 = vmatprep.subr.mxu0 0.0
    %3521 = vmatpush1.msra.mxu0 0.0
    %3522 = vmatprep.subr.mxu0 0.0
    %3523 = vmatpush1.msra.mxu0 0.0
    %3524 = vmatprep.subr.mxu0 0.0
    %3525 = vmatpush1.msra.mxu0 0.0
    %3526 = vmatprep.subr.mxu0 0.0
    %3527 = vmatpush1.msra.mxu0 0.0
    %3528 = vmatprep.subr.mxu0 0.0
    %3529 = vmatpush1.msra.mxu0 0.0
    %3530 = vmatprep.subr.mxu0 0.0
    %3531 = vmatpush1.msra.mxu0 0.0
    %3532 = vmatprep.subr.mxu0 0.0
    %3533 = vmatpush1.msra.mxu0 0.0
    %3534 = vmatprep.mubr.f32.mxu0 0.0
    %3535 = vmatmul.mubr.f32.gmra.mrb[0].mxu0 %v3320
    %v3536 = vpop.f32.mrb[0].mxu0
    %v3537 = vadd.f32 0.0, %v3536
    %v3538 = vpop.f32.mrb[0].mxu0
    %v3539 = vadd.f32 0.0, %v3538
    %3540 = vmatprep.mubr.f32.mxu0 0.0
    %3541 = vmatmul.mubr.f32.gmra.mrb[0].mxu0 %v3325
    %v3542 = vpop.f32.mrb[0].mxu0
    %v3543 = vadd.f32 0.0, %v3542
    %v3544 = vpop.f32.mrb[0].mxu0
    %v3545 = vadd.f32 0.0, %v3544
    %3546 = vdwg.mxu0
    %v3551 = vrot.slane %v3537, 1
    %v3552 = vrot.slane %v3543, 1
    %v3553 = vsel %vm903, %v3551, %v3552
    %v3554 = vrot.slane %v3539, 1
    %v3555 = vrot.slane %v3545, 1
    %v3556 = vsel %vm903, %v3554, %v3555
    %v3561 = vadd.f32 %v3427, %v3553
    %v3562 = vadd.f32 %v3429, %v3556
    %v3563 = vadd.f32 %v3433, %v3552
    %v3564 = vadd.f32 %v3435, %v3555
    %v3565 = vld [vmem:[#allocation11] sm:$0x3]
    %v3567 = vlaneseq
    %v3568 = vshrl.u32 %v3567, 7
    %v3569 = vsub.s32 0, %v3568
    %v3570 = vrot.slane %v3565, %v3569
    %v3571 = vlaneseq
    %v3572 = vshrl.u32 %v3571, 7
    %v3573 = vsub.s32 1, %v3572
    %v3574 = vrot.slane %v3565, %v3573
    %v3577 = vadd.f32 %v3561, %v3570
    %v3578 = vadd.f32 %v3562, %v3574
    %v3579 = vadd.f32 %v3563, %v3570
    %v3580 = vadd.f32 %v3564, %v3574
    %v3581 = vmax.f32 %v3577, 0.0
    %v3582 = vmax.f32 %v3578, 0.0
    %v3583 = vmax.f32 %v3579, 0.0
    %v3584 = vmax.f32 %v3580, 0.0
    %v3585 = vld [vmem:[#allocation16] sm:$0xff]
    %v3586 = vld [vmem:[#allocation16 + $0x8] sm:$0xff]
    %v3587 = vld [vmem:[#allocation13] sm:$0x3]
    %vm3588 = vcmask 105472
    %v3590 = vsel %vm3588, %v3587, 0
    %vm3592 = vcmask 1044480
    %v3594 = vsel %vm3592, %v3583, 0
    %v3597 = vsel %vm3592, %v3584, 0
    %3599 = vmatprep.subr.mxu0 %v3582
    %3600 = vmatpush1.msra.mxu0 %v3581
    %3601 = vmatprep.subr.mxu0 %v3597
    %3602 = vmatpush1.msra.mxu0 %v3594
    %3603 = vmatprep.subr.mxu0 0.0
    %3604 = vmatpush1.msra.mxu0 0.0
    %3605 = vmatprep.subr.mxu0 0.0
    %3606 = vmatpush1.msra.mxu0 0.0
    %3607 = vmatprep.subr.mxu0 0.0
    %3608 = vmatpush1.msra.mxu0 0.0
    %3609 = vmatprep.subr.mxu0 0.0
    %3610 = vmatpush1.msra.mxu0 0.0
    %3611 = vmatprep.subr.mxu0 0.0
    %3612 = vmatpush1.msra.mxu0 0.0
    %3613 = vmatprep.subr.mxu0 0.0
    %3614 = vmatpush1.msra.mxu0 0.0
    %3615 = vmatprep.subr.mxu0 0.0
    %3616 = vmatpush1.msra.mxu0 0.0
    %3617 = vmatprep.subr.mxu0 0.0
    %3618 = vmatpush1.msra.mxu0 0.0
    %3619 = vmatprep.subr.mxu0 0.0
    %3620 = vmatpush1.msra.mxu0 0.0
    %3621 = vmatprep.subr.mxu0 0.0
    %3622 = vmatpush1.msra.mxu0 0.0
    %3623 = vmatprep.subr.mxu0 0.0
    %3624 = vmatpush1.msra.mxu0 0.0
    %3625 = vmatprep.subr.mxu0 0.0
    %3626 = vmatpush1.msra.mxu0 0.0
    %3627 = vmatprep.subr.mxu0 0.0
    %3628 = vmatpush1.msra.mxu0 0.0
    %3629 = vmatprep.subr.mxu0 0.0
    %3630 = vmatpush1.msra.mxu0 0.0
    %3631 = vmatprep.subr.mxu0 0.0
    %3632 = vmatpush1.msra.mxu0 0.0
    %3633 = vmatprep.subr.mxu0 0.0
    %3634 = vmatpush1.msra.mxu0 0.0
    %3635 = vmatprep.subr.mxu0 0.0
    %3636 = vmatpush1.msra.mxu0 0.0
    %3637 = vmatprep.subr.mxu0 0.0
    %3638 = vmatpush1.msra.mxu0 0.0
    %3639 = vmatprep.subr.mxu0 0.0
    %3640 = vmatpush1.msra.mxu0 0.0
    %3641 = vmatprep.subr.mxu0 0.0
    %3642 = vmatpush1.msra.mxu0 0.0
    %3643 = vmatprep.subr.mxu0 0.0
    %3644 = vmatpush1.msra.mxu0 0.0
    %3645 = vmatprep.subr.mxu0 0.0
    %3646 = vmatpush1.msra.mxu0 0.0
    %3647 = vmatprep.subr.mxu0 0.0
    %3648 = vmatpush1.msra.mxu0 0.0
    %3649 = vmatprep.subr.mxu0 0.0
    %3650 = vmatpush1.msra.mxu0 0.0
    %3651 = vmatprep.subr.mxu0 0.0
    %3652 = vmatpush1.msra.mxu0 0.0
    %3653 = vmatprep.subr.mxu0 0.0
    %3654 = vmatpush1.msra.mxu0 0.0
    %3655 = vmatprep.subr.mxu0 0.0
    %3656 = vmatpush1.msra.mxu0 0.0
    %3657 = vmatprep.subr.mxu0 0.0
    %3658 = vmatpush1.msra.mxu0 0.0
    %3659 = vmatprep.subr.mxu0 0.0
    %3660 = vmatpush1.msra.mxu0 0.0
    %3661 = vmatprep.subr.mxu0 0.0
    %3662 = vmatpush1.msra.mxu0 0.0
    %3663 = vmatprep.mubr.f32.mxu0 0.0
    %3664 = vmatmul.mubr.f32.gmra.mrb[0].mxu0 %v3590
    %v3665 = vpop.f32.mrb[0].mxu0
    %v3666 = vadd.f32 0.0, %v3665
    %v3667 = vpop.f32.mrb[0].mxu0
    %v3668 = vadd.f32 0.0, %v3667
    %3669 = vdwg.mxu0
    %v3670 = vld [vmem:[#allocation14] sm:$0xff]
    %v3671 = vld [vmem:[#allocation14 + $0x8] sm:$0xff]
    %v3672 = vld [vmem:[#allocation14 + $0x10] sm:$0xff]
    %v3673 = vld [vmem:[#allocation14 + $0x18] sm:$0xff]
    %v3674 = vld [vmem:[#allocation14 + $0x20] sm:$0xff]
    %v3675 = vld [vmem:[#allocation14 + $0x28] sm:$0xff]
    %v3676 = vld [vmem:[#allocation14 + $0x30] sm:$0xff]
    %v3677 = vld [vmem:[#allocation14 + $0x38] sm:$0xff]
    %v3678 = vld [vmem:[#allocation14 + $0x40] sm:$0xff]
    %v3679 = vld [vmem:[#allocation14 + $0x48] sm:$0xff]
    %v3680 = vld [vmem:[#allocation14 + $0x50] sm:$0xff]
    %v3681 = vld [vmem:[#allocation14 + $0x58] sm:$0xff]
    %v3682 = vld [vmem:[#allocation14 + $0x60] sm:$0xff]
    %v3683 = vld [vmem:[#allocation14 + $0x68] sm:$0xff]
    %v3684 = vld [vmem:[#allocation14 + $0x70] sm:$0xff]
    %v3685 = vld [vmem:[#allocation14 + $0x78] sm:$0xff]
    %v3686 = vld [vmem:[#allocation14 + $0x80] sm:$0xff]
    %v3687 = vld [vmem:[#allocation14 + $0x88] sm:$0xff]
    %v3688 = vld [vmem:[#allocation14 + $0x90] sm:$0xff]
    %v3689 = vld [vmem:[#allocation14 + $0x98] sm:$0xff]
    %v3690 = vld [vmem:[#allocation14 + $0xa0] sm:$0xff]
    %v3691 = vld [vmem:[#allocation14 + $0xa8] sm:$0xff]
    %v3692 = vld [vmem:[#allocation14 + $0xb0] sm:$0xff]
    %v3693 = vld [vmem:[#allocation14 + $0xb8] sm:$0xff]
    %v3694 = vld [vmem:[#allocation14 + $0xc0] sm:$0xff]
    %v3695 = vld [vmem:[#allocation14 + $0xc8] sm:$0xff]
    %v3696 = vld [vmem:[#allocation14 + $0xd0] sm:$0xff]
    %v3697 = vld [vmem:[#allocation14 + $0xd8] sm:$0xff]
    %v3698 = vld [vmem:[#allocation14 + $0xe0] sm:$0xff]
    %v3699 = vld [vmem:[#allocation14 + $0xe8] sm:$0xff]
    %v3700 = vld [vmem:[#allocation14 + $0xf0] sm:$0xff]
    %v3701 = vld [vmem:[#allocation14 + $0xf8] sm:$0xff]
    %v3702 = vld [vmem:[#allocation14 + $0x100] sm:$0xff]
    %v3703 = vld [vmem:[#allocation14 + $0x108] sm:$0xff]
    %v3704 = vld [vmem:[#allocation14 + $0x110] sm:$0xff]
    %v3705 = vld [vmem:[#allocation14 + $0x118] sm:$0xff]
    %v3706 = vld [vmem:[#allocation14 + $0x120] sm:$0xff]
    %v3707 = vld [vmem:[#allocation14 + $0x128] sm:$0xff]
    %v3708 = vld [vmem:[#allocation14 + $0x130] sm:$0xff]
    %v3709 = vld [vmem:[#allocation14 + $0x138] sm:$0xff]
    %v3710 = vld [vmem:[#allocation14 + $0x140] sm:$0xff]
    %v3711 = vld [vmem:[#allocation14 + $0x148] sm:$0xff]
    %v3712 = vld [vmem:[#allocation14 + $0x150] sm:$0xff]
    %v3713 = vld [vmem:[#allocation14 + $0x158] sm:$0xff]
    %v3714 = vld [vmem:[#allocation14 + $0x160] sm:$0xff]
    %v3715 = vld [vmem:[#allocation14 + $0x168] sm:$0xff]
    %v3716 = vld [vmem:[#allocation14 + $0x170] sm:$0xff]
    %v3717 = vld [vmem:[#allocation14 + $0x178] sm:$0xff]
    %v3718 = vld [vmem:[#allocation14 + $0x180] sm:$0xff]
    %v3719 = vld [vmem:[#allocation14 + $0x188] sm:$0xff]
    %v3720 = vld [vmem:[#allocation14 + $0x190] sm:$0xff]
    %v3721 = vld [vmem:[#allocation14 + $0x198] sm:$0xff]
    %v3722 = vld [vmem:[#allocation14 + $0x1a0] sm:$0xff]
    %v3723 = vld [vmem:[#allocation14 + $0x1a8] sm:$0xff]
    %v3724 = vld [vmem:[#allocation14 + $0x1b0] sm:$0xff]
    %v3725 = vld [vmem:[#allocation14 + $0x1b8] sm:$0xff]
    %v3726 = vld [vmem:[#allocation14 + $0x1c0] sm:$0xff]
    %v3727 = vld [vmem:[#allocation14 + $0x1c8] sm:$0xff]
    %v3728 = vld [vmem:[#allocation14 + $0x1d0] sm:$0xff]
    %v3729 = vld [vmem:[#allocation14 + $0x1d8] sm:$0xff]
    %v3730 = vld [vmem:[#allocation14 + $0x1e0] sm:$0xff]
    %v3731 = vld [vmem:[#allocation14 + $0x1e8] sm:$0xff]
    %v3732 = vld [vmem:[#allocation14 + $0x1f0] sm:$0xff]
    %v3733 = vld [vmem:[#allocation14 + $0x1f8] sm:$0xff]
    %v3734 = vld [vmem:[#allocation14 + $0x200] sm:$0xff]
    %v3735 = vld [vmem:[#allocation14 + $0x208] sm:$0xff]
    %v3736 = vld [vmem:[#allocation14 + $0x210] sm:$0xff]
    %v3737 = vld [vmem:[#allocation14 + $0x218] sm:$0xff]
    %v3738 = vld [vmem:[#allocation14 + $0x220] sm:$0xff]
    %v3739 = vld [vmem:[#allocation14 + $0x228] sm:$0xff]
    %v3740 = vld [vmem:[#allocation14 + $0x230] sm:$0xff]
    %v3741 = vld [vmem:[#allocation14 + $0x238] sm:$0xff]
    %v3742 = vld [vmem:[#allocation14 + $0x240] sm:$0xff]
    %v3743 = vld [vmem:[#allocation14 + $0x248] sm:$0xff]
    %v3744 = vld [vmem:[#allocation14 + $0x250] sm:$0xff]
    %v3745 = vld [vmem:[#allocation14 + $0x258] sm:$0xff]
    %v3746 = vld [vmem:[#allocation14 + $0x260] sm:$0xff]
    %v3747 = vld [vmem:[#allocation14 + $0x268] sm:$0xff]
    %v3748 = vld [vmem:[#allocation14 + $0x270] sm:$0xff]
    %v3749 = vld [vmem:[#allocation14 + $0x278] sm:$0xff]
    %v3750 = vld [vmem:[#allocation14 + $0x280] sm:$0xff]
    %v3751 = vld [vmem:[#allocation14 + $0x288] sm:$0xff]
    %v3752 = vld [vmem:[#allocation14 + $0x290] sm:$0xff]
    %v3753 = vld [vmem:[#allocation14 + $0x298] sm:$0xff]
    %v3754 = vld [vmem:[#allocation14 + $0x2a0] sm:$0xff]
    %v3755 = vld [vmem:[#allocation14 + $0x2a8] sm:$0xff]
    %v3756 = vld [vmem:[#allocation14 + $0x2b0] sm:$0xff]
    %v3757 = vld [vmem:[#allocation14 + $0x2b8] sm:$0xff]
    %v3758 = vld [vmem:[#allocation14 + $0x2c0] sm:$0xff]
    %v3759 = vld [vmem:[#allocation14 + $0x2c8] sm:$0xff]
    %v3760 = vld [vmem:[#allocation14 + $0x2d0] sm:$0xff]
    %v3761 = vld [vmem:[#allocation14 + $0x2d8] sm:$0xff]
    %v3762 = vld [vmem:[#allocation14 + $0x2e0] sm:$0xff]
    %v3763 = vld [vmem:[#allocation14 + $0x2e8] sm:$0xff]
    %v3764 = vld [vmem:[#allocation14 + $0x2f0] sm:$0xff]
    %v3765 = vld [vmem:[#allocation14 + $0x2f8] sm:$0xff]
    %v3766 = vld [vmem:[#allocation14 + $0x300] sm:$0xff]
    %v3767 = vld [vmem:[#allocation14 + $0x308] sm:$0xff]
    %v3768 = vld [vmem:[#allocation14 + $0x310] sm:$0xff]
    %v3769 = vld [vmem:[#allocation14 + $0x318] sm:$0xff]
    %v3770 = vld [vmem:[#allocation14 + $0x320] sm:$0xff]
    %v3771 = vld [vmem:[#allocation14 + $0x328] sm:$0xff]
    %v3772 = vld [vmem:[#allocation14 + $0x330] sm:$0xff]
    %v3773 = vld [vmem:[#allocation14 + $0x338] sm:$0xff]
    %v3774 = vld [vmem:[#allocation14 + $0x340] sm:$0xff]
    %v3775 = vld [vmem:[#allocation14 + $0x348] sm:$0xff]
    %v3776 = vld [vmem:[#allocation14 + $0x350] sm:$0xff]
    %v3777 = vld [vmem:[#allocation14 + $0x358] sm:$0xff]
    %v3778 = vld [vmem:[#allocation14 + $0x360] sm:$0xff]
    %v3779 = vld [vmem:[#allocation14 + $0x368] sm:$0xff]
    %v3780 = vld [vmem:[#allocation14 + $0x370] sm:$0xff]
    %v3781 = vld [vmem:[#allocation14 + $0x378] sm:$0xff]
    %v3782 = vld [vmem:[#allocation14 + $0x380] sm:$0xff]
    %v3783 = vld [vmem:[#allocation14 + $0x388] sm:$0xff]
    %v3784 = vld [vmem:[#allocation14 + $0x390] sm:$0xff]
    %v3785 = vld [vmem:[#allocation14 + $0x398] sm:$0xff]
    %v3786 = vld [vmem:[#allocation14 + $0x3a0] sm:$0xff]
    %v3787 = vld [vmem:[#allocation14 + $0x3a8] sm:$0xff]
    %v3788 = vld [vmem:[#allocation14 + $0x3b0] sm:$0xff]
    %v3789 = vld [vmem:[#allocation14 + $0x3b8] sm:$0xff]
    %v3790 = vld [vmem:[#allocation14 + $0x3c0] sm:$0xff]
    %v3791 = vld [vmem:[#allocation14 + $0x3c8] sm:$0xff]
    %v3792 = vld [vmem:[#allocation14 + $0x3d0] sm:$0xff]
    %v3793 = vld [vmem:[#allocation14 + $0x3d8] sm:$0xff]
    %v3794 = vld [vmem:[#allocation14 + $0x3e0] sm:$0xff]
    %v3795 = vld [vmem:[#allocation14 + $0x3e8] sm:$0xff]
    %v3796 = vld [vmem:[#allocation14 + $0x3f0] sm:$0xff]
    %v3797 = vld [vmem:[#allocation14 + $0x3f8] sm:$0xff]
    %v3798 = vld [vmem:[#allocation14 + $0x400] sm:$0xff]
    %v3799 = vld [vmem:[#allocation14 + $0x408] sm:$0xff]
    %v3800 = vld [vmem:[#allocation14 + $0x410] sm:$0xff]
    %v3801 = vld [vmem:[#allocation14 + $0x418] sm:$0xff]
    %v3802 = vld [vmem:[#allocation14 + $0x420] sm:$0xff]
    %v3803 = vld [vmem:[#allocation14 + $0x428] sm:$0xff]
    %v3804 = vld [vmem:[#allocation14 + $0x430] sm:$0xff]
    %v3805 = vld [vmem:[#allocation14 + $0x438] sm:$0xff]
    %v3806 = vld [vmem:[#allocation14 + $0x440] sm:$0xff]
    %v3807 = vld [vmem:[#allocation14 + $0x448] sm:$0xff]
    %v3808 = vld [vmem:[#allocation14 + $0x450] sm:$0xff]
    %v3809 = vld [vmem:[#allocation14 + $0x458] sm:$0xff]
    %v3810 = vld [vmem:[#allocation14 + $0x460] sm:$0xff]
    %v3811 = vld [vmem:[#allocation14 + $0x468] sm:$0xff]
    %v3812 = vld [vmem:[#allocation14 + $0x470] sm:$0xff]
    %v3813 = vld [vmem:[#allocation14 + $0x478] sm:$0xff]
    %v3814 = vld [vmem:[#allocation14 + $0x480] sm:$0xff]
    %v3815 = vld [vmem:[#allocation14 + $0x488] sm:$0xff]
    %v3816 = vld [vmem:[#allocation14 + $0x490] sm:$0xff]
    %v3817 = vld [vmem:[#allocation14 + $0x498] sm:$0xff]
    %v3818 = vld [vmem:[#allocation14 + $0x4a0] sm:$0xff]
    %v3819 = vld [vmem:[#allocation14 + $0x4a8] sm:$0xff]
    %v3820 = vld [vmem:[#allocation14 + $0x4b0] sm:$0xff]
    %v3821 = vld [vmem:[#allocation14 + $0x4b8] sm:$0xff]
    %v3822 = vld [vmem:[#allocation14 + $0x4c0] sm:$0xff]
    %v3823 = vld [vmem:[#allocation14 + $0x4c8] sm:$0xff]
    %v3824 = vld [vmem:[#allocation14 + $0x4d0] sm:$0xff]
    %v3825 = vld [vmem:[#allocation14 + $0x4d8] sm:$0xff]
    %v3826 = vld [vmem:[#allocation14 + $0x4e0] sm:$0xff]
    %v3827 = vld [vmem:[#allocation14 + $0x4e8] sm:$0xff]
    %v3828 = vld [vmem:[#allocation14 + $0x4f0] sm:$0xff]
    %v3829 = vld [vmem:[#allocation14 + $0x4f8] sm:$0xff]
    %v3830 = vld [vmem:[#allocation14 + $0x500] sm:$0xff]
    %v3831 = vld [vmem:[#allocation14 + $0x508] sm:$0xff]
    %v3832 = vld [vmem:[#allocation14 + $0x510] sm:$0xff]
    %v3833 = vld [vmem:[#allocation14 + $0x518] sm:$0xff]
    %v3834 = vld [vmem:[#allocation14 + $0x520] sm:$0xff]
    %v3835 = vld [vmem:[#allocation14 + $0x528] sm:$0xff]
    %v3836 = vld [vmem:[#allocation14 + $0x530] sm:$0xff]
    %v3837 = vld [vmem:[#allocation14 + $0x538] sm:$0xff]
    %v3838 = vld [vmem:[#allocation14 + $0x540] sm:$0xff]
    %v3839 = vld [vmem:[#allocation14 + $0x548] sm:$0xff]
    %v3840 = vld [vmem:[#allocation14 + $0x550] sm:$0xff]
    %v3841 = vld [vmem:[#allocation14 + $0x558] sm:$0xff]
    %v3842 = vld [vmem:[#allocation14 + $0x560] sm:$0xff]
    %v3843 = vld [vmem:[#allocation14 + $0x568] sm:$0xff]
    %v3844 = vld [vmem:[#allocation14 + $0x570] sm:$0xff]
    %v3845 = vld [vmem:[#allocation14 + $0x578] sm:$0xff]
    %v3846 = vld [vmem:[#allocation14 + $0x580] sm:$0xff]
    %v3847 = vld [vmem:[#allocation14 + $0x588] sm:$0xff]
    %v3848 = vld [vmem:[#allocation14 + $0x590] sm:$0xff]
    %v3849 = vld [vmem:[#allocation14 + $0x598] sm:$0xff]
    %v3850 = vld [vmem:[#allocation14 + $0x5a0] sm:$0xff]
    %v3851 = vld [vmem:[#allocation14 + $0x5a8] sm:$0xff]
    %v3852 = vld [vmem:[#allocation14 + $0x5b0] sm:$0xff]
    %v3853 = vld [vmem:[#allocation14 + $0x5b8] sm:$0xff]
    %v3854 = vld [vmem:[#allocation14 + $0x5c0] sm:$0xff]
    %v3855 = vld [vmem:[#allocation14 + $0x5c8] sm:$0xff]
    %v3856 = vld [vmem:[#allocation14 + $0x5d0] sm:$0xff]
    %v3857 = vld [vmem:[#allocation14 + $0x5d8] sm:$0xff]
    %v3858 = vld [vmem:[#allocation14 + $0x5e0] sm:$0xff]
    %v3859 = vld [vmem:[#allocation14 + $0x5e8] sm:$0xff]
    %v3860 = vld [vmem:[#allocation14 + $0x5f0] sm:$0xff]
    %v3861 = vld [vmem:[#allocation14 + $0x5f8] sm:$0xff]
    %v3862 = vld [vmem:[#allocation14 + $0x600] sm:$0xff]
    %v3863 = vld [vmem:[#allocation14 + $0x608] sm:$0xff]
    %v3864 = vld [vmem:[#allocation14 + $0x610] sm:$0xff]
    %v3865 = vld [vmem:[#allocation14 + $0x618] sm:$0xff]
    %v3866 = vld [vmem:[#allocation14 + $0x620] sm:$0xff]
    %v3867 = vld [vmem:[#allocation14 + $0x628] sm:$0xff]
    %v3868 = vld [vmem:[#allocation14 + $0x630] sm:$0xff]
    %v3869 = vld [vmem:[#allocation14 + $0x638] sm:$0xff]
    %v3870 = vld [vmem:[#allocation14 + $0x640] sm:$0xff]
    %v3871 = vld [vmem:[#allocation14 + $0x648] sm:$0xff]
    %v3872 = vld [vmem:[#allocation14 + $0x650] sm:$0xff]
    %v3873 = vld [vmem:[#allocation14 + $0x658] sm:$0xff]
    %v3874 = vld [vmem:[#allocation14 + $0x660] sm:$0xff]
    %v3875 = vld [vmem:[#allocation14 + $0x668] sm:$0xff]
    %v3876 = vld [vmem:[#allocation14 + $0x670] sm:$0xff]
    %v3877 = vld [vmem:[#allocation14 + $0x678] sm:$0xff]
    %v3878 = vld [vmem:[#allocation14 + $0x680] sm:$0xff]
    %v3879 = vld [vmem:[#allocation14 + $0x688] sm:$0xff]
    %v3880 = vld [vmem:[#allocation14 + $0x690] sm:$0xff]
    %v3881 = vld [vmem:[#allocation14 + $0x698] sm:$0xff]
    %v3882 = vld [vmem:[#allocation14 + $0x6a0] sm:$0xff]
    %v3883 = vld [vmem:[#allocation14 + $0x6a8] sm:$0xff]
    %v3884 = vld [vmem:[#allocation14 + $0x6b0] sm:$0xff]
    %v3885 = vld [vmem:[#allocation14 + $0x6b8] sm:$0xff]
    %v3886 = vld [vmem:[#allocation14 + $0x6c0] sm:$0xff]
    %v3887 = vld [vmem:[#allocation14 + $0x6c8] sm:$0xff]
    %v3888 = vld [vmem:[#allocation14 + $0x6d0] sm:$0xff]
    %v3889 = vld [vmem:[#allocation14 + $0x6d8] sm:$0xff]
    %v3890 = vld [vmem:[#allocation14 + $0x6e0] sm:$0xff]
    %v3891 = vld [vmem:[#allocation14 + $0x6e8] sm:$0xff]
    %v3892 = vld [vmem:[#allocation14 + $0x6f0] sm:$0xff]
    %v3893 = vld [vmem:[#allocation14 + $0x6f8] sm:$0xff]
    %v3894 = vld [vmem:[#allocation14 + $0x700] sm:$0xff]
    %v3895 = vld [vmem:[#allocation14 + $0x708] sm:$0xff]
    %v3896 = vld [vmem:[#allocation14 + $0x710] sm:$0xff]
    %v3897 = vld [vmem:[#allocation14 + $0x718] sm:$0xff]
    %v3898 = vld [vmem:[#allocation14 + $0x720] sm:$0xff]
    %v3899 = vld [vmem:[#allocation14 + $0x728] sm:$0xff]
    %v3900 = vld [vmem:[#allocation14 + $0x730] sm:$0xff]
    %v3901 = vld [vmem:[#allocation14 + $0x738] sm:$0xff]
    %v3902 = vld [vmem:[#allocation14 + $0x740] sm:$0xff]
    %v3903 = vld [vmem:[#allocation14 + $0x748] sm:$0xff]
    %v3904 = vld [vmem:[#allocation14 + $0x750] sm:$0xff]
    %v3905 = vld [vmem:[#allocation14 + $0x758] sm:$0xff]
    %v3906 = vld [vmem:[#allocation14 + $0x760] sm:$0xff]
    %v3907 = vld [vmem:[#allocation14 + $0x768] sm:$0xff]
    %v3908 = vld [vmem:[#allocation14 + $0x770] sm:$0xff]
    %v3909 = vld [vmem:[#allocation14 + $0x778] sm:$0xff]
    %v3910 = vld [vmem:[#allocation14 + $0x780] sm:$0xff]
    %v3911 = vld [vmem:[#allocation14 + $0x788] sm:$0xff]
    %v3912 = vld [vmem:[#allocation14 + $0x790] sm:$0xff]
    %v3913 = vld [vmem:[#allocation14 + $0x798] sm:$0xff]
    %v3914 = vld [vmem:[#allocation14 + $0x7a0] sm:$0xff]
    %v3915 = vld [vmem:[#allocation14 + $0x7a8] sm:$0xff]
    %v3916 = vld [vmem:[#allocation14 + $0x7b0] sm:$0xff]
    %v3917 = vld [vmem:[#allocation14 + $0x7b8] sm:$0xff]
    %v3918 = vld [vmem:[#allocation14 + $0x7c0] sm:$0xff]
    %v3919 = vld [vmem:[#allocation14 + $0x7c8] sm:$0xff]
    %v3920 = vld [vmem:[#allocation14 + $0x7d0] sm:$0xff]
    %v3921 = vld [vmem:[#allocation14 + $0x7d8] sm:$0xff]
    %v3922 = vld [vmem:[#allocation14 + $0x7e0] sm:$0xff]
    %v3923 = vld [vmem:[#allocation14 + $0x7e8] sm:$0xff]
    %v3924 = vld [vmem:[#allocation14 + $0x7f0] sm:$0xff]
    %v3925 = vld [vmem:[#allocation14 + $0x7f8] sm:$0xff]
    %v3926 = vld [vmem:[#allocation14 + $0x800] sm:$0xff]
    %v3927 = vld [vmem:[#allocation14 + $0x808] sm:$0xff]
    %v3928 = vld [vmem:[#allocation14 + $0x810] sm:$0xff]
    %v3929 = vld [vmem:[#allocation14 + $0x818] sm:$0xff]
    %v3930 = vld [vmem:[#allocation14 + $0x820] sm:$0xff]
    %v3931 = vld [vmem:[#allocation14 + $0x828] sm:$0xff]
    %v3932 = vld [vmem:[#allocation14 + $0x830] sm:$0xff]
    %v3933 = vld [vmem:[#allocation14 + $0x838] sm:$0xff]
    %v3934 = vld [vmem:[#allocation14 + $0x840] sm:$0xff]
    %v3935 = vld [vmem:[#allocation14 + $0x848] sm:$0xff]
    %v3936 = vld [vmem:[#allocation14 + $0x850] sm:$0xff]
    %v3937 = vld [vmem:[#allocation14 + $0x858] sm:$0xff]
    %v3938 = vld [vmem:[#allocation14 + $0x860] sm:$0xff]
    %v3939 = vld [vmem:[#allocation14 + $0x868] sm:$0xff]
    %v3940 = vld [vmem:[#allocation14 + $0x870] sm:$0xff]
    %v3941 = vld [vmem:[#allocation14 + $0x878] sm:$0xff]
    %v3942 = vld [vmem:[#allocation14 + $0x880] sm:$0xff]
    %v3943 = vld [vmem:[#allocation14 + $0x888] sm:$0xff]
    %v3944 = vld [vmem:[#allocation14 + $0x890] sm:$0xff]
    %v3945 = vld [vmem:[#allocation14 + $0x898] sm:$0xff]
    %v3946 = vld [vmem:[#allocation14 + $0x8a0] sm:$0xff]
    %v3947 = vld [vmem:[#allocation14 + $0x8a8] sm:$0xff]
    %v3948 = vld [vmem:[#allocation14 + $0x8b0] sm:$0xff]
    %v3949 = vld [vmem:[#allocation14 + $0x8b8] sm:$0xff]
    %v3950 = vld [vmem:[#allocation14 + $0x8c0] sm:$0xff]
    %v3951 = vld [vmem:[#allocation14 + $0x8c8] sm:$0xff]
    %v3952 = vld [vmem:[#allocation14 + $0x8d0] sm:$0xff]
    %v3953 = vld [vmem:[#allocation14 + $0x8d8] sm:$0xff]
    %v3954 = vld [vmem:[#allocation14 + $0x8e0] sm:$0xff]
    %v3955 = vld [vmem:[#allocation14 + $0x8e8] sm:$0xff]
    %v3956 = vld [vmem:[#allocation14 + $0x8f0] sm:$0xff]
    %v3957 = vld [vmem:[#allocation14 + $0x8f8] sm:$0xff]
    %vm3958 = vcmask 130048
    %v3960 = vsel %vm3958, %v3668, 0
    %3962 = vmatprep.subr.mxu0 %v3671
    %3963 = vmatpush1.msra.mxu0 %v3670
    %3964 = vmatprep.subr.mxu0 %v3687
    %3965 = vmatpush1.msra.mxu0 %v3686
    %3966 = vmatprep.subr.mxu0 %v3703
    %3967 = vmatpush1.msra.mxu0 %v3702
    %3968 = vmatprep.subr.mxu0 %v3719
    %3969 = vmatpush1.msra.mxu0 %v3718
    %3970 = vmatprep.subr.mxu0 %v3735
    %3971 = vmatpush1.msra.mxu0 %v3734
    %3972 = vmatprep.subr.mxu0 %v3751
    %3973 = vmatpush1.msra.mxu0 %v3750
    %3974 = vmatprep.subr.mxu0 %v3767
    %3975 = vmatpush1.msra.mxu0 %v3766
    %3976 = vmatprep.subr.mxu0 %v3783
    %3977 = vmatpush1.msra.mxu0 %v3782
    %3978 = vmatprep.subr.mxu0 %v3799
    %3979 = vmatpush1.msra.mxu0 %v3798
    %3980 = vmatprep.subr.mxu0 %v3815
    %3981 = vmatpush1.msra.mxu0 %v3814
    %3982 = vmatprep.subr.mxu0 %v3831
    %3983 = vmatpush1.msra.mxu0 %v3830
    %3984 = vmatprep.subr.mxu0 %v3847
    %3985 = vmatpush1.msra.mxu0 %v3846
    %3986 = vmatprep.subr.mxu0 %v3863
    %3987 = vmatpush1.msra.mxu0 %v3862
    %3988 = vmatprep.subr.mxu0 %v3879
    %3989 = vmatpush1.msra.mxu0 %v3878
    %3990 = vmatprep.subr.mxu0 %v3895
    %3991 = vmatpush1.msra.mxu0 %v3894
    %3992 = vmatprep.subr.mxu0 %v3911
    %3993 = vmatpush1.msra.mxu0 %v3910
    %3994 = vmatprep.subr.mxu0 %v3927
    %3995 = vmatpush1.msra.mxu0 %v3926
    %3996 = vmatprep.subr.mxu0 %v3943
    %3997 = vmatpush1.msra.mxu0 %v3942
    %3998 = vmatprep.subr.mxu0 0.0
    %3999 = vmatpush1.msra.mxu0 0.0
    %4000 = vmatprep.subr.mxu0 0.0
    %4001 = vmatpush1.msra.mxu0 0.0
    %4002 = vmatprep.subr.mxu0 0.0
    %4003 = vmatpush1.msra.mxu0 0.0
    %4004 = vmatprep.subr.mxu0 0.0
    %4005 = vmatpush1.msra.mxu0 0.0
    %4006 = vmatprep.subr.mxu0 0.0
    %4007 = vmatpush1.msra.mxu0 0.0
    %4008 = vmatprep.subr.mxu0 0.0
    %4009 = vmatpush1.msra.mxu0 0.0
    %4010 = vmatprep.subr.mxu0 0.0
    %4011 = vmatpush1.msra.mxu0 0.0
    %4012 = vmatprep.subr.mxu0 0.0
    %4013 = vmatpush1.msra.mxu0 0.0
    %4014 = vmatprep.subr.mxu0 0.0
    %4015 = vmatpush1.msra.mxu0 0.0
    %4016 = vmatprep.subr.mxu0 0.0
    %4017 = vmatpush1.msra.mxu0 0.0
    %4018 = vmatprep.subr.mxu0 0.0
    %4019 = vmatpush1.msra.mxu0 0.0
    %4020 = vmatprep.subr.mxu0 0.0
    %4021 = vmatpush1.msra.mxu0 0.0
    %4022 = vmatprep.subr.mxu0 0.0
    %4023 = vmatpush1.msra.mxu0 0.0
    %4024 = vmatprep.subr.mxu0 0.0
    %4025 = vmatpush1.msra.mxu0 0.0
    %4026 = vmatprep.mubr.f32.mxu0 %v3960
    %4027 = vmatmul.mubr.f32.gmra.mrb[0].mxu0 %v3666
    %v4028 = vpop.f32.mrb[0].mxu0
    %v4029 = vadd.f32 0.0, %v4028
    %v4030 = vpop.f32.mrb[0].mxu0
    %v4031 = vadd.f32 0.0, %v4030
    %4032 = vdwg.mxu0
    %4033 = vmatprep.subr.mxu0 %v3673
    %4034 = vmatpush1.msra.mxu0 %v3672
    %4035 = vmatprep.subr.mxu0 %v3689
    %4036 = vmatpush1.msra.mxu0 %v3688
    %4037 = vmatprep.subr.mxu0 %v3705
    %4038 = vmatpush1.msra.mxu0 %v3704
    %4039 = vmatprep.subr.mxu0 %v3721
    %4040 = vmatpush1.msra.mxu0 %v3720
    %4041 = vmatprep.subr.mxu0 %v3737
    %4042 = vmatpush1.msra.mxu0 %v3736
    %4043 = vmatprep.subr.mxu0 %v3753
    %4044 = vmatpush1.msra.mxu0 %v3752
    %4045 = vmatprep.subr.mxu0 %v3769
    %4046 = vmatpush1.msra.mxu0 %v3768
    %4047 = vmatprep.subr.mxu0 %v3785
    %4048 = vmatpush1.msra.mxu0 %v3784
    %4049 = vmatprep.subr.mxu0 %v3801
    %4050 = vmatpush1.msra.mxu0 %v3800
    %4051 = vmatprep.subr.mxu0 %v3817
    %4052 = vmatpush1.msra.mxu0 %v3816
    %4053 = vmatprep.subr.mxu0 %v3833
    %4054 = vmatpush1.msra.mxu0 %v3832
    %4055 = vmatprep.subr.mxu0 %v3849
    %4056 = vmatpush1.msra.mxu0 %v3848
    %4057 = vmatprep.subr.mxu0 %v3865
    %4058 = vmatpush1.msra.mxu0 %v3864
    %4059 = vmatprep.subr.mxu0 %v3881
    %4060 = vmatpush1.msra.mxu0 %v3880
    %4061 = vmatprep.subr.mxu0 %v3897
    %4062 = vmatpush1.msra.mxu0 %v3896
    %4063 = vmatprep.subr.mxu0 %v3913
    %4064 = vmatpush1.msra.mxu0 %v3912
    %4065 = vmatprep.subr.mxu0 %v3929
    %4066 = vmatpush1.msra.mxu0 %v3928
    %4067 = vmatprep.subr.mxu0 %v3945
    %4068 = vmatpush1.msra.mxu0 %v3944
    %4069 = vmatprep.subr.mxu0 0.0
    %4070 = vmatpush1.msra.mxu0 0.0
    %4071 = vmatprep.subr.mxu0 0.0
    %4072 = vmatpush1.msra.mxu0 0.0
    %4073 = vmatprep.subr.mxu0 0.0
    %4074 = vmatpush1.msra.mxu0 0.0
    %4075 = vmatprep.subr.mxu0 0.0
    %4076 = vmatpush1.msra.mxu0 0.0
    %4077 = vmatprep.subr.mxu0 0.0
    %4078 = vmatpush1.msra.mxu0 0.0
    %4079 = vmatprep.subr.mxu0 0.0
    %4080 = vmatpush1.msra.mxu0 0.0
    %4081 = vmatprep.subr.mxu0 0.0
    %4082 = vmatpush1.msra.mxu0 0.0
    %4083 = vmatprep.subr.mxu0 0.0
    %4084 = vmatpush1.msra.mxu0 0.0
    %4085 = vmatprep.subr.mxu0 0.0
    %4086 = vmatpush1.msra.mxu0 0.0
    %4087 = vmatprep.subr.mxu0 0.0
    %4088 = vmatpush1.msra.mxu0 0.0
    %4089 = vmatprep.subr.mxu0 0.0
    %4090 = vmatpush1.msra.mxu0 0.0
    %4091 = vmatprep.subr.mxu0 0.0
    %4092 = vmatpush1.msra.mxu0 0.0
    %4093 = vmatprep.subr.mxu0 0.0
    %4094 = vmatpush1.msra.mxu0 0.0
    %4095 = vmatprep.subr.mxu0 0.0
    %4096 = vmatpush1.msra.mxu0 0.0
    %4097 = vmatprep.mubr.f32.mxu0 %v3960
    %4098 = vmatmul.mubr.f32.gmra.mrb[0].mxu0 %v3666
    %v4099 = vpop.f32.mrb[0].mxu0
    %v4100 = vadd.f32 0.0, %v4099
    %v4101 = vpop.f32.mrb[0].mxu0
    %v4102 = vadd.f32 0.0, %v4101
    %4103 = vdwg.mxu0
    %4104 = vmatprep.subr.mxu0 %v3675
    %4105 = vmatpush1.msra.mxu0 %v3674
    %4106 = vmatprep.subr.mxu0 %v3691
    %4107 = vmatpush1.msra.mxu0 %v3690
    %4108 = vmatprep.subr.mxu0 %v3707
    %4109 = vmatpush1.msra.mxu0 %v3706
    %4110 = vmatprep.subr.mxu0 %v3723
    %4111 = vmatpush1.msra.mxu0 %v3722
    %4112 = vmatprep.subr.mxu0 %v3739
    %4113 = vmatpush1.msra.mxu0 %v3738
    %4114 = vmatprep.subr.mxu0 %v3755
    %4115 = vmatpush1.msra.mxu0 %v3754
    %4116 = vmatprep.subr.mxu0 %v3771
    %4117 = vmatpush1.msra.mxu0 %v3770
    %4118 = vmatprep.subr.mxu0 %v3787
    %4119 = vmatpush1.msra.mxu0 %v3786
    %4120 = vmatprep.subr.mxu0 %v3803
    %4121 = vmatpush1.msra.mxu0 %v3802
    %4122 = vmatprep.subr.mxu0 %v3819
    %4123 = vmatpush1.msra.mxu0 %v3818
    %4124 = vmatprep.subr.mxu0 %v3835
    %4125 = vmatpush1.msra.mxu0 %v3834
    %4126 = vmatprep.subr.mxu0 %v3851
    %4127 = vmatpush1.msra.mxu0 %v3850
    %4128 = vmatprep.subr.mxu0 %v3867
    %4129 = vmatpush1.msra.mxu0 %v3866
    %4130 = vmatprep.subr.mxu0 %v3883
    %4131 = vmatpush1.msra.mxu0 %v3882
    %4132 = vmatprep.subr.mxu0 %v3899
    %4133 = vmatpush1.msra.mxu0 %v3898
    %4134 = vmatprep.subr.mxu0 %v3915
    %4135 = vmatpush1.msra.mxu0 %v3914
    %4136 = vmatprep.subr.mxu0 %v3931
    %4137 = vmatpush1.msra.mxu0 %v3930
    %4138 = vmatprep.subr.mxu0 %v3947
    %4139 = vmatpush1.msra.mxu0 %v3946
    %4140 = vmatprep.subr.mxu0 0.0
    %4141 = vmatpush1.msra.mxu0 0.0
    %4142 = vmatprep.subr.mxu0 0.0
    %4143 = vmatpush1.msra.mxu0 0.0
    %4144 = vmatprep.subr.mxu0 0.0
    %4145 = vmatpush1.msra.mxu0 0.0
    %4146 = vmatprep.subr.mxu0 0.0
    %4147 = vmatpush1.msra.mxu0 0.0
    %4148 = vmatprep.subr.mxu0 0.0
    %4149 = vmatpush1.msra.mxu0 0.0
    %4150 = vmatprep.subr.mxu0 0.0
    %4151 = vmatpush1.msra.mxu0 0.0
    %4152 = vmatprep.subr.mxu0 0.0
    %4153 = vmatpush1.msra.mxu0 0.0
    %4154 = vmatprep.subr.mxu0 0.0
    %4155 = vmatpush1.msra.mxu0 0.0
    %4156 = vmatprep.subr.mxu0 0.0
    %4157 = vmatpush1.msra.mxu0 0.0
    %4158 = vmatprep.subr.mxu0 0.0
    %4159 = vmatpush1.msra.mxu0 0.0
    %4160 = vmatprep.subr.mxu0 0.0
    %4161 = vmatpush1.msra.mxu0 0.0
    %4162 = vmatprep.subr.mxu0 0.0
    %4163 = vmatpush1.msra.mxu0 0.0
    %4164 = vmatprep.subr.mxu0 0.0
    %4165 = vmatpush1.msra.mxu0 0.0
    %4166 = vmatprep.subr.mxu0 0.0
    %4167 = vmatpush1.msra.mxu0 0.0
    %4168 = vmatprep.mubr.f32.mxu0 %v3960
    %4169 = vmatmul.mubr.f32.gmra.mrb[0].mxu0 %v3666
    %v4170 = vpop.f32.mrb[0].mxu0
    %v4171 = vadd.f32 0.0, %v4170
    %v4172 = vpop.f32.mrb[0].mxu0
    %v4173 = vadd.f32 0.0, %v4172
    %4174 = vdwg.mxu0
    %4175 = vmatprep.subr.mxu0 %v3677
    %4176 = vmatpush1.msra.mxu0 %v3676
    %4177 = vmatprep.subr.mxu0 %v3693
    %4178 = vmatpush1.msra.mxu0 %v3692
    %4179 = vmatprep.subr.mxu0 %v3709
    %4180 = vmatpush1.msra.mxu0 %v3708
    %4181 = vmatprep.subr.mxu0 %v3725
    %4182 = vmatpush1.msra.mxu0 %v3724
    %4183 = vmatprep.subr.mxu0 %v3741
    %4184 = vmatpush1.msra.mxu0 %v3740
    %4185 = vmatprep.subr.mxu0 %v3757
    %4186 = vmatpush1.msra.mxu0 %v3756
    %4187 = vmatprep.subr.mxu0 %v3773
    %4188 = vmatpush1.msra.mxu0 %v3772
    %4189 = vmatprep.subr.mxu0 %v3789
    %4190 = vmatpush1.msra.mxu0 %v3788
    %4191 = vmatprep.subr.mxu0 %v3805
    %4192 = vmatpush1.msra.mxu0 %v3804
    %4193 = vmatprep.subr.mxu0 %v3821
    %4194 = vmatpush1.msra.mxu0 %v3820
    %4195 = vmatprep.subr.mxu0 %v3837
    %4196 = vmatpush1.msra.mxu0 %v3836
    %4197 = vmatprep.subr.mxu0 %v3853
    %4198 = vmatpush1.msra.mxu0 %v3852
    %4199 = vmatprep.subr.mxu0 %v3869
    %4200 = vmatpush1.msra.mxu0 %v3868
    %4201 = vmatprep.subr.mxu0 %v3885
    %4202 = vmatpush1.msra.mxu0 %v3884
    %4203 = vmatprep.subr.mxu0 %v3901
    %4204 = vmatpush1.msra.mxu0 %v3900
    %4205 = vmatprep.subr.mxu0 %v3917
    %4206 = vmatpush1.msra.mxu0 %v3916
    %4207 = vmatprep.subr.mxu0 %v3933
    %4208 = vmatpush1.msra.mxu0 %v3932
    %4209 = vmatprep.subr.mxu0 %v3949
    %4210 = vmatpush1.msra.mxu0 %v3948
    %4211 = vmatprep.subr.mxu0 0.0
    %4212 = vmatpush1.msra.mxu0 0.0
    %4213 = vmatprep.subr.mxu0 0.0
    %4214 = vmatpush1.msra.mxu0 0.0
    %4215 = vmatprep.subr.mxu0 0.0
    %4216 = vmatpush1.msra.mxu0 0.0
    %4217 = vmatprep.subr.mxu0 0.0
    %4218 = vmatpush1.msra.mxu0 0.0
    %4219 = vmatprep.subr.mxu0 0.0
    %4220 = vmatpush1.msra.mxu0 0.0
    %4221 = vmatprep.subr.mxu0 0.0
    %4222 = vmatpush1.msra.mxu0 0.0
    %4223 = vmatprep.subr.mxu0 0.0
    %4224 = vmatpush1.msra.mxu0 0.0
    %4225 = vmatprep.subr.mxu0 0.0
    %4226 = vmatpush1.msra.mxu0 0.0
    %4227 = vmatprep.subr.mxu0 0.0
    %4228 = vmatpush1.msra.mxu0 0.0
    %4229 = vmatprep.subr.mxu0 0.0
    %4230 = vmatpush1.msra.mxu0 0.0
    %4231 = vmatprep.subr.mxu0 0.0
    %4232 = vmatpush1.msra.mxu0 0.0
    %4233 = vmatprep.subr.mxu0 0.0
    %4234 = vmatpush1.msra.mxu0 0.0
    %4235 = vmatprep.subr.mxu0 0.0
    %4236 = vmatpush1.msra.mxu0 0.0
    %4237 = vmatprep.subr.mxu0 0.0
    %4238 = vmatpush1.msra.mxu0 0.0
    %4239 = vmatprep.mubr.f32.mxu0 %v3960
    %4240 = vmatmul.mubr.f32.gmra.mrb[0].mxu0 %v3666
    %v4241 = vpop.f32.mrb[0].mxu0
    %v4242 = vadd.f32 0.0, %v4241
    %v4243 = vpop.f32.mrb[0].mxu0
    %v4244 = vadd.f32 0.0, %v4243
    %4245 = vdwg.mxu0
    %4246 = vmatprep.subr.mxu0 %v3679
    %4247 = vmatpush1.msra.mxu0 %v3678
    %4248 = vmatprep.subr.mxu0 %v3695
    %4249 = vmatpush1.msra.mxu0 %v3694
    %4250 = vmatprep.subr.mxu0 %v3711
    %4251 = vmatpush1.msra.mxu0 %v3710
    %4252 = vmatprep.subr.mxu0 %v3727
    %4253 = vmatpush1.msra.mxu0 %v3726
    %4254 = vmatprep.subr.mxu0 %v3743
    %4255 = vmatpush1.msra.mxu0 %v3742
    %4256 = vmatprep.subr.mxu0 %v3759
    %4257 = vmatpush1.msra.mxu0 %v3758
    %4258 = vmatprep.subr.mxu0 %v3775
    %4259 = vmatpush1.msra.mxu0 %v3774
    %4260 = vmatprep.subr.mxu0 %v3791
    %4261 = vmatpush1.msra.mxu0 %v3790
    %4262 = vmatprep.subr.mxu0 %v3807
    %4263 = vmatpush1.msra.mxu0 %v3806
    %4264 = vmatprep.subr.mxu0 %v3823
    %4265 = vmatpush1.msra.mxu0 %v3822
    %4266 = vmatprep.subr.mxu0 %v3839
    %4267 = vmatpush1.msra.mxu0 %v3838
    %4268 = vmatprep.subr.mxu0 %v3855
    %4269 = vmatpush1.msra.mxu0 %v3854
    %4270 = vmatprep.subr.mxu0 %v3871
    %4271 = vmatpush1.msra.mxu0 %v3870
    %4272 = vmatprep.subr.mxu0 %v3887
    %4273 = vmatpush1.msra.mxu0 %v3886
    %4274 = vmatprep.subr.mxu0 %v3903
    %4275 = vmatpush1.msra.mxu0 %v3902
    %4276 = vmatprep.subr.mxu0 %v3919
    %4277 = vmatpush1.msra.mxu0 %v3918
    %4278 = vmatprep.subr.mxu0 %v3935
    %4279 = vmatpush1.msra.mxu0 %v3934
    %4280 = vmatprep.subr.mxu0 %v3951
    %4281 = vmatpush1.msra.mxu0 %v3950
    %4282 = vmatprep.subr.mxu0 0.0
    %4283 = vmatpush1.msra.mxu0 0.0
    %4284 = vmatprep.subr.mxu0 0.0
    %4285 = vmatpush1.msra.mxu0 0.0
    %4286 = vmatprep.subr.mxu0 0.0
    %4287 = vmatpush1.msra.mxu0 0.0
    %4288 = vmatprep.subr.mxu0 0.0
    %4289 = vmatpush1.msra.mxu0 0.0
    %4290 = vmatprep.subr.mxu0 0.0
    %4291 = vmatpush1.msra.mxu0 0.0
    %4292 = vmatprep.subr.mxu0 0.0
    %4293 = vmatpush1.msra.mxu0 0.0
    %4294 = vmatprep.subr.mxu0 0.0
    %4295 = vmatpush1.msra.mxu0 0.0
    %4296 = vmatprep.subr.mxu0 0.0
    %4297 = vmatpush1.msra.mxu0 0.0
    %4298 = vmatprep.subr.mxu0 0.0
    %4299 = vmatpush1.msra.mxu0 0.0
    %4300 = vmatprep.subr.mxu0 0.0
    %4301 = vmatpush1.msra.mxu0 0.0
    %4302 = vmatprep.subr.mxu0 0.0
    %4303 = vmatpush1.msra.mxu0 0.0
    %4304 = vmatprep.subr.mxu0 0.0
    %4305 = vmatpush1.msra.mxu0 0.0
    %4306 = vmatprep.subr.mxu0 0.0
    %4307 = vmatpush1.msra.mxu0 0.0
    %4308 = vmatprep.subr.mxu0 0.0
    %4309 = vmatpush1.msra.mxu0 0.0
    %4310 = vmatprep.mubr.f32.mxu0 %v3960
    %4311 = vmatmul.mubr.f32.gmra.mrb[0].mxu0 %v3666
    %v4312 = vpop.f32.mrb[0].mxu0
    %v4313 = vadd.f32 0.0, %v4312
    %v4314 = vpop.f32.mrb[0].mxu0
    %v4315 = vadd.f32 0.0, %v4314
    %4316 = vdwg.mxu0
    %4317 = vmatprep.subr.mxu0 %v3681
    %4318 = vmatpush1.msra.mxu0 %v3680
    %4319 = vmatprep.subr.mxu0 %v3697
    %4320 = vmatpush1.msra.mxu0 %v3696
    %4321 = vmatprep.subr.mxu0 %v3713
    %4322 = vmatpush1.msra.mxu0 %v3712
    %4323 = vmatprep.subr.mxu0 %v3729
    %4324 = vmatpush1.msra.mxu0 %v3728
    %4325 = vmatprep.subr.mxu0 %v3745
    %4326 = vmatpush1.msra.mxu0 %v3744
    %4327 = vmatprep.subr.mxu0 %v3761
    %4328 = vmatpush1.msra.mxu0 %v3760
    %4329 = vmatprep.subr.mxu0 %v3777
    %4330 = vmatpush1.msra.mxu0 %v3776
    %4331 = vmatprep.subr.mxu0 %v3793
    %4332 = vmatpush1.msra.mxu0 %v3792
    %4333 = vmatprep.subr.mxu0 %v3809
    %4334 = vmatpush1.msra.mxu0 %v3808
    %4335 = vmatprep.subr.mxu0 %v3825
    %4336 = vmatpush1.msra.mxu0 %v3824
    %4337 = vmatprep.subr.mxu0 %v3841
    %4338 = vmatpush1.msra.mxu0 %v3840
    %4339 = vmatprep.subr.mxu0 %v3857
    %4340 = vmatpush1.msra.mxu0 %v3856
    %4341 = vmatprep.subr.mxu0 %v3873
    %4342 = vmatpush1.msra.mxu0 %v3872
    %4343 = vmatprep.subr.mxu0 %v3889
    %4344 = vmatpush1.msra.mxu0 %v3888
    %4345 = vmatprep.subr.mxu0 %v3905
    %4346 = vmatpush1.msra.mxu0 %v3904
    %4347 = vmatprep.subr.mxu0 %v3921
    %4348 = vmatpush1.msra.mxu0 %v3920
    %4349 = vmatprep.subr.mxu0 %v3937
    %4350 = vmatpush1.msra.mxu0 %v3936
    %4351 = vmatprep.subr.mxu0 %v3953
    %4352 = vmatpush1.msra.mxu0 %v3952
    %4353 = vmatprep.subr.mxu0 0.0
    %4354 = vmatpush1.msra.mxu0 0.0
    %4355 = vmatprep.subr.mxu0 0.0
    %4356 = vmatpush1.msra.mxu0 0.0
    %4357 = vmatprep.subr.mxu0 0.0
    %4358 = vmatpush1.msra.mxu0 0.0
    %4359 = vmatprep.subr.mxu0 0.0
    %4360 = vmatpush1.msra.mxu0 0.0
    %4361 = vmatprep.subr.mxu0 0.0
    %4362 = vmatpush1.msra.mxu0 0.0
    %4363 = vmatprep.subr.mxu0 0.0
    %4364 = vmatpush1.msra.mxu0 0.0
    %4365 = vmatprep.subr.mxu0 0.0
    %4366 = vmatpush1.msra.mxu0 0.0
    %4367 = vmatprep.subr.mxu0 0.0
    %4368 = vmatpush1.msra.mxu0 0.0
    %4369 = vmatprep.subr.mxu0 0.0
    %4370 = vmatpush1.msra.mxu0 0.0
    %4371 = vmatprep.subr.mxu0 0.0
    %4372 = vmatpush1.msra.mxu0 0.0
    %4373 = vmatprep.subr.mxu0 0.0
    %4374 = vmatpush1.msra.mxu0 0.0
    %4375 = vmatprep.subr.mxu0 0.0
    %4376 = vmatpush1.msra.mxu0 0.0
    %4377 = vmatprep.subr.mxu0 0.0
    %4378 = vmatpush1.msra.mxu0 0.0
    %4379 = vmatprep.subr.mxu0 0.0
    %4380 = vmatpush1.msra.mxu0 0.0
    %4381 = vmatprep.mubr.f32.mxu0 %v3960
    %4382 = vmatmul.mubr.f32.gmra.mrb[0].mxu0 %v3666
    %v4383 = vpop.f32.mrb[0].mxu0
    %v4384 = vadd.f32 0.0, %v4383
    %v4385 = vpop.f32.mrb[0].mxu0
    %v4386 = vadd.f32 0.0, %v4385
    %4387 = vdwg.mxu0
    %4388 = vmatprep.subr.mxu0 %v3683
    %4389 = vmatpush1.msra.mxu0 %v3682
    %4390 = vmatprep.subr.mxu0 %v3699
    %4391 = vmatpush1.msra.mxu0 %v3698
    %4392 = vmatprep.subr.mxu0 %v3715
    %4393 = vmatpush1.msra.mxu0 %v3714
    %4394 = vmatprep.subr.mxu0 %v3731
    %4395 = vmatpush1.msra.mxu0 %v3730
    %4396 = vmatprep.subr.mxu0 %v3747
    %4397 = vmatpush1.msra.mxu0 %v3746
    %4398 = vmatprep.subr.mxu0 %v3763
    %4399 = vmatpush1.msra.mxu0 %v3762
    %4400 = vmatprep.subr.mxu0 %v3779
    %4401 = vmatpush1.msra.mxu0 %v3778
    %4402 = vmatprep.subr.mxu0 %v3795
    %4403 = vmatpush1.msra.mxu0 %v3794
    %4404 = vmatprep.subr.mxu0 %v3811
    %4405 = vmatpush1.msra.mxu0 %v3810
    %4406 = vmatprep.subr.mxu0 %v3827
    %4407 = vmatpush1.msra.mxu0 %v3826
    %4408 = vmatprep.subr.mxu0 %v3843
    %4409 = vmatpush1.msra.mxu0 %v3842
    %4410 = vmatprep.subr.mxu0 %v3859
    %4411 = vmatpush1.msra.mxu0 %v3858
    %4412 = vmatprep.subr.mxu0 %v3875
    %4413 = vmatpush1.msra.mxu0 %v3874
    %4414 = vmatprep.subr.mxu0 %v3891
    %4415 = vmatpush1.msra.mxu0 %v3890
    %4416 = vmatprep.subr.mxu0 %v3907
    %4417 = vmatpush1.msra.mxu0 %v3906
    %4418 = vmatprep.subr.mxu0 %v3923
    %4419 = vmatpush1.msra.mxu0 %v3922
    %4420 = vmatprep.subr.mxu0 %v3939
    %4421 = vmatpush1.msra.mxu0 %v3938
    %4422 = vmatprep.subr.mxu0 %v3955
    %4423 = vmatpush1.msra.mxu0 %v3954
    %4424 = vmatprep.subr.mxu0 0.0
    %4425 = vmatpush1.msra.mxu0 0.0
    %4426 = vmatprep.subr.mxu0 0.0
    %4427 = vmatpush1.msra.mxu0 0.0
    %4428 = vmatprep.subr.mxu0 0.0
    %4429 = vmatpush1.msra.mxu0 0.0
    %4430 = vmatprep.subr.mxu0 0.0
    %4431 = vmatpush1.msra.mxu0 0.0
    %4432 = vmatprep.subr.mxu0 0.0
    %4433 = vmatpush1.msra.mxu0 0.0
    %4434 = vmatprep.subr.mxu0 0.0
    %4435 = vmatpush1.msra.mxu0 0.0
    %4436 = vmatprep.subr.mxu0 0.0
    %4437 = vmatpush1.msra.mxu0 0.0
    %4438 = vmatprep.subr.mxu0 0.0
    %4439 = vmatpush1.msra.mxu0 0.0
    %4440 = vmatprep.subr.mxu0 0.0
    %4441 = vmatpush1.msra.mxu0 0.0
    %4442 = vmatprep.subr.mxu0 0.0
    %4443 = vmatpush1.msra.mxu0 0.0
    %4444 = vmatprep.subr.mxu0 0.0
    %4445 = vmatpush1.msra.mxu0 0.0
    %4446 = vmatprep.subr.mxu0 0.0
    %4447 = vmatpush1.msra.mxu0 0.0
    %4448 = vmatprep.subr.mxu0 0.0
    %4449 = vmatpush1.msra.mxu0 0.0
    %4450 = vmatprep.subr.mxu0 0.0
    %4451 = vmatpush1.msra.mxu0 0.0
    %4452 = vmatprep.mubr.f32.mxu0 %v3960
    %4453 = vmatmul.mubr.f32.gmra.mrb[0].mxu0 %v3666
    %v4454 = vpop.f32.mrb[0].mxu0
    %v4455 = vadd.f32 0.0, %v4454
    %v4456 = vpop.f32.mrb[0].mxu0
    %v4457 = vadd.f32 0.0, %v4456
    %4458 = vdwg.mxu0
    %4459 = vmatprep.subr.mxu0 %v3685
    %4460 = vmatpush1.msra.mxu0 %v3684
    %4461 = vmatprep.subr.mxu0 %v3701
    %4462 = vmatpush1.msra.mxu0 %v3700
    %4463 = vmatprep.subr.mxu0 %v3717
    %4464 = vmatpush1.msra.mxu0 %v3716
    %4465 = vmatprep.subr.mxu0 %v3733
    %4466 = vmatpush1.msra.mxu0 %v3732
    %4467 = vmatprep.subr.mxu0 %v3749
    %4468 = vmatpush1.msra.mxu0 %v3748
    %4469 = vmatprep.subr.mxu0 %v3765
    %4470 = vmatpush1.msra.mxu0 %v3764
    %4471 = vmatprep.subr.mxu0 %v3781
    %4472 = vmatpush1.msra.mxu0 %v3780
    %4473 = vmatprep.subr.mxu0 %v3797
    %4474 = vmatpush1.msra.mxu0 %v3796
    %4475 = vmatprep.subr.mxu0 %v3813
    %4476 = vmatpush1.msra.mxu0 %v3812
    %4477 = vmatprep.subr.mxu0 %v3829
    %4478 = vmatpush1.msra.mxu0 %v3828
    %4479 = vmatprep.subr.mxu0 %v3845
    %4480 = vmatpush1.msra.mxu0 %v3844
    %4481 = vmatprep.subr.mxu0 %v3861
    %4482 = vmatpush1.msra.mxu0 %v3860
    %4483 = vmatprep.subr.mxu0 %v3877
    %4484 = vmatpush1.msra.mxu0 %v3876
    %4485 = vmatprep.subr.mxu0 %v3893
    %4486 = vmatpush1.msra.mxu0 %v3892
    %4487 = vmatprep.subr.mxu0 %v3909
    %4488 = vmatpush1.msra.mxu0 %v3908
    %4489 = vmatprep.subr.mxu0 %v3925
    %4490 = vmatpush1.msra.mxu0 %v3924
    %4491 = vmatprep.subr.mxu0 %v3941
    %4492 = vmatpush1.msra.mxu0 %v3940
    %4493 = vmatprep.subr.mxu0 %v3957
    %4494 = vmatpush1.msra.mxu0 %v3956
    %4495 = vmatprep.subr.mxu0 0.0
    %4496 = vmatpush1.msra.mxu0 0.0
    %4497 = vmatprep.subr.mxu0 0.0
    %4498 = vmatpush1.msra.mxu0 0.0
    %4499 = vmatprep.subr.mxu0 0.0
    %4500 = vmatpush1.msra.mxu0 0.0
    %4501 = vmatprep.subr.mxu0 0.0
    %4502 = vmatpush1.msra.mxu0 0.0
    %4503 = vmatprep.subr.mxu0 0.0
    %4504 = vmatpush1.msra.mxu0 0.0
    %4505 = vmatprep.subr.mxu0 0.0
    %4506 = vmatpush1.msra.mxu0 0.0
    %4507 = vmatprep.subr.mxu0 0.0
    %4508 = vmatpush1.msra.mxu0 0.0
    %4509 = vmatprep.subr.mxu0 0.0
    %4510 = vmatpush1.msra.mxu0 0.0
    %4511 = vmatprep.subr.mxu0 0.0
    %4512 = vmatpush1.msra.mxu0 0.0
    %4513 = vmatprep.subr.mxu0 0.0
    %4514 = vmatpush1.msra.mxu0 0.0
    %4515 = vmatprep.subr.mxu0 0.0
    %4516 = vmatpush1.msra.mxu0 0.0
    %4517 = vmatprep.subr.mxu0 0.0
    %4518 = vmatpush1.msra.mxu0 0.0
    %4519 = vmatprep.subr.mxu0 0.0
    %4520 = vmatpush1.msra.mxu0 0.0
    %4521 = vmatprep.subr.mxu0 0.0
    %4522 = vmatpush1.msra.mxu0 0.0
    %4523 = vmatprep.mubr.f32.mxu0 %v3960
    %4524 = vmatmul.mubr.f32.gmra.mrb[0].mxu0 %v3666
    %v4525 = vpop.f32.mrb[0].mxu0
    %v4526 = vadd.f32 0.0, %v4525
    %v4527 = vpop.f32.mrb[0].mxu0
    %v4528 = vadd.f32 0.0, %v4527
    %4529 = vdwg.mxu0
    %v4532 = vlaneseq
    %v4533 = vshrl.u32 %v4532, 7
    %v4534 = vsub.s32 0, %v4533
    %v4535 = vrot.slane %v3585, %v4534
    %v4536 = vlaneseq
    %v4537 = vshrl.u32 %v4536, 7
    %v4538 = vsub.s32 1, %v4537
    %v4539 = vrot.slane %v3585, %v4538
    %v4540 = vlaneseq
    %v4541 = vshrl.u32 %v4540, 7
    %v4542 = vsub.s32 2, %v4541
    %v4543 = vrot.slane %v3585, %v4542
    %v4544 = vlaneseq
    %v4545 = vshrl.u32 %v4544, 7
    %v4546 = vsub.s32 3, %v4545
    %v4547 = vrot.slane %v3585, %v4546
    %v4548 = vlaneseq
    %v4549 = vshrl.u32 %v4548, 7
    %v4550 = vsub.s32 4, %v4549
    %v4551 = vrot.slane %v3585, %v4550
    %v4552 = vlaneseq
    %v4553 = vshrl.u32 %v4552, 7
    %v4554 = vsub.s32 5, %v4553
    %v4555 = vrot.slane %v3585, %v4554
    %v4556 = vlaneseq
    %v4557 = vshrl.u32 %v4556, 7
    %v4558 = vsub.s32 6, %v4557
    %v4559 = vrot.slane %v3585, %v4558
    %v4560 = vlaneseq
    %v4561 = vshrl.u32 %v4560, 7
    %v4562 = vsub.s32 7, %v4561
    %v4563 = vrot.slane %v3585, %v4562
    %v4564 = vlaneseq
    %v4565 = vshrl.u32 %v4564, 7
    %v4566 = vsub.s32 0, %v4565
    %v4567 = vrot.slane %v3586, %v4566
    %v4568 = vlaneseq
    %v4569 = vshrl.u32 %v4568, 7
    %v4570 = vsub.s32 1, %v4569
    %v4571 = vrot.slane %v3586, %v4570
    %v4572 = vlaneseq
    %v4573 = vshrl.u32 %v4572, 7
    %v4574 = vsub.s32 2, %v4573
    %v4575 = vrot.slane %v3586, %v4574
    %v4576 = vlaneseq
    %v4577 = vshrl.u32 %v4576, 7
    %v4578 = vsub.s32 3, %v4577
    %v4579 = vrot.slane %v3586, %v4578
    %v4580 = vlaneseq
    %v4581 = vshrl.u32 %v4580, 7
    %v4582 = vsub.s32 4, %v4581
    %v4583 = vrot.slane %v3586, %v4582
    %v4584 = vlaneseq
    %v4585 = vshrl.u32 %v4584, 7
    %v4586 = vsub.s32 5, %v4585
    %v4587 = vrot.slane %v3586, %v4586
    %v4588 = vlaneseq
    %v4589 = vshrl.u32 %v4588, 7
    %v4590 = vsub.s32 6, %v4589
    %v4591 = vrot.slane %v3586, %v4590
    %v4592 = vlaneseq
    %v4593 = vshrl.u32 %v4592, 7
    %v4594 = vsub.s32 7, %v4593
    %v4595 = vrot.slane %v3586, %v4594
    %v4612 = vadd.f32 %v4535, %v4029
    %v4613 = vadd.f32 %v4539, %v4031
    %v4614 = vadd.f32 %v4543, %v4100
    %v4615 = vadd.f32 %v4547, %v4102
    %v4616 = vadd.f32 %v4551, %v4171
    %v4617 = vadd.f32 %v4555, %v4173
    %v4618 = vadd.f32 %v4559, %v4242
    %v4619 = vadd.f32 %v4563, %v4244
    %v4620 = vadd.f32 %v4567, %v4313
    %v4621 = vadd.f32 %v4571, %v4315
    %v4622 = vadd.f32 %v4575, %v4384
    %v4623 = vadd.f32 %v4579, %v4386
    %v4624 = vadd.f32 %v4583, %v4455
    %v4625 = vadd.f32 %v4587, %v4457
    %v4626 = vadd.f32 %v4591, %v4526
    %v4627 = vadd.f32 %v4595, %v4528
    %s4628 = scalar_lea.vmem [#allocation13], 2
    %v4629 = vld [vmem:[%s4628] sm:$0x3]
    %v4631 = vsel %vm3588, %v4629, 0
    %4633 = vmatprep.subr.mxu0 %v3582
    %4634 = vmatpush1.msra.mxu0 %v3581
    %4635 = vmatprep.subr.mxu0 %v3597
    %4636 = vmatpush1.msra.mxu0 %v3594
    %4637 = vmatprep.subr.mxu0 0.0
    %4638 = vmatpush1.msra.mxu0 0.0
    %4639 = vmatprep.subr.mxu0 0.0
    %4640 = vmatpush1.msra.mxu0 0.0
    %4641 = vmatprep.subr.mxu0 0.0
    %4642 = vmatpush1.msra.mxu0 0.0
    %4643 = vmatprep.subr.mxu0 0.0
    %4644 = vmatpush1.msra.mxu0 0.0
    %4645 = vmatprep.subr.mxu0 0.0
    %4646 = vmatpush1.msra.mxu0 0.0
    %4647 = vmatprep.subr.mxu0 0.0
    %4648 = vmatpush1.msra.mxu0 0.0
    %4649 = vmatprep.subr.mxu0 0.0
    %4650 = vmatpush1.msra.mxu0 0.0
    %4651 = vmatprep.subr.mxu0 0.0
    %4652 = vmatpush1.msra.mxu0 0.0
    %4653 = vmatprep.subr.mxu0 0.0
    %4654 = vmatpush1.msra.mxu0 0.0
    %4655 = vmatprep.subr.mxu0 0.0
    %4656 = vmatpush1.msra.mxu0 0.0
    %4657 = vmatprep.subr.mxu0 0.0
    %4658 = vmatpush1.msra.mxu0 0.0
    %4659 = vmatprep.subr.mxu0 0.0
    %4660 = vmatpush1.msra.mxu0 0.0
    %4661 = vmatprep.subr.mxu0 0.0
    %4662 = vmatpush1.msra.mxu0 0.0
    %4663 = vmatprep.subr.mxu0 0.0
    %4664 = vmatpush1.msra.mxu0 0.0
    %4665 = vmatprep.subr.mxu0 0.0
    %4666 = vmatpush1.msra.mxu0 0.0
    %4667 = vmatprep.subr.mxu0 0.0
    %4668 = vmatpush1.msra.mxu0 0.0
    %4669 = vmatprep.subr.mxu0 0.0
    %4670 = vmatpush1.msra.mxu0 0.0
    %4671 = vmatprep.subr.mxu0 0.0
    %4672 = vmatpush1.msra.mxu0 0.0
    %4673 = vmatprep.subr.mxu0 0.0
    %4674 = vmatpush1.msra.mxu0 0.0
    %4675 = vmatprep.subr.mxu0 0.0
    %4676 = vmatpush1.msra.mxu0 0.0
    %4677 = vmatprep.subr.mxu0 0.0
    %4678 = vmatpush1.msra.mxu0 0.0
    %4679 = vmatprep.subr.mxu0 0.0
    %4680 = vmatpush1.msra.mxu0 0.0
    %4681 = vmatprep.subr.mxu0 0.0
    %4682 = vmatpush1.msra.mxu0 0.0
    %4683 = vmatprep.subr.mxu0 0.0
    %4684 = vmatpush1.msra.mxu0 0.0
    %4685 = vmatprep.subr.mxu0 0.0
    %4686 = vmatpush1.msra.mxu0 0.0
    %4687 = vmatprep.subr.mxu0 0.0
    %4688 = vmatpush1.msra.mxu0 0.0
    %4689 = vmatprep.subr.mxu0 0.0
    %4690 = vmatpush1.msra.mxu0 0.0
    %4691 = vmatprep.subr.mxu0 0.0
    %4692 = vmatpush1.msra.mxu0 0.0
    %4693 = vmatprep.subr.mxu0 0.0
    %4694 = vmatpush1.msra.mxu0 0.0
    %4695 = vmatprep.subr.mxu0 0.0
    %4696 = vmatpush1.msra.mxu0 0.0
    %4697 = vmatprep.mubr.f32.mxu0 0.0
    %4698 = vmatmul.mubr.f32.gmra.mrb[0].mxu0 %v4631
    %v4699 = vpop.f32.mrb[0].mxu0
    %v4700 = vadd.f32 0.0, %v4699
    %v4701 = vpop.f32.mrb[0].mxu0
    %v4702 = vadd.f32 0.0, %v4701
    %4703 = vdwg.mxu0
    %s4704 = scalar_lea.vmem [#allocation14], 2304
    %v4705 = vld [vmem:[%s4704] sm:$0xff]
    %v4706 = vld [vmem:[%s4704 + $0x8] sm:$0xff]
    %v4707 = vld [vmem:[%s4704 + $0x10] sm:$0xff]
    %v4708 = vld [vmem:[%s4704 + $0x18] sm:$0xff]
    %v4709 = vld [vmem:[%s4704 + $0x20] sm:$0xff]
    %v4710 = vld [vmem:[%s4704 + $0x28] sm:$0xff]
    %v4711 = vld [vmem:[%s4704 + $0x30] sm:$0xff]
    %v4712 = vld [vmem:[%s4704 + $0x38] sm:$0xff]
    %v4713 = vld [vmem:[%s4704 + $0x40] sm:$0xff]
    %v4714 = vld [vmem:[%s4704 + $0x48] sm:$0xff]
    %v4715 = vld [vmem:[%s4704 + $0x50] sm:$0xff]
    %v4716 = vld [vmem:[%s4704 + $0x58] sm:$0xff]
    %v4717 = vld [vmem:[%s4704 + $0x60] sm:$0xff]
    %v4718 = vld [vmem:[%s4704 + $0x68] sm:$0xff]
    %v4719 = vld [vmem:[%s4704 + $0x70] sm:$0xff]
    %v4720 = vld [vmem:[%s4704 + $0x78] sm:$0xff]
    %v4721 = vld [vmem:[%s4704 + $0x80] sm:$0xff]
    %v4722 = vld [vmem:[%s4704 + $0x88] sm:$0xff]
    %v4723 = vld [vmem:[%s4704 + $0x90] sm:$0xff]
    %v4724 = vld [vmem:[%s4704 + $0x98] sm:$0xff]
    %v4725 = vld [vmem:[%s4704 + $0xa0] sm:$0xff]
    %v4726 = vld [vmem:[%s4704 + $0xa8] sm:$0xff]
    %v4727 = vld [vmem:[%s4704 + $0xb0] sm:$0xff]
    %v4728 = vld [vmem:[%s4704 + $0xb8] sm:$0xff]
    %v4729 = vld [vmem:[%s4704 + $0xc0] sm:$0xff]
    %v4730 = vld [vmem:[%s4704 + $0xc8] sm:$0xff]
    %v4731 = vld [vmem:[%s4704 + $0xd0] sm:$0xff]
    %v4732 = vld [vmem:[%s4704 + $0xd8] sm:$0xff]
    %v4733 = vld [vmem:[%s4704 + $0xe0] sm:$0xff]
    %v4734 = vld [vmem:[%s4704 + $0xe8] sm:$0xff]
    %v4735 = vld [vmem:[%s4704 + $0xf0] sm:$0xff]
    %v4736 = vld [vmem:[%s4704 + $0xf8] sm:$0xff]
    %v4737 = vld [vmem:[%s4704 + $0x100] sm:$0xff]
    %v4738 = vld [vmem:[%s4704 + $0x108] sm:$0xff]
    %v4739 = vld [vmem:[%s4704 + $0x110] sm:$0xff]
    %v4740 = vld [vmem:[%s4704 + $0x118] sm:$0xff]
    %v4741 = vld [vmem:[%s4704 + $0x120] sm:$0xff]
    %v4742 = vld [vmem:[%s4704 + $0x128] sm:$0xff]
    %v4743 = vld [vmem:[%s4704 + $0x130] sm:$0xff]
    %v4744 = vld [vmem:[%s4704 + $0x138] sm:$0xff]
    %v4745 = vld [vmem:[%s4704 + $0x140] sm:$0xff]
    %v4746 = vld [vmem:[%s4704 + $0x148] sm:$0xff]
    %v4747 = vld [vmem:[%s4704 + $0x150] sm:$0xff]
    %v4748 = vld [vmem:[%s4704 + $0x158] sm:$0xff]
    %v4749 = vld [vmem:[%s4704 + $0x160] sm:$0xff]
    %v4750 = vld [vmem:[%s4704 + $0x168] sm:$0xff]
    %v4751 = vld [vmem:[%s4704 + $0x170] sm:$0xff]
    %v4752 = vld [vmem:[%s4704 + $0x178] sm:$0xff]
    %v4753 = vld [vmem:[%s4704 + $0x180] sm:$0xff]
    %v4754 = vld [vmem:[%s4704 + $0x188] sm:$0xff]
    %v4755 = vld [vmem:[%s4704 + $0x190] sm:$0xff]
    %v4756 = vld [vmem:[%s4704 + $0x198] sm:$0xff]
    %v4757 = vld [vmem:[%s4704 + $0x1a0] sm:$0xff]
    %v4758 = vld [vmem:[%s4704 + $0x1a8] sm:$0xff]
    %v4759 = vld [vmem:[%s4704 + $0x1b0] sm:$0xff]
    %v4760 = vld [vmem:[%s4704 + $0x1b8] sm:$0xff]
    %v4761 = vld [vmem:[%s4704 + $0x1c0] sm:$0xff]
    %v4762 = vld [vmem:[%s4704 + $0x1c8] sm:$0xff]
    %v4763 = vld [vmem:[%s4704 + $0x1d0] sm:$0xff]
    %v4764 = vld [vmem:[%s4704 + $0x1d8] sm:$0xff]
    %v4765 = vld [vmem:[%s4704 + $0x1e0] sm:$0xff]
    %v4766 = vld [vmem:[%s4704 + $0x1e8] sm:$0xff]
    %v4767 = vld [vmem:[%s4704 + $0x1f0] sm:$0xff]
    %v4768 = vld [vmem:[%s4704 + $0x1f8] sm:$0xff]
    %v4769 = vld [vmem:[%s4704 + $0x200] sm:$0xff]
    %v4770 = vld [vmem:[%s4704 + $0x208] sm:$0xff]
    %v4771 = vld [vmem:[%s4704 + $0x210] sm:$0xff]
    %v4772 = vld [vmem:[%s4704 + $0x218] sm:$0xff]
    %v4773 = vld [vmem:[%s4704 + $0x220] sm:$0xff]
    %v4774 = vld [vmem:[%s4704 + $0x228] sm:$0xff]
    %v4775 = vld [vmem:[%s4704 + $0x230] sm:$0xff]
    %v4776 = vld [vmem:[%s4704 + $0x238] sm:$0xff]
    %v4777 = vld [vmem:[%s4704 + $0x240] sm:$0xff]
    %v4778 = vld [vmem:[%s4704 + $0x248] sm:$0xff]
    %v4779 = vld [vmem:[%s4704 + $0x250] sm:$0xff]
    %v4780 = vld [vmem:[%s4704 + $0x258] sm:$0xff]
    %v4781 = vld [vmem:[%s4704 + $0x260] sm:$0xff]
    %v4782 = vld [vmem:[%s4704 + $0x268] sm:$0xff]
    %v4783 = vld [vmem:[%s4704 + $0x270] sm:$0xff]
    %v4784 = vld [vmem:[%s4704 + $0x278] sm:$0xff]
    %v4785 = vld [vmem:[%s4704 + $0x280] sm:$0xff]
    %v4786 = vld [vmem:[%s4704 + $0x288] sm:$0xff]
    %v4787 = vld [vmem:[%s4704 + $0x290] sm:$0xff]
    %v4788 = vld [vmem:[%s4704 + $0x298] sm:$0xff]
    %v4789 = vld [vmem:[%s4704 + $0x2a0] sm:$0xff]
    %v4790 = vld [vmem:[%s4704 + $0x2a8] sm:$0xff]
    %v4791 = vld [vmem:[%s4704 + $0x2b0] sm:$0xff]
    %v4792 = vld [vmem:[%s4704 + $0x2b8] sm:$0xff]
    %v4793 = vld [vmem:[%s4704 + $0x2c0] sm:$0xff]
    %v4794 = vld [vmem:[%s4704 + $0x2c8] sm:$0xff]
    %v4795 = vld [vmem:[%s4704 + $0x2d0] sm:$0xff]
    %v4796 = vld [vmem:[%s4704 + $0x2d8] sm:$0xff]
    %v4797 = vld [vmem:[%s4704 + $0x2e0] sm:$0xff]
    %v4798 = vld [vmem:[%s4704 + $0x2e8] sm:$0xff]
    %v4799 = vld [vmem:[%s4704 + $0x2f0] sm:$0xff]
    %v4800 = vld [vmem:[%s4704 + $0x2f8] sm:$0xff]
    %v4801 = vld [vmem:[%s4704 + $0x300] sm:$0xff]
    %v4802 = vld [vmem:[%s4704 + $0x308] sm:$0xff]
    %v4803 = vld [vmem:[%s4704 + $0x310] sm:$0xff]
    %v4804 = vld [vmem:[%s4704 + $0x318] sm:$0xff]
    %v4805 = vld [vmem:[%s4704 + $0x320] sm:$0xff]
    %v4806 = vld [vmem:[%s4704 + $0x328] sm:$0xff]
    %v4807 = vld [vmem:[%s4704 + $0x330] sm:$0xff]
    %v4808 = vld [vmem:[%s4704 + $0x338] sm:$0xff]
    %v4809 = vld [vmem:[%s4704 + $0x340] sm:$0xff]
    %v4810 = vld [vmem:[%s4704 + $0x348] sm:$0xff]
    %v4811 = vld [vmem:[%s4704 + $0x350] sm:$0xff]
    %v4812 = vld [vmem:[%s4704 + $0x358] sm:$0xff]
    %v4813 = vld [vmem:[%s4704 + $0x360] sm:$0xff]
    %v4814 = vld [vmem:[%s4704 + $0x368] sm:$0xff]
    %v4815 = vld [vmem:[%s4704 + $0x370] sm:$0xff]
    %v4816 = vld [vmem:[%s4704 + $0x378] sm:$0xff]
    %v4817 = vld [vmem:[%s4704 + $0x380] sm:$0xff]
    %v4818 = vld [vmem:[%s4704 + $0x388] sm:$0xff]
    %v4819 = vld [vmem:[%s4704 + $0x390] sm:$0xff]
    %v4820 = vld [vmem:[%s4704 + $0x398] sm:$0xff]
    %v4821 = vld [vmem:[%s4704 + $0x3a0] sm:$0xff]
    %v4822 = vld [vmem:[%s4704 + $0x3a8] sm:$0xff]
    %v4823 = vld [vmem:[%s4704 + $0x3b0] sm:$0xff]
    %v4824 = vld [vmem:[%s4704 + $0x3b8] sm:$0xff]
    %v4825 = vld [vmem:[%s4704 + $0x3c0] sm:$0xff]
    %v4826 = vld [vmem:[%s4704 + $0x3c8] sm:$0xff]
    %v4827 = vld [vmem:[%s4704 + $0x3d0] sm:$0xff]
    %v4828 = vld [vmem:[%s4704 + $0x3d8] sm:$0xff]
    %v4829 = vld [vmem:[%s4704 + $0x3e0] sm:$0xff]
    %v4830 = vld [vmem:[%s4704 + $0x3e8] sm:$0xff]
    %v4831 = vld [vmem:[%s4704 + $0x3f0] sm:$0xff]
    %v4832 = vld [vmem:[%s4704 + $0x3f8] sm:$0xff]
    %v4833 = vld [vmem:[%s4704 + $0x400] sm:$0xff]
    %v4834 = vld [vmem:[%s4704 + $0x408] sm:$0xff]
    %v4835 = vld [vmem:[%s4704 + $0x410] sm:$0xff]
    %v4836 = vld [vmem:[%s4704 + $0x418] sm:$0xff]
    %v4837 = vld [vmem:[%s4704 + $0x420] sm:$0xff]
    %v4838 = vld [vmem:[%s4704 + $0x428] sm:$0xff]
    %v4839 = vld [vmem:[%s4704 + $0x430] sm:$0xff]
    %v4840 = vld [vmem:[%s4704 + $0x438] sm:$0xff]
    %v4841 = vld [vmem:[%s4704 + $0x440] sm:$0xff]
    %v4842 = vld [vmem:[%s4704 + $0x448] sm:$0xff]
    %v4843 = vld [vmem:[%s4704 + $0x450] sm:$0xff]
    %v4844 = vld [vmem:[%s4704 + $0x458] sm:$0xff]
    %v4845 = vld [vmem:[%s4704 + $0x460] sm:$0xff]
    %v4846 = vld [vmem:[%s4704 + $0x468] sm:$0xff]
    %v4847 = vld [vmem:[%s4704 + $0x470] sm:$0xff]
    %v4848 = vld [vmem:[%s4704 + $0x478] sm:$0xff]
    %v4849 = vld [vmem:[%s4704 + $0x480] sm:$0xff]
    %v4850 = vld [vmem:[%s4704 + $0x488] sm:$0xff]
    %v4851 = vld [vmem:[%s4704 + $0x490] sm:$0xff]
    %v4852 = vld [vmem:[%s4704 + $0x498] sm:$0xff]
    %v4853 = vld [vmem:[%s4704 + $0x4a0] sm:$0xff]
    %v4854 = vld [vmem:[%s4704 + $0x4a8] sm:$0xff]
    %v4855 = vld [vmem:[%s4704 + $0x4b0] sm:$0xff]
    %v4856 = vld [vmem:[%s4704 + $0x4b8] sm:$0xff]
    %v4857 = vld [vmem:[%s4704 + $0x4c0] sm:$0xff]
    %v4858 = vld [vmem:[%s4704 + $0x4c8] sm:$0xff]
    %v4859 = vld [vmem:[%s4704 + $0x4d0] sm:$0xff]
    %v4860 = vld [vmem:[%s4704 + $0x4d8] sm:$0xff]
    %v4861 = vld [vmem:[%s4704 + $0x4e0] sm:$0xff]
    %v4862 = vld [vmem:[%s4704 + $0x4e8] sm:$0xff]
    %v4863 = vld [vmem:[%s4704 + $0x4f0] sm:$0xff]
    %v4864 = vld [vmem:[%s4704 + $0x4f8] sm:$0xff]
    %v4865 = vld [vmem:[%s4704 + $0x500] sm:$0xff]
    %v4866 = vld [vmem:[%s4704 + $0x508] sm:$0xff]
    %v4867 = vld [vmem:[%s4704 + $0x510] sm:$0xff]
    %v4868 = vld [vmem:[%s4704 + $0x518] sm:$0xff]
    %v4869 = vld [vmem:[%s4704 + $0x520] sm:$0xff]
    %v4870 = vld [vmem:[%s4704 + $0x528] sm:$0xff]
    %v4871 = vld [vmem:[%s4704 + $0x530] sm:$0xff]
    %v4872 = vld [vmem:[%s4704 + $0x538] sm:$0xff]
    %v4873 = vld [vmem:[%s4704 + $0x540] sm:$0xff]
    %v4874 = vld [vmem:[%s4704 + $0x548] sm:$0xff]
    %v4875 = vld [vmem:[%s4704 + $0x550] sm:$0xff]
    %v4876 = vld [vmem:[%s4704 + $0x558] sm:$0xff]
    %v4877 = vld [vmem:[%s4704 + $0x560] sm:$0xff]
    %v4878 = vld [vmem:[%s4704 + $0x568] sm:$0xff]
    %v4879 = vld [vmem:[%s4704 + $0x570] sm:$0xff]
    %v4880 = vld [vmem:[%s4704 + $0x578] sm:$0xff]
    %v4881 = vld [vmem:[%s4704 + $0x580] sm:$0xff]
    %v4882 = vld [vmem:[%s4704 + $0x588] sm:$0xff]
    %v4883 = vld [vmem:[%s4704 + $0x590] sm:$0xff]
    %v4884 = vld [vmem:[%s4704 + $0x598] sm:$0xff]
    %v4885 = vld [vmem:[%s4704 + $0x5a0] sm:$0xff]
    %v4886 = vld [vmem:[%s4704 + $0x5a8] sm:$0xff]
    %v4887 = vld [vmem:[%s4704 + $0x5b0] sm:$0xff]
    %v4888 = vld [vmem:[%s4704 + $0x5b8] sm:$0xff]
    %v4889 = vld [vmem:[%s4704 + $0x5c0] sm:$0xff]
    %v4890 = vld [vmem:[%s4704 + $0x5c8] sm:$0xff]
    %v4891 = vld [vmem:[%s4704 + $0x5d0] sm:$0xff]
    %v4892 = vld [vmem:[%s4704 + $0x5d8] sm:$0xff]
    %v4893 = vld [vmem:[%s4704 + $0x5e0] sm:$0xff]
    %v4894 = vld [vmem:[%s4704 + $0x5e8] sm:$0xff]
    %v4895 = vld [vmem:[%s4704 + $0x5f0] sm:$0xff]
    %v4896 = vld [vmem:[%s4704 + $0x5f8] sm:$0xff]
    %v4897 = vld [vmem:[%s4704 + $0x600] sm:$0xff]
    %v4898 = vld [vmem:[%s4704 + $0x608] sm:$0xff]
    %v4899 = vld [vmem:[%s4704 + $0x610] sm:$0xff]
    %v4900 = vld [vmem:[%s4704 + $0x618] sm:$0xff]
    %v4901 = vld [vmem:[%s4704 + $0x620] sm:$0xff]
    %v4902 = vld [vmem:[%s4704 + $0x628] sm:$0xff]
    %v4903 = vld [vmem:[%s4704 + $0x630] sm:$0xff]
    %v4904 = vld [vmem:[%s4704 + $0x638] sm:$0xff]
    %v4905 = vld [vmem:[%s4704 + $0x640] sm:$0xff]
    %v4906 = vld [vmem:[%s4704 + $0x648] sm:$0xff]
    %v4907 = vld [vmem:[%s4704 + $0x650] sm:$0xff]
    %v4908 = vld [vmem:[%s4704 + $0x658] sm:$0xff]
    %v4909 = vld [vmem:[%s4704 + $0x660] sm:$0xff]
    %v4910 = vld [vmem:[%s4704 + $0x668] sm:$0xff]
    %v4911 = vld [vmem:[%s4704 + $0x670] sm:$0xff]
    %v4912 = vld [vmem:[%s4704 + $0x678] sm:$0xff]
    %v4913 = vld [vmem:[%s4704 + $0x680] sm:$0xff]
    %v4914 = vld [vmem:[%s4704 + $0x688] sm:$0xff]
    %v4915 = vld [vmem:[%s4704 + $0x690] sm:$0xff]
    %v4916 = vld [vmem:[%s4704 + $0x698] sm:$0xff]
    %v4917 = vld [vmem:[%s4704 + $0x6a0] sm:$0xff]
    %v4918 = vld [vmem:[%s4704 + $0x6a8] sm:$0xff]
    %v4919 = vld [vmem:[%s4704 + $0x6b0] sm:$0xff]
    %v4920 = vld [vmem:[%s4704 + $0x6b8] sm:$0xff]
    %v4921 = vld [vmem:[%s4704 + $0x6c0] sm:$0xff]
    %v4922 = vld [vmem:[%s4704 + $0x6c8] sm:$0xff]
    %v4923 = vld [vmem:[%s4704 + $0x6d0] sm:$0xff]
    %v4924 = vld [vmem:[%s4704 + $0x6d8] sm:$0xff]
    %v4925 = vld [vmem:[%s4704 + $0x6e0] sm:$0xff]
    %v4926 = vld [vmem:[%s4704 + $0x6e8] sm:$0xff]
    %v4927 = vld [vmem:[%s4704 + $0x6f0] sm:$0xff]
    %v4928 = vld [vmem:[%s4704 + $0x6f8] sm:$0xff]
    %v4929 = vld [vmem:[%s4704 + $0x700] sm:$0xff]
    %v4930 = vld [vmem:[%s4704 + $0x708] sm:$0xff]
    %v4931 = vld [vmem:[%s4704 + $0x710] sm:$0xff]
    %v4932 = vld [vmem:[%s4704 + $0x718] sm:$0xff]
    %v4933 = vld [vmem:[%s4704 + $0x720] sm:$0xff]
    %v4934 = vld [vmem:[%s4704 + $0x728] sm:$0xff]
    %v4935 = vld [vmem:[%s4704 + $0x730] sm:$0xff]
    %v4936 = vld [vmem:[%s4704 + $0x738] sm:$0xff]
    %v4937 = vld [vmem:[%s4704 + $0x740] sm:$0xff]
    %v4938 = vld [vmem:[%s4704 + $0x748] sm:$0xff]
    %v4939 = vld [vmem:[%s4704 + $0x750] sm:$0xff]
    %v4940 = vld [vmem:[%s4704 + $0x758] sm:$0xff]
    %v4941 = vld [vmem:[%s4704 + $0x760] sm:$0xff]
    %v4942 = vld [vmem:[%s4704 + $0x768] sm:$0xff]
    %v4943 = vld [vmem:[%s4704 + $0x770] sm:$0xff]
    %v4944 = vld [vmem:[%s4704 + $0x778] sm:$0xff]
    %v4945 = vld [vmem:[%s4704 + $0x780] sm:$0xff]
    %v4946 = vld [vmem:[%s4704 + $0x788] sm:$0xff]
    %v4947 = vld [vmem:[%s4704 + $0x790] sm:$0xff]
    %v4948 = vld [vmem:[%s4704 + $0x798] sm:$0xff]
    %v4949 = vld [vmem:[%s4704 + $0x7a0] sm:$0xff]
    %v4950 = vld [vmem:[%s4704 + $0x7a8] sm:$0xff]
    %v4951 = vld [vmem:[%s4704 + $0x7b0] sm:$0xff]
    %v4952 = vld [vmem:[%s4704 + $0x7b8] sm:$0xff]
    %v4953 = vld [vmem:[%s4704 + $0x7c0] sm:$0xff]
    %v4954 = vld [vmem:[%s4704 + $0x7c8] sm:$0xff]
    %v4955 = vld [vmem:[%s4704 + $0x7d0] sm:$0xff]
    %v4956 = vld [vmem:[%s4704 + $0x7d8] sm:$0xff]
    %v4957 = vld [vmem:[%s4704 + $0x7e0] sm:$0xff]
    %v4958 = vld [vmem:[%s4704 + $0x7e8] sm:$0xff]
    %v4959 = vld [vmem:[%s4704 + $0x7f0] sm:$0xff]
    %v4960 = vld [vmem:[%s4704 + $0x7f8] sm:$0xff]
    %v4961 = vld [vmem:[%s4704 + $0x800] sm:$0xff]
    %v4962 = vld [vmem:[%s4704 + $0x808] sm:$0xff]
    %v4963 = vld [vmem:[%s4704 + $0x810] sm:$0xff]
    %v4964 = vld [vmem:[%s4704 + $0x818] sm:$0xff]
    %v4965 = vld [vmem:[%s4704 + $0x820] sm:$0xff]
    %v4966 = vld [vmem:[%s4704 + $0x828] sm:$0xff]
    %v4967 = vld [vmem:[%s4704 + $0x830] sm:$0xff]
    %v4968 = vld [vmem:[%s4704 + $0x838] sm:$0xff]
    %v4969 = vld [vmem:[%s4704 + $0x840] sm:$0xff]
    %v4970 = vld [vmem:[%s4704 + $0x848] sm:$0xff]
    %v4971 = vld [vmem:[%s4704 + $0x850] sm:$0xff]
    %v4972 = vld [vmem:[%s4704 + $0x858] sm:$0xff]
    %v4973 = vld [vmem:[%s4704 + $0x860] sm:$0xff]
    %v4974 = vld [vmem:[%s4704 + $0x868] sm:$0xff]
    %v4975 = vld [vmem:[%s4704 + $0x870] sm:$0xff]
    %v4976 = vld [vmem:[%s4704 + $0x878] sm:$0xff]
    %v4977 = vld [vmem:[%s4704 + $0x880] sm:$0xff]
    %v4978 = vld [vmem:[%s4704 + $0x888] sm:$0xff]
    %v4979 = vld [vmem:[%s4704 + $0x890] sm:$0xff]
    %v4980 = vld [vmem:[%s4704 + $0x898] sm:$0xff]
    %v4981 = vld [vmem:[%s4704 + $0x8a0] sm:$0xff]
    %v4982 = vld [vmem:[%s4704 + $0x8a8] sm:$0xff]
    %v4983 = vld [vmem:[%s4704 + $0x8b0] sm:$0xff]
    %v4984 = vld [vmem:[%s4704 + $0x8b8] sm:$0xff]
    %v4985 = vld [vmem:[%s4704 + $0x8c0] sm:$0xff]
    %v4986 = vld [vmem:[%s4704 + $0x8c8] sm:$0xff]
    %v4987 = vld [vmem:[%s4704 + $0x8d0] sm:$0xff]
    %v4988 = vld [vmem:[%s4704 + $0x8d8] sm:$0xff]
    %v4989 = vld [vmem:[%s4704 + $0x8e0] sm:$0xff]
    %v4990 = vld [vmem:[%s4704 + $0x8e8] sm:$0xff]
    %v4991 = vld [vmem:[%s4704 + $0x8f0] sm:$0xff]
    %v4992 = vld [vmem:[%s4704 + $0x8f8] sm:$0xff]
    %v4994 = vsel %vm3958, %v4702, 0
    %4996 = vmatprep.subr.mxu0 %v4706
    %4997 = vmatpush1.msra.mxu0 %v4705
    %4998 = vmatprep.subr.mxu0 %v4722
    %4999 = vmatpush1.msra.mxu0 %v4721
    %5000 = vmatprep.subr.mxu0 %v4738
    %5001 = vmatpush1.msra.mxu0 %v4737
    %5002 = vmatprep.subr.mxu0 %v4754
    %5003 = vmatpush1.msra.mxu0 %v4753
    %5004 = vmatprep.subr.mxu0 %v4770
    %5005 = vmatpush1.msra.mxu0 %v4769
    %5006 = vmatprep.subr.mxu0 %v4786
    %5007 = vmatpush1.msra.mxu0 %v4785
    %5008 = vmatprep.subr.mxu0 %v4802
    %5009 = vmatpush1.msra.mxu0 %v4801
    %5010 = vmatprep.subr.mxu0 %v4818
    %5011 = vmatpush1.msra.mxu0 %v4817
    %5012 = vmatprep.subr.mxu0 %v4834
    %5013 = vmatpush1.msra.mxu0 %v4833
    %5014 = vmatprep.subr.mxu0 %v4850
    %5015 = vmatpush1.msra.mxu0 %v4849
    %5016 = vmatprep.subr.mxu0 %v4866
    %5017 = vmatpush1.msra.mxu0 %v4865
    %5018 = vmatprep.subr.mxu0 %v4882
    %5019 = vmatpush1.msra.mxu0 %v4881
    %5020 = vmatprep.subr.mxu0 %v4898
    %5021 = vmatpush1.msra.mxu0 %v4897
    %5022 = vmatprep.subr.mxu0 %v4914
    %5023 = vmatpush1.msra.mxu0 %v4913
    %5024 = vmatprep.subr.mxu0 %v4930
    %5025 = vmatpush1.msra.mxu0 %v4929
    %5026 = vmatprep.subr.mxu0 %v4946
    %5027 = vmatpush1.msra.mxu0 %v4945
    %5028 = vmatprep.subr.mxu0 %v4962
    %5029 = vmatpush1.msra.mxu0 %v4961
    %5030 = vmatprep.subr.mxu0 %v4978
    %5031 = vmatpush1.msra.mxu0 %v4977
    %5032 = vmatprep.subr.mxu0 0.0
    %5033 = vmatpush1.msra.mxu0 0.0
    %5034 = vmatprep.subr.mxu0 0.0
    %5035 = vmatpush1.msra.mxu0 0.0
    %5036 = vmatprep.subr.mxu0 0.0
    %5037 = vmatpush1.msra.mxu0 0.0
    %5038 = vmatprep.subr.mxu0 0.0
    %5039 = vmatpush1.msra.mxu0 0.0
    %5040 = vmatprep.subr.mxu0 0.0
    %5041 = vmatpush1.msra.mxu0 0.0
    %5042 = vmatprep.subr.mxu0 0.0
    %5043 = vmatpush1.msra.mxu0 0.0
    %5044 = vmatprep.subr.mxu0 0.0
    %5045 = vmatpush1.msra.mxu0 0.0
    %5046 = vmatprep.subr.mxu0 0.0
    %5047 = vmatpush1.msra.mxu0 0.0
    %5048 = vmatprep.subr.mxu0 0.0
    %5049 = vmatpush1.msra.mxu0 0.0
    %5050 = vmatprep.subr.mxu0 0.0
    %5051 = vmatpush1.msra.mxu0 0.0
    %5052 = vmatprep.subr.mxu0 0.0
    %5053 = vmatpush1.msra.mxu0 0.0
    %5054 = vmatprep.subr.mxu0 0.0
    %5055 = vmatpush1.msra.mxu0 0.0
    %5056 = vmatprep.subr.mxu0 0.0
    %5057 = vmatpush1.msra.mxu0 0.0
    %5058 = vmatprep.subr.mxu0 0.0
    %5059 = vmatpush1.msra.mxu0 0.0
    %5060 = vmatprep.mubr.f32.mxu0 %v4994
    %5061 = vmatmul.mubr.f32.gmra.mrb[0].mxu0 %v4700
    %v5062 = vpop.f32.mrb[0].mxu0
    %v5063 = vadd.f32 0.0, %v5062
    %v5064 = vpop.f32.mrb[0].mxu0
    %v5065 = vadd.f32 0.0, %v5064
    %5066 = vdwg.mxu0
    %5067 = vmatprep.subr.mxu0 %v4708
    %5068 = vmatpush1.msra.mxu0 %v4707
    %5069 = vmatprep.subr.mxu0 %v4724
    %5070 = vmatpush1.msra.mxu0 %v4723
    %5071 = vmatprep.subr.mxu0 %v4740
    %5072 = vmatpush1.msra.mxu0 %v4739
    %5073 = vmatprep.subr.mxu0 %v4756
    %5074 = vmatpush1.msra.mxu0 %v4755
    %5075 = vmatprep.subr.mxu0 %v4772
    %5076 = vmatpush1.msra.mxu0 %v4771
    %5077 = vmatprep.subr.mxu0 %v4788
    %5078 = vmatpush1.msra.mxu0 %v4787
    %5079 = vmatprep.subr.mxu0 %v4804
    %5080 = vmatpush1.msra.mxu0 %v4803
    %5081 = vmatprep.subr.mxu0 %v4820
    %5082 = vmatpush1.msra.mxu0 %v4819
    %5083 = vmatprep.subr.mxu0 %v4836
    %5084 = vmatpush1.msra.mxu0 %v4835
    %5085 = vmatprep.subr.mxu0 %v4852
    %5086 = vmatpush1.msra.mxu0 %v4851
    %5087 = vmatprep.subr.mxu0 %v4868
    %5088 = vmatpush1.msra.mxu0 %v4867
    %5089 = vmatprep.subr.mxu0 %v4884
    %5090 = vmatpush1.msra.mxu0 %v4883
    %5091 = vmatprep.subr.mxu0 %v4900
    %5092 = vmatpush1.msra.mxu0 %v4899
    %5093 = vmatprep.subr.mxu0 %v4916
    %5094 = vmatpush1.msra.mxu0 %v4915
    %5095 = vmatprep.subr.mxu0 %v4932
    %5096 = vmatpush1.msra.mxu0 %v4931
    %5097 = vmatprep.subr.mxu0 %v4948
    %5098 = vmatpush1.msra.mxu0 %v4947
    %5099 = vmatprep.subr.mxu0 %v4964
    %5100 = vmatpush1.msra.mxu0 %v4963
    %5101 = vmatprep.subr.mxu0 %v4980
    %5102 = vmatpush1.msra.mxu0 %v4979
    %5103 = vmatprep.subr.mxu0 0.0
    %5104 = vmatpush1.msra.mxu0 0.0
    %5105 = vmatprep.subr.mxu0 0.0
    %5106 = vmatpush1.msra.mxu0 0.0
    %5107 = vmatprep.subr.mxu0 0.0
    %5108 = vmatpush1.msra.mxu0 0.0
    %5109 = vmatprep.subr.mxu0 0.0
    %5110 = vmatpush1.msra.mxu0 0.0
    %5111 = vmatprep.subr.mxu0 0.0
    %5112 = vmatpush1.msra.mxu0 0.0
    %5113 = vmatprep.subr.mxu0 0.0
    %5114 = vmatpush1.msra.mxu0 0.0
    %5115 = vmatprep.subr.mxu0 0.0
    %5116 = vmatpush1.msra.mxu0 0.0
    %5117 = vmatprep.subr.mxu0 0.0
    %5118 = vmatpush1.msra.mxu0 0.0
    %5119 = vmatprep.subr.mxu0 0.0
    %5120 = vmatpush1.msra.mxu0 0.0
    %5121 = vmatprep.subr.mxu0 0.0
    %5122 = vmatpush1.msra.mxu0 0.0
    %5123 = vmatprep.subr.mxu0 0.0
    %5124 = vmatpush1.msra.mxu0 0.0
    %5125 = vmatprep.subr.mxu0 0.0
    %5126 = vmatpush1.msra.mxu0 0.0
    %5127 = vmatprep.subr.mxu0 0.0
    %5128 = vmatpush1.msra.mxu0 0.0
    %5129 = vmatprep.subr.mxu0 0.0
    %5130 = vmatpush1.msra.mxu0 0.0
    %5131 = vmatprep.mubr.f32.mxu0 %v4994
    %5132 = vmatmul.mubr.f32.gmra.mrb[0].mxu0 %v4700
    %v5133 = vpop.f32.mrb[0].mxu0
    %v5134 = vadd.f32 0.0, %v5133
    %v5135 = vpop.f32.mrb[0].mxu0
    %v5136 = vadd.f32 0.0, %v5135
    %5137 = vdwg.mxu0
    %5138 = vmatprep.subr.mxu0 %v4710
    %5139 = vmatpush1.msra.mxu0 %v4709
    %5140 = vmatprep.subr.mxu0 %v4726
    %5141 = vmatpush1.msra.mxu0 %v4725
    %5142 = vmatprep.subr.mxu0 %v4742
    %5143 = vmatpush1.msra.mxu0 %v4741
    %5144 = vmatprep.subr.mxu0 %v4758
    %5145 = vmatpush1.msra.mxu0 %v4757
    %5146 = vmatprep.subr.mxu0 %v4774
    %5147 = vmatpush1.msra.mxu0 %v4773
    %5148 = vmatprep.subr.mxu0 %v4790
    %5149 = vmatpush1.msra.mxu0 %v4789
    %5150 = vmatprep.subr.mxu0 %v4806
    %5151 = vmatpush1.msra.mxu0 %v4805
    %5152 = vmatprep.subr.mxu0 %v4822
    %5153 = vmatpush1.msra.mxu0 %v4821
    %5154 = vmatprep.subr.mxu0 %v4838
    %5155 = vmatpush1.msra.mxu0 %v4837
    %5156 = vmatprep.subr.mxu0 %v4854
    %5157 = vmatpush1.msra.mxu0 %v4853
    %5158 = vmatprep.subr.mxu0 %v4870
    %5159 = vmatpush1.msra.mxu0 %v4869
    %5160 = vmatprep.subr.mxu0 %v4886
    %5161 = vmatpush1.msra.mxu0 %v4885
    %5162 = vmatprep.subr.mxu0 %v4902
    %5163 = vmatpush1.msra.mxu0 %v4901
    %5164 = vmatprep.subr.mxu0 %v4918
    %5165 = vmatpush1.msra.mxu0 %v4917
    %5166 = vmatprep.subr.mxu0 %v4934
    %5167 = vmatpush1.msra.mxu0 %v4933
    %5168 = vmatprep.subr.mxu0 %v4950
    %5169 = vmatpush1.msra.mxu0 %v4949
    %5170 = vmatprep.subr.mxu0 %v4966
    %5171 = vmatpush1.msra.mxu0 %v4965
    %5172 = vmatprep.subr.mxu0 %v4982
    %5173 = vmatpush1.msra.mxu0 %v4981
    %5174 = vmatprep.subr.mxu0 0.0
    %5175 = vmatpush1.msra.mxu0 0.0
    %5176 = vmatprep.subr.mxu0 0.0
    %5177 = vmatpush1.msra.mxu0 0.0
    %5178 = vmatprep.subr.mxu0 0.0
    %5179 = vmatpush1.msra.mxu0 0.0
    %5180 = vmatprep.subr.mxu0 0.0
    %5181 = vmatpush1.msra.mxu0 0.0
    %5182 = vmatprep.subr.mxu0 0.0
    %5183 = vmatpush1.msra.mxu0 0.0
    %5184 = vmatprep.subr.mxu0 0.0
    %5185 = vmatpush1.msra.mxu0 0.0
    %5186 = vmatprep.subr.mxu0 0.0
    %5187 = vmatpush1.msra.mxu0 0.0
    %5188 = vmatprep.subr.mxu0 0.0
    %5189 = vmatpush1.msra.mxu0 0.0
    %5190 = vmatprep.subr.mxu0 0.0
    %5191 = vmatpush1.msra.mxu0 0.0
    %5192 = vmatprep.subr.mxu0 0.0
    %5193 = vmatpush1.msra.mxu0 0.0
    %5194 = vmatprep.subr.mxu0 0.0
    %5195 = vmatpush1.msra.mxu0 0.0
    %5196 = vmatprep.subr.mxu0 0.0
    %5197 = vmatpush1.msra.mxu0 0.0
    %5198 = vmatprep.subr.mxu0 0.0
    %5199 = vmatpush1.msra.mxu0 0.0
    %5200 = vmatprep.subr.mxu0 0.0
    %5201 = vmatpush1.msra.mxu0 0.0
    %5202 = vmatprep.mubr.f32.mxu0 %v4994
    %5203 = vmatmul.mubr.f32.gmra.mrb[0].mxu0 %v4700
    %v5204 = vpop.f32.mrb[0].mxu0
    %v5205 = vadd.f32 0.0, %v5204
    %v5206 = vpop.f32.mrb[0].mxu0
    %v5207 = vadd.f32 0.0, %v5206
    %5208 = vdwg.mxu0
    %5209 = vmatprep.subr.mxu0 %v4712
    %5210 = vmatpush1.msra.mxu0 %v4711
    %5211 = vmatprep.subr.mxu0 %v4728
    %5212 = vmatpush1.msra.mxu0 %v4727
    %5213 = vmatprep.subr.mxu0 %v4744
    %5214 = vmatpush1.msra.mxu0 %v4743
    %5215 = vmatprep.subr.mxu0 %v4760
    %5216 = vmatpush1.msra.mxu0 %v4759
    %5217 = vmatprep.subr.mxu0 %v4776
    %5218 = vmatpush1.msra.mxu0 %v4775
    %5219 = vmatprep.subr.mxu0 %v4792
    %5220 = vmatpush1.msra.mxu0 %v4791
    %5221 = vmatprep.subr.mxu0 %v4808
    %5222 = vmatpush1.msra.mxu0 %v4807
    %5223 = vmatprep.subr.mxu0 %v4824
    %5224 = vmatpush1.msra.mxu0 %v4823
    %5225 = vmatprep.subr.mxu0 %v4840
    %5226 = vmatpush1.msra.mxu0 %v4839
    %5227 = vmatprep.subr.mxu0 %v4856
    %5228 = vmatpush1.msra.mxu0 %v4855
    %5229 = vmatprep.subr.mxu0 %v4872
    %5230 = vmatpush1.msra.mxu0 %v4871
    %5231 = vmatprep.subr.mxu0 %v4888
    %5232 = vmatpush1.msra.mxu0 %v4887
    %5233 = vmatprep.subr.mxu0 %v4904
    %5234 = vmatpush1.msra.mxu0 %v4903
    %5235 = vmatprep.subr.mxu0 %v4920
    %5236 = vmatpush1.msra.mxu0 %v4919
    %5237 = vmatprep.subr.mxu0 %v4936
    %5238 = vmatpush1.msra.mxu0 %v4935
    %5239 = vmatprep.subr.mxu0 %v4952
    %5240 = vmatpush1.msra.mxu0 %v4951
    %5241 = vmatprep.subr.mxu0 %v4968
    %5242 = vmatpush1.msra.mxu0 %v4967
    %5243 = vmatprep.subr.mxu0 %v4984
    %5244 = vmatpush1.msra.mxu0 %v4983
    %5245 = vmatprep.subr.mxu0 0.0
    %5246 = vmatpush1.msra.mxu0 0.0
    %5247 = vmatprep.subr.mxu0 0.0
    %5248 = vmatpush1.msra.mxu0 0.0
    %5249 = vmatprep.subr.mxu0 0.0
    %5250 = vmatpush1.msra.mxu0 0.0
    %5251 = vmatprep.subr.mxu0 0.0
    %5252 = vmatpush1.msra.mxu0 0.0
    %5253 = vmatprep.subr.mxu0 0.0
    %5254 = vmatpush1.msra.mxu0 0.0
    %5255 = vmatprep.subr.mxu0 0.0
    %5256 = vmatpush1.msra.mxu0 0.0
    %5257 = vmatprep.subr.mxu0 0.0
    %5258 = vmatpush1.msra.mxu0 0.0
    %5259 = vmatprep.subr.mxu0 0.0
    %5260 = vmatpush1.msra.mxu0 0.0
    %5261 = vmatprep.subr.mxu0 0.0
    %5262 = vmatpush1.msra.mxu0 0.0
    %5263 = vmatprep.subr.mxu0 0.0
    %5264 = vmatpush1.msra.mxu0 0.0
    %5265 = vmatprep.subr.mxu0 0.0
    %5266 = vmatpush1.msra.mxu0 0.0
    %5267 = vmatprep.subr.mxu0 0.0
    %5268 = vmatpush1.msra.mxu0 0.0
    %5269 = vmatprep.subr.mxu0 0.0
    %5270 = vmatpush1.msra.mxu0 0.0
    %5271 = vmatprep.subr.mxu0 0.0
    %5272 = vmatpush1.msra.mxu0 0.0
    %5273 = vmatprep.mubr.f32.mxu0 %v4994
    %5274 = vmatmul.mubr.f32.gmra.mrb[0].mxu0 %v4700
    %v5275 = vpop.f32.mrb[0].mxu0
    %v5276 = vadd.f32 0.0, %v5275
    %v5277 = vpop.f32.mrb[0].mxu0
    %v5278 = vadd.f32 0.0, %v5277
    %5279 = vdwg.mxu0
    %5280 = vmatprep.subr.mxu0 %v4714
    %5281 = vmatpush1.msra.mxu0 %v4713
    %5282 = vmatprep.subr.mxu0 %v4730
    %5283 = vmatpush1.msra.mxu0 %v4729
    %5284 = vmatprep.subr.mxu0 %v4746
    %5285 = vmatpush1.msra.mxu0 %v4745
    %5286 = vmatprep.subr.mxu0 %v4762
    %5287 = vmatpush1.msra.mxu0 %v4761
    %5288 = vmatprep.subr.mxu0 %v4778
    %5289 = vmatpush1.msra.mxu0 %v4777
    %5290 = vmatprep.subr.mxu0 %v4794
    %5291 = vmatpush1.msra.mxu0 %v4793
    %5292 = vmatprep.subr.mxu0 %v4810
    %5293 = vmatpush1.msra.mxu0 %v4809
    %5294 = vmatprep.subr.mxu0 %v4826
    %5295 = vmatpush1.msra.mxu0 %v4825
    %5296 = vmatprep.subr.mxu0 %v4842
    %5297 = vmatpush1.msra.mxu0 %v4841
    %5298 = vmatprep.subr.mxu0 %v4858
    %5299 = vmatpush1.msra.mxu0 %v4857
    %5300 = vmatprep.subr.mxu0 %v4874
    %5301 = vmatpush1.msra.mxu0 %v4873
    %5302 = vmatprep.subr.mxu0 %v4890
    %5303 = vmatpush1.msra.mxu0 %v4889
    %5304 = vmatprep.subr.mxu0 %v4906
    %5305 = vmatpush1.msra.mxu0 %v4905
    %5306 = vmatprep.subr.mxu0 %v4922
    %5307 = vmatpush1.msra.mxu0 %v4921
    %5308 = vmatprep.subr.mxu0 %v4938
    %5309 = vmatpush1.msra.mxu0 %v4937
    %5310 = vmatprep.subr.mxu0 %v4954
    %5311 = vmatpush1.msra.mxu0 %v4953
    %5312 = vmatprep.subr.mxu0 %v4970
    %5313 = vmatpush1.msra.mxu0 %v4969
    %5314 = vmatprep.subr.mxu0 %v4986
    %5315 = vmatpush1.msra.mxu0 %v4985
    %5316 = vmatprep.subr.mxu0 0.0
    %5317 = vmatpush1.msra.mxu0 0.0
    %5318 = vmatprep.subr.mxu0 0.0
    %5319 = vmatpush1.msra.mxu0 0.0
    %5320 = vmatprep.subr.mxu0 0.0
    %5321 = vmatpush1.msra.mxu0 0.0
    %5322 = vmatprep.subr.mxu0 0.0
    %5323 = vmatpush1.msra.mxu0 0.0
    %5324 = vmatprep.subr.mxu0 0.0
    %5325 = vmatpush1.msra.mxu0 0.0
    %5326 = vmatprep.subr.mxu0 0.0
    %5327 = vmatpush1.msra.mxu0 0.0
    %5328 = vmatprep.subr.mxu0 0.0
    %5329 = vmatpush1.msra.mxu0 0.0
    %5330 = vmatprep.subr.mxu0 0.0
    %5331 = vmatpush1.msra.mxu0 0.0
    %5332 = vmatprep.subr.mxu0 0.0
    %5333 = vmatpush1.msra.mxu0 0.0
    %5334 = vmatprep.subr.mxu0 0.0
    %5335 = vmatpush1.msra.mxu0 0.0
    %5336 = vmatprep.subr.mxu0 0.0
    %5337 = vmatpush1.msra.mxu0 0.0
    %5338 = vmatprep.subr.mxu0 0.0
    %5339 = vmatpush1.msra.mxu0 0.0
    %5340 = vmatprep.subr.mxu0 0.0
    %5341 = vmatpush1.msra.mxu0 0.0
    %5342 = vmatprep.subr.mxu0 0.0
    %5343 = vmatpush1.msra.mxu0 0.0
    %5344 = vmatprep.mubr.f32.mxu0 %v4994
    %5345 = vmatmul.mubr.f32.gmra.mrb[0].mxu0 %v4700
    %v5346 = vpop.f32.mrb[0].mxu0
    %v5347 = vadd.f32 0.0, %v5346
    %v5348 = vpop.f32.mrb[0].mxu0
    %v5349 = vadd.f32 0.0, %v5348
    %5350 = vdwg.mxu0
    %5351 = vmatprep.subr.mxu0 %v4716
    %5352 = vmatpush1.msra.mxu0 %v4715
    %5353 = vmatprep.subr.mxu0 %v4732
    %5354 = vmatpush1.msra.mxu0 %v4731
    %5355 = vmatprep.subr.mxu0 %v4748
    %5356 = vmatpush1.msra.mxu0 %v4747
    %5357 = vmatprep.subr.mxu0 %v4764
    %5358 = vmatpush1.msra.mxu0 %v4763
    %5359 = vmatprep.subr.mxu0 %v4780
    %5360 = vmatpush1.msra.mxu0 %v4779
    %5361 = vmatprep.subr.mxu0 %v4796
    %5362 = vmatpush1.msra.mxu0 %v4795
    %5363 = vmatprep.subr.mxu0 %v4812
    %5364 = vmatpush1.msra.mxu0 %v4811
    %5365 = vmatprep.subr.mxu0 %v4828
    %5366 = vmatpush1.msra.mxu0 %v4827
    %5367 = vmatprep.subr.mxu0 %v4844
    %5368 = vmatpush1.msra.mxu0 %v4843
    %5369 = vmatprep.subr.mxu0 %v4860
    %5370 = vmatpush1.msra.mxu0 %v4859
    %5371 = vmatprep.subr.mxu0 %v4876
    %5372 = vmatpush1.msra.mxu0 %v4875
    %5373 = vmatprep.subr.mxu0 %v4892
    %5374 = vmatpush1.msra.mxu0 %v4891
    %5375 = vmatprep.subr.mxu0 %v4908
    %5376 = vmatpush1.msra.mxu0 %v4907
    %5377 = vmatprep.subr.mxu0 %v4924
    %5378 = vmatpush1.msra.mxu0 %v4923
    %5379 = vmatprep.subr.mxu0 %v4940
    %5380 = vmatpush1.msra.mxu0 %v4939
    %5381 = vmatprep.subr.mxu0 %v4956
    %5382 = vmatpush1.msra.mxu0 %v4955
    %5383 = vmatprep.subr.mxu0 %v4972
    %5384 = vmatpush1.msra.mxu0 %v4971
    %5385 = vmatprep.subr.mxu0 %v4988
    %5386 = vmatpush1.msra.mxu0 %v4987
    %5387 = vmatprep.subr.mxu0 0.0
    %5388 = vmatpush1.msra.mxu0 0.0
    %5389 = vmatprep.subr.mxu0 0.0
    %5390 = vmatpush1.msra.mxu0 0.0
    %5391 = vmatprep.subr.mxu0 0.0
    %5392 = vmatpush1.msra.mxu0 0.0
    %5393 = vmatprep.subr.mxu0 0.0
    %5394 = vmatpush1.msra.mxu0 0.0
    %5395 = vmatprep.subr.mxu0 0.0
    %5396 = vmatpush1.msra.mxu0 0.0
    %5397 = vmatprep.subr.mxu0 0.0
    %5398 = vmatpush1.msra.mxu0 0.0
    %5399 = vmatprep.subr.mxu0 0.0
    %5400 = vmatpush1.msra.mxu0 0.0
    %5401 = vmatprep.subr.mxu0 0.0
    %5402 = vmatpush1.msra.mxu0 0.0
    %5403 = vmatprep.subr.mxu0 0.0
    %5404 = vmatpush1.msra.mxu0 0.0
    %5405 = vmatprep.subr.mxu0 0.0
    %5406 = vmatpush1.msra.mxu0 0.0
    %5407 = vmatprep.subr.mxu0 0.0
    %5408 = vmatpush1.msra.mxu0 0.0
    %5409 = vmatprep.subr.mxu0 0.0
    %5410 = vmatpush1.msra.mxu0 0.0
    %5411 = vmatprep.subr.mxu0 0.0
    %5412 = vmatpush1.msra.mxu0 0.0
    %5413 = vmatprep.subr.mxu0 0.0
    %5414 = vmatpush1.msra.mxu0 0.0
    %5415 = vmatprep.mubr.f32.mxu0 %v4994
    %5416 = vmatmul.mubr.f32.gmra.mrb[0].mxu0 %v4700
    %v5417 = vpop.f32.mrb[0].mxu0
    %v5418 = vadd.f32 0.0, %v5417
    %v5419 = vpop.f32.mrb[0].mxu0
    %v5420 = vadd.f32 0.0, %v5419
    %5421 = vdwg.mxu0
    %5422 = vmatprep.subr.mxu0 %v4718
    %5423 = vmatpush1.msra.mxu0 %v4717
    %5424 = vmatprep.subr.mxu0 %v4734
    %5425 = vmatpush1.msra.mxu0 %v4733
    %5426 = vmatprep.subr.mxu0 %v4750
    %5427 = vmatpush1.msra.mxu0 %v4749
    %5428 = vmatprep.subr.mxu0 %v4766
    %5429 = vmatpush1.msra.mxu0 %v4765
    %5430 = vmatprep.subr.mxu0 %v4782
    %5431 = vmatpush1.msra.mxu0 %v4781
    %5432 = vmatprep.subr.mxu0 %v4798
    %5433 = vmatpush1.msra.mxu0 %v4797
    %5434 = vmatprep.subr.mxu0 %v4814
    %5435 = vmatpush1.msra.mxu0 %v4813
    %5436 = vmatprep.subr.mxu0 %v4830
    %5437 = vmatpush1.msra.mxu0 %v4829
    %5438 = vmatprep.subr.mxu0 %v4846
    %5439 = vmatpush1.msra.mxu0 %v4845
    %5440 = vmatprep.subr.mxu0 %v4862
    %5441 = vmatpush1.msra.mxu0 %v4861
    %5442 = vmatprep.subr.mxu0 %v4878
    %5443 = vmatpush1.msra.mxu0 %v4877
    %5444 = vmatprep.subr.mxu0 %v4894
    %5445 = vmatpush1.msra.mxu0 %v4893
    %5446 = vmatprep.subr.mxu0 %v4910
    %5447 = vmatpush1.msra.mxu0 %v4909
    %5448 = vmatprep.subr.mxu0 %v4926
    %5449 = vmatpush1.msra.mxu0 %v4925
    %5450 = vmatprep.subr.mxu0 %v4942
    %5451 = vmatpush1.msra.mxu0 %v4941
    %5452 = vmatprep.subr.mxu0 %v4958
    %5453 = vmatpush1.msra.mxu0 %v4957
    %5454 = vmatprep.subr.mxu0 %v4974
    %5455 = vmatpush1.msra.mxu0 %v4973
    %5456 = vmatprep.subr.mxu0 %v4990
    %5457 = vmatpush1.msra.mxu0 %v4989
    %5458 = vmatprep.subr.mxu0 0.0
    %5459 = vmatpush1.msra.mxu0 0.0
    %5460 = vmatprep.subr.mxu0 0.0
    %5461 = vmatpush1.msra.mxu0 0.0
    %5462 = vmatprep.subr.mxu0 0.0
    %5463 = vmatpush1.msra.mxu0 0.0
    %5464 = vmatprep.subr.mxu0 0.0
    %5465 = vmatpush1.msra.mxu0 0.0
    %5466 = vmatprep.subr.mxu0 0.0
    %5467 = vmatpush1.msra.mxu0 0.0
    %5468 = vmatprep.subr.mxu0 0.0
    %5469 = vmatpush1.msra.mxu0 0.0
    %5470 = vmatprep.subr.mxu0 0.0
    %5471 = vmatpush1.msra.mxu0 0.0
    %5472 = vmatprep.subr.mxu0 0.0
    %5473 = vmatpush1.msra.mxu0 0.0
    %5474 = vmatprep.subr.mxu0 0.0
    %5475 = vmatpush1.msra.mxu0 0.0
    %5476 = vmatprep.subr.mxu0 0.0
    %5477 = vmatpush1.msra.mxu0 0.0
    %5478 = vmatprep.subr.mxu0 0.0
    %5479 = vmatpush1.msra.mxu0 0.0
    %5480 = vmatprep.subr.mxu0 0.0
    %5481 = vmatpush1.msra.mxu0 0.0
    %5482 = vmatprep.subr.mxu0 0.0
    %5483 = vmatpush1.msra.mxu0 0.0
    %5484 = vmatprep.subr.mxu0 0.0
    %5485 = vmatpush1.msra.mxu0 0.0
    %5486 = vmatprep.mubr.f32.mxu0 %v4994
    %5487 = vmatmul.mubr.f32.gmra.mrb[0].mxu0 %v4700
    %v5488 = vpop.f32.mrb[0].mxu0
    %v5489 = vadd.f32 0.0, %v5488
    %v5490 = vpop.f32.mrb[0].mxu0
    %v5491 = vadd.f32 0.0, %v5490
    %5492 = vdwg.mxu0
    %5493 = vmatprep.subr.mxu0 %v4720
    %5494 = vmatpush1.msra.mxu0 %v4719
    %5495 = vmatprep.subr.mxu0 %v4736
    %5496 = vmatpush1.msra.mxu0 %v4735
    %5497 = vmatprep.subr.mxu0 %v4752
    %5498 = vmatpush1.msra.mxu0 %v4751
    %5499 = vmatprep.subr.mxu0 %v4768
    %5500 = vmatpush1.msra.mxu0 %v4767
    %5501 = vmatprep.subr.mxu0 %v4784
    %5502 = vmatpush1.msra.mxu0 %v4783
    %5503 = vmatprep.subr.mxu0 %v4800
    %5504 = vmatpush1.msra.mxu0 %v4799
    %5505 = vmatprep.subr.mxu0 %v4816
    %5506 = vmatpush1.msra.mxu0 %v4815
    %5507 = vmatprep.subr.mxu0 %v4832
    %5508 = vmatpush1.msra.mxu0 %v4831
    %5509 = vmatprep.subr.mxu0 %v4848
    %5510 = vmatpush1.msra.mxu0 %v4847
    %5511 = vmatprep.subr.mxu0 %v4864
    %5512 = vmatpush1.msra.mxu0 %v4863
    %5513 = vmatprep.subr.mxu0 %v4880
    %5514 = vmatpush1.msra.mxu0 %v4879
    %5515 = vmatprep.subr.mxu0 %v4896
    %5516 = vmatpush1.msra.mxu0 %v4895
    %5517 = vmatprep.subr.mxu0 %v4912
    %5518 = vmatpush1.msra.mxu0 %v4911
    %5519 = vmatprep.subr.mxu0 %v4928
    %5520 = vmatpush1.msra.mxu0 %v4927
    %5521 = vmatprep.subr.mxu0 %v4944
    %5522 = vmatpush1.msra.mxu0 %v4943
    %5523 = vmatprep.subr.mxu0 %v4960
    %5524 = vmatpush1.msra.mxu0 %v4959
    %5525 = vmatprep.subr.mxu0 %v4976
    %5526 = vmatpush1.msra.mxu0 %v4975
    %5527 = vmatprep.subr.mxu0 %v4992
    %5528 = vmatpush1.msra.mxu0 %v4991
    %5529 = vmatprep.subr.mxu0 0.0
    %5530 = vmatpush1.msra.mxu0 0.0
    %5531 = vmatprep.subr.mxu0 0.0
    %5532 = vmatpush1.msra.mxu0 0.0
    %5533 = vmatprep.subr.mxu0 0.0
    %5534 = vmatpush1.msra.mxu0 0.0
    %5535 = vmatprep.subr.mxu0 0.0
    %5536 = vmatpush1.msra.mxu0 0.0
    %5537 = vmatprep.subr.mxu0 0.0
    %5538 = vmatpush1.msra.mxu0 0.0
    %5539 = vmatprep.subr.mxu0 0.0
    %5540 = vmatpush1.msra.mxu0 0.0
    %5541 = vmatprep.subr.mxu0 0.0
    %5542 = vmatpush1.msra.mxu0 0.0
    %5543 = vmatprep.subr.mxu0 0.0
    %5544 = vmatpush1.msra.mxu0 0.0
    %5545 = vmatprep.subr.mxu0 0.0
    %5546 = vmatpush1.msra.mxu0 0.0
    %5547 = vmatprep.subr.mxu0 0.0
    %5548 = vmatpush1.msra.mxu0 0.0
    %5549 = vmatprep.subr.mxu0 0.0
    %5550 = vmatpush1.msra.mxu0 0.0
    %5551 = vmatprep.subr.mxu0 0.0
    %5552 = vmatpush1.msra.mxu0 0.0
    %5553 = vmatprep.subr.mxu0 0.0
    %5554 = vmatpush1.msra.mxu0 0.0
    %5555 = vmatprep.subr.mxu0 0.0
    %5556 = vmatpush1.msra.mxu0 0.0
    %5557 = vmatprep.mubr.f32.mxu0 %v4994
    %5558 = vmatmul.mubr.f32.gmra.mrb[0].mxu0 %v4700
    %v5559 = vpop.f32.mrb[0].mxu0
    %v5560 = vadd.f32 0.0, %v5559
    %v5561 = vpop.f32.mrb[0].mxu0
    %v5562 = vadd.f32 0.0, %v5561
    %5563 = vdwg.mxu0
    %v5564 = vadd.f32 %v4612, %v5063
    %v5565 = vadd.f32 %v4613, %v5065
    %v5566 = vadd.f32 %v4614, %v5134
    %v5567 = vadd.f32 %v4615, %v5136
    %v5568 = vadd.f32 %v4616, %v5205
    %v5569 = vadd.f32 %v4617, %v5207
    %v5570 = vadd.f32 %v4618, %v5276
    %v5571 = vadd.f32 %v4619, %v5278
    %v5572 = vadd.f32 %v4620, %v5347
    %v5573 = vadd.f32 %v4621, %v5349
    %v5574 = vadd.f32 %v4622, %v5418
    %v5575 = vadd.f32 %v4623, %v5420
    %v5576 = vadd.f32 %v4624, %v5489
    %v5577 = vadd.f32 %v4625, %v5491
    %v5578 = vadd.f32 %v4626, %v5560
    %v5579 = vadd.f32 %v4627, %v5562
    %s5580 = scalar_lea.vmem [#allocation13], 4
    %v5581 = vld [vmem:[%s5580] sm:$0x3]
    %v5583 = vsel %vm3588, %v5581, 0
    %5585 = vmatprep.subr.mxu0 %v3582
    %5586 = vmatpush1.msra.mxu0 %v3581
    %5587 = vmatprep.subr.mxu0 %v3597
    %5588 = vmatpush1.msra.mxu0 %v3594
    %5589 = vmatprep.subr.mxu0 0.0
    %5590 = vmatpush1.msra.mxu0 0.0
    %5591 = vmatprep.subr.mxu0 0.0
    %5592 = vmatpush1.msra.mxu0 0.0
    %5593 = vmatprep.subr.mxu0 0.0
    %5594 = vmatpush1.msra.mxu0 0.0
    %5595 = vmatprep.subr.mxu0 0.0
    %5596 = vmatpush1.msra.mxu0 0.0
    %5597 = vmatprep.subr.mxu0 0.0
    %5598 = vmatpush1.msra.mxu0 0.0
    %5599 = vmatprep.subr.mxu0 0.0
    %5600 = vmatpush1.msra.mxu0 0.0
    %5601 = vmatprep.subr.mxu0 0.0
    %5602 = vmatpush1.msra.mxu0 0.0
    %5603 = vmatprep.subr.mxu0 0.0
    %5604 = vmatpush1.msra.mxu0 0.0
    %5605 = vmatprep.subr.mxu0 0.0
    %5606 = vmatpush1.msra.mxu0 0.0
    %5607 = vmatprep.subr.mxu0 0.0
    %5608 = vmatpush1.msra.mxu0 0.0
    %5609 = vmatprep.subr.mxu0 0.0
    %5610 = vmatpush1.msra.mxu0 0.0
    %5611 = vmatprep.subr.mxu0 0.0
    %5612 = vmatpush1.msra.mxu0 0.0
    %5613 = vmatprep.subr.mxu0 0.0
    %5614 = vmatpush1.msra.mxu0 0.0
    %5615 = vmatprep.subr.mxu0 0.0
    %5616 = vmatpush1.msra.mxu0 0.0
    %5617 = vmatprep.subr.mxu0 0.0
    %5618 = vmatpush1.msra.mxu0 0.0
    %5619 = vmatprep.subr.mxu0 0.0
    %5620 = vmatpush1.msra.mxu0 0.0
    %5621 = vmatprep.subr.mxu0 0.0
    %5622 = vmatpush1.msra.mxu0 0.0
    %5623 = vmatprep.subr.mxu0 0.0
    %5624 = vmatpush1.msra.mxu0 0.0
    %5625 = vmatprep.subr.mxu0 0.0
    %5626 = vmatpush1.msra.mxu0 0.0
    %5627 = vmatprep.subr.mxu0 0.0
    %5628 = vmatpush1.msra.mxu0 0.0
    %5629 = vmatprep.subr.mxu0 0.0
    %5630 = vmatpush1.msra.mxu0 0.0
    %5631 = vmatprep.subr.mxu0 0.0
    %5632 = vmatpush1.msra.mxu0 0.0
    %5633 = vmatprep.subr.mxu0 0.0
    %5634 = vmatpush1.msra.mxu0 0.0
    %5635 = vmatprep.subr.mxu0 0.0
    %5636 = vmatpush1.msra.mxu0 0.0
    %5637 = vmatprep.subr.mxu0 0.0
    %5638 = vmatpush1.msra.mxu0 0.0
    %5639 = vmatprep.subr.mxu0 0.0
    %5640 = vmatpush1.msra.mxu0 0.0
    %5641 = vmatprep.subr.mxu0 0.0
    %5642 = vmatpush1.msra.mxu0 0.0
    %5643 = vmatprep.subr.mxu0 0.0
    %5644 = vmatpush1.msra.mxu0 0.0
    %5645 = vmatprep.subr.mxu0 0.0
    %5646 = vmatpush1.msra.mxu0 0.0
    %5647 = vmatprep.subr.mxu0 0.0
    %5648 = vmatpush1.msra.mxu0 0.0
    %5649 = vmatprep.mubr.f32.mxu0 0.0
    %5650 = vmatmul.mubr.f32.gmra.mrb[0].mxu0 %v5583
    %v5651 = vpop.f32.mrb[0].mxu0
    %v5652 = vadd.f32 0.0, %v5651
    %v5653 = vpop.f32.mrb[0].mxu0
    %v5654 = vadd.f32 0.0, %v5653
    %5655 = vdwg.mxu0
    %s5656 = scalar_lea.vmem [#allocation14], 4608
    %v5657 = vld [vmem:[%s5656] sm:$0xff]
    %v5658 = vld [vmem:[%s5656 + $0x8] sm:$0xff]
    %v5659 = vld [vmem:[%s5656 + $0x10] sm:$0xff]
    %v5660 = vld [vmem:[%s5656 + $0x18] sm:$0xff]
    %v5661 = vld [vmem:[%s5656 + $0x20] sm:$0xff]
    %v5662 = vld [vmem:[%s5656 + $0x28] sm:$0xff]
    %v5663 = vld [vmem:[%s5656 + $0x30] sm:$0xff]
    %v5664 = vld [vmem:[%s5656 + $0x38] sm:$0xff]
    %v5665 = vld [vmem:[%s5656 + $0x40] sm:$0xff]
    %v5666 = vld [vmem:[%s5656 + $0x48] sm:$0xff]
    %v5667 = vld [vmem:[%s5656 + $0x50] sm:$0xff]
    %v5668 = vld [vmem:[%s5656 + $0x58] sm:$0xff]
    %v5669 = vld [vmem:[%s5656 + $0x60] sm:$0xff]
    %v5670 = vld [vmem:[%s5656 + $0x68] sm:$0xff]
    %v5671 = vld [vmem:[%s5656 + $0x70] sm:$0xff]
    %v5672 = vld [vmem:[%s5656 + $0x78] sm:$0xff]
    %v5673 = vld [vmem:[%s5656 + $0x80] sm:$0xff]
    %v5674 = vld [vmem:[%s5656 + $0x88] sm:$0xff]
    %v5675 = vld [vmem:[%s5656 + $0x90] sm:$0xff]
    %v5676 = vld [vmem:[%s5656 + $0x98] sm:$0xff]
    %v5677 = vld [vmem:[%s5656 + $0xa0] sm:$0xff]
    %v5678 = vld [vmem:[%s5656 + $0xa8] sm:$0xff]
    %v5679 = vld [vmem:[%s5656 + $0xb0] sm:$0xff]
    %v5680 = vld [vmem:[%s5656 + $0xb8] sm:$0xff]
    %v5681 = vld [vmem:[%s5656 + $0xc0] sm:$0xff]
    %v5682 = vld [vmem:[%s5656 + $0xc8] sm:$0xff]
    %v5683 = vld [vmem:[%s5656 + $0xd0] sm:$0xff]
    %v5684 = vld [vmem:[%s5656 + $0xd8] sm:$0xff]
    %v5685 = vld [vmem:[%s5656 + $0xe0] sm:$0xff]
    %v5686 = vld [vmem:[%s5656 + $0xe8] sm:$0xff]
    %v5687 = vld [vmem:[%s5656 + $0xf0] sm:$0xff]
    %v5688 = vld [vmem:[%s5656 + $0xf8] sm:$0xff]
    %v5689 = vld [vmem:[%s5656 + $0x100] sm:$0xff]
    %v5690 = vld [vmem:[%s5656 + $0x108] sm:$0xff]
    %v5691 = vld [vmem:[%s5656 + $0x110] sm:$0xff]
    %v5692 = vld [vmem:[%s5656 + $0x118] sm:$0xff]
    %v5693 = vld [vmem:[%s5656 + $0x120] sm:$0xff]
    %v5694 = vld [vmem:[%s5656 + $0x128] sm:$0xff]
    %v5695 = vld [vmem:[%s5656 + $0x130] sm:$0xff]
    %v5696 = vld [vmem:[%s5656 + $0x138] sm:$0xff]
    %v5697 = vld [vmem:[%s5656 + $0x140] sm:$0xff]
    %v5698 = vld [vmem:[%s5656 + $0x148] sm:$0xff]
    %v5699 = vld [vmem:[%s5656 + $0x150] sm:$0xff]
    %v5700 = vld [vmem:[%s5656 + $0x158] sm:$0xff]
    %v5701 = vld [vmem:[%s5656 + $0x160] sm:$0xff]
    %v5702 = vld [vmem:[%s5656 + $0x168] sm:$0xff]
    %v5703 = vld [vmem:[%s5656 + $0x170] sm:$0xff]
    %v5704 = vld [vmem:[%s5656 + $0x178] sm:$0xff]
    %v5705 = vld [vmem:[%s5656 + $0x180] sm:$0xff]
    %v5706 = vld [vmem:[%s5656 + $0x188] sm:$0xff]
    %v5707 = vld [vmem:[%s5656 + $0x190] sm:$0xff]
    %v5708 = vld [vmem:[%s5656 + $0x198] sm:$0xff]
    %v5709 = vld [vmem:[%s5656 + $0x1a0] sm:$0xff]
    %v5710 = vld [vmem:[%s5656 + $0x1a8] sm:$0xff]
    %v5711 = vld [vmem:[%s5656 + $0x1b0] sm:$0xff]
    %v5712 = vld [vmem:[%s5656 + $0x1b8] sm:$0xff]
    %v5713 = vld [vmem:[%s5656 + $0x1c0] sm:$0xff]
    %v5714 = vld [vmem:[%s5656 + $0x1c8] sm:$0xff]
    %v5715 = vld [vmem:[%s5656 + $0x1d0] sm:$0xff]
    %v5716 = vld [vmem:[%s5656 + $0x1d8] sm:$0xff]
    %v5717 = vld [vmem:[%s5656 + $0x1e0] sm:$0xff]
    %v5718 = vld [vmem:[%s5656 + $0x1e8] sm:$0xff]
    %v5719 = vld [vmem:[%s5656 + $0x1f0] sm:$0xff]
    %v5720 = vld [vmem:[%s5656 + $0x1f8] sm:$0xff]
    %v5721 = vld [vmem:[%s5656 + $0x200] sm:$0xff]
    %v5722 = vld [vmem:[%s5656 + $0x208] sm:$0xff]
    %v5723 = vld [vmem:[%s5656 + $0x210] sm:$0xff]
    %v5724 = vld [vmem:[%s5656 + $0x218] sm:$0xff]
    %v5725 = vld [vmem:[%s5656 + $0x220] sm:$0xff]
    %v5726 = vld [vmem:[%s5656 + $0x228] sm:$0xff]
    %v5727 = vld [vmem:[%s5656 + $0x230] sm:$0xff]
    %v5728 = vld [vmem:[%s5656 + $0x238] sm:$0xff]
    %v5729 = vld [vmem:[%s5656 + $0x240] sm:$0xff]
    %v5730 = vld [vmem:[%s5656 + $0x248] sm:$0xff]
    %v5731 = vld [vmem:[%s5656 + $0x250] sm:$0xff]
    %v5732 = vld [vmem:[%s5656 + $0x258] sm:$0xff]
    %v5733 = vld [vmem:[%s5656 + $0x260] sm:$0xff]
    %v5734 = vld [vmem:[%s5656 + $0x268] sm:$0xff]
    %v5735 = vld [vmem:[%s5656 + $0x270] sm:$0xff]
    %v5736 = vld [vmem:[%s5656 + $0x278] sm:$0xff]
    %v5737 = vld [vmem:[%s5656 + $0x280] sm:$0xff]
    %v5738 = vld [vmem:[%s5656 + $0x288] sm:$0xff]
    %v5739 = vld [vmem:[%s5656 + $0x290] sm:$0xff]
    %v5740 = vld [vmem:[%s5656 + $0x298] sm:$0xff]
    %v5741 = vld [vmem:[%s5656 + $0x2a0] sm:$0xff]
    %v5742 = vld [vmem:[%s5656 + $0x2a8] sm:$0xff]
    %v5743 = vld [vmem:[%s5656 + $0x2b0] sm:$0xff]
    %v5744 = vld [vmem:[%s5656 + $0x2b8] sm:$0xff]
    %v5745 = vld [vmem:[%s5656 + $0x2c0] sm:$0xff]
    %v5746 = vld [vmem:[%s5656 + $0x2c8] sm:$0xff]
    %v5747 = vld [vmem:[%s5656 + $0x2d0] sm:$0xff]
    %v5748 = vld [vmem:[%s5656 + $0x2d8] sm:$0xff]
    %v5749 = vld [vmem:[%s5656 + $0x2e0] sm:$0xff]
    %v5750 = vld [vmem:[%s5656 + $0x2e8] sm:$0xff]
    %v5751 = vld [vmem:[%s5656 + $0x2f0] sm:$0xff]
    %v5752 = vld [vmem:[%s5656 + $0x2f8] sm:$0xff]
    %v5753 = vld [vmem:[%s5656 + $0x300] sm:$0xff]
    %v5754 = vld [vmem:[%s5656 + $0x308] sm:$0xff]
    %v5755 = vld [vmem:[%s5656 + $0x310] sm:$0xff]
    %v5756 = vld [vmem:[%s5656 + $0x318] sm:$0xff]
    %v5757 = vld [vmem:[%s5656 + $0x320] sm:$0xff]
    %v5758 = vld [vmem:[%s5656 + $0x328] sm:$0xff]
    %v5759 = vld [vmem:[%s5656 + $0x330] sm:$0xff]
    %v5760 = vld [vmem:[%s5656 + $0x338] sm:$0xff]
    %v5761 = vld [vmem:[%s5656 + $0x340] sm:$0xff]
    %v5762 = vld [vmem:[%s5656 + $0x348] sm:$0xff]
    %v5763 = vld [vmem:[%s5656 + $0x350] sm:$0xff]
    %v5764 = vld [vmem:[%s5656 + $0x358] sm:$0xff]
    %v5765 = vld [vmem:[%s5656 + $0x360] sm:$0xff]
    %v5766 = vld [vmem:[%s5656 + $0x368] sm:$0xff]
    %v5767 = vld [vmem:[%s5656 + $0x370] sm:$0xff]
    %v5768 = vld [vmem:[%s5656 + $0x378] sm:$0xff]
    %v5769 = vld [vmem:[%s5656 + $0x380] sm:$0xff]
    %v5770 = vld [vmem:[%s5656 + $0x388] sm:$0xff]
    %v5771 = vld [vmem:[%s5656 + $0x390] sm:$0xff]
    %v5772 = vld [vmem:[%s5656 + $0x398] sm:$0xff]
    %v5773 = vld [vmem:[%s5656 + $0x3a0] sm:$0xff]
    %v5774 = vld [vmem:[%s5656 + $0x3a8] sm:$0xff]
    %v5775 = vld [vmem:[%s5656 + $0x3b0] sm:$0xff]
    %v5776 = vld [vmem:[%s5656 + $0x3b8] sm:$0xff]
    %v5777 = vld [vmem:[%s5656 + $0x3c0] sm:$0xff]
    %v5778 = vld [vmem:[%s5656 + $0x3c8] sm:$0xff]
    %v5779 = vld [vmem:[%s5656 + $0x3d0] sm:$0xff]
    %v5780 = vld [vmem:[%s5656 + $0x3d8] sm:$0xff]
    %v5781 = vld [vmem:[%s5656 + $0x3e0] sm:$0xff]
    %v5782 = vld [vmem:[%s5656 + $0x3e8] sm:$0xff]
    %v5783 = vld [vmem:[%s5656 + $0x3f0] sm:$0xff]
    %v5784 = vld [vmem:[%s5656 + $0x3f8] sm:$0xff]
    %v5785 = vld [vmem:[%s5656 + $0x400] sm:$0xff]
    %v5786 = vld [vmem:[%s5656 + $0x408] sm:$0xff]
    %v5787 = vld [vmem:[%s5656 + $0x410] sm:$0xff]
    %v5788 = vld [vmem:[%s5656 + $0x418] sm:$0xff]
    %v5789 = vld [vmem:[%s5656 + $0x420] sm:$0xff]
    %v5790 = vld [vmem:[%s5656 + $0x428] sm:$0xff]
    %v5791 = vld [vmem:[%s5656 + $0x430] sm:$0xff]
    %v5792 = vld [vmem:[%s5656 + $0x438] sm:$0xff]
    %v5793 = vld [vmem:[%s5656 + $0x440] sm:$0xff]
    %v5794 = vld [vmem:[%s5656 + $0x448] sm:$0xff]
    %v5795 = vld [vmem:[%s5656 + $0x450] sm:$0xff]
    %v5796 = vld [vmem:[%s5656 + $0x458] sm:$0xff]
    %v5797 = vld [vmem:[%s5656 + $0x460] sm:$0xff]
    %v5798 = vld [vmem:[%s5656 + $0x468] sm:$0xff]
    %v5799 = vld [vmem:[%s5656 + $0x470] sm:$0xff]
    %v5800 = vld [vmem:[%s5656 + $0x478] sm:$0xff]
    %v5801 = vld [vmem:[%s5656 + $0x480] sm:$0xff]
    %v5802 = vld [vmem:[%s5656 + $0x488] sm:$0xff]
    %v5803 = vld [vmem:[%s5656 + $0x490] sm:$0xff]
    %v5804 = vld [vmem:[%s5656 + $0x498] sm:$0xff]
    %v5805 = vld [vmem:[%s5656 + $0x4a0] sm:$0xff]
    %v5806 = vld [vmem:[%s5656 + $0x4a8] sm:$0xff]
    %v5807 = vld [vmem:[%s5656 + $0x4b0] sm:$0xff]
    %v5808 = vld [vmem:[%s5656 + $0x4b8] sm:$0xff]
    %v5809 = vld [vmem:[%s5656 + $0x4c0] sm:$0xff]
    %v5810 = vld [vmem:[%s5656 + $0x4c8] sm:$0xff]
    %v5811 = vld [vmem:[%s5656 + $0x4d0] sm:$0xff]
    %v5812 = vld [vmem:[%s5656 + $0x4d8] sm:$0xff]
    %v5813 = vld [vmem:[%s5656 + $0x4e0] sm:$0xff]
    %v5814 = vld [vmem:[%s5656 + $0x4e8] sm:$0xff]
    %v5815 = vld [vmem:[%s5656 + $0x4f0] sm:$0xff]
    %v5816 = vld [vmem:[%s5656 + $0x4f8] sm:$0xff]
    %v5817 = vld [vmem:[%s5656 + $0x500] sm:$0xff]
    %v5818 = vld [vmem:[%s5656 + $0x508] sm:$0xff]
    %v5819 = vld [vmem:[%s5656 + $0x510] sm:$0xff]
    %v5820 = vld [vmem:[%s5656 + $0x518] sm:$0xff]
    %v5821 = vld [vmem:[%s5656 + $0x520] sm:$0xff]
    %v5822 = vld [vmem:[%s5656 + $0x528] sm:$0xff]
    %v5823 = vld [vmem:[%s5656 + $0x530] sm:$0xff]
    %v5824 = vld [vmem:[%s5656 + $0x538] sm:$0xff]
    %v5825 = vld [vmem:[%s5656 + $0x540] sm:$0xff]
    %v5826 = vld [vmem:[%s5656 + $0x548] sm:$0xff]
    %v5827 = vld [vmem:[%s5656 + $0x550] sm:$0xff]
    %v5828 = vld [vmem:[%s5656 + $0x558] sm:$0xff]
    %v5829 = vld [vmem:[%s5656 + $0x560] sm:$0xff]
    %v5830 = vld [vmem:[%s5656 + $0x568] sm:$0xff]
    %v5831 = vld [vmem:[%s5656 + $0x570] sm:$0xff]
    %v5832 = vld [vmem:[%s5656 + $0x578] sm:$0xff]
    %v5833 = vld [vmem:[%s5656 + $0x580] sm:$0xff]
    %v5834 = vld [vmem:[%s5656 + $0x588] sm:$0xff]
    %v5835 = vld [vmem:[%s5656 + $0x590] sm:$0xff]
    %v5836 = vld [vmem:[%s5656 + $0x598] sm:$0xff]
    %v5837 = vld [vmem:[%s5656 + $0x5a0] sm:$0xff]
    %v5838 = vld [vmem:[%s5656 + $0x5a8] sm:$0xff]
    %v5839 = vld [vmem:[%s5656 + $0x5b0] sm:$0xff]
    %v5840 = vld [vmem:[%s5656 + $0x5b8] sm:$0xff]
    %v5841 = vld [vmem:[%s5656 + $0x5c0] sm:$0xff]
    %v5842 = vld [vmem:[%s5656 + $0x5c8] sm:$0xff]
    %v5843 = vld [vmem:[%s5656 + $0x5d0] sm:$0xff]
    %v5844 = vld [vmem:[%s5656 + $0x5d8] sm:$0xff]
    %v5845 = vld [vmem:[%s5656 + $0x5e0] sm:$0xff]
    %v5846 = vld [vmem:[%s5656 + $0x5e8] sm:$0xff]
    %v5847 = vld [vmem:[%s5656 + $0x5f0] sm:$0xff]
    %v5848 = vld [vmem:[%s5656 + $0x5f8] sm:$0xff]
    %v5849 = vld [vmem:[%s5656 + $0x600] sm:$0xff]
    %v5850 = vld [vmem:[%s5656 + $0x608] sm:$0xff]
    %v5851 = vld [vmem:[%s5656 + $0x610] sm:$0xff]
    %v5852 = vld [vmem:[%s5656 + $0x618] sm:$0xff]
    %v5853 = vld [vmem:[%s5656 + $0x620] sm:$0xff]
    %v5854 = vld [vmem:[%s5656 + $0x628] sm:$0xff]
    %v5855 = vld [vmem:[%s5656 + $0x630] sm:$0xff]
    %v5856 = vld [vmem:[%s5656 + $0x638] sm:$0xff]
    %v5857 = vld [vmem:[%s5656 + $0x640] sm:$0xff]
    %v5858 = vld [vmem:[%s5656 + $0x648] sm:$0xff]
    %v5859 = vld [vmem:[%s5656 + $0x650] sm:$0xff]
    %v5860 = vld [vmem:[%s5656 + $0x658] sm:$0xff]
    %v5861 = vld [vmem:[%s5656 + $0x660] sm:$0xff]
    %v5862 = vld [vmem:[%s5656 + $0x668] sm:$0xff]
    %v5863 = vld [vmem:[%s5656 + $0x670] sm:$0xff]
    %v5864 = vld [vmem:[%s5656 + $0x678] sm:$0xff]
    %v5865 = vld [vmem:[%s5656 + $0x680] sm:$0xff]
    %v5866 = vld [vmem:[%s5656 + $0x688] sm:$0xff]
    %v5867 = vld [vmem:[%s5656 + $0x690] sm:$0xff]
    %v5868 = vld [vmem:[%s5656 + $0x698] sm:$0xff]
    %v5869 = vld [vmem:[%s5656 + $0x6a0] sm:$0xff]
    %v5870 = vld [vmem:[%s5656 + $0x6a8] sm:$0xff]
    %v5871 = vld [vmem:[%s5656 + $0x6b0] sm:$0xff]
    %v5872 = vld [vmem:[%s5656 + $0x6b8] sm:$0xff]
    %v5873 = vld [vmem:[%s5656 + $0x6c0] sm:$0xff]
    %v5874 = vld [vmem:[%s5656 + $0x6c8] sm:$0xff]
    %v5875 = vld [vmem:[%s5656 + $0x6d0] sm:$0xff]
    %v5876 = vld [vmem:[%s5656 + $0x6d8] sm:$0xff]
    %v5877 = vld [vmem:[%s5656 + $0x6e0] sm:$0xff]
    %v5878 = vld [vmem:[%s5656 + $0x6e8] sm:$0xff]
    %v5879 = vld [vmem:[%s5656 + $0x6f0] sm:$0xff]
    %v5880 = vld [vmem:[%s5656 + $0x6f8] sm:$0xff]
    %v5881 = vld [vmem:[%s5656 + $0x700] sm:$0xff]
    %v5882 = vld [vmem:[%s5656 + $0x708] sm:$0xff]
    %v5883 = vld [vmem:[%s5656 + $0x710] sm:$0xff]
    %v5884 = vld [vmem:[%s5656 + $0x718] sm:$0xff]
    %v5885 = vld [vmem:[%s5656 + $0x720] sm:$0xff]
    %v5886 = vld [vmem:[%s5656 + $0x728] sm:$0xff]
    %v5887 = vld [vmem:[%s5656 + $0x730] sm:$0xff]
    %v5888 = vld [vmem:[%s5656 + $0x738] sm:$0xff]
    %v5889 = vld [vmem:[%s5656 + $0x740] sm:$0xff]
    %v5890 = vld [vmem:[%s5656 + $0x748] sm:$0xff]
    %v5891 = vld [vmem:[%s5656 + $0x750] sm:$0xff]
    %v5892 = vld [vmem:[%s5656 + $0x758] sm:$0xff]
    %v5893 = vld [vmem:[%s5656 + $0x760] sm:$0xff]
    %v5894 = vld [vmem:[%s5656 + $0x768] sm:$0xff]
    %v5895 = vld [vmem:[%s5656 + $0x770] sm:$0xff]
    %v5896 = vld [vmem:[%s5656 + $0x778] sm:$0xff]
    %v5897 = vld [vmem:[%s5656 + $0x780] sm:$0xff]
    %v5898 = vld [vmem:[%s5656 + $0x788] sm:$0xff]
    %v5899 = vld [vmem:[%s5656 + $0x790] sm:$0xff]
    %v5900 = vld [vmem:[%s5656 + $0x798] sm:$0xff]
    %v5901 = vld [vmem:[%s5656 + $0x7a0] sm:$0xff]
    %v5902 = vld [vmem:[%s5656 + $0x7a8] sm:$0xff]
    %v5903 = vld [vmem:[%s5656 + $0x7b0] sm:$0xff]
    %v5904 = vld [vmem:[%s5656 + $0x7b8] sm:$0xff]
    %v5905 = vld [vmem:[%s5656 + $0x7c0] sm:$0xff]
    %v5906 = vld [vmem:[%s5656 + $0x7c8] sm:$0xff]
    %v5907 = vld [vmem:[%s5656 + $0x7d0] sm:$0xff]
    %v5908 = vld [vmem:[%s5656 + $0x7d8] sm:$0xff]
    %v5909 = vld [vmem:[%s5656 + $0x7e0] sm:$0xff]
    %v5910 = vld [vmem:[%s5656 + $0x7e8] sm:$0xff]
    %v5911 = vld [vmem:[%s5656 + $0x7f0] sm:$0xff]
    %v5912 = vld [vmem:[%s5656 + $0x7f8] sm:$0xff]
    %v5913 = vld [vmem:[%s5656 + $0x800] sm:$0xff]
    %v5914 = vld [vmem:[%s5656 + $0x808] sm:$0xff]
    %v5915 = vld [vmem:[%s5656 + $0x810] sm:$0xff]
    %v5916 = vld [vmem:[%s5656 + $0x818] sm:$0xff]
    %v5917 = vld [vmem:[%s5656 + $0x820] sm:$0xff]
    %v5918 = vld [vmem:[%s5656 + $0x828] sm:$0xff]
    %v5919 = vld [vmem:[%s5656 + $0x830] sm:$0xff]
    %v5920 = vld [vmem:[%s5656 + $0x838] sm:$0xff]
    %v5921 = vld [vmem:[%s5656 + $0x840] sm:$0xff]
    %v5922 = vld [vmem:[%s5656 + $0x848] sm:$0xff]
    %v5923 = vld [vmem:[%s5656 + $0x850] sm:$0xff]
    %v5924 = vld [vmem:[%s5656 + $0x858] sm:$0xff]
    %v5925 = vld [vmem:[%s5656 + $0x860] sm:$0xff]
    %v5926 = vld [vmem:[%s5656 + $0x868] sm:$0xff]
    %v5927 = vld [vmem:[%s5656 + $0x870] sm:$0xff]
    %v5928 = vld [vmem:[%s5656 + $0x878] sm:$0xff]
    %v5929 = vld [vmem:[%s5656 + $0x880] sm:$0xff]
    %v5930 = vld [vmem:[%s5656 + $0x888] sm:$0xff]
    %v5931 = vld [vmem:[%s5656 + $0x890] sm:$0xff]
    %v5932 = vld [vmem:[%s5656 + $0x898] sm:$0xff]
    %v5933 = vld [vmem:[%s5656 + $0x8a0] sm:$0xff]
    %v5934 = vld [vmem:[%s5656 + $0x8a8] sm:$0xff]
    %v5935 = vld [vmem:[%s5656 + $0x8b0] sm:$0xff]
    %v5936 = vld [vmem:[%s5656 + $0x8b8] sm:$0xff]
    %v5937 = vld [vmem:[%s5656 + $0x8c0] sm:$0xff]
    %v5938 = vld [vmem:[%s5656 + $0x8c8] sm:$0xff]
    %v5939 = vld [vmem:[%s5656 + $0x8d0] sm:$0xff]
    %v5940 = vld [vmem:[%s5656 + $0x8d8] sm:$0xff]
    %v5941 = vld [vmem:[%s5656 + $0x8e0] sm:$0xff]
    %v5942 = vld [vmem:[%s5656 + $0x8e8] sm:$0xff]
    %v5943 = vld [vmem:[%s5656 + $0x8f0] sm:$0xff]
    %v5944 = vld [vmem:[%s5656 + $0x8f8] sm:$0xff]
    %v5946 = vsel %vm3958, %v5654, 0
    %5948 = vmatprep.subr.mxu0 %v5658
    %5949 = vmatpush1.msra.mxu0 %v5657
    %5950 = vmatprep.subr.mxu0 %v5674
    %5951 = vmatpush1.msra.mxu0 %v5673
    %5952 = vmatprep.subr.mxu0 %v5690
    %5953 = vmatpush1.msra.mxu0 %v5689
    %5954 = vmatprep.subr.mxu0 %v5706
    %5955 = vmatpush1.msra.mxu0 %v5705
    %5956 = vmatprep.subr.mxu0 %v5722
    %5957 = vmatpush1.msra.mxu0 %v5721
    %5958 = vmatprep.subr.mxu0 %v5738
    %5959 = vmatpush1.msra.mxu0 %v5737
    %5960 = vmatprep.subr.mxu0 %v5754
    %5961 = vmatpush1.msra.mxu0 %v5753
    %5962 = vmatprep.subr.mxu0 %v5770
    %5963 = vmatpush1.msra.mxu0 %v5769
    %5964 = vmatprep.subr.mxu0 %v5786
    %5965 = vmatpush1.msra.mxu0 %v5785
    %5966 = vmatprep.subr.mxu0 %v5802
    %5967 = vmatpush1.msra.mxu0 %v5801
    %5968 = vmatprep.subr.mxu0 %v5818
    %5969 = vmatpush1.msra.mxu0 %v5817
    %5970 = vmatprep.subr.mxu0 %v5834
    %5971 = vmatpush1.msra.mxu0 %v5833
    %5972 = vmatprep.subr.mxu0 %v5850
    %5973 = vmatpush1.msra.mxu0 %v5849
    %5974 = vmatprep.subr.mxu0 %v5866
    %5975 = vmatpush1.msra.mxu0 %v5865
    %5976 = vmatprep.subr.mxu0 %v5882
    %5977 = vmatpush1.msra.mxu0 %v5881
    %5978 = vmatprep.subr.mxu0 %v5898
    %5979 = vmatpush1.msra.mxu0 %v5897
    %5980 = vmatprep.subr.mxu0 %v5914
    %5981 = vmatpush1.msra.mxu0 %v5913
    %5982 = vmatprep.subr.mxu0 %v5930
    %5983 = vmatpush1.msra.mxu0 %v5929
    %5984 = vmatprep.subr.mxu0 0.0
    %5985 = vmatpush1.msra.mxu0 0.0
    %5986 = vmatprep.subr.mxu0 0.0
    %5987 = vmatpush1.msra.mxu0 0.0
    %5988 = vmatprep.subr.mxu0 0.0
    %5989 = vmatpush1.msra.mxu0 0.0
    %5990 = vmatprep.subr.mxu0 0.0
    %5991 = vmatpush1.msra.mxu0 0.0
    %5992 = vmatprep.subr.mxu0 0.0
    %5993 = vmatpush1.msra.mxu0 0.0
    %5994 = vmatprep.subr.mxu0 0.0
    %5995 = vmatpush1.msra.mxu0 0.0
    %5996 = vmatprep.subr.mxu0 0.0
    %5997 = vmatpush1.msra.mxu0 0.0
    %5998 = vmatprep.subr.mxu0 0.0
    %5999 = vmatpush1.msra.mxu0 0.0
    %6000 = vmatprep.subr.mxu0 0.0
    %6001 = vmatpush1.msra.mxu0 0.0
    %6002 = vmatprep.subr.mxu0 0.0
    %6003 = vmatpush1.msra.mxu0 0.0
    %6004 = vmatprep.subr.mxu0 0.0
    %6005 = vmatpush1.msra.mxu0 0.0
    %6006 = vmatprep.subr.mxu0 0.0
    %6007 = vmatpush1.msra.mxu0 0.0
    %6008 = vmatprep.subr.mxu0 0.0
    %6009 = vmatpush1.msra.mxu0 0.0
    %6010 = vmatprep.subr.mxu0 0.0
    %6011 = vmatpush1.msra.mxu0 0.0
    %6012 = vmatprep.mubr.f32.mxu0 %v5946
    %6013 = vmatmul.mubr.f32.gmra.mrb[0].mxu0 %v5652
    %v6014 = vpop.f32.mrb[0].mxu0
    %v6015 = vadd.f32 0.0, %v6014
    %v6016 = vpop.f32.mrb[0].mxu0
    %v6017 = vadd.f32 0.0, %v6016
    %6018 = vdwg.mxu0
    %6019 = vmatprep.subr.mxu0 %v5660
    %6020 = vmatpush1.msra.mxu0 %v5659
    %6021 = vmatprep.subr.mxu0 %v5676
    %6022 = vmatpush1.msra.mxu0 %v5675
    %6023 = vmatprep.subr.mxu0 %v5692
    %6024 = vmatpush1.msra.mxu0 %v5691
    %6025 = vmatprep.subr.mxu0 %v5708
    %6026 = vmatpush1.msra.mxu0 %v5707
    %6027 = vmatprep.subr.mxu0 %v5724
    %6028 = vmatpush1.msra.mxu0 %v5723
    %6029 = vmatprep.subr.mxu0 %v5740
    %6030 = vmatpush1.msra.mxu0 %v5739
    %6031 = vmatprep.subr.mxu0 %v5756
    %6032 = vmatpush1.msra.mxu0 %v5755
    %6033 = vmatprep.subr.mxu0 %v5772
    %6034 = vmatpush1.msra.mxu0 %v5771
    %6035 = vmatprep.subr.mxu0 %v5788
    %6036 = vmatpush1.msra.mxu0 %v5787
    %6037 = vmatprep.subr.mxu0 %v5804
    %6038 = vmatpush1.msra.mxu0 %v5803
    %6039 = vmatprep.subr.mxu0 %v5820
    %6040 = vmatpush1.msra.mxu0 %v5819
    %6041 = vmatprep.subr.mxu0 %v5836
    %6042 = vmatpush1.msra.mxu0 %v5835
    %6043 = vmatprep.subr.mxu0 %v5852
    %6044 = vmatpush1.msra.mxu0 %v5851
    %6045 = vmatprep.subr.mxu0 %v5868
    %6046 = vmatpush1.msra.mxu0 %v5867
    %6047 = vmatprep.subr.mxu0 %v5884
    %6048 = vmatpush1.msra.mxu0 %v5883
    %6049 = vmatprep.subr.mxu0 %v5900
    %6050 = vmatpush1.msra.mxu0 %v5899
    %6051 = vmatprep.subr.mxu0 %v5916
    %6052 = vmatpush1.msra.mxu0 %v5915
    %6053 = vmatprep.subr.mxu0 %v5932
    %6054 = vmatpush1.msra.mxu0 %v5931
    %6055 = vmatprep.subr.mxu0 0.0
    %6056 = vmatpush1.msra.mxu0 0.0
    %6057 = vmatprep.subr.mxu0 0.0
    %6058 = vmatpush1.msra.mxu0 0.0
    %6059 = vmatprep.subr.mxu0 0.0
    %6060 = vmatpush1.msra.mxu0 0.0
    %6061 = vmatprep.subr.mxu0 0.0
    %6062 = vmatpush1.msra.mxu0 0.0
    %6063 = vmatprep.subr.mxu0 0.0
    %6064 = vmatpush1.msra.mxu0 0.0
    %6065 = vmatprep.subr.mxu0 0.0
    %6066 = vmatpush1.msra.mxu0 0.0
    %6067 = vmatprep.subr.mxu0 0.0
    %6068 = vmatpush1.msra.mxu0 0.0
    %6069 = vmatprep.subr.mxu0 0.0
    %6070 = vmatpush1.msra.mxu0 0.0
    %6071 = vmatprep.subr.mxu0 0.0
    %6072 = vmatpush1.msra.mxu0 0.0
    %6073 = vmatprep.subr.mxu0 0.0
    %6074 = vmatpush1.msra.mxu0 0.0
    %6075 = vmatprep.subr.mxu0 0.0
    %6076 = vmatpush1.msra.mxu0 0.0
    %6077 = vmatprep.subr.mxu0 0.0
    %6078 = vmatpush1.msra.mxu0 0.0
    %6079 = vmatprep.subr.mxu0 0.0
    %6080 = vmatpush1.msra.mxu0 0.0
    %6081 = vmatprep.subr.mxu0 0.0
    %6082 = vmatpush1.msra.mxu0 0.0
    %6083 = vmatprep.mubr.f32.mxu0 %v5946
    %6084 = vmatmul.mubr.f32.gmra.mrb[0].mxu0 %v5652
    %v6085 = vpop.f32.mrb[0].mxu0
    %v6086 = vadd.f32 0.0, %v6085
    %v6087 = vpop.f32.mrb[0].mxu0
    %v6088 = vadd.f32 0.0, %v6087
    %6089 = vdwg.mxu0
    %6090 = vmatprep.subr.mxu0 %v5662
    %6091 = vmatpush1.msra.mxu0 %v5661
    %6092 = vmatprep.subr.mxu0 %v5678
    %6093 = vmatpush1.msra.mxu0 %v5677
    %6094 = vmatprep.subr.mxu0 %v5694
    %6095 = vmatpush1.msra.mxu0 %v5693
    %6096 = vmatprep.subr.mxu0 %v5710
    %6097 = vmatpush1.msra.mxu0 %v5709
    %6098 = vmatprep.subr.mxu0 %v5726
    %6099 = vmatpush1.msra.mxu0 %v5725
    %6100 = vmatprep.subr.mxu0 %v5742
    %6101 = vmatpush1.msra.mxu0 %v5741
    %6102 = vmatprep.subr.mxu0 %v5758
    %6103 = vmatpush1.msra.mxu0 %v5757
    %6104 = vmatprep.subr.mxu0 %v5774
    %6105 = vmatpush1.msra.mxu0 %v5773
    %6106 = vmatprep.subr.mxu0 %v5790
    %6107 = vmatpush1.msra.mxu0 %v5789
    %6108 = vmatprep.subr.mxu0 %v5806
    %6109 = vmatpush1.msra.mxu0 %v5805
    %6110 = vmatprep.subr.mxu0 %v5822
    %6111 = vmatpush1.msra.mxu0 %v5821
    %6112 = vmatprep.subr.mxu0 %v5838
    %6113 = vmatpush1.msra.mxu0 %v5837
    %6114 = vmatprep.subr.mxu0 %v5854
    %6115 = vmatpush1.msra.mxu0 %v5853
    %6116 = vmatprep.subr.mxu0 %v5870
    %6117 = vmatpush1.msra.mxu0 %v5869
    %6118 = vmatprep.subr.mxu0 %v5886
    %6119 = vmatpush1.msra.mxu0 %v5885
    %6120 = vmatprep.subr.mxu0 %v5902
    %6121 = vmatpush1.msra.mxu0 %v5901
    %6122 = vmatprep.subr.mxu0 %v5918
    %6123 = vmatpush1.msra.mxu0 %v5917
    %6124 = vmatprep.subr.mxu0 %v5934
    %6125 = vmatpush1.msra.mxu0 %v5933
    %6126 = vmatprep.subr.mxu0 0.0
    %6127 = vmatpush1.msra.mxu0 0.0
    %6128 = vmatprep.subr.mxu0 0.0
    %6129 = vmatpush1.msra.mxu0 0.0
    %6130 = vmatprep.subr.mxu0 0.0
    %6131 = vmatpush1.msra.mxu0 0.0
    %6132 = vmatprep.subr.mxu0 0.0
    %6133 = vmatpush1.msra.mxu0 0.0
    %6134 = vmatprep.subr.mxu0 0.0
    %6135 = vmatpush1.msra.mxu0 0.0
    %6136 = vmatprep.subr.mxu0 0.0
    %6137 = vmatpush1.msra.mxu0 0.0
    %6138 = vmatprep.subr.mxu0 0.0
    %6139 = vmatpush1.msra.mxu0 0.0
    %6140 = vmatprep.subr.mxu0 0.0
    %6141 = vmatpush1.msra.mxu0 0.0
    %6142 = vmatprep.subr.mxu0 0.0
    %6143 = vmatpush1.msra.mxu0 0.0
    %6144 = vmatprep.subr.mxu0 0.0
    %6145 = vmatpush1.msra.mxu0 0.0
    %6146 = vmatprep.subr.mxu0 0.0
    %6147 = vmatpush1.msra.mxu0 0.0
    %6148 = vmatprep.subr.mxu0 0.0
    %6149 = vmatpush1.msra.mxu0 0.0
    %6150 = vmatprep.subr.mxu0 0.0
    %6151 = vmatpush1.msra.mxu0 0.0
    %6152 = vmatprep.subr.mxu0 0.0
    %6153 = vmatpush1.msra.mxu0 0.0
    %6154 = vmatprep.mubr.f32.mxu0 %v5946
    %6155 = vmatmul.mubr.f32.gmra.mrb[0].mxu0 %v5652
    %v6156 = vpop.f32.mrb[0].mxu0
    %v6157 = vadd.f32 0.0, %v6156
    %v6158 = vpop.f32.mrb[0].mxu0
    %v6159 = vadd.f32 0.0, %v6158
    %6160 = vdwg.mxu0
    %6161 = vmatprep.subr.mxu0 %v5664
    %6162 = vmatpush1.msra.mxu0 %v5663
    %6163 = vmatprep.subr.mxu0 %v5680
    %6164 = vmatpush1.msra.mxu0 %v5679
    %6165 = vmatprep.subr.mxu0 %v5696
    %6166 = vmatpush1.msra.mxu0 %v5695
    %6167 = vmatprep.subr.mxu0 %v5712
    %6168 = vmatpush1.msra.mxu0 %v5711
    %6169 = vmatprep.subr.mxu0 %v5728
    %6170 = vmatpush1.msra.mxu0 %v5727
    %6171 = vmatprep.subr.mxu0 %v5744
    %6172 = vmatpush1.msra.mxu0 %v5743
    %6173 = vmatprep.subr.mxu0 %v5760
    %6174 = vmatpush1.msra.mxu0 %v5759
    %6175 = vmatprep.subr.mxu0 %v5776
    %6176 = vmatpush1.msra.mxu0 %v5775
    %6177 = vmatprep.subr.mxu0 %v5792
    %6178 = vmatpush1.msra.mxu0 %v5791
    %6179 = vmatprep.subr.mxu0 %v5808
    %6180 = vmatpush1.msra.mxu0 %v5807
    %6181 = vmatprep.subr.mxu0 %v5824
    %6182 = vmatpush1.msra.mxu0 %v5823
    %6183 = vmatprep.subr.mxu0 %v5840
    %6184 = vmatpush1.msra.mxu0 %v5839
    %6185 = vmatprep.subr.mxu0 %v5856
    %6186 = vmatpush1.msra.mxu0 %v5855
    %6187 = vmatprep.subr.mxu0 %v5872
    %6188 = vmatpush1.msra.mxu0 %v5871
    %6189 = vmatprep.subr.mxu0 %v5888
    %6190 = vmatpush1.msra.mxu0 %v5887
    %6191 = vmatprep.subr.mxu0 %v5904
    %6192 = vmatpush1.msra.mxu0 %v5903
    %6193 = vmatprep.subr.mxu0 %v5920
    %6194 = vmatpush1.msra.mxu0 %v5919
    %6195 = vmatprep.subr.mxu0 %v5936
    %6196 = vmatpush1.msra.mxu0 %v5935
    %6197 = vmatprep.subr.mxu0 0.0
    %6198 = vmatpush1.msra.mxu0 0.0
    %6199 = vmatprep.subr.mxu0 0.0
    %6200 = vmatpush1.msra.mxu0 0.0
    %6201 = vmatprep.subr.mxu0 0.0
    %6202 = vmatpush1.msra.mxu0 0.0
    %6203 = vmatprep.subr.mxu0 0.0
    %6204 = vmatpush1.msra.mxu0 0.0
    %6205 = vmatprep.subr.mxu0 0.0
    %6206 = vmatpush1.msra.mxu0 0.0
    %6207 = vmatprep.subr.mxu0 0.0
    %6208 = vmatpush1.msra.mxu0 0.0
    %6209 = vmatprep.subr.mxu0 0.0
    %6210 = vmatpush1.msra.mxu0 0.0
    %6211 = vmatprep.subr.mxu0 0.0
    %6212 = vmatpush1.msra.mxu0 0.0
    %6213 = vmatprep.subr.mxu0 0.0
    %6214 = vmatpush1.msra.mxu0 0.0
    %6215 = vmatprep.subr.mxu0 0.0
    %6216 = vmatpush1.msra.mxu0 0.0
    %6217 = vmatprep.subr.mxu0 0.0
    %6218 = vmatpush1.msra.mxu0 0.0
    %6219 = vmatprep.subr.mxu0 0.0
    %6220 = vmatpush1.msra.mxu0 0.0
    %6221 = vmatprep.subr.mxu0 0.0
    %6222 = vmatpush1.msra.mxu0 0.0
    %6223 = vmatprep.subr.mxu0 0.0
    %6224 = vmatpush1.msra.mxu0 0.0
    %6225 = vmatprep.mubr.f32.mxu0 %v5946
    %6226 = vmatmul.mubr.f32.gmra.mrb[0].mxu0 %v5652
    %v6227 = vpop.f32.mrb[0].mxu0
    %v6228 = vadd.f32 0.0, %v6227
    %v6229 = vpop.f32.mrb[0].mxu0
    %v6230 = vadd.f32 0.0, %v6229
    %6231 = vdwg.mxu0
    %6232 = vmatprep.subr.mxu0 %v5666
    %6233 = vmatpush1.msra.mxu0 %v5665
    %6234 = vmatprep.subr.mxu0 %v5682
    %6235 = vmatpush1.msra.mxu0 %v5681
    %6236 = vmatprep.subr.mxu0 %v5698
    %6237 = vmatpush1.msra.mxu0 %v5697
    %6238 = vmatprep.subr.mxu0 %v5714
    %6239 = vmatpush1.msra.mxu0 %v5713
    %6240 = vmatprep.subr.mxu0 %v5730
    %6241 = vmatpush1.msra.mxu0 %v5729
    %6242 = vmatprep.subr.mxu0 %v5746
    %6243 = vmatpush1.msra.mxu0 %v5745
    %6244 = vmatprep.subr.mxu0 %v5762
    %6245 = vmatpush1.msra.mxu0 %v5761
    %6246 = vmatprep.subr.mxu0 %v5778
    %6247 = vmatpush1.msra.mxu0 %v5777
    %6248 = vmatprep.subr.mxu0 %v5794
    %6249 = vmatpush1.msra.mxu0 %v5793
    %6250 = vmatprep.subr.mxu0 %v5810
    %6251 = vmatpush1.msra.mxu0 %v5809
    %6252 = vmatprep.subr.mxu0 %v5826
    %6253 = vmatpush1.msra.mxu0 %v5825
    %6254 = vmatprep.subr.mxu0 %v5842
    %6255 = vmatpush1.msra.mxu0 %v5841
    %6256 = vmatprep.subr.mxu0 %v5858
    %6257 = vmatpush1.msra.mxu0 %v5857
    %6258 = vmatprep.subr.mxu0 %v5874
    %6259 = vmatpush1.msra.mxu0 %v5873
    %6260 = vmatprep.subr.mxu0 %v5890
    %6261 = vmatpush1.msra.mxu0 %v5889
    %6262 = vmatprep.subr.mxu0 %v5906
    %6263 = vmatpush1.msra.mxu0 %v5905
    %6264 = vmatprep.subr.mxu0 %v5922
    %6265 = vmatpush1.msra.mxu0 %v5921
    %6266 = vmatprep.subr.mxu0 %v5938
    %6267 = vmatpush1.msra.mxu0 %v5937
    %6268 = vmatprep.subr.mxu0 0.0
    %6269 = vmatpush1.msra.mxu0 0.0
    %6270 = vmatprep.subr.mxu0 0.0
    %6271 = vmatpush1.msra.mxu0 0.0
    %6272 = vmatprep.subr.mxu0 0.0
    %6273 = vmatpush1.msra.mxu0 0.0
    %6274 = vmatprep.subr.mxu0 0.0
    %6275 = vmatpush1.msra.mxu0 0.0
    %6276 = vmatprep.subr.mxu0 0.0
    %6277 = vmatpush1.msra.mxu0 0.0
    %6278 = vmatprep.subr.mxu0 0.0
    %6279 = vmatpush1.msra.mxu0 0.0
    %6280 = vmatprep.subr.mxu0 0.0
    %6281 = vmatpush1.msra.mxu0 0.0
    %6282 = vmatprep.subr.mxu0 0.0
    %6283 = vmatpush1.msra.mxu0 0.0
    %6284 = vmatprep.subr.mxu0 0.0
    %6285 = vmatpush1.msra.mxu0 0.0
    %6286 = vmatprep.subr.mxu0 0.0
    %6287 = vmatpush1.msra.mxu0 0.0
    %6288 = vmatprep.subr.mxu0 0.0
    %6289 = vmatpush1.msra.mxu0 0.0
    %6290 = vmatprep.subr.mxu0 0.0
    %6291 = vmatpush1.msra.mxu0 0.0
    %6292 = vmatprep.subr.mxu0 0.0
    %6293 = vmatpush1.msra.mxu0 0.0
    %6294 = vmatprep.subr.mxu0 0.0
    %6295 = vmatpush1.msra.mxu0 0.0
    %6296 = vmatprep.mubr.f32.mxu0 %v5946
    %6297 = vmatmul.mubr.f32.gmra.mrb[0].mxu0 %v5652
    %v6298 = vpop.f32.mrb[0].mxu0
    %v6299 = vadd.f32 0.0, %v6298
    %v6300 = vpop.f32.mrb[0].mxu0
    %v6301 = vadd.f32 0.0, %v6300
    %6302 = vdwg.mxu0
    %6303 = vmatprep.subr.mxu0 %v5668
    %6304 = vmatpush1.msra.mxu0 %v5667
    %6305 = vmatprep.subr.mxu0 %v5684
    %6306 = vmatpush1.msra.mxu0 %v5683
    %6307 = vmatprep.subr.mxu0 %v5700
    %6308 = vmatpush1.msra.mxu0 %v5699
    %6309 = vmatprep.subr.mxu0 %v5716
    %6310 = vmatpush1.msra.mxu0 %v5715
    %6311 = vmatprep.subr.mxu0 %v5732
    %6312 = vmatpush1.msra.mxu0 %v5731
    %6313 = vmatprep.subr.mxu0 %v5748
    %6314 = vmatpush1.msra.mxu0 %v5747
    %6315 = vmatprep.subr.mxu0 %v5764
    %6316 = vmatpush1.msra.mxu0 %v5763
    %6317 = vmatprep.subr.mxu0 %v5780
    %6318 = vmatpush1.msra.mxu0 %v5779
    %6319 = vmatprep.subr.mxu0 %v5796
    %6320 = vmatpush1.msra.mxu0 %v5795
    %6321 = vmatprep.subr.mxu0 %v5812
    %6322 = vmatpush1.msra.mxu0 %v5811
    %6323 = vmatprep.subr.mxu0 %v5828
    %6324 = vmatpush1.msra.mxu0 %v5827
    %6325 = vmatprep.subr.mxu0 %v5844
    %6326 = vmatpush1.msra.mxu0 %v5843
    %6327 = vmatprep.subr.mxu0 %v5860
    %6328 = vmatpush1.msra.mxu0 %v5859
    %6329 = vmatprep.subr.mxu0 %v5876
    %6330 = vmatpush1.msra.mxu0 %v5875
    %6331 = vmatprep.subr.mxu0 %v5892
    %6332 = vmatpush1.msra.mxu0 %v5891
    %6333 = vmatprep.subr.mxu0 %v5908
    %6334 = vmatpush1.msra.mxu0 %v5907
    %6335 = vmatprep.subr.mxu0 %v5924
    %6336 = vmatpush1.msra.mxu0 %v5923
    %6337 = vmatprep.subr.mxu0 %v5940
    %6338 = vmatpush1.msra.mxu0 %v5939
    %6339 = vmatprep.subr.mxu0 0.0
    %6340 = vmatpush1.msra.mxu0 0.0
    %6341 = vmatprep.subr.mxu0 0.0
    %6342 = vmatpush1.msra.mxu0 0.0
    %6343 = vmatprep.subr.mxu0 0.0
    %6344 = vmatpush1.msra.mxu0 0.0
    %6345 = vmatprep.subr.mxu0 0.0
    %6346 = vmatpush1.msra.mxu0 0.0
    %6347 = vmatprep.subr.mxu0 0.0
    %6348 = vmatpush1.msra.mxu0 0.0
    %6349 = vmatprep.subr.mxu0 0.0
    %6350 = vmatpush1.msra.mxu0 0.0
    %6351 = vmatprep.subr.mxu0 0.0
    %6352 = vmatpush1.msra.mxu0 0.0
    %6353 = vmatprep.subr.mxu0 0.0
    %6354 = vmatpush1.msra.mxu0 0.0
    %6355 = vmatprep.subr.mxu0 0.0
    %6356 = vmatpush1.msra.mxu0 0.0
    %6357 = vmatprep.subr.mxu0 0.0
    %6358 = vmatpush1.msra.mxu0 0.0
    %6359 = vmatprep.subr.mxu0 0.0
    %6360 = vmatpush1.msra.mxu0 0.0
    %6361 = vmatprep.subr.mxu0 0.0
    %6362 = vmatpush1.msra.mxu0 0.0
    %6363 = vmatprep.subr.mxu0 0.0
    %6364 = vmatpush1.msra.mxu0 0.0
    %6365 = vmatprep.subr.mxu0 0.0
    %6366 = vmatpush1.msra.mxu0 0.0
    %6367 = vmatprep.mubr.f32.mxu0 %v5946
    %6368 = vmatmul.mubr.f32.gmra.mrb[0].mxu0 %v5652
    %v6369 = vpop.f32.mrb[0].mxu0
    %v6370 = vadd.f32 0.0, %v6369
    %v6371 = vpop.f32.mrb[0].mxu0
    %v6372 = vadd.f32 0.0, %v6371
    %6373 = vdwg.mxu0
    %6374 = vmatprep.subr.mxu0 %v5670
    %6375 = vmatpush1.msra.mxu0 %v5669
    %6376 = vmatprep.subr.mxu0 %v5686
    %6377 = vmatpush1.msra.mxu0 %v5685
    %6378 = vmatprep.subr.mxu0 %v5702
    %6379 = vmatpush1.msra.mxu0 %v5701
    %6380 = vmatprep.subr.mxu0 %v5718
    %6381 = vmatpush1.msra.mxu0 %v5717
    %6382 = vmatprep.subr.mxu0 %v5734
    %6383 = vmatpush1.msra.mxu0 %v5733
    %6384 = vmatprep.subr.mxu0 %v5750
    %6385 = vmatpush1.msra.mxu0 %v5749
    %6386 = vmatprep.subr.mxu0 %v5766
    %6387 = vmatpush1.msra.mxu0 %v5765
    %6388 = vmatprep.subr.mxu0 %v5782
    %6389 = vmatpush1.msra.mxu0 %v5781
    %6390 = vmatprep.subr.mxu0 %v5798
    %6391 = vmatpush1.msra.mxu0 %v5797
    %6392 = vmatprep.subr.mxu0 %v5814
    %6393 = vmatpush1.msra.mxu0 %v5813
    %6394 = vmatprep.subr.mxu0 %v5830
    %6395 = vmatpush1.msra.mxu0 %v5829
    %6396 = vmatprep.subr.mxu0 %v5846
    %6397 = vmatpush1.msra.mxu0 %v5845
    %6398 = vmatprep.subr.mxu0 %v5862
    %6399 = vmatpush1.msra.mxu0 %v5861
    %6400 = vmatprep.subr.mxu0 %v5878
    %6401 = vmatpush1.msra.mxu0 %v5877
    %6402 = vmatprep.subr.mxu0 %v5894
    %6403 = vmatpush1.msra.mxu0 %v5893
    %6404 = vmatprep.subr.mxu0 %v5910
    %6405 = vmatpush1.msra.mxu0 %v5909
    %6406 = vmatprep.subr.mxu0 %v5926
    %6407 = vmatpush1.msra.mxu0 %v5925
    %6408 = vmatprep.subr.mxu0 %v5942
    %6409 = vmatpush1.msra.mxu0 %v5941
    %6410 = vmatprep.subr.mxu0 0.0
    %6411 = vmatpush1.msra.mxu0 0.0
    %6412 = vmatprep.subr.mxu0 0.0
    %6413 = vmatpush1.msra.mxu0 0.0
    %6414 = vmatprep.subr.mxu0 0.0
    %6415 = vmatpush1.msra.mxu0 0.0
    %6416 = vmatprep.subr.mxu0 0.0
    %6417 = vmatpush1.msra.mxu0 0.0
    %6418 = vmatprep.subr.mxu0 0.0
    %6419 = vmatpush1.msra.mxu0 0.0
    %6420 = vmatprep.subr.mxu0 0.0
    %6421 = vmatpush1.msra.mxu0 0.0
    %6422 = vmatprep.subr.mxu0 0.0
    %6423 = vmatpush1.msra.mxu0 0.0
    %6424 = vmatprep.subr.mxu0 0.0
    %6425 = vmatpush1.msra.mxu0 0.0
    %6426 = vmatprep.subr.mxu0 0.0
    %6427 = vmatpush1.msra.mxu0 0.0
    %6428 = vmatprep.subr.mxu0 0.0
    %6429 = vmatpush1.msra.mxu0 0.0
    %6430 = vmatprep.subr.mxu0 0.0
    %6431 = vmatpush1.msra.mxu0 0.0
    %6432 = vmatprep.subr.mxu0 0.0
    %6433 = vmatpush1.msra.mxu0 0.0
    %6434 = vmatprep.subr.mxu0 0.0
    %6435 = vmatpush1.msra.mxu0 0.0
    %6436 = vmatprep.subr.mxu0 0.0
    %6437 = vmatpush1.msra.mxu0 0.0
    %6438 = vmatprep.mubr.f32.mxu0 %v5946
    %6439 = vmatmul.mubr.f32.gmra.mrb[0].mxu0 %v5652
    %v6440 = vpop.f32.mrb[0].mxu0
    %v6441 = vadd.f32 0.0, %v6440
    %v6442 = vpop.f32.mrb[0].mxu0
    %v6443 = vadd.f32 0.0, %v6442
    %6444 = vdwg.mxu0
    %6445 = vmatprep.subr.mxu0 %v5672
    %6446 = vmatpush1.msra.mxu0 %v5671
    %6447 = vmatprep.subr.mxu0 %v5688
    %6448 = vmatpush1.msra.mxu0 %v5687
    %6449 = vmatprep.subr.mxu0 %v5704
    %6450 = vmatpush1.msra.mxu0 %v5703
    %6451 = vmatprep.subr.mxu0 %v5720
    %6452 = vmatpush1.msra.mxu0 %v5719
    %6453 = vmatprep.subr.mxu0 %v5736
    %6454 = vmatpush1.msra.mxu0 %v5735
    %6455 = vmatprep.subr.mxu0 %v5752
    %6456 = vmatpush1.msra.mxu0 %v5751
    %6457 = vmatprep.subr.mxu0 %v5768
    %6458 = vmatpush1.msra.mxu0 %v5767
    %6459 = vmatprep.subr.mxu0 %v5784
    %6460 = vmatpush1.msra.mxu0 %v5783
    %6461 = vmatprep.subr.mxu0 %v5800
    %6462 = vmatpush1.msra.mxu0 %v5799
    %6463 = vmatprep.subr.mxu0 %v5816
    %6464 = vmatpush1.msra.mxu0 %v5815
    %6465 = vmatprep.subr.mxu0 %v5832
    %6466 = vmatpush1.msra.mxu0 %v5831
    %6467 = vmatprep.subr.mxu0 %v5848
    %6468 = vmatpush1.msra.mxu0 %v5847
    %6469 = vmatprep.subr.mxu0 %v5864
    %6470 = vmatpush1.msra.mxu0 %v5863
    %6471 = vmatprep.subr.mxu0 %v5880
    %6472 = vmatpush1.msra.mxu0 %v5879
    %6473 = vmatprep.subr.mxu0 %v5896
    %6474 = vmatpush1.msra.mxu0 %v5895
    %6475 = vmatprep.subr.mxu0 %v5912
    %6476 = vmatpush1.msra.mxu0 %v5911
    %6477 = vmatprep.subr.mxu0 %v5928
    %6478 = vmatpush1.msra.mxu0 %v5927
    %6479 = vmatprep.subr.mxu0 %v5944
    %6480 = vmatpush1.msra.mxu0 %v5943
    %6481 = vmatprep.subr.mxu0 0.0
    %6482 = vmatpush1.msra.mxu0 0.0
    %6483 = vmatprep.subr.mxu0 0.0
    %6484 = vmatpush1.msra.mxu0 0.0
    %6485 = vmatprep.subr.mxu0 0.0
    %6486 = vmatpush1.msra.mxu0 0.0
    %6487 = vmatprep.subr.mxu0 0.0
    %6488 = vmatpush1.msra.mxu0 0.0
    %6489 = vmatprep.subr.mxu0 0.0
    %6490 = vmatpush1.msra.mxu0 0.0
    %6491 = vmatprep.subr.mxu0 0.0
    %6492 = vmatpush1.msra.mxu0 0.0
    %6493 = vmatprep.subr.mxu0 0.0
    %6494 = vmatpush1.msra.mxu0 0.0
    %6495 = vmatprep.subr.mxu0 0.0
    %6496 = vmatpush1.msra.mxu0 0.0
    %6497 = vmatprep.subr.mxu0 0.0
    %6498 = vmatpush1.msra.mxu0 0.0
    %6499 = vmatprep.subr.mxu0 0.0
    %6500 = vmatpush1.msra.mxu0 0.0
    %6501 = vmatprep.subr.mxu0 0.0
    %6502 = vmatpush1.msra.mxu0 0.0
    %6503 = vmatprep.subr.mxu0 0.0
    %6504 = vmatpush1.msra.mxu0 0.0
    %6505 = vmatprep.subr.mxu0 0.0
    %6506 = vmatpush1.msra.mxu0 0.0
    %6507 = vmatprep.subr.mxu0 0.0
    %6508 = vmatpush1.msra.mxu0 0.0
    %6509 = vmatprep.mubr.f32.mxu0 %v5946
    %6510 = vmatmul.mubr.f32.gmra.mrb[0].mxu0 %v5652
    %v6511 = vpop.f32.mrb[0].mxu0
    %v6512 = vadd.f32 0.0, %v6511
    %v6513 = vpop.f32.mrb[0].mxu0
    %v6514 = vadd.f32 0.0, %v6513
    %6515 = vdwg.mxu0
    %v6516 = vadd.f32 %v5564, %v6015
    %v6517 = vadd.f32 %v5565, %v6017
    %v6518 = vadd.f32 %v5566, %v6086
    %v6519 = vadd.f32 %v5567, %v6088
    %v6520 = vadd.f32 %v5568, %v6157
    %v6521 = vadd.f32 %v5569, %v6159
    %v6522 = vadd.f32 %v5570, %v6228
    %v6523 = vadd.f32 %v5571, %v6230
    %v6524 = vadd.f32 %v5572, %v6299
    %v6525 = vadd.f32 %v5573, %v6301
    %v6526 = vadd.f32 %v5574, %v6370
    %v6527 = vadd.f32 %v5575, %v6372
    %v6528 = vadd.f32 %v5576, %v6441
    %v6529 = vadd.f32 %v5577, %v6443
    %v6530 = vadd.f32 %v5578, %v6512
    %v6531 = vadd.f32 %v5579, %v6514
    %s6532 = scalar_lea.vmem [#allocation13], 6
    %v6533 = vld [vmem:[%s6532] sm:$0x3]
    %v6535 = vsel %vm3588, %v6533, 0
    %6537 = vmatprep.subr.mxu0 %v3582
    %6538 = vmatpush1.msra.mxu0 %v3581
    %6539 = vmatprep.subr.mxu0 %v3597
    %6540 = vmatpush1.msra.mxu0 %v3594
    %6541 = vmatprep.subr.mxu0 0.0
    %6542 = vmatpush1.msra.mxu0 0.0
    %6543 = vmatprep.subr.mxu0 0.0
    %6544 = vmatpush1.msra.mxu0 0.0
    %6545 = vmatprep.subr.mxu0 0.0
    %6546 = vmatpush1.msra.mxu0 0.0
    %6547 = vmatprep.subr.mxu0 0.0
    %6548 = vmatpush1.msra.mxu0 0.0
    %6549 = vmatprep.subr.mxu0 0.0
    %6550 = vmatpush1.msra.mxu0 0.0
    %6551 = vmatprep.subr.mxu0 0.0
    %6552 = vmatpush1.msra.mxu0 0.0
    %6553 = vmatprep.subr.mxu0 0.0
    %6554 = vmatpush1.msra.mxu0 0.0
    %6555 = vmatprep.subr.mxu0 0.0
    %6556 = vmatpush1.msra.mxu0 0.0
    %6557 = vmatprep.subr.mxu0 0.0
    %6558 = vmatpush1.msra.mxu0 0.0
    %6559 = vmatprep.subr.mxu0 0.0
    %6560 = vmatpush1.msra.mxu0 0.0
    %6561 = vmatprep.subr.mxu0 0.0
    %6562 = vmatpush1.msra.mxu0 0.0
    %6563 = vmatprep.subr.mxu0 0.0
    %6564 = vmatpush1.msra.mxu0 0.0
    %6565 = vmatprep.subr.mxu0 0.0
    %6566 = vmatpush1.msra.mxu0 0.0
    %6567 = vmatprep.subr.mxu0 0.0
    %6568 = vmatpush1.msra.mxu0 0.0
    %6569 = vmatprep.subr.mxu0 0.0
    %6570 = vmatpush1.msra.mxu0 0.0
    %6571 = vmatprep.subr.mxu0 0.0
    %6572 = vmatpush1.msra.mxu0 0.0
    %6573 = vmatprep.subr.mxu0 0.0
    %6574 = vmatpush1.msra.mxu0 0.0
    %6575 = vmatprep.subr.mxu0 0.0
    %6576 = vmatpush1.msra.mxu0 0.0
    %6577 = vmatprep.subr.mxu0 0.0
    %6578 = vmatpush1.msra.mxu0 0.0
    %6579 = vmatprep.subr.mxu0 0.0
    %6580 = vmatpush1.msra.mxu0 0.0
    %6581 = vmatprep.subr.mxu0 0.0
    %6582 = vmatpush1.msra.mxu0 0.0
    %6583 = vmatprep.subr.mxu0 0.0
    %6584 = vmatpush1.msra.mxu0 0.0
    %6585 = vmatprep.subr.mxu0 0.0
    %6586 = vmatpush1.msra.mxu0 0.0
    %6587 = vmatprep.subr.mxu0 0.0
    %6588 = vmatpush1.msra.mxu0 0.0
    %6589 = vmatprep.subr.mxu0 0.0
    %6590 = vmatpush1.msra.mxu0 0.0
    %6591 = vmatprep.subr.mxu0 0.0
    %6592 = vmatpush1.msra.mxu0 0.0
    %6593 = vmatprep.subr.mxu0 0.0
    %6594 = vmatpush1.msra.mxu0 0.0
    %6595 = vmatprep.subr.mxu0 0.0
    %6596 = vmatpush1.msra.mxu0 0.0
    %6597 = vmatprep.subr.mxu0 0.0
    %6598 = vmatpush1.msra.mxu0 0.0
    %6599 = vmatprep.subr.mxu0 0.0
    %6600 = vmatpush1.msra.mxu0 0.0
    %6601 = vmatprep.mubr.f32.mxu0 0.0
    %6602 = vmatmul.mubr.f32.gmra.mrb[0].mxu0 %v6535
    %v6603 = vpop.f32.mrb[0].mxu0
    %v6604 = vadd.f32 0.0, %v6603
    %v6605 = vpop.f32.mrb[0].mxu0
    %v6606 = vadd.f32 0.0, %v6605
    %6607 = vdwg.mxu0
    %s6608 = scalar_lea.vmem [#allocation14], 6912
    %v6609 = vld [vmem:[%s6608] sm:$0xff]
    %v6610 = vld [vmem:[%s6608 + $0x8] sm:$0xff]
    %v6611 = vld [vmem:[%s6608 + $0x10] sm:$0xff]
    %v6612 = vld [vmem:[%s6608 + $0x18] sm:$0xff]
    %v6613 = vld [vmem:[%s6608 + $0x20] sm:$0xff]
    %v6614 = vld [vmem:[%s6608 + $0x28] sm:$0xff]
    %v6615 = vld [vmem:[%s6608 + $0x30] sm:$0xff]
    %v6616 = vld [vmem:[%s6608 + $0x38] sm:$0xff]
    %v6617 = vld [vmem:[%s6608 + $0x40] sm:$0xff]
    %v6618 = vld [vmem:[%s6608 + $0x48] sm:$0xff]
    %v6619 = vld [vmem:[%s6608 + $0x50] sm:$0xff]
    %v6620 = vld [vmem:[%s6608 + $0x58] sm:$0xff]
    %v6621 = vld [vmem:[%s6608 + $0x60] sm:$0xff]
    %v6622 = vld [vmem:[%s6608 + $0x68] sm:$0xff]
    %v6623 = vld [vmem:[%s6608 + $0x70] sm:$0xff]
    %v6624 = vld [vmem:[%s6608 + $0x78] sm:$0xff]
    %v6625 = vld [vmem:[%s6608 + $0x80] sm:$0xff]
    %v6626 = vld [vmem:[%s6608 + $0x88] sm:$0xff]
    %v6627 = vld [vmem:[%s6608 + $0x90] sm:$0xff]
    %v6628 = vld [vmem:[%s6608 + $0x98] sm:$0xff]
    %v6629 = vld [vmem:[%s6608 + $0xa0] sm:$0xff]
    %v6630 = vld [vmem:[%s6608 + $0xa8] sm:$0xff]
    %v6631 = vld [vmem:[%s6608 + $0xb0] sm:$0xff]
    %v6632 = vld [vmem:[%s6608 + $0xb8] sm:$0xff]
    %v6633 = vld [vmem:[%s6608 + $0xc0] sm:$0xff]
    %v6634 = vld [vmem:[%s6608 + $0xc8] sm:$0xff]
    %v6635 = vld [vmem:[%s6608 + $0xd0] sm:$0xff]
    %v6636 = vld [vmem:[%s6608 + $0xd8] sm:$0xff]
    %v6637 = vld [vmem:[%s6608 + $0xe0] sm:$0xff]
    %v6638 = vld [vmem:[%s6608 + $0xe8] sm:$0xff]
    %v6639 = vld [vmem:[%s6608 + $0xf0] sm:$0xff]
    %v6640 = vld [vmem:[%s6608 + $0xf8] sm:$0xff]
    %v6641 = vld [vmem:[%s6608 + $0x100] sm:$0xff]
    %v6642 = vld [vmem:[%s6608 + $0x108] sm:$0xff]
    %v6643 = vld [vmem:[%s6608 + $0x110] sm:$0xff]
    %v6644 = vld [vmem:[%s6608 + $0x118] sm:$0xff]
    %v6645 = vld [vmem:[%s6608 + $0x120] sm:$0xff]
    %v6646 = vld [vmem:[%s6608 + $0x128] sm:$0xff]
    %v6647 = vld [vmem:[%s6608 + $0x130] sm:$0xff]
    %v6648 = vld [vmem:[%s6608 + $0x138] sm:$0xff]
    %v6649 = vld [vmem:[%s6608 + $0x140] sm:$0xff]
    %v6650 = vld [vmem:[%s6608 + $0x148] sm:$0xff]
    %v6651 = vld [vmem:[%s6608 + $0x150] sm:$0xff]
    %v6652 = vld [vmem:[%s6608 + $0x158] sm:$0xff]
    %v6653 = vld [vmem:[%s6608 + $0x160] sm:$0xff]
    %v6654 = vld [vmem:[%s6608 + $0x168] sm:$0xff]
    %v6655 = vld [vmem:[%s6608 + $0x170] sm:$0xff]
    %v6656 = vld [vmem:[%s6608 + $0x178] sm:$0xff]
    %v6657 = vld [vmem:[%s6608 + $0x180] sm:$0xff]
    %v6658 = vld [vmem:[%s6608 + $0x188] sm:$0xff]
    %v6659 = vld [vmem:[%s6608 + $0x190] sm:$0xff]
    %v6660 = vld [vmem:[%s6608 + $0x198] sm:$0xff]
    %v6661 = vld [vmem:[%s6608 + $0x1a0] sm:$0xff]
    %v6662 = vld [vmem:[%s6608 + $0x1a8] sm:$0xff]
    %v6663 = vld [vmem:[%s6608 + $0x1b0] sm:$0xff]
    %v6664 = vld [vmem:[%s6608 + $0x1b8] sm:$0xff]
    %v6665 = vld [vmem:[%s6608 + $0x1c0] sm:$0xff]
    %v6666 = vld [vmem:[%s6608 + $0x1c8] sm:$0xff]
    %v6667 = vld [vmem:[%s6608 + $0x1d0] sm:$0xff]
    %v6668 = vld [vmem:[%s6608 + $0x1d8] sm:$0xff]
    %v6669 = vld [vmem:[%s6608 + $0x1e0] sm:$0xff]
    %v6670 = vld [vmem:[%s6608 + $0x1e8] sm:$0xff]
    %v6671 = vld [vmem:[%s6608 + $0x1f0] sm:$0xff]
    %v6672 = vld [vmem:[%s6608 + $0x1f8] sm:$0xff]
    %v6673 = vld [vmem:[%s6608 + $0x200] sm:$0xff]
    %v6674 = vld [vmem:[%s6608 + $0x208] sm:$0xff]
    %v6675 = vld [vmem:[%s6608 + $0x210] sm:$0xff]
    %v6676 = vld [vmem:[%s6608 + $0x218] sm:$0xff]
    %v6677 = vld [vmem:[%s6608 + $0x220] sm:$0xff]
    %v6678 = vld [vmem:[%s6608 + $0x228] sm:$0xff]
    %v6679 = vld [vmem:[%s6608 + $0x230] sm:$0xff]
    %v6680 = vld [vmem:[%s6608 + $0x238] sm:$0xff]
    %v6681 = vld [vmem:[%s6608 + $0x240] sm:$0xff]
    %v6682 = vld [vmem:[%s6608 + $0x248] sm:$0xff]
    %v6683 = vld [vmem:[%s6608 + $0x250] sm:$0xff]
    %v6684 = vld [vmem:[%s6608 + $0x258] sm:$0xff]
    %v6685 = vld [vmem:[%s6608 + $0x260] sm:$0xff]
    %v6686 = vld [vmem:[%s6608 + $0x268] sm:$0xff]
    %v6687 = vld [vmem:[%s6608 + $0x270] sm:$0xff]
    %v6688 = vld [vmem:[%s6608 + $0x278] sm:$0xff]
    %v6689 = vld [vmem:[%s6608 + $0x280] sm:$0xff]
    %v6690 = vld [vmem:[%s6608 + $0x288] sm:$0xff]
    %v6691 = vld [vmem:[%s6608 + $0x290] sm:$0xff]
    %v6692 = vld [vmem:[%s6608 + $0x298] sm:$0xff]
    %v6693 = vld [vmem:[%s6608 + $0x2a0] sm:$0xff]
    %v6694 = vld [vmem:[%s6608 + $0x2a8] sm:$0xff]
    %v6695 = vld [vmem:[%s6608 + $0x2b0] sm:$0xff]
    %v6696 = vld [vmem:[%s6608 + $0x2b8] sm:$0xff]
    %v6697 = vld [vmem:[%s6608 + $0x2c0] sm:$0xff]
    %v6698 = vld [vmem:[%s6608 + $0x2c8] sm:$0xff]
    %v6699 = vld [vmem:[%s6608 + $0x2d0] sm:$0xff]
    %v6700 = vld [vmem:[%s6608 + $0x2d8] sm:$0xff]
    %v6701 = vld [vmem:[%s6608 + $0x2e0] sm:$0xff]
    %v6702 = vld [vmem:[%s6608 + $0x2e8] sm:$0xff]
    %v6703 = vld [vmem:[%s6608 + $0x2f0] sm:$0xff]
    %v6704 = vld [vmem:[%s6608 + $0x2f8] sm:$0xff]
    %v6705 = vld [vmem:[%s6608 + $0x300] sm:$0xff]
    %v6706 = vld [vmem:[%s6608 + $0x308] sm:$0xff]
    %v6707 = vld [vmem:[%s6608 + $0x310] sm:$0xff]
    %v6708 = vld [vmem:[%s6608 + $0x318] sm:$0xff]
    %v6709 = vld [vmem:[%s6608 + $0x320] sm:$0xff]
    %v6710 = vld [vmem:[%s6608 + $0x328] sm:$0xff]
    %v6711 = vld [vmem:[%s6608 + $0x330] sm:$0xff]
    %v6712 = vld [vmem:[%s6608 + $0x338] sm:$0xff]
    %v6713 = vld [vmem:[%s6608 + $0x340] sm:$0xff]
    %v6714 = vld [vmem:[%s6608 + $0x348] sm:$0xff]
    %v6715 = vld [vmem:[%s6608 + $0x350] sm:$0xff]
    %v6716 = vld [vmem:[%s6608 + $0x358] sm:$0xff]
    %v6717 = vld [vmem:[%s6608 + $0x360] sm:$0xff]
    %v6718 = vld [vmem:[%s6608 + $0x368] sm:$0xff]
    %v6719 = vld [vmem:[%s6608 + $0x370] sm:$0xff]
    %v6720 = vld [vmem:[%s6608 + $0x378] sm:$0xff]
    %v6721 = vld [vmem:[%s6608 + $0x380] sm:$0xff]
    %v6722 = vld [vmem:[%s6608 + $0x388] sm:$0xff]
    %v6723 = vld [vmem:[%s6608 + $0x390] sm:$0xff]
    %v6724 = vld [vmem:[%s6608 + $0x398] sm:$0xff]
    %v6725 = vld [vmem:[%s6608 + $0x3a0] sm:$0xff]
    %v6726 = vld [vmem:[%s6608 + $0x3a8] sm:$0xff]
    %v6727 = vld [vmem:[%s6608 + $0x3b0] sm:$0xff]
    %v6728 = vld [vmem:[%s6608 + $0x3b8] sm:$0xff]
    %v6729 = vld [vmem:[%s6608 + $0x3c0] sm:$0xff]
    %v6730 = vld [vmem:[%s6608 + $0x3c8] sm:$0xff]
    %v6731 = vld [vmem:[%s6608 + $0x3d0] sm:$0xff]
    %v6732 = vld [vmem:[%s6608 + $0x3d8] sm:$0xff]
    %v6733 = vld [vmem:[%s6608 + $0x3e0] sm:$0xff]
    %v6734 = vld [vmem:[%s6608 + $0x3e8] sm:$0xff]
    %v6735 = vld [vmem:[%s6608 + $0x3f0] sm:$0xff]
    %v6736 = vld [vmem:[%s6608 + $0x3f8] sm:$0xff]
    %v6737 = vld [vmem:[%s6608 + $0x400] sm:$0xff]
    %v6738 = vld [vmem:[%s6608 + $0x408] sm:$0xff]
    %v6739 = vld [vmem:[%s6608 + $0x410] sm:$0xff]
    %v6740 = vld [vmem:[%s6608 + $0x418] sm:$0xff]
    %v6741 = vld [vmem:[%s6608 + $0x420] sm:$0xff]
    %v6742 = vld [vmem:[%s6608 + $0x428] sm:$0xff]
    %v6743 = vld [vmem:[%s6608 + $0x430] sm:$0xff]
    %v6744 = vld [vmem:[%s6608 + $0x438] sm:$0xff]
    %v6745 = vld [vmem:[%s6608 + $0x440] sm:$0xff]
    %v6746 = vld [vmem:[%s6608 + $0x448] sm:$0xff]
    %v6747 = vld [vmem:[%s6608 + $0x450] sm:$0xff]
    %v6748 = vld [vmem:[%s6608 + $0x458] sm:$0xff]
    %v6749 = vld [vmem:[%s6608 + $0x460] sm:$0xff]
    %v6750 = vld [vmem:[%s6608 + $0x468] sm:$0xff]
    %v6751 = vld [vmem:[%s6608 + $0x470] sm:$0xff]
    %v6752 = vld [vmem:[%s6608 + $0x478] sm:$0xff]
    %v6753 = vld [vmem:[%s6608 + $0x480] sm:$0xff]
    %v6754 = vld [vmem:[%s6608 + $0x488] sm:$0xff]
    %v6755 = vld [vmem:[%s6608 + $0x490] sm:$0xff]
    %v6756 = vld [vmem:[%s6608 + $0x498] sm:$0xff]
    %v6757 = vld [vmem:[%s6608 + $0x4a0] sm:$0xff]
    %v6758 = vld [vmem:[%s6608 + $0x4a8] sm:$0xff]
    %v6759 = vld [vmem:[%s6608 + $0x4b0] sm:$0xff]
    %v6760 = vld [vmem:[%s6608 + $0x4b8] sm:$0xff]
    %v6761 = vld [vmem:[%s6608 + $0x4c0] sm:$0xff]
    %v6762 = vld [vmem:[%s6608 + $0x4c8] sm:$0xff]
    %v6763 = vld [vmem:[%s6608 + $0x4d0] sm:$0xff]
    %v6764 = vld [vmem:[%s6608 + $0x4d8] sm:$0xff]
    %v6765 = vld [vmem:[%s6608 + $0x4e0] sm:$0xff]
    %v6766 = vld [vmem:[%s6608 + $0x4e8] sm:$0xff]
    %v6767 = vld [vmem:[%s6608 + $0x4f0] sm:$0xff]
    %v6768 = vld [vmem:[%s6608 + $0x4f8] sm:$0xff]
    %v6769 = vld [vmem:[%s6608 + $0x500] sm:$0xff]
    %v6770 = vld [vmem:[%s6608 + $0x508] sm:$0xff]
    %v6771 = vld [vmem:[%s6608 + $0x510] sm:$0xff]
    %v6772 = vld [vmem:[%s6608 + $0x518] sm:$0xff]
    %v6773 = vld [vmem:[%s6608 + $0x520] sm:$0xff]
    %v6774 = vld [vmem:[%s6608 + $0x528] sm:$0xff]
    %v6775 = vld [vmem:[%s6608 + $0x530] sm:$0xff]
    %v6776 = vld [vmem:[%s6608 + $0x538] sm:$0xff]
    %v6777 = vld [vmem:[%s6608 + $0x540] sm:$0xff]
    %v6778 = vld [vmem:[%s6608 + $0x548] sm:$0xff]
    %v6779 = vld [vmem:[%s6608 + $0x550] sm:$0xff]
    %v6780 = vld [vmem:[%s6608 + $0x558] sm:$0xff]
    %v6781 = vld [vmem:[%s6608 + $0x560] sm:$0xff]
    %v6782 = vld [vmem:[%s6608 + $0x568] sm:$0xff]
    %v6783 = vld [vmem:[%s6608 + $0x570] sm:$0xff]
    %v6784 = vld [vmem:[%s6608 + $0x578] sm:$0xff]
    %v6785 = vld [vmem:[%s6608 + $0x580] sm:$0xff]
    %v6786 = vld [vmem:[%s6608 + $0x588] sm:$0xff]
    %v6787 = vld [vmem:[%s6608 + $0x590] sm:$0xff]
    %v6788 = vld [vmem:[%s6608 + $0x598] sm:$0xff]
    %v6789 = vld [vmem:[%s6608 + $0x5a0] sm:$0xff]
    %v6790 = vld [vmem:[%s6608 + $0x5a8] sm:$0xff]
    %v6791 = vld [vmem:[%s6608 + $0x5b0] sm:$0xff]
    %v6792 = vld [vmem:[%s6608 + $0x5b8] sm:$0xff]
    %v6793 = vld [vmem:[%s6608 + $0x5c0] sm:$0xff]
    %v6794 = vld [vmem:[%s6608 + $0x5c8] sm:$0xff]
    %v6795 = vld [vmem:[%s6608 + $0x5d0] sm:$0xff]
    %v6796 = vld [vmem:[%s6608 + $0x5d8] sm:$0xff]
    %v6797 = vld [vmem:[%s6608 + $0x5e0] sm:$0xff]
    %v6798 = vld [vmem:[%s6608 + $0x5e8] sm:$0xff]
    %v6799 = vld [vmem:[%s6608 + $0x5f0] sm:$0xff]
    %v6800 = vld [vmem:[%s6608 + $0x5f8] sm:$0xff]
    %v6801 = vld [vmem:[%s6608 + $0x600] sm:$0xff]
    %v6802 = vld [vmem:[%s6608 + $0x608] sm:$0xff]
    %v6803 = vld [vmem:[%s6608 + $0x610] sm:$0xff]
    %v6804 = vld [vmem:[%s6608 + $0x618] sm:$0xff]
    %v6805 = vld [vmem:[%s6608 + $0x620] sm:$0xff]
    %v6806 = vld [vmem:[%s6608 + $0x628] sm:$0xff]
    %v6807 = vld [vmem:[%s6608 + $0x630] sm:$0xff]
    %v6808 = vld [vmem:[%s6608 + $0x638] sm:$0xff]
    %v6809 = vld [vmem:[%s6608 + $0x640] sm:$0xff]
    %v6810 = vld [vmem:[%s6608 + $0x648] sm:$0xff]
    %v6811 = vld [vmem:[%s6608 + $0x650] sm:$0xff]
    %v6812 = vld [vmem:[%s6608 + $0x658] sm:$0xff]
    %v6813 = vld [vmem:[%s6608 + $0x660] sm:$0xff]
    %v6814 = vld [vmem:[%s6608 + $0x668] sm:$0xff]
    %v6815 = vld [vmem:[%s6608 + $0x670] sm:$0xff]
    %v6816 = vld [vmem:[%s6608 + $0x678] sm:$0xff]
    %v6817 = vld [vmem:[%s6608 + $0x680] sm:$0xff]
    %v6818 = vld [vmem:[%s6608 + $0x688] sm:$0xff]
    %v6819 = vld [vmem:[%s6608 + $0x690] sm:$0xff]
    %v6820 = vld [vmem:[%s6608 + $0x698] sm:$0xff]
    %v6821 = vld [vmem:[%s6608 + $0x6a0] sm:$0xff]
    %v6822 = vld [vmem:[%s6608 + $0x6a8] sm:$0xff]
    %v6823 = vld [vmem:[%s6608 + $0x6b0] sm:$0xff]
    %v6824 = vld [vmem:[%s6608 + $0x6b8] sm:$0xff]
    %v6825 = vld [vmem:[%s6608 + $0x6c0] sm:$0xff]
    %v6826 = vld [vmem:[%s6608 + $0x6c8] sm:$0xff]
    %v6827 = vld [vmem:[%s6608 + $0x6d0] sm:$0xff]
    %v6828 = vld [vmem:[%s6608 + $0x6d8] sm:$0xff]
    %v6829 = vld [vmem:[%s6608 + $0x6e0] sm:$0xff]
    %v6830 = vld [vmem:[%s6608 + $0x6e8] sm:$0xff]
    %v6831 = vld [vmem:[%s6608 + $0x6f0] sm:$0xff]
    %v6832 = vld [vmem:[%s6608 + $0x6f8] sm:$0xff]
    %v6833 = vld [vmem:[%s6608 + $0x700] sm:$0xff]
    %v6834 = vld [vmem:[%s6608 + $0x708] sm:$0xff]
    %v6835 = vld [vmem:[%s6608 + $0x710] sm:$0xff]
    %v6836 = vld [vmem:[%s6608 + $0x718] sm:$0xff]
    %v6837 = vld [vmem:[%s6608 + $0x720] sm:$0xff]
    %v6838 = vld [vmem:[%s6608 + $0x728] sm:$0xff]
    %v6839 = vld [vmem:[%s6608 + $0x730] sm:$0xff]
    %v6840 = vld [vmem:[%s6608 + $0x738] sm:$0xff]
    %v6841 = vld [vmem:[%s6608 + $0x740] sm:$0xff]
    %v6842 = vld [vmem:[%s6608 + $0x748] sm:$0xff]
    %v6843 = vld [vmem:[%s6608 + $0x750] sm:$0xff]
    %v6844 = vld [vmem:[%s6608 + $0x758] sm:$0xff]
    %v6845 = vld [vmem:[%s6608 + $0x760] sm:$0xff]
    %v6846 = vld [vmem:[%s6608 + $0x768] sm:$0xff]
    %v6847 = vld [vmem:[%s6608 + $0x770] sm:$0xff]
    %v6848 = vld [vmem:[%s6608 + $0x778] sm:$0xff]
    %v6849 = vld [vmem:[%s6608 + $0x780] sm:$0xff]
    %v6850 = vld [vmem:[%s6608 + $0x788] sm:$0xff]
    %v6851 = vld [vmem:[%s6608 + $0x790] sm:$0xff]
    %v6852 = vld [vmem:[%s6608 + $0x798] sm:$0xff]
    %v6853 = vld [vmem:[%s6608 + $0x7a0] sm:$0xff]
    %v6854 = vld [vmem:[%s6608 + $0x7a8] sm:$0xff]
    %v6855 = vld [vmem:[%s6608 + $0x7b0] sm:$0xff]
    %v6856 = vld [vmem:[%s6608 + $0x7b8] sm:$0xff]
    %v6857 = vld [vmem:[%s6608 + $0x7c0] sm:$0xff]
    %v6858 = vld [vmem:[%s6608 + $0x7c8] sm:$0xff]
    %v6859 = vld [vmem:[%s6608 + $0x7d0] sm:$0xff]
    %v6860 = vld [vmem:[%s6608 + $0x7d8] sm:$0xff]
    %v6861 = vld [vmem:[%s6608 + $0x7e0] sm:$0xff]
    %v6862 = vld [vmem:[%s6608 + $0x7e8] sm:$0xff]
    %v6863 = vld [vmem:[%s6608 + $0x7f0] sm:$0xff]
    %v6864 = vld [vmem:[%s6608 + $0x7f8] sm:$0xff]
    %v6865 = vld [vmem:[%s6608 + $0x800] sm:$0xff]
    %v6866 = vld [vmem:[%s6608 + $0x808] sm:$0xff]
    %v6867 = vld [vmem:[%s6608 + $0x810] sm:$0xff]
    %v6868 = vld [vmem:[%s6608 + $0x818] sm:$0xff]
    %v6869 = vld [vmem:[%s6608 + $0x820] sm:$0xff]
    %v6870 = vld [vmem:[%s6608 + $0x828] sm:$0xff]
    %v6871 = vld [vmem:[%s6608 + $0x830] sm:$0xff]
    %v6872 = vld [vmem:[%s6608 + $0x838] sm:$0xff]
    %v6873 = vld [vmem:[%s6608 + $0x840] sm:$0xff]
    %v6874 = vld [vmem:[%s6608 + $0x848] sm:$0xff]
    %v6875 = vld [vmem:[%s6608 + $0x850] sm:$0xff]
    %v6876 = vld [vmem:[%s6608 + $0x858] sm:$0xff]
    %v6877 = vld [vmem:[%s6608 + $0x860] sm:$0xff]
    %v6878 = vld [vmem:[%s6608 + $0x868] sm:$0xff]
    %v6879 = vld [vmem:[%s6608 + $0x870] sm:$0xff]
    %v6880 = vld [vmem:[%s6608 + $0x878] sm:$0xff]
    %v6881 = vld [vmem:[%s6608 + $0x880] sm:$0xff]
    %v6882 = vld [vmem:[%s6608 + $0x888] sm:$0xff]
    %v6883 = vld [vmem:[%s6608 + $0x890] sm:$0xff]
    %v6884 = vld [vmem:[%s6608 + $0x898] sm:$0xff]
    %v6885 = vld [vmem:[%s6608 + $0x8a0] sm:$0xff]
    %v6886 = vld [vmem:[%s6608 + $0x8a8] sm:$0xff]
    %v6887 = vld [vmem:[%s6608 + $0x8b0] sm:$0xff]
    %v6888 = vld [vmem:[%s6608 + $0x8b8] sm:$0xff]
    %v6889 = vld [vmem:[%s6608 + $0x8c0] sm:$0xff]
    %v6890 = vld [vmem:[%s6608 + $0x8c8] sm:$0xff]
    %v6891 = vld [vmem:[%s6608 + $0x8d0] sm:$0xff]
    %v6892 = vld [vmem:[%s6608 + $0x8d8] sm:$0xff]
    %v6893 = vld [vmem:[%s6608 + $0x8e0] sm:$0xff]
    %v6894 = vld [vmem:[%s6608 + $0x8e8] sm:$0xff]
    %v6895 = vld [vmem:[%s6608 + $0x8f0] sm:$0xff]
    %v6896 = vld [vmem:[%s6608 + $0x8f8] sm:$0xff]
    %v6898 = vsel %vm3958, %v6606, 0
    %6900 = vmatprep.subr.mxu0 %v6610
    %6901 = vmatpush1.msra.mxu0 %v6609
    %6902 = vmatprep.subr.mxu0 %v6626
    %6903 = vmatpush1.msra.mxu0 %v6625
    %6904 = vmatprep.subr.mxu0 %v6642
    %6905 = vmatpush1.msra.mxu0 %v6641
    %6906 = vmatprep.subr.mxu0 %v6658
    %6907 = vmatpush1.msra.mxu0 %v6657
    %6908 = vmatprep.subr.mxu0 %v6674
    %6909 = vmatpush1.msra.mxu0 %v6673
    %6910 = vmatprep.subr.mxu0 %v6690
    %6911 = vmatpush1.msra.mxu0 %v6689
    %6912 = vmatprep.subr.mxu0 %v6706
    %6913 = vmatpush1.msra.mxu0 %v6705
    %6914 = vmatprep.subr.mxu0 %v6722
    %6915 = vmatpush1.msra.mxu0 %v6721
    %6916 = vmatprep.subr.mxu0 %v6738
    %6917 = vmatpush1.msra.mxu0 %v6737
    %6918 = vmatprep.subr.mxu0 %v6754
    %6919 = vmatpush1.msra.mxu0 %v6753
    %6920 = vmatprep.subr.mxu0 %v6770
    %6921 = vmatpush1.msra.mxu0 %v6769
    %6922 = vmatprep.subr.mxu0 %v6786
    %6923 = vmatpush1.msra.mxu0 %v6785
    %6924 = vmatprep.subr.mxu0 %v6802
    %6925 = vmatpush1.msra.mxu0 %v6801
    %6926 = vmatprep.subr.mxu0 %v6818
    %6927 = vmatpush1.msra.mxu0 %v6817
    %6928 = vmatprep.subr.mxu0 %v6834
    %6929 = vmatpush1.msra.mxu0 %v6833
    %6930 = vmatprep.subr.mxu0 %v6850
    %6931 = vmatpush1.msra.mxu0 %v6849
    %6932 = vmatprep.subr.mxu0 %v6866
    %6933 = vmatpush1.msra.mxu0 %v6865
    %6934 = vmatprep.subr.mxu0 %v6882
    %6935 = vmatpush1.msra.mxu0 %v6881
    %6936 = vmatprep.subr.mxu0 0.0
    %6937 = vmatpush1.msra.mxu0 0.0
    %6938 = vmatprep.subr.mxu0 0.0
    %6939 = vmatpush1.msra.mxu0 0.0
    %6940 = vmatprep.subr.mxu0 0.0
    %6941 = vmatpush1.msra.mxu0 0.0
    %6942 = vmatprep.subr.mxu0 0.0
    %6943 = vmatpush1.msra.mxu0 0.0
    %6944 = vmatprep.subr.mxu0 0.0
    %6945 = vmatpush1.msra.mxu0 0.0
    %6946 = vmatprep.subr.mxu0 0.0
    %6947 = vmatpush1.msra.mxu0 0.0
    %6948 = vmatprep.subr.mxu0 0.0
    %6949 = vmatpush1.msra.mxu0 0.0
    %6950 = vmatprep.subr.mxu0 0.0
    %6951 = vmatpush1.msra.mxu0 0.0
    %6952 = vmatprep.subr.mxu0 0.0
    %6953 = vmatpush1.msra.mxu0 0.0
    %6954 = vmatprep.subr.mxu0 0.0
    %6955 = vmatpush1.msra.mxu0 0.0
    %6956 = vmatprep.subr.mxu0 0.0
    %6957 = vmatpush1.msra.mxu0 0.0
    %6958 = vmatprep.subr.mxu0 0.0
    %6959 = vmatpush1.msra.mxu0 0.0
    %6960 = vmatprep.subr.mxu0 0.0
    %6961 = vmatpush1.msra.mxu0 0.0
    %6962 = vmatprep.subr.mxu0 0.0
    %6963 = vmatpush1.msra.mxu0 0.0
    %6964 = vmatprep.mubr.f32.mxu0 %v6898
    %6965 = vmatmul.mubr.f32.gmra.mrb[0].mxu0 %v6604
    %v6966 = vpop.f32.mrb[0].mxu0
    %v6967 = vadd.f32 0.0, %v6966
    %v6968 = vpop.f32.mrb[0].mxu0
    %v6969 = vadd.f32 0.0, %v6968
    %6970 = vdwg.mxu0
    %6971 = vmatprep.subr.mxu0 %v6612
    %6972 = vmatpush1.msra.mxu0 %v6611
    %6973 = vmatprep.subr.mxu0 %v6628
    %6974 = vmatpush1.msra.mxu0 %v6627
    %6975 = vmatprep.subr.mxu0 %v6644
    %6976 = vmatpush1.msra.mxu0 %v6643
    %6977 = vmatprep.subr.mxu0 %v6660
    %6978 = vmatpush1.msra.mxu0 %v6659
    %6979 = vmatprep.subr.mxu0 %v6676
    %6980 = vmatpush1.msra.mxu0 %v6675
    %6981 = vmatprep.subr.mxu0 %v6692
    %6982 = vmatpush1.msra.mxu0 %v6691
    %6983 = vmatprep.subr.mxu0 %v6708
    %6984 = vmatpush1.msra.mxu0 %v6707
    %6985 = vmatprep.subr.mxu0 %v6724
    %6986 = vmatpush1.msra.mxu0 %v6723
    %6987 = vmatprep.subr.mxu0 %v6740
    %6988 = vmatpush1.msra.mxu0 %v6739
    %6989 = vmatprep.subr.mxu0 %v6756
    %6990 = vmatpush1.msra.mxu0 %v6755
    %6991 = vmatprep.subr.mxu0 %v6772
    %6992 = vmatpush1.msra.mxu0 %v6771
    %6993 = vmatprep.subr.mxu0 %v6788
    %6994 = vmatpush1.msra.mxu0 %v6787
    %6995 = vmatprep.subr.mxu0 %v6804
    %6996 = vmatpush1.msra.mxu0 %v6803
    %6997 = vmatprep.subr.mxu0 %v6820
    %6998 = vmatpush1.msra.mxu0 %v6819
    %6999 = vmatprep.subr.mxu0 %v6836
    %7000 = vmatpush1.msra.mxu0 %v6835
    %7001 = vmatprep.subr.mxu0 %v6852
    %7002 = vmatpush1.msra.mxu0 %v6851
    %7003 = vmatprep.subr.mxu0 %v6868
    %7004 = vmatpush1.msra.mxu0 %v6867
    %7005 = vmatprep.subr.mxu0 %v6884
    %7006 = vmatpush1.msra.mxu0 %v6883
    %7007 = vmatprep.subr.mxu0 0.0
    %7008 = vmatpush1.msra.mxu0 0.0
    %7009 = vmatprep.subr.mxu0 0.0
    %7010 = vmatpush1.msra.mxu0 0.0
    %7011 = vmatprep.subr.mxu0 0.0
    %7012 = vmatpush1.msra.mxu0 0.0
    %7013 = vmatprep.subr.mxu0 0.0
    %7014 = vmatpush1.msra.mxu0 0.0
    %7015 = vmatprep.subr.mxu0 0.0
    %7016 = vmatpush1.msra.mxu0 0.0
    %7017 = vmatprep.subr.mxu0 0.0
    %7018 = vmatpush1.msra.mxu0 0.0
    %7019 = vmatprep.subr.mxu0 0.0
    %7020 = vmatpush1.msra.mxu0 0.0
    %7021 = vmatprep.subr.mxu0 0.0
    %7022 = vmatpush1.msra.mxu0 0.0
    %7023 = vmatprep.subr.mxu0 0.0
    %7024 = vmatpush1.msra.mxu0 0.0
    %7025 = vmatprep.subr.mxu0 0.0
    %7026 = vmatpush1.msra.mxu0 0.0
    %7027 = vmatprep.subr.mxu0 0.0
    %7028 = vmatpush1.msra.mxu0 0.0
    %7029 = vmatprep.subr.mxu0 0.0
    %7030 = vmatpush1.msra.mxu0 0.0
    %7031 = vmatprep.subr.mxu0 0.0
    %7032 = vmatpush1.msra.mxu0 0.0
    %7033 = vmatprep.subr.mxu0 0.0
    %7034 = vmatpush1.msra.mxu0 0.0
    %7035 = vmatprep.mubr.f32.mxu0 %v6898
    %7036 = vmatmul.mubr.f32.gmra.mrb[0].mxu0 %v6604
    %v7037 = vpop.f32.mrb[0].mxu0
    %v7038 = vadd.f32 0.0, %v7037
    %v7039 = vpop.f32.mrb[0].mxu0
    %v7040 = vadd.f32 0.0, %v7039
    %7041 = vdwg.mxu0
    %7042 = vmatprep.subr.mxu0 %v6614
    %7043 = vmatpush1.msra.mxu0 %v6613
    %7044 = vmatprep.subr.mxu0 %v6630
    %7045 = vmatpush1.msra.mxu0 %v6629
    %7046 = vmatprep.subr.mxu0 %v6646
    %7047 = vmatpush1.msra.mxu0 %v6645
    %7048 = vmatprep.subr.mxu0 %v6662
    %7049 = vmatpush1.msra.mxu0 %v6661
    %7050 = vmatprep.subr.mxu0 %v6678
    %7051 = vmatpush1.msra.mxu0 %v6677
    %7052 = vmatprep.subr.mxu0 %v6694
    %7053 = vmatpush1.msra.mxu0 %v6693
    %7054 = vmatprep.subr.mxu0 %v6710
    %7055 = vmatpush1.msra.mxu0 %v6709
    %7056 = vmatprep.subr.mxu0 %v6726
    %7057 = vmatpush1.msra.mxu0 %v6725
    %7058 = vmatprep.subr.mxu0 %v6742
    %7059 = vmatpush1.msra.mxu0 %v6741
    %7060 = vmatprep.subr.mxu0 %v6758
    %7061 = vmatpush1.msra.mxu0 %v6757
    %7062 = vmatprep.subr.mxu0 %v6774
    %7063 = vmatpush1.msra.mxu0 %v6773
    %7064 = vmatprep.subr.mxu0 %v6790
    %7065 = vmatpush1.msra.mxu0 %v6789
    %7066 = vmatprep.subr.mxu0 %v6806
    %7067 = vmatpush1.msra.mxu0 %v6805
    %7068 = vmatprep.subr.mxu0 %v6822
    %7069 = vmatpush1.msra.mxu0 %v6821
    %7070 = vmatprep.subr.mxu0 %v6838
    %7071 = vmatpush1.msra.mxu0 %v6837
    %7072 = vmatprep.subr.mxu0 %v6854
    %7073 = vmatpush1.msra.mxu0 %v6853
    %7074 = vmatprep.subr.mxu0 %v6870
    %7075 = vmatpush1.msra.mxu0 %v6869
    %7076 = vmatprep.subr.mxu0 %v6886
    %7077 = vmatpush1.msra.mxu0 %v6885
    %7078 = vmatprep.subr.mxu0 0.0
    %7079 = vmatpush1.msra.mxu0 0.0
    %7080 = vmatprep.subr.mxu0 0.0
    %7081 = vmatpush1.msra.mxu0 0.0
    %7082 = vmatprep.subr.mxu0 0.0
    %7083 = vmatpush1.msra.mxu0 0.0
    %7084 = vmatprep.subr.mxu0 0.0
    %7085 = vmatpush1.msra.mxu0 0.0
    %7086 = vmatprep.subr.mxu0 0.0
    %7087 = vmatpush1.msra.mxu0 0.0
    %7088 = vmatprep.subr.mxu0 0.0
    %7089 = vmatpush1.msra.mxu0 0.0
    %7090 = vmatprep.subr.mxu0 0.0
    %7091 = vmatpush1.msra.mxu0 0.0
    %7092 = vmatprep.subr.mxu0 0.0
    %7093 = vmatpush1.msra.mxu0 0.0
    %7094 = vmatprep.subr.mxu0 0.0
    %7095 = vmatpush1.msra.mxu0 0.0
    %7096 = vmatprep.subr.mxu0 0.0
    %7097 = vmatpush1.msra.mxu0 0.0
    %7098 = vmatprep.subr.mxu0 0.0
    %7099 = vmatpush1.msra.mxu0 0.0
    %7100 = vmatprep.subr.mxu0 0.0
    %7101 = vmatpush1.msra.mxu0 0.0
    %7102 = vmatprep.subr.mxu0 0.0
    %7103 = vmatpush1.msra.mxu0 0.0
    %7104 = vmatprep.subr.mxu0 0.0
    %7105 = vmatpush1.msra.mxu0 0.0
    %7106 = vmatprep.mubr.f32.mxu0 %v6898
    %7107 = vmatmul.mubr.f32.gmra.mrb[0].mxu0 %v6604
    %v7108 = vpop.f32.mrb[0].mxu0
    %v7109 = vadd.f32 0.0, %v7108
    %v7110 = vpop.f32.mrb[0].mxu0
    %v7111 = vadd.f32 0.0, %v7110
    %7112 = vdwg.mxu0
    %7113 = vmatprep.subr.mxu0 %v6616
    %7114 = vmatpush1.msra.mxu0 %v6615
    %7115 = vmatprep.subr.mxu0 %v6632
    %7116 = vmatpush1.msra.mxu0 %v6631
    %7117 = vmatprep.subr.mxu0 %v6648
    %7118 = vmatpush1.msra.mxu0 %v6647
    %7119 = vmatprep.subr.mxu0 %v6664
    %7120 = vmatpush1.msra.mxu0 %v6663
    %7121 = vmatprep.subr.mxu0 %v6680
    %7122 = vmatpush1.msra.mxu0 %v6679
    %7123 = vmatprep.subr.mxu0 %v6696
    %7124 = vmatpush1.msra.mxu0 %v6695
    %7125 = vmatprep.subr.mxu0 %v6712
    %7126 = vmatpush1.msra.mxu0 %v6711
    %7127 = vmatprep.subr.mxu0 %v6728
    %7128 = vmatpush1.msra.mxu0 %v6727
    %7129 = vmatprep.subr.mxu0 %v6744
    %7130 = vmatpush1.msra.mxu0 %v6743
    %7131 = vmatprep.subr.mxu0 %v6760
    %7132 = vmatpush1.msra.mxu0 %v6759
    %7133 = vmatprep.subr.mxu0 %v6776
    %7134 = vmatpush1.msra.mxu0 %v6775
    %7135 = vmatprep.subr.mxu0 %v6792
    %7136 = vmatpush1.msra.mxu0 %v6791
    %7137 = vmatprep.subr.mxu0 %v6808
    %7138 = vmatpush1.msra.mxu0 %v6807
    %7139 = vmatprep.subr.mxu0 %v6824
    %7140 = vmatpush1.msra.mxu0 %v6823
    %7141 = vmatprep.subr.mxu0 %v6840
    %7142 = vmatpush1.msra.mxu0 %v6839
    %7143 = vmatprep.subr.mxu0 %v6856
    %7144 = vmatpush1.msra.mxu0 %v6855
    %7145 = vmatprep.subr.mxu0 %v6872
    %7146 = vmatpush1.msra.mxu0 %v6871
    %7147 = vmatprep.subr.mxu0 %v6888
    %7148 = vmatpush1.msra.mxu0 %v6887
    %7149 = vmatprep.subr.mxu0 0.0
    %7150 = vmatpush1.msra.mxu0 0.0
    %7151 = vmatprep.subr.mxu0 0.0
    %7152 = vmatpush1.msra.mxu0 0.0
    %7153 = vmatprep.subr.mxu0 0.0
    %7154 = vmatpush1.msra.mxu0 0.0
    %7155 = vmatprep.subr.mxu0 0.0
    %7156 = vmatpush1.msra.mxu0 0.0
    %7157 = vmatprep.subr.mxu0 0.0
    %7158 = vmatpush1.msra.mxu0 0.0
    %7159 = vmatprep.subr.mxu0 0.0
    %7160 = vmatpush1.msra.mxu0 0.0
    %7161 = vmatprep.subr.mxu0 0.0
    %7162 = vmatpush1.msra.mxu0 0.0
    %7163 = vmatprep.subr.mxu0 0.0
    %7164 = vmatpush1.msra.mxu0 0.0
    %7165 = vmatprep.subr.mxu0 0.0
    %7166 = vmatpush1.msra.mxu0 0.0
    %7167 = vmatprep.subr.mxu0 0.0
    %7168 = vmatpush1.msra.mxu0 0.0
    %7169 = vmatprep.subr.mxu0 0.0
    %7170 = vmatpush1.msra.mxu0 0.0
    %7171 = vmatprep.subr.mxu0 0.0
    %7172 = vmatpush1.msra.mxu0 0.0
    %7173 = vmatprep.subr.mxu0 0.0
    %7174 = vmatpush1.msra.mxu0 0.0
    %7175 = vmatprep.subr.mxu0 0.0
    %7176 = vmatpush1.msra.mxu0 0.0
    %7177 = vmatprep.mubr.f32.mxu0 %v6898
    %7178 = vmatmul.mubr.f32.gmra.mrb[0].mxu0 %v6604
    %v7179 = vpop.f32.mrb[0].mxu0
    %v7180 = vadd.f32 0.0, %v7179
    %v7181 = vpop.f32.mrb[0].mxu0
    %v7182 = vadd.f32 0.0, %v7181
    %7183 = vdwg.mxu0
    %7184 = vmatprep.subr.mxu0 %v6618
    %7185 = vmatpush1.msra.mxu0 %v6617
    %7186 = vmatprep.subr.mxu0 %v6634
    %7187 = vmatpush1.msra.mxu0 %v6633
    %7188 = vmatprep.subr.mxu0 %v6650
    %7189 = vmatpush1.msra.mxu0 %v6649
    %7190 = vmatprep.subr.mxu0 %v6666
    %7191 = vmatpush1.msra.mxu0 %v6665
    %7192 = vmatprep.subr.mxu0 %v6682
    %7193 = vmatpush1.msra.mxu0 %v6681
    %7194 = vmatprep.subr.mxu0 %v6698
    %7195 = vmatpush1.msra.mxu0 %v6697
    %7196 = vmatprep.subr.mxu0 %v6714
    %7197 = vmatpush1.msra.mxu0 %v6713
    %7198 = vmatprep.subr.mxu0 %v6730
    %7199 = vmatpush1.msra.mxu0 %v6729
    %7200 = vmatprep.subr.mxu0 %v6746
    %7201 = vmatpush1.msra.mxu0 %v6745
    %7202 = vmatprep.subr.mxu0 %v6762
    %7203 = vmatpush1.msra.mxu0 %v6761
    %7204 = vmatprep.subr.mxu0 %v6778
    %7205 = vmatpush1.msra.mxu0 %v6777
    %7206 = vmatprep.subr.mxu0 %v6794
    %7207 = vmatpush1.msra.mxu0 %v6793
    %7208 = vmatprep.subr.mxu0 %v6810
    %7209 = vmatpush1.msra.mxu0 %v6809
    %7210 = vmatprep.subr.mxu0 %v6826
    %7211 = vmatpush1.msra.mxu0 %v6825
    %7212 = vmatprep.subr.mxu0 %v6842
    %7213 = vmatpush1.msra.mxu0 %v6841
    %7214 = vmatprep.subr.mxu0 %v6858
    %7215 = vmatpush1.msra.mxu0 %v6857
    %7216 = vmatprep.subr.mxu0 %v6874
    %7217 = vmatpush1.msra.mxu0 %v6873
    %7218 = vmatprep.subr.mxu0 %v6890
    %7219 = vmatpush1.msra.mxu0 %v6889
    %7220 = vmatprep.subr.mxu0 0.0
    %7221 = vmatpush1.msra.mxu0 0.0
    %7222 = vmatprep.subr.mxu0 0.0
    %7223 = vmatpush1.msra.mxu0 0.0
    %7224 = vmatprep.subr.mxu0 0.0
    %7225 = vmatpush1.msra.mxu0 0.0
    %7226 = vmatprep.subr.mxu0 0.0
    %7227 = vmatpush1.msra.mxu0 0.0
    %7228 = vmatprep.subr.mxu0 0.0
    %7229 = vmatpush1.msra.mxu0 0.0
    %7230 = vmatprep.subr.mxu0 0.0
    %7231 = vmatpush1.msra.mxu0 0.0
    %7232 = vmatprep.subr.mxu0 0.0
    %7233 = vmatpush1.msra.mxu0 0.0
    %7234 = vmatprep.subr.mxu0 0.0
    %7235 = vmatpush1.msra.mxu0 0.0
    %7236 = vmatprep.subr.mxu0 0.0
    %7237 = vmatpush1.msra.mxu0 0.0
    %7238 = vmatprep.subr.mxu0 0.0
    %7239 = vmatpush1.msra.mxu0 0.0
    %7240 = vmatprep.subr.mxu0 0.0
    %7241 = vmatpush1.msra.mxu0 0.0
    %7242 = vmatprep.subr.mxu0 0.0
    %7243 = vmatpush1.msra.mxu0 0.0
    %7244 = vmatprep.subr.mxu0 0.0
    %7245 = vmatpush1.msra.mxu0 0.0
    %7246 = vmatprep.subr.mxu0 0.0
    %7247 = vmatpush1.msra.mxu0 0.0
    %7248 = vmatprep.mubr.f32.mxu0 %v6898
    %7249 = vmatmul.mubr.f32.gmra.mrb[0].mxu0 %v6604
    %v7250 = vpop.f32.mrb[0].mxu0
    %v7251 = vadd.f32 0.0, %v7250
    %v7252 = vpop.f32.mrb[0].mxu0
    %v7253 = vadd.f32 0.0, %v7252
    %7254 = vdwg.mxu0
    %7255 = vmatprep.subr.mxu0 %v6620
    %7256 = vmatpush1.msra.mxu0 %v6619
    %7257 = vmatprep.subr.mxu0 %v6636
    %7258 = vmatpush1.msra.mxu0 %v6635
    %7259 = vmatprep.subr.mxu0 %v6652
    %7260 = vmatpush1.msra.mxu0 %v6651
    %7261 = vmatprep.subr.mxu0 %v6668
    %7262 = vmatpush1.msra.mxu0 %v6667
    %7263 = vmatprep.subr.mxu0 %v6684
    %7264 = vmatpush1.msra.mxu0 %v6683
    %7265 = vmatprep.subr.mxu0 %v6700
    %7266 = vmatpush1.msra.mxu0 %v6699
    %7267 = vmatprep.subr.mxu0 %v6716
    %7268 = vmatpush1.msra.mxu0 %v6715
    %7269 = vmatprep.subr.mxu0 %v6732
    %7270 = vmatpush1.msra.mxu0 %v6731
    %7271 = vmatprep.subr.mxu0 %v6748
    %7272 = vmatpush1.msra.mxu0 %v6747
    %7273 = vmatprep.subr.mxu0 %v6764
    %7274 = vmatpush1.msra.mxu0 %v6763
    %7275 = vmatprep.subr.mxu0 %v6780
    %7276 = vmatpush1.msra.mxu0 %v6779
    %7277 = vmatprep.subr.mxu0 %v6796
    %7278 = vmatpush1.msra.mxu0 %v6795
    %7279 = vmatprep.subr.mxu0 %v6812
    %7280 = vmatpush1.msra.mxu0 %v6811
    %7281 = vmatprep.subr.mxu0 %v6828
    %7282 = vmatpush1.msra.mxu0 %v6827
    %7283 = vmatprep.subr.mxu0 %v6844
    %7284 = vmatpush1.msra.mxu0 %v6843
    %7285 = vmatprep.subr.mxu0 %v6860
    %7286 = vmatpush1.msra.mxu0 %v6859
    %7287 = vmatprep.subr.mxu0 %v6876
    %7288 = vmatpush1.msra.mxu0 %v6875
    %7289 = vmatprep.subr.mxu0 %v6892
    %7290 = vmatpush1.msra.mxu0 %v6891
    %7291 = vmatprep.subr.mxu0 0.0
    %7292 = vmatpush1.msra.mxu0 0.0
    %7293 = vmatprep.subr.mxu0 0.0
    %7294 = vmatpush1.msra.mxu0 0.0
    %7295 = vmatprep.subr.mxu0 0.0
    %7296 = vmatpush1.msra.mxu0 0.0
    %7297 = vmatprep.subr.mxu0 0.0
    %7298 = vmatpush1.msra.mxu0 0.0
    %7299 = vmatprep.subr.mxu0 0.0
    %7300 = vmatpush1.msra.mxu0 0.0
    %7301 = vmatprep.subr.mxu0 0.0
    %7302 = vmatpush1.msra.mxu0 0.0
    %7303 = vmatprep.subr.mxu0 0.0
    %7304 = vmatpush1.msra.mxu0 0.0
    %7305 = vmatprep.subr.mxu0 0.0
    %7306 = vmatpush1.msra.mxu0 0.0
    %7307 = vmatprep.subr.mxu0 0.0
    %7308 = vmatpush1.msra.mxu0 0.0
    %7309 = vmatprep.subr.mxu0 0.0
    %7310 = vmatpush1.msra.mxu0 0.0
    %7311 = vmatprep.subr.mxu0 0.0
    %7312 = vmatpush1.msra.mxu0 0.0
    %7313 = vmatprep.subr.mxu0 0.0
    %7314 = vmatpush1.msra.mxu0 0.0
    %7315 = vmatprep.subr.mxu0 0.0
    %7316 = vmatpush1.msra.mxu0 0.0
    %7317 = vmatprep.subr.mxu0 0.0
    %7318 = vmatpush1.msra.mxu0 0.0
    %7319 = vmatprep.mubr.f32.mxu0 %v6898
    %7320 = vmatmul.mubr.f32.gmra.mrb[0].mxu0 %v6604
    %v7321 = vpop.f32.mrb[0].mxu0
    %v7322 = vadd.f32 0.0, %v7321
    %v7323 = vpop.f32.mrb[0].mxu0
    %v7324 = vadd.f32 0.0, %v7323
    %7325 = vdwg.mxu0
    %7326 = vmatprep.subr.mxu0 %v6622
    %7327 = vmatpush1.msra.mxu0 %v6621
    %7328 = vmatprep.subr.mxu0 %v6638
    %7329 = vmatpush1.msra.mxu0 %v6637
    %7330 = vmatprep.subr.mxu0 %v6654
    %7331 = vmatpush1.msra.mxu0 %v6653
    %7332 = vmatprep.subr.mxu0 %v6670
    %7333 = vmatpush1.msra.mxu0 %v6669
    %7334 = vmatprep.subr.mxu0 %v6686
    %7335 = vmatpush1.msra.mxu0 %v6685
    %7336 = vmatprep.subr.mxu0 %v6702
    %7337 = vmatpush1.msra.mxu0 %v6701
    %7338 = vmatprep.subr.mxu0 %v6718
    %7339 = vmatpush1.msra.mxu0 %v6717
    %7340 = vmatprep.subr.mxu0 %v6734
    %7341 = vmatpush1.msra.mxu0 %v6733
    %7342 = vmatprep.subr.mxu0 %v6750
    %7343 = vmatpush1.msra.mxu0 %v6749
    %7344 = vmatprep.subr.mxu0 %v6766
    %7345 = vmatpush1.msra.mxu0 %v6765
    %7346 = vmatprep.subr.mxu0 %v6782
    %7347 = vmatpush1.msra.mxu0 %v6781
    %7348 = vmatprep.subr.mxu0 %v6798
    %7349 = vmatpush1.msra.mxu0 %v6797
    %7350 = vmatprep.subr.mxu0 %v6814
    %7351 = vmatpush1.msra.mxu0 %v6813
    %7352 = vmatprep.subr.mxu0 %v6830
    %7353 = vmatpush1.msra.mxu0 %v6829
    %7354 = vmatprep.subr.mxu0 %v6846
    %7355 = vmatpush1.msra.mxu0 %v6845
    %7356 = vmatprep.subr.mxu0 %v6862
    %7357 = vmatpush1.msra.mxu0 %v6861
    %7358 = vmatprep.subr.mxu0 %v6878
    %7359 = vmatpush1.msra.mxu0 %v6877
    %7360 = vmatprep.subr.mxu0 %v6894
    %7361 = vmatpush1.msra.mxu0 %v6893
    %7362 = vmatprep.subr.mxu0 0.0
    %7363 = vmatpush1.msra.mxu0 0.0
    %7364 = vmatprep.subr.mxu0 0.0
    %7365 = vmatpush1.msra.mxu0 0.0
    %7366 = vmatprep.subr.mxu0 0.0
    %7367 = vmatpush1.msra.mxu0 0.0
    %7368 = vmatprep.subr.mxu0 0.0
    %7369 = vmatpush1.msra.mxu0 0.0
    %7370 = vmatprep.subr.mxu0 0.0
    %7371 = vmatpush1.msra.mxu0 0.0
    %7372 = vmatprep.subr.mxu0 0.0
    %7373 = vmatpush1.msra.mxu0 0.0
    %7374 = vmatprep.subr.mxu0 0.0
    %7375 = vmatpush1.msra.mxu0 0.0
    %7376 = vmatprep.subr.mxu0 0.0
    %7377 = vmatpush1.msra.mxu0 0.0
    %7378 = vmatprep.subr.mxu0 0.0
    %7379 = vmatpush1.msra.mxu0 0.0
    %7380 = vmatprep.subr.mxu0 0.0
    %7381 = vmatpush1.msra.mxu0 0.0
    %7382 = vmatprep.subr.mxu0 0.0
    %7383 = vmatpush1.msra.mxu0 0.0
    %7384 = vmatprep.subr.mxu0 0.0
    %7385 = vmatpush1.msra.mxu0 0.0
    %7386 = vmatprep.subr.mxu0 0.0
    %7387 = vmatpush1.msra.mxu0 0.0
    %7388 = vmatprep.subr.mxu0 0.0
    %7389 = vmatpush1.msra.mxu0 0.0
    %7390 = vmatprep.mubr.f32.mxu0 %v6898
    %7391 = vmatmul.mubr.f32.gmra.mrb[0].mxu0 %v6604
    %v7392 = vpop.f32.mrb[0].mxu0
    %v7393 = vadd.f32 0.0, %v7392
    %v7394 = vpop.f32.mrb[0].mxu0
    %v7395 = vadd.f32 0.0, %v7394
    %7396 = vdwg.mxu0
    %7397 = vmatprep.subr.mxu0 %v6624
    %7398 = vmatpush1.msra.mxu0 %v6623
    %7399 = vmatprep.subr.mxu0 %v6640
    %7400 = vmatpush1.msra.mxu0 %v6639
    %7401 = vmatprep.subr.mxu0 %v6656
    %7402 = vmatpush1.msra.mxu0 %v6655
    %7403 = vmatprep.subr.mxu0 %v6672
    %7404 = vmatpush1.msra.mxu0 %v6671
    %7405 = vmatprep.subr.mxu0 %v6688
    %7406 = vmatpush1.msra.mxu0 %v6687
    %7407 = vmatprep.subr.mxu0 %v6704
    %7408 = vmatpush1.msra.mxu0 %v6703
    %7409 = vmatprep.subr.mxu0 %v6720
    %7410 = vmatpush1.msra.mxu0 %v6719
    %7411 = vmatprep.subr.mxu0 %v6736
    %7412 = vmatpush1.msra.mxu0 %v6735
    %7413 = vmatprep.subr.mxu0 %v6752
    %7414 = vmatpush1.msra.mxu0 %v6751
    %7415 = vmatprep.subr.mxu0 %v6768
    %7416 = vmatpush1.msra.mxu0 %v6767
    %7417 = vmatprep.subr.mxu0 %v6784
    %7418 = vmatpush1.msra.mxu0 %v6783
    %7419 = vmatprep.subr.mxu0 %v6800
    %7420 = vmatpush1.msra.mxu0 %v6799
    %7421 = vmatprep.subr.mxu0 %v6816
    %7422 = vmatpush1.msra.mxu0 %v6815
    %7423 = vmatprep.subr.mxu0 %v6832
    %7424 = vmatpush1.msra.mxu0 %v6831
    %7425 = vmatprep.subr.mxu0 %v6848
    %7426 = vmatpush1.msra.mxu0 %v6847
    %7427 = vmatprep.subr.mxu0 %v6864
    %7428 = vmatpush1.msra.mxu0 %v6863
    %7429 = vmatprep.subr.mxu0 %v6880
    %7430 = vmatpush1.msra.mxu0 %v6879
    %7431 = vmatprep.subr.mxu0 %v6896
    %7432 = vmatpush1.msra.mxu0 %v6895
    %7433 = vmatprep.subr.mxu0 0.0
    %7434 = vmatpush1.msra.mxu0 0.0
    %7435 = vmatprep.subr.mxu0 0.0
    %7436 = vmatpush1.msra.mxu0 0.0
    %7437 = vmatprep.subr.mxu0 0.0
    %7438 = vmatpush1.msra.mxu0 0.0
    %7439 = vmatprep.subr.mxu0 0.0
    %7440 = vmatpush1.msra.mxu0 0.0
    %7441 = vmatprep.subr.mxu0 0.0
    %7442 = vmatpush1.msra.mxu0 0.0
    %7443 = vmatprep.subr.mxu0 0.0
    %7444 = vmatpush1.msra.mxu0 0.0
    %7445 = vmatprep.subr.mxu0 0.0
    %7446 = vmatpush1.msra.mxu0 0.0
    %7447 = vmatprep.subr.mxu0 0.0
    %7448 = vmatpush1.msra.mxu0 0.0
    %7449 = vmatprep.subr.mxu0 0.0
    %7450 = vmatpush1.msra.mxu0 0.0
    %7451 = vmatprep.subr.mxu0 0.0
    %7452 = vmatpush1.msra.mxu0 0.0
    %7453 = vmatprep.subr.mxu0 0.0
    %7454 = vmatpush1.msra.mxu0 0.0
    %7455 = vmatprep.subr.mxu0 0.0
    %7456 = vmatpush1.msra.mxu0 0.0
    %7457 = vmatprep.subr.mxu0 0.0
    %7458 = vmatpush1.msra.mxu0 0.0
    %7459 = vmatprep.subr.mxu0 0.0
    %7460 = vmatpush1.msra.mxu0 0.0
    %7461 = vmatprep.mubr.f32.mxu0 %v6898
    %7462 = vmatmul.mubr.f32.gmra.mrb[0].mxu0 %v6604
    %v7463 = vpop.f32.mrb[0].mxu0
    %v7464 = vadd.f32 0.0, %v7463
    %v7465 = vpop.f32.mrb[0].mxu0
    %v7466 = vadd.f32 0.0, %v7465
    %7467 = vdwg.mxu0
    %v7468 = vadd.f32 %v6516, %v6967
    %v7469 = vadd.f32 %v6517, %v6969
    %v7470 = vadd.f32 %v6518, %v7038
    %v7471 = vadd.f32 %v6519, %v7040
    %v7472 = vadd.f32 %v6520, %v7109
    %v7473 = vadd.f32 %v6521, %v7111
    %v7474 = vadd.f32 %v6522, %v7180
    %v7475 = vadd.f32 %v6523, %v7182
    %v7476 = vadd.f32 %v6524, %v7251
    %v7477 = vadd.f32 %v6525, %v7253
    %v7478 = vadd.f32 %v6526, %v7322
    %v7479 = vadd.f32 %v6527, %v7324
    %v7480 = vadd.f32 %v6528, %v7393
    %v7481 = vadd.f32 %v6529, %v7395
    %v7482 = vadd.f32 %v6530, %v7464
    %v7483 = vadd.f32 %v6531, %v7466
    %s7484 = scalar_lea.vmem [#allocation13], 8
    %v7485 = vld [vmem:[%s7484] sm:$0x3]
    %v7487 = vsel %vm3588, %v7485, 0
    %7489 = vmatprep.subr.mxu0 %v3582
    %7490 = vmatpush1.msra.mxu0 %v3581
    %7491 = vmatprep.subr.mxu0 %v3597
    %7492 = vmatpush1.msra.mxu0 %v3594
    %7493 = vmatprep.subr.mxu0 0.0
    %7494 = vmatpush1.msra.mxu0 0.0
    %7495 = vmatprep.subr.mxu0 0.0
    %7496 = vmatpush1.msra.mxu0 0.0
    %7497 = vmatprep.subr.mxu0 0.0
    %7498 = vmatpush1.msra.mxu0 0.0
    %7499 = vmatprep.subr.mxu0 0.0
    %7500 = vmatpush1.msra.mxu0 0.0
    %7501 = vmatprep.subr.mxu0 0.0
    %7502 = vmatpush1.msra.mxu0 0.0
    %7503 = vmatprep.subr.mxu0 0.0
    %7504 = vmatpush1.msra.mxu0 0.0
    %7505 = vmatprep.subr.mxu0 0.0
    %7506 = vmatpush1.msra.mxu0 0.0
    %7507 = vmatprep.subr.mxu0 0.0
    %7508 = vmatpush1.msra.mxu0 0.0
    %7509 = vmatprep.subr.mxu0 0.0
    %7510 = vmatpush1.msra.mxu0 0.0
    %7511 = vmatprep.subr.mxu0 0.0
    %7512 = vmatpush1.msra.mxu0 0.0
    %7513 = vmatprep.subr.mxu0 0.0
    %7514 = vmatpush1.msra.mxu0 0.0
    %7515 = vmatprep.subr.mxu0 0.0
    %7516 = vmatpush1.msra.mxu0 0.0
    %7517 = vmatprep.subr.mxu0 0.0
    %7518 = vmatpush1.msra.mxu0 0.0
    %7519 = vmatprep.subr.mxu0 0.0
    %7520 = vmatpush1.msra.mxu0 0.0
    %7521 = vmatprep.subr.mxu0 0.0
    %7522 = vmatpush1.msra.mxu0 0.0
    %7523 = vmatprep.subr.mxu0 0.0
    %7524 = vmatpush1.msra.mxu0 0.0
    %7525 = vmatprep.subr.mxu0 0.0
    %7526 = vmatpush1.msra.mxu0 0.0
    %7527 = vmatprep.subr.mxu0 0.0
    %7528 = vmatpush1.msra.mxu0 0.0
    %7529 = vmatprep.subr.mxu0 0.0
    %7530 = vmatpush1.msra.mxu0 0.0
    %7531 = vmatprep.subr.mxu0 0.0
    %7532 = vmatpush1.msra.mxu0 0.0
    %7533 = vmatprep.subr.mxu0 0.0
    %7534 = vmatpush1.msra.mxu0 0.0
    %7535 = vmatprep.subr.mxu0 0.0
    %7536 = vmatpush1.msra.mxu0 0.0
    %7537 = vmatprep.subr.mxu0 0.0
    %7538 = vmatpush1.msra.mxu0 0.0
    %7539 = vmatprep.subr.mxu0 0.0
    %7540 = vmatpush1.msra.mxu0 0.0
    %7541 = vmatprep.subr.mxu0 0.0
    %7542 = vmatpush1.msra.mxu0 0.0
    %7543 = vmatprep.subr.mxu0 0.0
    %7544 = vmatpush1.msra.mxu0 0.0
    %7545 = vmatprep.subr.mxu0 0.0
    %7546 = vmatpush1.msra.mxu0 0.0
    %7547 = vmatprep.subr.mxu0 0.0
    %7548 = vmatpush1.msra.mxu0 0.0
    %7549 = vmatprep.subr.mxu0 0.0
    %7550 = vmatpush1.msra.mxu0 0.0
    %7551 = vmatprep.subr.mxu0 0.0
    %7552 = vmatpush1.msra.mxu0 0.0
    %7553 = vmatprep.mubr.f32.mxu0 0.0
    %7554 = vmatmul.mubr.f32.gmra.mrb[0].mxu0 %v7487
    %v7555 = vpop.f32.mrb[0].mxu0
    %v7556 = vadd.f32 0.0, %v7555
    %v7557 = vpop.f32.mrb[0].mxu0
    %v7558 = vadd.f32 0.0, %v7557
    %7559 = vdwg.mxu0
    %s7560 = scalar_lea.vmem [#allocation14], 9216
    %v7561 = vld [vmem:[%s7560] sm:$0xff]
    %v7562 = vld [vmem:[%s7560 + $0x8] sm:$0xff]
    %v7563 = vld [vmem:[%s7560 + $0x10] sm:$0xff]
    %v7564 = vld [vmem:[%s7560 + $0x18] sm:$0xff]
    %v7565 = vld [vmem:[%s7560 + $0x20] sm:$0xff]
    %v7566 = vld [vmem:[%s7560 + $0x28] sm:$0xff]
    %v7567 = vld [vmem:[%s7560 + $0x30] sm:$0xff]
    %v7568 = vld [vmem:[%s7560 + $0x38] sm:$0xff]
    %v7569 = vld [vmem:[%s7560 + $0x40] sm:$0xff]
    %v7570 = vld [vmem:[%s7560 + $0x48] sm:$0xff]
    %v7571 = vld [vmem:[%s7560 + $0x50] sm:$0xff]
    %v7572 = vld [vmem:[%s7560 + $0x58] sm:$0xff]
    %v7573 = vld [vmem:[%s7560 + $0x60] sm:$0xff]
    %v7574 = vld [vmem:[%s7560 + $0x68] sm:$0xff]
    %v7575 = vld [vmem:[%s7560 + $0x70] sm:$0xff]
    %v7576 = vld [vmem:[%s7560 + $0x78] sm:$0xff]
    %v7577 = vld [vmem:[%s7560 + $0x80] sm:$0xff]
    %v7578 = vld [vmem:[%s7560 + $0x88] sm:$0xff]
    %v7579 = vld [vmem:[%s7560 + $0x90] sm:$0xff]
    %v7580 = vld [vmem:[%s7560 + $0x98] sm:$0xff]
    %v7581 = vld [vmem:[%s7560 + $0xa0] sm:$0xff]
    %v7582 = vld [vmem:[%s7560 + $0xa8] sm:$0xff]
    %v7583 = vld [vmem:[%s7560 + $0xb0] sm:$0xff]
    %v7584 = vld [vmem:[%s7560 + $0xb8] sm:$0xff]
    %v7585 = vld [vmem:[%s7560 + $0xc0] sm:$0xff]
    %v7586 = vld [vmem:[%s7560 + $0xc8] sm:$0xff]
    %v7587 = vld [vmem:[%s7560 + $0xd0] sm:$0xff]
    %v7588 = vld [vmem:[%s7560 + $0xd8] sm:$0xff]
    %v7589 = vld [vmem:[%s7560 + $0xe0] sm:$0xff]
    %v7590 = vld [vmem:[%s7560 + $0xe8] sm:$0xff]
    %v7591 = vld [vmem:[%s7560 + $0xf0] sm:$0xff]
    %v7592 = vld [vmem:[%s7560 + $0xf8] sm:$0xff]
    %v7593 = vld [vmem:[%s7560 + $0x100] sm:$0xff]
    %v7594 = vld [vmem:[%s7560 + $0x108] sm:$0xff]
    %v7595 = vld [vmem:[%s7560 + $0x110] sm:$0xff]
    %v7596 = vld [vmem:[%s7560 + $0x118] sm:$0xff]
    %v7597 = vld [vmem:[%s7560 + $0x120] sm:$0xff]
    %v7598 = vld [vmem:[%s7560 + $0x128] sm:$0xff]
    %v7599 = vld [vmem:[%s7560 + $0x130] sm:$0xff]
    %v7600 = vld [vmem:[%s7560 + $0x138] sm:$0xff]
    %v7601 = vld [vmem:[%s7560 + $0x140] sm:$0xff]
    %v7602 = vld [vmem:[%s7560 + $0x148] sm:$0xff]
    %v7603 = vld [vmem:[%s7560 + $0x150] sm:$0xff]
    %v7604 = vld [vmem:[%s7560 + $0x158] sm:$0xff]
    %v7605 = vld [vmem:[%s7560 + $0x160] sm:$0xff]
    %v7606 = vld [vmem:[%s7560 + $0x168] sm:$0xff]
    %v7607 = vld [vmem:[%s7560 + $0x170] sm:$0xff]
    %v7608 = vld [vmem:[%s7560 + $0x178] sm:$0xff]
    %v7609 = vld [vmem:[%s7560 + $0x180] sm:$0xff]
    %v7610 = vld [vmem:[%s7560 + $0x188] sm:$0xff]
    %v7611 = vld [vmem:[%s7560 + $0x190] sm:$0xff]
    %v7612 = vld [vmem:[%s7560 + $0x198] sm:$0xff]
    %v7613 = vld [vmem:[%s7560 + $0x1a0] sm:$0xff]
    %v7614 = vld [vmem:[%s7560 + $0x1a8] sm:$0xff]
    %v7615 = vld [vmem:[%s7560 + $0x1b0] sm:$0xff]
    %v7616 = vld [vmem:[%s7560 + $0x1b8] sm:$0xff]
    %v7617 = vld [vmem:[%s7560 + $0x1c0] sm:$0xff]
    %v7618 = vld [vmem:[%s7560 + $0x1c8] sm:$0xff]
    %v7619 = vld [vmem:[%s7560 + $0x1d0] sm:$0xff]
    %v7620 = vld [vmem:[%s7560 + $0x1d8] sm:$0xff]
    %v7621 = vld [vmem:[%s7560 + $0x1e0] sm:$0xff]
    %v7622 = vld [vmem:[%s7560 + $0x1e8] sm:$0xff]
    %v7623 = vld [vmem:[%s7560 + $0x1f0] sm:$0xff]
    %v7624 = vld [vmem:[%s7560 + $0x1f8] sm:$0xff]
    %v7625 = vld [vmem:[%s7560 + $0x200] sm:$0xff]
    %v7626 = vld [vmem:[%s7560 + $0x208] sm:$0xff]
    %v7627 = vld [vmem:[%s7560 + $0x210] sm:$0xff]
    %v7628 = vld [vmem:[%s7560 + $0x218] sm:$0xff]
    %v7629 = vld [vmem:[%s7560 + $0x220] sm:$0xff]
    %v7630 = vld [vmem:[%s7560 + $0x228] sm:$0xff]
    %v7631 = vld [vmem:[%s7560 + $0x230] sm:$0xff]
    %v7632 = vld [vmem:[%s7560 + $0x238] sm:$0xff]
    %v7633 = vld [vmem:[%s7560 + $0x240] sm:$0xff]
    %v7634 = vld [vmem:[%s7560 + $0x248] sm:$0xff]
    %v7635 = vld [vmem:[%s7560 + $0x250] sm:$0xff]
    %v7636 = vld [vmem:[%s7560 + $0x258] sm:$0xff]
    %v7637 = vld [vmem:[%s7560 + $0x260] sm:$0xff]
    %v7638 = vld [vmem:[%s7560 + $0x268] sm:$0xff]
    %v7639 = vld [vmem:[%s7560 + $0x270] sm:$0xff]
    %v7640 = vld [vmem:[%s7560 + $0x278] sm:$0xff]
    %v7641 = vld [vmem:[%s7560 + $0x280] sm:$0xff]
    %v7642 = vld [vmem:[%s7560 + $0x288] sm:$0xff]
    %v7643 = vld [vmem:[%s7560 + $0x290] sm:$0xff]
    %v7644 = vld [vmem:[%s7560 + $0x298] sm:$0xff]
    %v7645 = vld [vmem:[%s7560 + $0x2a0] sm:$0xff]
    %v7646 = vld [vmem:[%s7560 + $0x2a8] sm:$0xff]
    %v7647 = vld [vmem:[%s7560 + $0x2b0] sm:$0xff]
    %v7648 = vld [vmem:[%s7560 + $0x2b8] sm:$0xff]
    %v7649 = vld [vmem:[%s7560 + $0x2c0] sm:$0xff]
    %v7650 = vld [vmem:[%s7560 + $0x2c8] sm:$0xff]
    %v7651 = vld [vmem:[%s7560 + $0x2d0] sm:$0xff]
    %v7652 = vld [vmem:[%s7560 + $0x2d8] sm:$0xff]
    %v7653 = vld [vmem:[%s7560 + $0x2e0] sm:$0xff]
    %v7654 = vld [vmem:[%s7560 + $0x2e8] sm:$0xff]
    %v7655 = vld [vmem:[%s7560 + $0x2f0] sm:$0xff]
    %v7656 = vld [vmem:[%s7560 + $0x2f8] sm:$0xff]
    %v7657 = vld [vmem:[%s7560 + $0x300] sm:$0xff]
    %v7658 = vld [vmem:[%s7560 + $0x308] sm:$0xff]
    %v7659 = vld [vmem:[%s7560 + $0x310] sm:$0xff]
    %v7660 = vld [vmem:[%s7560 + $0x318] sm:$0xff]
    %v7661 = vld [vmem:[%s7560 + $0x320] sm:$0xff]
    %v7662 = vld [vmem:[%s7560 + $0x328] sm:$0xff]
    %v7663 = vld [vmem:[%s7560 + $0x330] sm:$0xff]
    %v7664 = vld [vmem:[%s7560 + $0x338] sm:$0xff]
    %v7665 = vld [vmem:[%s7560 + $0x340] sm:$0xff]
    %v7666 = vld [vmem:[%s7560 + $0x348] sm:$0xff]
    %v7667 = vld [vmem:[%s7560 + $0x350] sm:$0xff]
    %v7668 = vld [vmem:[%s7560 + $0x358] sm:$0xff]
    %v7669 = vld [vmem:[%s7560 + $0x360] sm:$0xff]
    %v7670 = vld [vmem:[%s7560 + $0x368] sm:$0xff]
    %v7671 = vld [vmem:[%s7560 + $0x370] sm:$0xff]
    %v7672 = vld [vmem:[%s7560 + $0x378] sm:$0xff]
    %v7673 = vld [vmem:[%s7560 + $0x380] sm:$0xff]
    %v7674 = vld [vmem:[%s7560 + $0x388] sm:$0xff]
    %v7675 = vld [vmem:[%s7560 + $0x390] sm:$0xff]
    %v7676 = vld [vmem:[%s7560 + $0x398] sm:$0xff]
    %v7677 = vld [vmem:[%s7560 + $0x3a0] sm:$0xff]
    %v7678 = vld [vmem:[%s7560 + $0x3a8] sm:$0xff]
    %v7679 = vld [vmem:[%s7560 + $0x3b0] sm:$0xff]
    %v7680 = vld [vmem:[%s7560 + $0x3b8] sm:$0xff]
    %v7681 = vld [vmem:[%s7560 + $0x3c0] sm:$0xff]
    %v7682 = vld [vmem:[%s7560 + $0x3c8] sm:$0xff]
    %v7683 = vld [vmem:[%s7560 + $0x3d0] sm:$0xff]
    %v7684 = vld [vmem:[%s7560 + $0x3d8] sm:$0xff]
    %v7685 = vld [vmem:[%s7560 + $0x3e0] sm:$0xff]
    %v7686 = vld [vmem:[%s7560 + $0x3e8] sm:$0xff]
    %v7687 = vld [vmem:[%s7560 + $0x3f0] sm:$0xff]
    %v7688 = vld [vmem:[%s7560 + $0x3f8] sm:$0xff]
    %v7689 = vld [vmem:[%s7560 + $0x400] sm:$0xff]
    %v7690 = vld [vmem:[%s7560 + $0x408] sm:$0xff]
    %v7691 = vld [vmem:[%s7560 + $0x410] sm:$0xff]
    %v7692 = vld [vmem:[%s7560 + $0x418] sm:$0xff]
    %v7693 = vld [vmem:[%s7560 + $0x420] sm:$0xff]
    %v7694 = vld [vmem:[%s7560 + $0x428] sm:$0xff]
    %v7695 = vld [vmem:[%s7560 + $0x430] sm:$0xff]
    %v7696 = vld [vmem:[%s7560 + $0x438] sm:$0xff]
    %v7697 = vld [vmem:[%s7560 + $0x440] sm:$0xff]
    %v7698 = vld [vmem:[%s7560 + $0x448] sm:$0xff]
    %v7699 = vld [vmem:[%s7560 + $0x450] sm:$0xff]
    %v7700 = vld [vmem:[%s7560 + $0x458] sm:$0xff]
    %v7701 = vld [vmem:[%s7560 + $0x460] sm:$0xff]
    %v7702 = vld [vmem:[%s7560 + $0x468] sm:$0xff]
    %v7703 = vld [vmem:[%s7560 + $0x470] sm:$0xff]
    %v7704 = vld [vmem:[%s7560 + $0x478] sm:$0xff]
    %v7705 = vld [vmem:[%s7560 + $0x480] sm:$0xff]
    %v7706 = vld [vmem:[%s7560 + $0x488] sm:$0xff]
    %v7707 = vld [vmem:[%s7560 + $0x490] sm:$0xff]
    %v7708 = vld [vmem:[%s7560 + $0x498] sm:$0xff]
    %v7709 = vld [vmem:[%s7560 + $0x4a0] sm:$0xff]
    %v7710 = vld [vmem:[%s7560 + $0x4a8] sm:$0xff]
    %v7711 = vld [vmem:[%s7560 + $0x4b0] sm:$0xff]
    %v7712 = vld [vmem:[%s7560 + $0x4b8] sm:$0xff]
    %v7713 = vld [vmem:[%s7560 + $0x4c0] sm:$0xff]
    %v7714 = vld [vmem:[%s7560 + $0x4c8] sm:$0xff]
    %v7715 = vld [vmem:[%s7560 + $0x4d0] sm:$0xff]
    %v7716 = vld [vmem:[%s7560 + $0x4d8] sm:$0xff]
    %v7717 = vld [vmem:[%s7560 + $0x4e0] sm:$0xff]
    %v7718 = vld [vmem:[%s7560 + $0x4e8] sm:$0xff]
    %v7719 = vld [vmem:[%s7560 + $0x4f0] sm:$0xff]
    %v7720 = vld [vmem:[%s7560 + $0x4f8] sm:$0xff]
    %v7721 = vld [vmem:[%s7560 + $0x500] sm:$0xff]
    %v7722 = vld [vmem:[%s7560 + $0x508] sm:$0xff]
    %v7723 = vld [vmem:[%s7560 + $0x510] sm:$0xff]
    %v7724 = vld [vmem:[%s7560 + $0x518] sm:$0xff]
    %v7725 = vld [vmem:[%s7560 + $0x520] sm:$0xff]
    %v7726 = vld [vmem:[%s7560 + $0x528] sm:$0xff]
    %v7727 = vld [vmem:[%s7560 + $0x530] sm:$0xff]
    %v7728 = vld [vmem:[%s7560 + $0x538] sm:$0xff]
    %v7729 = vld [vmem:[%s7560 + $0x540] sm:$0xff]
    %v7730 = vld [vmem:[%s7560 + $0x548] sm:$0xff]
    %v7731 = vld [vmem:[%s7560 + $0x550] sm:$0xff]
    %v7732 = vld [vmem:[%s7560 + $0x558] sm:$0xff]
    %v7733 = vld [vmem:[%s7560 + $0x560] sm:$0xff]
    %v7734 = vld [vmem:[%s7560 + $0x568] sm:$0xff]
    %v7735 = vld [vmem:[%s7560 + $0x570] sm:$0xff]
    %v7736 = vld [vmem:[%s7560 + $0x578] sm:$0xff]
    %v7737 = vld [vmem:[%s7560 + $0x580] sm:$0xff]
    %v7738 = vld [vmem:[%s7560 + $0x588] sm:$0xff]
    %v7739 = vld [vmem:[%s7560 + $0x590] sm:$0xff]
    %v7740 = vld [vmem:[%s7560 + $0x598] sm:$0xff]
    %v7741 = vld [vmem:[%s7560 + $0x5a0] sm:$0xff]
    %v7742 = vld [vmem:[%s7560 + $0x5a8] sm:$0xff]
    %v7743 = vld [vmem:[%s7560 + $0x5b0] sm:$0xff]
    %v7744 = vld [vmem:[%s7560 + $0x5b8] sm:$0xff]
    %v7745 = vld [vmem:[%s7560 + $0x5c0] sm:$0xff]
    %v7746 = vld [vmem:[%s7560 + $0x5c8] sm:$0xff]
    %v7747 = vld [vmem:[%s7560 + $0x5d0] sm:$0xff]
    %v7748 = vld [vmem:[%s7560 + $0x5d8] sm:$0xff]
    %v7749 = vld [vmem:[%s7560 + $0x5e0] sm:$0xff]
    %v7750 = vld [vmem:[%s7560 + $0x5e8] sm:$0xff]
    %v7751 = vld [vmem:[%s7560 + $0x5f0] sm:$0xff]
    %v7752 = vld [vmem:[%s7560 + $0x5f8] sm:$0xff]
    %v7753 = vld [vmem:[%s7560 + $0x600] sm:$0xff]
    %v7754 = vld [vmem:[%s7560 + $0x608] sm:$0xff]
    %v7755 = vld [vmem:[%s7560 + $0x610] sm:$0xff]
    %v7756 = vld [vmem:[%s7560 + $0x618] sm:$0xff]
    %v7757 = vld [vmem:[%s7560 + $0x620] sm:$0xff]
    %v7758 = vld [vmem:[%s7560 + $0x628] sm:$0xff]
    %v7759 = vld [vmem:[%s7560 + $0x630] sm:$0xff]
    %v7760 = vld [vmem:[%s7560 + $0x638] sm:$0xff]
    %v7761 = vld [vmem:[%s7560 + $0x640] sm:$0xff]
    %v7762 = vld [vmem:[%s7560 + $0x648] sm:$0xff]
    %v7763 = vld [vmem:[%s7560 + $0x650] sm:$0xff]
    %v7764 = vld [vmem:[%s7560 + $0x658] sm:$0xff]
    %v7765 = vld [vmem:[%s7560 + $0x660] sm:$0xff]
    %v7766 = vld [vmem:[%s7560 + $0x668] sm:$0xff]
    %v7767 = vld [vmem:[%s7560 + $0x670] sm:$0xff]
    %v7768 = vld [vmem:[%s7560 + $0x678] sm:$0xff]
    %v7769 = vld [vmem:[%s7560 + $0x680] sm:$0xff]
    %v7770 = vld [vmem:[%s7560 + $0x688] sm:$0xff]
    %v7771 = vld [vmem:[%s7560 + $0x690] sm:$0xff]
    %v7772 = vld [vmem:[%s7560 + $0x698] sm:$0xff]
    %v7773 = vld [vmem:[%s7560 + $0x6a0] sm:$0xff]
    %v7774 = vld [vmem:[%s7560 + $0x6a8] sm:$0xff]
    %v7775 = vld [vmem:[%s7560 + $0x6b0] sm:$0xff]
    %v7776 = vld [vmem:[%s7560 + $0x6b8] sm:$0xff]
    %v7777 = vld [vmem:[%s7560 + $0x6c0] sm:$0xff]
    %v7778 = vld [vmem:[%s7560 + $0x6c8] sm:$0xff]
    %v7779 = vld [vmem:[%s7560 + $0x6d0] sm:$0xff]
    %v7780 = vld [vmem:[%s7560 + $0x6d8] sm:$0xff]
    %v7781 = vld [vmem:[%s7560 + $0x6e0] sm:$0xff]
    %v7782 = vld [vmem:[%s7560 + $0x6e8] sm:$0xff]
    %v7783 = vld [vmem:[%s7560 + $0x6f0] sm:$0xff]
    %v7784 = vld [vmem:[%s7560 + $0x6f8] sm:$0xff]
    %v7785 = vld [vmem:[%s7560 + $0x700] sm:$0xff]
    %v7786 = vld [vmem:[%s7560 + $0x708] sm:$0xff]
    %v7787 = vld [vmem:[%s7560 + $0x710] sm:$0xff]
    %v7788 = vld [vmem:[%s7560 + $0x718] sm:$0xff]
    %v7789 = vld [vmem:[%s7560 + $0x720] sm:$0xff]
    %v7790 = vld [vmem:[%s7560 + $0x728] sm:$0xff]
    %v7791 = vld [vmem:[%s7560 + $0x730] sm:$0xff]
    %v7792 = vld [vmem:[%s7560 + $0x738] sm:$0xff]
    %v7793 = vld [vmem:[%s7560 + $0x740] sm:$0xff]
    %v7794 = vld [vmem:[%s7560 + $0x748] sm:$0xff]
    %v7795 = vld [vmem:[%s7560 + $0x750] sm:$0xff]
    %v7796 = vld [vmem:[%s7560 + $0x758] sm:$0xff]
    %v7797 = vld [vmem:[%s7560 + $0x760] sm:$0xff]
    %v7798 = vld [vmem:[%s7560 + $0x768] sm:$0xff]
    %v7799 = vld [vmem:[%s7560 + $0x770] sm:$0xff]
    %v7800 = vld [vmem:[%s7560 + $0x778] sm:$0xff]
    %v7801 = vld [vmem:[%s7560 + $0x780] sm:$0xff]
    %v7802 = vld [vmem:[%s7560 + $0x788] sm:$0xff]
    %v7803 = vld [vmem:[%s7560 + $0x790] sm:$0xff]
    %v7804 = vld [vmem:[%s7560 + $0x798] sm:$0xff]
    %v7805 = vld [vmem:[%s7560 + $0x7a0] sm:$0xff]
    %v7806 = vld [vmem:[%s7560 + $0x7a8] sm:$0xff]
    %v7807 = vld [vmem:[%s7560 + $0x7b0] sm:$0xff]
    %v7808 = vld [vmem:[%s7560 + $0x7b8] sm:$0xff]
    %v7809 = vld [vmem:[%s7560 + $0x7c0] sm:$0xff]
    %v7810 = vld [vmem:[%s7560 + $0x7c8] sm:$0xff]
    %v7811 = vld [vmem:[%s7560 + $0x7d0] sm:$0xff]
    %v7812 = vld [vmem:[%s7560 + $0x7d8] sm:$0xff]
    %v7813 = vld [vmem:[%s7560 + $0x7e0] sm:$0xff]
    %v7814 = vld [vmem:[%s7560 + $0x7e8] sm:$0xff]
    %v7815 = vld [vmem:[%s7560 + $0x7f0] sm:$0xff]
    %v7816 = vld [vmem:[%s7560 + $0x7f8] sm:$0xff]
    %v7817 = vld [vmem:[%s7560 + $0x800] sm:$0xff]
    %v7818 = vld [vmem:[%s7560 + $0x808] sm:$0xff]
    %v7819 = vld [vmem:[%s7560 + $0x810] sm:$0xff]
    %v7820 = vld [vmem:[%s7560 + $0x818] sm:$0xff]
    %v7821 = vld [vmem:[%s7560 + $0x820] sm:$0xff]
    %v7822 = vld [vmem:[%s7560 + $0x828] sm:$0xff]
    %v7823 = vld [vmem:[%s7560 + $0x830] sm:$0xff]
    %v7824 = vld [vmem:[%s7560 + $0x838] sm:$0xff]
    %v7825 = vld [vmem:[%s7560 + $0x840] sm:$0xff]
    %v7826 = vld [vmem:[%s7560 + $0x848] sm:$0xff]
    %v7827 = vld [vmem:[%s7560 + $0x850] sm:$0xff]
    %v7828 = vld [vmem:[%s7560 + $0x858] sm:$0xff]
    %v7829 = vld [vmem:[%s7560 + $0x860] sm:$0xff]
    %v7830 = vld [vmem:[%s7560 + $0x868] sm:$0xff]
    %v7831 = vld [vmem:[%s7560 + $0x870] sm:$0xff]
    %v7832 = vld [vmem:[%s7560 + $0x878] sm:$0xff]
    %v7833 = vld [vmem:[%s7560 + $0x880] sm:$0xff]
    %v7834 = vld [vmem:[%s7560 + $0x888] sm:$0xff]
    %v7835 = vld [vmem:[%s7560 + $0x890] sm:$0xff]
    %v7836 = vld [vmem:[%s7560 + $0x898] sm:$0xff]
    %v7837 = vld [vmem:[%s7560 + $0x8a0] sm:$0xff]
    %v7838 = vld [vmem:[%s7560 + $0x8a8] sm:$0xff]
    %v7839 = vld [vmem:[%s7560 + $0x8b0] sm:$0xff]
    %v7840 = vld [vmem:[%s7560 + $0x8b8] sm:$0xff]
    %v7841 = vld [vmem:[%s7560 + $0x8c0] sm:$0xff]
    %v7842 = vld [vmem:[%s7560 + $0x8c8] sm:$0xff]
    %v7843 = vld [vmem:[%s7560 + $0x8d0] sm:$0xff]
    %v7844 = vld [vmem:[%s7560 + $0x8d8] sm:$0xff]
    %v7845 = vld [vmem:[%s7560 + $0x8e0] sm:$0xff]
    %v7846 = vld [vmem:[%s7560 + $0x8e8] sm:$0xff]
    %v7847 = vld [vmem:[%s7560 + $0x8f0] sm:$0xff]
    %v7848 = vld [vmem:[%s7560 + $0x8f8] sm:$0xff]
    %v7850 = vsel %vm3958, %v7558, 0
    %7852 = vmatprep.subr.mxu0 %v7562
    %7853 = vmatpush1.msra.mxu0 %v7561
    %7854 = vmatprep.subr.mxu0 %v7578
    %7855 = vmatpush1.msra.mxu0 %v7577
    %7856 = vmatprep.subr.mxu0 %v7594
    %7857 = vmatpush1.msra.mxu0 %v7593
    %7858 = vmatprep.subr.mxu0 %v7610
    %7859 = vmatpush1.msra.mxu0 %v7609
    %7860 = vmatprep.subr.mxu0 %v7626
    %7861 = vmatpush1.msra.mxu0 %v7625
    %7862 = vmatprep.subr.mxu0 %v7642
    %7863 = vmatpush1.msra.mxu0 %v7641
    %7864 = vmatprep.subr.mxu0 %v7658
    %7865 = vmatpush1.msra.mxu0 %v7657
    %7866 = vmatprep.subr.mxu0 %v7674
    %7867 = vmatpush1.msra.mxu0 %v7673
    %7868 = vmatprep.subr.mxu0 %v7690
    %7869 = vmatpush1.msra.mxu0 %v7689
    %7870 = vmatprep.subr.mxu0 %v7706
    %7871 = vmatpush1.msra.mxu0 %v7705
    %7872 = vmatprep.subr.mxu0 %v7722
    %7873 = vmatpush1.msra.mxu0 %v7721
    %7874 = vmatprep.subr.mxu0 %v7738
    %7875 = vmatpush1.msra.mxu0 %v7737
    %7876 = vmatprep.subr.mxu0 %v7754
    %7877 = vmatpush1.msra.mxu0 %v7753
    %7878 = vmatprep.subr.mxu0 %v7770
    %7879 = vmatpush1.msra.mxu0 %v7769
    %7880 = vmatprep.subr.mxu0 %v7786
    %7881 = vmatpush1.msra.mxu0 %v7785
    %7882 = vmatprep.subr.mxu0 %v7802
    %7883 = vmatpush1.msra.mxu0 %v7801
    %7884 = vmatprep.subr.mxu0 %v7818
    %7885 = vmatpush1.msra.mxu0 %v7817
    %7886 = vmatprep.subr.mxu0 %v7834
    %7887 = vmatpush1.msra.mxu0 %v7833
    %7888 = vmatprep.subr.mxu0 0.0
    %7889 = vmatpush1.msra.mxu0 0.0
    %7890 = vmatprep.subr.mxu0 0.0
    %7891 = vmatpush1.msra.mxu0 0.0
    %7892 = vmatprep.subr.mxu0 0.0
    %7893 = vmatpush1.msra.mxu0 0.0
    %7894 = vmatprep.subr.mxu0 0.0
    %7895 = vmatpush1.msra.mxu0 0.0
    %7896 = vmatprep.subr.mxu0 0.0
    %7897 = vmatpush1.msra.mxu0 0.0
    %7898 = vmatprep.subr.mxu0 0.0
    %7899 = vmatpush1.msra.mxu0 0.0
    %7900 = vmatprep.subr.mxu0 0.0
    %7901 = vmatpush1.msra.mxu0 0.0
    %7902 = vmatprep.subr.mxu0 0.0
    %7903 = vmatpush1.msra.mxu0 0.0
    %7904 = vmatprep.subr.mxu0 0.0
    %7905 = vmatpush1.msra.mxu0 0.0
    %7906 = vmatprep.subr.mxu0 0.0
    %7907 = vmatpush1.msra.mxu0 0.0
    %7908 = vmatprep.subr.mxu0 0.0
    %7909 = vmatpush1.msra.mxu0 0.0
    %7910 = vmatprep.subr.mxu0 0.0
    %7911 = vmatpush1.msra.mxu0 0.0
    %7912 = vmatprep.subr.mxu0 0.0
    %7913 = vmatpush1.msra.mxu0 0.0
    %7914 = vmatprep.subr.mxu0 0.0
    %7915 = vmatpush1.msra.mxu0 0.0
    %7916 = vmatprep.mubr.f32.mxu0 %v7850
    %7917 = vmatmul.mubr.f32.gmra.mrb[0].mxu0 %v7556
    %v7918 = vpop.f32.mrb[0].mxu0
    %v7919 = vadd.f32 0.0, %v7918
    %v7920 = vpop.f32.mrb[0].mxu0
    %v7921 = vadd.f32 0.0, %v7920
    %7922 = vdwg.mxu0
    %7923 = vmatprep.subr.mxu0 %v7564
    %7924 = vmatpush1.msra.mxu0 %v7563
    %7925 = vmatprep.subr.mxu0 %v7580
    %7926 = vmatpush1.msra.mxu0 %v7579
    %7927 = vmatprep.subr.mxu0 %v7596
    %7928 = vmatpush1.msra.mxu0 %v7595
    %7929 = vmatprep.subr.mxu0 %v7612
    %7930 = vmatpush1.msra.mxu0 %v7611
    %7931 = vmatprep.subr.mxu0 %v7628
    %7932 = vmatpush1.msra.mxu0 %v7627
    %7933 = vmatprep.subr.mxu0 %v7644
    %7934 = vmatpush1.msra.mxu0 %v7643
    %7935 = vmatprep.subr.mxu0 %v7660
    %7936 = vmatpush1.msra.mxu0 %v7659
    %7937 = vmatprep.subr.mxu0 %v7676
    %7938 = vmatpush1.msra.mxu0 %v7675
    %7939 = vmatprep.subr.mxu0 %v7692
    %7940 = vmatpush1.msra.mxu0 %v7691
    %7941 = vmatprep.subr.mxu0 %v7708
    %7942 = vmatpush1.msra.mxu0 %v7707
    %7943 = vmatprep.subr.mxu0 %v7724
    %7944 = vmatpush1.msra.mxu0 %v7723
    %7945 = vmatprep.subr.mxu0 %v7740
    %7946 = vmatpush1.msra.mxu0 %v7739
    %7947 = vmatprep.subr.mxu0 %v7756
    %7948 = vmatpush1.msra.mxu0 %v7755
    %7949 = vmatprep.subr.mxu0 %v7772
    %7950 = vmatpush1.msra.mxu0 %v7771
    %7951 = vmatprep.subr.mxu0 %v7788
    %7952 = vmatpush1.msra.mxu0 %v7787
    %7953 = vmatprep.subr.mxu0 %v7804
    %7954 = vmatpush1.msra.mxu0 %v7803
    %7955 = vmatprep.subr.mxu0 %v7820
    %7956 = vmatpush1.msra.mxu0 %v7819
    %7957 = vmatprep.subr.mxu0 %v7836
    %7958 = vmatpush1.msra.mxu0 %v7835
    %7959 = vmatprep.subr.mxu0 0.0
    %7960 = vmatpush1.msra.mxu0 0.0
    %7961 = vmatprep.subr.mxu0 0.0
    %7962 = vmatpush1.msra.mxu0 0.0
    %7963 = vmatprep.subr.mxu0 0.0
    %7964 = vmatpush1.msra.mxu0 0.0
    %7965 = vmatprep.subr.mxu0 0.0
    %7966 = vmatpush1.msra.mxu0 0.0
    %7967 = vmatprep.subr.mxu0 0.0
    %7968 = vmatpush1.msra.mxu0 0.0
    %7969 = vmatprep.subr.mxu0 0.0
    %7970 = vmatpush1.msra.mxu0 0.0
    %7971 = vmatprep.subr.mxu0 0.0
    %7972 = vmatpush1.msra.mxu0 0.0
    %7973 = vmatprep.subr.mxu0 0.0
    %7974 = vmatpush1.msra.mxu0 0.0
    %7975 = vmatprep.subr.mxu0 0.0
    %7976 = vmatpush1.msra.mxu0 0.0
    %7977 = vmatprep.subr.mxu0 0.0
    %7978 = vmatpush1.msra.mxu0 0.0
    %7979 = vmatprep.subr.mxu0 0.0
    %7980 = vmatpush1.msra.mxu0 0.0
    %7981 = vmatprep.subr.mxu0 0.0
    %7982 = vmatpush1.msra.mxu0 0.0
    %7983 = vmatprep.subr.mxu0 0.0
    %7984 = vmatpush1.msra.mxu0 0.0
    %7985 = vmatprep.subr.mxu0 0.0
    %7986 = vmatpush1.msra.mxu0 0.0
    %7987 = vmatprep.mubr.f32.mxu0 %v7850
    %7988 = vmatmul.mubr.f32.gmra.mrb[0].mxu0 %v7556
    %v7989 = vpop.f32.mrb[0].mxu0
    %v7990 = vadd.f32 0.0, %v7989
    %v7991 = vpop.f32.mrb[0].mxu0
    %v7992 = vadd.f32 0.0, %v7991
    %7993 = vdwg.mxu0
    %7994 = vmatprep.subr.mxu0 %v7566
    %7995 = vmatpush1.msra.mxu0 %v7565
    %7996 = vmatprep.subr.mxu0 %v7582
    %7997 = vmatpush1.msra.mxu0 %v7581
    %7998 = vmatprep.subr.mxu0 %v7598
    %7999 = vmatpush1.msra.mxu0 %v7597
    %8000 = vmatprep.subr.mxu0 %v7614
    %8001 = vmatpush1.msra.mxu0 %v7613
    %8002 = vmatprep.subr.mxu0 %v7630
    %8003 = vmatpush1.msra.mxu0 %v7629
    %8004 = vmatprep.subr.mxu0 %v7646
    %8005 = vmatpush1.msra.mxu0 %v7645
    %8006 = vmatprep.subr.mxu0 %v7662
    %8007 = vmatpush1.msra.mxu0 %v7661
    %8008 = vmatprep.subr.mxu0 %v7678
    %8009 = vmatpush1.msra.mxu0 %v7677
    %8010 = vmatprep.subr.mxu0 %v7694
    %8011 = vmatpush1.msra.mxu0 %v7693
    %8012 = vmatprep.subr.mxu0 %v7710
    %8013 = vmatpush1.msra.mxu0 %v7709
    %8014 = vmatprep.subr.mxu0 %v7726
    %8015 = vmatpush1.msra.mxu0 %v7725
    %8016 = vmatprep.subr.mxu0 %v7742
    %8017 = vmatpush1.msra.mxu0 %v7741
    %8018 = vmatprep.subr.mxu0 %v7758
    %8019 = vmatpush1.msra.mxu0 %v7757
    %8020 = vmatprep.subr.mxu0 %v7774
    %8021 = vmatpush1.msra.mxu0 %v7773
    %8022 = vmatprep.subr.mxu0 %v7790
    %8023 = vmatpush1.msra.mxu0 %v7789
    %8024 = vmatprep.subr.mxu0 %v7806
    %8025 = vmatpush1.msra.mxu0 %v7805
    %8026 = vmatprep.subr.mxu0 %v7822
    %8027 = vmatpush1.msra.mxu0 %v7821
    %8028 = vmatprep.subr.mxu0 %v7838
    %8029 = vmatpush1.msra.mxu0 %v7837
    %8030 = vmatprep.subr.mxu0 0.0
    %8031 = vmatpush1.msra.mxu0 0.0
    %8032 = vmatprep.subr.mxu0 0.0
    %8033 = vmatpush1.msra.mxu0 0.0
    %8034 = vmatprep.subr.mxu0 0.0
    %8035 = vmatpush1.msra.mxu0 0.0
    %8036 = vmatprep.subr.mxu0 0.0
    %8037 = vmatpush1.msra.mxu0 0.0
    %8038 = vmatprep.subr.mxu0 0.0
    %8039 = vmatpush1.msra.mxu0 0.0
    %8040 = vmatprep.subr.mxu0 0.0
    %8041 = vmatpush1.msra.mxu0 0.0
    %8042 = vmatprep.subr.mxu0 0.0
    %8043 = vmatpush1.msra.mxu0 0.0
    %8044 = vmatprep.subr.mxu0 0.0
    %8045 = vmatpush1.msra.mxu0 0.0
    %8046 = vmatprep.subr.mxu0 0.0
    %8047 = vmatpush1.msra.mxu0 0.0
    %8048 = vmatprep.subr.mxu0 0.0
    %8049 = vmatpush1.msra.mxu0 0.0
    %8050 = vmatprep.subr.mxu0 0.0
    %8051 = vmatpush1.msra.mxu0 0.0
    %8052 = vmatprep.subr.mxu0 0.0
    %8053 = vmatpush1.msra.mxu0 0.0
    %8054 = vmatprep.subr.mxu0 0.0
    %8055 = vmatpush1.msra.mxu0 0.0
    %8056 = vmatprep.subr.mxu0 0.0
    %8057 = vmatpush1.msra.mxu0 0.0
    %8058 = vmatprep.mubr.f32.mxu0 %v7850
    %8059 = vmatmul.mubr.f32.gmra.mrb[0].mxu0 %v7556
    %v8060 = vpop.f32.mrb[0].mxu0
    %v8061 = vadd.f32 0.0, %v8060
    %v8062 = vpop.f32.mrb[0].mxu0
    %v8063 = vadd.f32 0.0, %v8062
    %8064 = vdwg.mxu0
    %8065 = vmatprep.subr.mxu0 %v7568
    %8066 = vmatpush1.msra.mxu0 %v7567
    %8067 = vmatprep.subr.mxu0 %v7584
    %8068 = vmatpush1.msra.mxu0 %v7583
    %8069 = vmatprep.subr.mxu0 %v7600
    %8070 = vmatpush1.msra.mxu0 %v7599
    %8071 = vmatprep.subr.mxu0 %v7616
    %8072 = vmatpush1.msra.mxu0 %v7615
    %8073 = vmatprep.subr.mxu0 %v7632
    %8074 = vmatpush1.msra.mxu0 %v7631
    %8075 = vmatprep.subr.mxu0 %v7648
    %8076 = vmatpush1.msra.mxu0 %v7647
    %8077 = vmatprep.subr.mxu0 %v7664
    %8078 = vmatpush1.msra.mxu0 %v7663
    %8079 = vmatprep.subr.mxu0 %v7680
    %8080 = vmatpush1.msra.mxu0 %v7679
    %8081 = vmatprep.subr.mxu0 %v7696
    %8082 = vmatpush1.msra.mxu0 %v7695
    %8083 = vmatprep.subr.mxu0 %v7712
    %8084 = vmatpush1.msra.mxu0 %v7711
    %8085 = vmatprep.subr.mxu0 %v7728
    %8086 = vmatpush1.msra.mxu0 %v7727
    %8087 = vmatprep.subr.mxu0 %v7744
    %8088 = vmatpush1.msra.mxu0 %v7743
    %8089 = vmatprep.subr.mxu0 %v7760
    %8090 = vmatpush1.msra.mxu0 %v7759
    %8091 = vmatprep.subr.mxu0 %v7776
    %8092 = vmatpush1.msra.mxu0 %v7775
    %8093 = vmatprep.subr.mxu0 %v7792
    %8094 = vmatpush1.msra.mxu0 %v7791
    %8095 = vmatprep.subr.mxu0 %v7808
    %8096 = vmatpush1.msra.mxu0 %v7807
    %8097 = vmatprep.subr.mxu0 %v7824
    %8098 = vmatpush1.msra.mxu0 %v7823
    %8099 = vmatprep.subr.mxu0 %v7840
    %8100 = vmatpush1.msra.mxu0 %v7839
    %8101 = vmatprep.subr.mxu0 0.0
    %8102 = vmatpush1.msra.mxu0 0.0
    %8103 = vmatprep.subr.mxu0 0.0
    %8104 = vmatpush1.msra.mxu0 0.0
    %8105 = vmatprep.subr.mxu0 0.0
    %8106 = vmatpush1.msra.mxu0 0.0
    %8107 = vmatprep.subr.mxu0 0.0
    %8108 = vmatpush1.msra.mxu0 0.0
    %8109 = vmatprep.subr.mxu0 0.0
    %8110 = vmatpush1.msra.mxu0 0.0
    %8111 = vmatprep.subr.mxu0 0.0
    %8112 = vmatpush1.msra.mxu0 0.0
    %8113 = vmatprep.subr.mxu0 0.0
    %8114 = vmatpush1.msra.mxu0 0.0
    %8115 = vmatprep.subr.mxu0 0.0
    %8116 = vmatpush1.msra.mxu0 0.0
    %8117 = vmatprep.subr.mxu0 0.0
    %8118 = vmatpush1.msra.mxu0 0.0
    %8119 = vmatprep.subr.mxu0 0.0
    %8120 = vmatpush1.msra.mxu0 0.0
    %8121 = vmatprep.subr.mxu0 0.0
    %8122 = vmatpush1.msra.mxu0 0.0
    %8123 = vmatprep.subr.mxu0 0.0
    %8124 = vmatpush1.msra.mxu0 0.0
    %8125 = vmatprep.subr.mxu0 0.0
    %8126 = vmatpush1.msra.mxu0 0.0
    %8127 = vmatprep.subr.mxu0 0.0
    %8128 = vmatpush1.msra.mxu0 0.0
    %8129 = vmatprep.mubr.f32.mxu0 %v7850
    %8130 = vmatmul.mubr.f32.gmra.mrb[0].mxu0 %v7556
    %v8131 = vpop.f32.mrb[0].mxu0
    %v8132 = vadd.f32 0.0, %v8131
    %v8133 = vpop.f32.mrb[0].mxu0
    %v8134 = vadd.f32 0.0, %v8133
    %8135 = vdwg.mxu0
    %8136 = vmatprep.subr.mxu0 %v7570
    %8137 = vmatpush1.msra.mxu0 %v7569
    %8138 = vmatprep.subr.mxu0 %v7586
    %8139 = vmatpush1.msra.mxu0 %v7585
    %8140 = vmatprep.subr.mxu0 %v7602
    %8141 = vmatpush1.msra.mxu0 %v7601
    %8142 = vmatprep.subr.mxu0 %v7618
    %8143 = vmatpush1.msra.mxu0 %v7617
    %8144 = vmatprep.subr.mxu0 %v7634
    %8145 = vmatpush1.msra.mxu0 %v7633
    %8146 = vmatprep.subr.mxu0 %v7650
    %8147 = vmatpush1.msra.mxu0 %v7649
    %8148 = vmatprep.subr.mxu0 %v7666
    %8149 = vmatpush1.msra.mxu0 %v7665
    %8150 = vmatprep.subr.mxu0 %v7682
    %8151 = vmatpush1.msra.mxu0 %v7681
    %8152 = vmatprep.subr.mxu0 %v7698
    %8153 = vmatpush1.msra.mxu0 %v7697
    %8154 = vmatprep.subr.mxu0 %v7714
    %8155 = vmatpush1.msra.mxu0 %v7713
    %8156 = vmatprep.subr.mxu0 %v7730
    %8157 = vmatpush1.msra.mxu0 %v7729
    %8158 = vmatprep.subr.mxu0 %v7746
    %8159 = vmatpush1.msra.mxu0 %v7745
    %8160 = vmatprep.subr.mxu0 %v7762
    %8161 = vmatpush1.msra.mxu0 %v7761
    %8162 = vmatprep.subr.mxu0 %v7778
    %8163 = vmatpush1.msra.mxu0 %v7777
    %8164 = vmatprep.subr.mxu0 %v7794
    %8165 = vmatpush1.msra.mxu0 %v7793
    %8166 = vmatprep.subr.mxu0 %v7810
    %8167 = vmatpush1.msra.mxu0 %v7809
    %8168 = vmatprep.subr.mxu0 %v7826
    %8169 = vmatpush1.msra.mxu0 %v7825
    %8170 = vmatprep.subr.mxu0 %v7842
    %8171 = vmatpush1.msra.mxu0 %v7841
    %8172 = vmatprep.subr.mxu0 0.0
    %8173 = vmatpush1.msra.mxu0 0.0
    %8174 = vmatprep.subr.mxu0 0.0
    %8175 = vmatpush1.msra.mxu0 0.0
    %8176 = vmatprep.subr.mxu0 0.0
    %8177 = vmatpush1.msra.mxu0 0.0
    %8178 = vmatprep.subr.mxu0 0.0
    %8179 = vmatpush1.msra.mxu0 0.0
    %8180 = vmatprep.subr.mxu0 0.0
    %8181 = vmatpush1.msra.mxu0 0.0
    %8182 = vmatprep.subr.mxu0 0.0
    %8183 = vmatpush1.msra.mxu0 0.0
    %8184 = vmatprep.subr.mxu0 0.0
    %8185 = vmatpush1.msra.mxu0 0.0
    %8186 = vmatprep.subr.mxu0 0.0
    %8187 = vmatpush1.msra.mxu0 0.0
    %8188 = vmatprep.subr.mxu0 0.0
    %8189 = vmatpush1.msra.mxu0 0.0
    %8190 = vmatprep.subr.mxu0 0.0
    %8191 = vmatpush1.msra.mxu0 0.0
    %8192 = vmatprep.subr.mxu0 0.0
    %8193 = vmatpush1.msra.mxu0 0.0
    %8194 = vmatprep.subr.mxu0 0.0
    %8195 = vmatpush1.msra.mxu0 0.0
    %8196 = vmatprep.subr.mxu0 0.0
    %8197 = vmatpush1.msra.mxu0 0.0
    %8198 = vmatprep.subr.mxu0 0.0
    %8199 = vmatpush1.msra.mxu0 0.0
    %8200 = vmatprep.mubr.f32.mxu0 %v7850
    %8201 = vmatmul.mubr.f32.gmra.mrb[0].mxu0 %v7556
    %v8202 = vpop.f32.mrb[0].mxu0
    %v8203 = vadd.f32 0.0, %v8202
    %v8204 = vpop.f32.mrb[0].mxu0
    %v8205 = vadd.f32 0.0, %v8204
    %8206 = vdwg.mxu0
    %8207 = vmatprep.subr.mxu0 %v7572
    %8208 = vmatpush1.msra.mxu0 %v7571
    %8209 = vmatprep.subr.mxu0 %v7588
    %8210 = vmatpush1.msra.mxu0 %v7587
    %8211 = vmatprep.subr.mxu0 %v7604
    %8212 = vmatpush1.msra.mxu0 %v7603
    %8213 = vmatprep.subr.mxu0 %v7620
    %8214 = vmatpush1.msra.mxu0 %v7619
    %8215 = vmatprep.subr.mxu0 %v7636
    %8216 = vmatpush1.msra.mxu0 %v7635
    %8217 = vmatprep.subr.mxu0 %v7652
    %8218 = vmatpush1.msra.mxu0 %v7651
    %8219 = vmatprep.subr.mxu0 %v7668
    %8220 = vmatpush1.msra.mxu0 %v7667
    %8221 = vmatprep.subr.mxu0 %v7684
    %8222 = vmatpush1.msra.mxu0 %v7683
    %8223 = vmatprep.subr.mxu0 %v7700
    %8224 = vmatpush1.msra.mxu0 %v7699
    %8225 = vmatprep.subr.mxu0 %v7716
    %8226 = vmatpush1.msra.mxu0 %v7715
    %8227 = vmatprep.subr.mxu0 %v7732
    %8228 = vmatpush1.msra.mxu0 %v7731
    %8229 = vmatprep.subr.mxu0 %v7748
    %8230 = vmatpush1.msra.mxu0 %v7747
    %8231 = vmatprep.subr.mxu0 %v7764
    %8232 = vmatpush1.msra.mxu0 %v7763
    %8233 = vmatprep.subr.mxu0 %v7780
    %8234 = vmatpush1.msra.mxu0 %v7779
    %8235 = vmatprep.subr.mxu0 %v7796
    %8236 = vmatpush1.msra.mxu0 %v7795
    %8237 = vmatprep.subr.mxu0 %v7812
    %8238 = vmatpush1.msra.mxu0 %v7811
    %8239 = vmatprep.subr.mxu0 %v7828
    %8240 = vmatpush1.msra.mxu0 %v7827
    %8241 = vmatprep.subr.mxu0 %v7844
    %8242 = vmatpush1.msra.mxu0 %v7843
    %8243 = vmatprep.subr.mxu0 0.0
    %8244 = vmatpush1.msra.mxu0 0.0
    %8245 = vmatprep.subr.mxu0 0.0
    %8246 = vmatpush1.msra.mxu0 0.0
    %8247 = vmatprep.subr.mxu0 0.0
    %8248 = vmatpush1.msra.mxu0 0.0
    %8249 = vmatprep.subr.mxu0 0.0
    %8250 = vmatpush1.msra.mxu0 0.0
    %8251 = vmatprep.subr.mxu0 0.0
    %8252 = vmatpush1.msra.mxu0 0.0
    %8253 = vmatprep.subr.mxu0 0.0
    %8254 = vmatpush1.msra.mxu0 0.0
    %8255 = vmatprep.subr.mxu0 0.0
    %8256 = vmatpush1.msra.mxu0 0.0
    %8257 = vmatprep.subr.mxu0 0.0
    %8258 = vmatpush1.msra.mxu0 0.0
    %8259 = vmatprep.subr.mxu0 0.0
    %8260 = vmatpush1.msra.mxu0 0.0
    %8261 = vmatprep.subr.mxu0 0.0
    %8262 = vmatpush1.msra.mxu0 0.0
    %8263 = vmatprep.subr.mxu0 0.0
    %8264 = vmatpush1.msra.mxu0 0.0
    %8265 = vmatprep.subr.mxu0 0.0
    %8266 = vmatpush1.msra.mxu0 0.0
    %8267 = vmatprep.subr.mxu0 0.0
    %8268 = vmatpush1.msra.mxu0 0.0
    %8269 = vmatprep.subr.mxu0 0.0
    %8270 = vmatpush1.msra.mxu0 0.0
    %8271 = vmatprep.mubr.f32.mxu0 %v7850
    %8272 = vmatmul.mubr.f32.gmra.mrb[0].mxu0 %v7556
    %v8273 = vpop.f32.mrb[0].mxu0
    %v8274 = vadd.f32 0.0, %v8273
    %v8275 = vpop.f32.mrb[0].mxu0
    %v8276 = vadd.f32 0.0, %v8275
    %8277 = vdwg.mxu0
    %8278 = vmatprep.subr.mxu0 %v7574
    %8279 = vmatpush1.msra.mxu0 %v7573
    %8280 = vmatprep.subr.mxu0 %v7590
    %8281 = vmatpush1.msra.mxu0 %v7589
    %8282 = vmatprep.subr.mxu0 %v7606
    %8283 = vmatpush1.msra.mxu0 %v7605
    %8284 = vmatprep.subr.mxu0 %v7622
    %8285 = vmatpush1.msra.mxu0 %v7621
    %8286 = vmatprep.subr.mxu0 %v7638
    %8287 = vmatpush1.msra.mxu0 %v7637
    %8288 = vmatprep.subr.mxu0 %v7654
    %8289 = vmatpush1.msra.mxu0 %v7653
    %8290 = vmatprep.subr.mxu0 %v7670
    %8291 = vmatpush1.msra.mxu0 %v7669
    %8292 = vmatprep.subr.mxu0 %v7686
    %8293 = vmatpush1.msra.mxu0 %v7685
    %8294 = vmatprep.subr.mxu0 %v7702
    %8295 = vmatpush1.msra.mxu0 %v7701
    %8296 = vmatprep.subr.mxu0 %v7718
    %8297 = vmatpush1.msra.mxu0 %v7717
    %8298 = vmatprep.subr.mxu0 %v7734
    %8299 = vmatpush1.msra.mxu0 %v7733
    %8300 = vmatprep.subr.mxu0 %v7750
    %8301 = vmatpush1.msra.mxu0 %v7749
    %8302 = vmatprep.subr.mxu0 %v7766
    %8303 = vmatpush1.msra.mxu0 %v7765
    %8304 = vmatprep.subr.mxu0 %v7782
    %8305 = vmatpush1.msra.mxu0 %v7781
    %8306 = vmatprep.subr.mxu0 %v7798
    %8307 = vmatpush1.msra.mxu0 %v7797
    %8308 = vmatprep.subr.mxu0 %v7814
    %8309 = vmatpush1.msra.mxu0 %v7813
    %8310 = vmatprep.subr.mxu0 %v7830
    %8311 = vmatpush1.msra.mxu0 %v7829
    %8312 = vmatprep.subr.mxu0 %v7846
    %8313 = vmatpush1.msra.mxu0 %v7845
    %8314 = vmatprep.subr.mxu0 0.0
    %8315 = vmatpush1.msra.mxu0 0.0
    %8316 = vmatprep.subr.mxu0 0.0
    %8317 = vmatpush1.msra.mxu0 0.0
    %8318 = vmatprep.subr.mxu0 0.0
    %8319 = vmatpush1.msra.mxu0 0.0
    %8320 = vmatprep.subr.mxu0 0.0
    %8321 = vmatpush1.msra.mxu0 0.0
    %8322 = vmatprep.subr.mxu0 0.0
    %8323 = vmatpush1.msra.mxu0 0.0
    %8324 = vmatprep.subr.mxu0 0.0
    %8325 = vmatpush1.msra.mxu0 0.0
    %8326 = vmatprep.subr.mxu0 0.0
    %8327 = vmatpush1.msra.mxu0 0.0
    %8328 = vmatprep.subr.mxu0 0.0
    %8329 = vmatpush1.msra.mxu0 0.0
    %8330 = vmatprep.subr.mxu0 0.0
    %8331 = vmatpush1.msra.mxu0 0.0
    %8332 = vmatprep.subr.mxu0 0.0
    %8333 = vmatpush1.msra.mxu0 0.0
    %8334 = vmatprep.subr.mxu0 0.0
    %8335 = vmatpush1.msra.mxu0 0.0
    %8336 = vmatprep.subr.mxu0 0.0
    %8337 = vmatpush1.msra.mxu0 0.0
    %8338 = vmatprep.subr.mxu0 0.0
    %8339 = vmatpush1.msra.mxu0 0.0
    %8340 = vmatprep.subr.mxu0 0.0
    %8341 = vmatpush1.msra.mxu0 0.0
    %8342 = vmatprep.mubr.f32.mxu0 %v7850
    %8343 = vmatmul.mubr.f32.gmra.mrb[0].mxu0 %v7556
    %v8344 = vpop.f32.mrb[0].mxu0
    %v8345 = vadd.f32 0.0, %v8344
    %v8346 = vpop.f32.mrb[0].mxu0
    %v8347 = vadd.f32 0.0, %v8346
    %8348 = vdwg.mxu0
    %8349 = vmatprep.subr.mxu0 %v7576
    %8350 = vmatpush1.msra.mxu0 %v7575
    %8351 = vmatprep.subr.mxu0 %v7592
    %8352 = vmatpush1.msra.mxu0 %v7591
    %8353 = vmatprep.subr.mxu0 %v7608
    %8354 = vmatpush1.msra.mxu0 %v7607
    %8355 = vmatprep.subr.mxu0 %v7624
    %8356 = vmatpush1.msra.mxu0 %v7623
    %8357 = vmatprep.subr.mxu0 %v7640
    %8358 = vmatpush1.msra.mxu0 %v7639
    %8359 = vmatprep.subr.mxu0 %v7656
    %8360 = vmatpush1.msra.mxu0 %v7655
    %8361 = vmatprep.subr.mxu0 %v7672
    %8362 = vmatpush1.msra.mxu0 %v7671
    %8363 = vmatprep.subr.mxu0 %v7688
    %8364 = vmatpush1.msra.mxu0 %v7687
    %8365 = vmatprep.subr.mxu0 %v7704
    %8366 = vmatpush1.msra.mxu0 %v7703
    %8367 = vmatprep.subr.mxu0 %v7720
    %8368 = vmatpush1.msra.mxu0 %v7719
    %8369 = vmatprep.subr.mxu0 %v7736
    %8370 = vmatpush1.msra.mxu0 %v7735
    %8371 = vmatprep.subr.mxu0 %v7752
    %8372 = vmatpush1.msra.mxu0 %v7751
    %8373 = vmatprep.subr.mxu0 %v7768
    %8374 = vmatpush1.msra.mxu0 %v7767
    %8375 = vmatprep.subr.mxu0 %v7784
    %8376 = vmatpush1.msra.mxu0 %v7783
    %8377 = vmatprep.subr.mxu0 %v7800
    %8378 = vmatpush1.msra.mxu0 %v7799
    %8379 = vmatprep.subr.mxu0 %v7816
    %8380 = vmatpush1.msra.mxu0 %v7815
    %8381 = vmatprep.subr.mxu0 %v7832
    %8382 = vmatpush1.msra.mxu0 %v7831
    %8383 = vmatprep.subr.mxu0 %v7848
    %8384 = vmatpush1.msra.mxu0 %v7847
    %8385 = vmatprep.subr.mxu0 0.0
    %8386 = vmatpush1.msra.mxu0 0.0
    %8387 = vmatprep.subr.mxu0 0.0
    %8388 = vmatpush1.msra.mxu0 0.0
    %8389 = vmatprep.subr.mxu0 0.0
    %8390 = vmatpush1.msra.mxu0 0.0
    %8391 = vmatprep.subr.mxu0 0.0
    %8392 = vmatpush1.msra.mxu0 0.0
    %8393 = vmatprep.subr.mxu0 0.0
    %8394 = vmatpush1.msra.mxu0 0.0
    %8395 = vmatprep.subr.mxu0 0.0
    %8396 = vmatpush1.msra.mxu0 0.0
    %8397 = vmatprep.subr.mxu0 0.0
    %8398 = vmatpush1.msra.mxu0 0.0
    %8399 = vmatprep.subr.mxu0 0.0
    %8400 = vmatpush1.msra.mxu0 0.0
    %8401 = vmatprep.subr.mxu0 0.0
    %8402 = vmatpush1.msra.mxu0 0.0
    %8403 = vmatprep.subr.mxu0 0.0
    %8404 = vmatpush1.msra.mxu0 0.0
    %8405 = vmatprep.subr.mxu0 0.0
    %8406 = vmatpush1.msra.mxu0 0.0
    %8407 = vmatprep.subr.mxu0 0.0
    %8408 = vmatpush1.msra.mxu0 0.0
    %8409 = vmatprep.subr.mxu0 0.0
    %8410 = vmatpush1.msra.mxu0 0.0
    %8411 = vmatprep.subr.mxu0 0.0
    %8412 = vmatpush1.msra.mxu0 0.0
    %8413 = vmatprep.mubr.f32.mxu0 %v7850
    %8414 = vmatmul.mubr.f32.gmra.mrb[0].mxu0 %v7556
    %v8415 = vpop.f32.mrb[0].mxu0
    %v8416 = vadd.f32 0.0, %v8415
    %v8417 = vpop.f32.mrb[0].mxu0
    %v8418 = vadd.f32 0.0, %v8417
    %8419 = vdwg.mxu0
    %v8420 = vadd.f32 %v7468, %v7919
    %v8421 = vadd.f32 %v7469, %v7921
    %v8422 = vadd.f32 %v7470, %v7990
    %v8423 = vadd.f32 %v7471, %v7992
    %v8424 = vadd.f32 %v7472, %v8061
    %v8425 = vadd.f32 %v7473, %v8063
    %v8426 = vadd.f32 %v7474, %v8132
    %v8427 = vadd.f32 %v7475, %v8134
    %v8428 = vadd.f32 %v7476, %v8203
    %v8429 = vadd.f32 %v7477, %v8205
    %v8430 = vadd.f32 %v7478, %v8274
    %v8431 = vadd.f32 %v7479, %v8276
    %v8432 = vadd.f32 %v7480, %v8345
    %v8433 = vadd.f32 %v7481, %v8347
    %v8434 = vadd.f32 %v7482, %v8416
    %v8435 = vadd.f32 %v7483, %v8418
    %s8436 = scalar_lea.vmem [#allocation13], 10
    %v8437 = vld [vmem:[%s8436] sm:$0x3]
    %v8439 = vsel %vm3588, %v8437, 0
    %8441 = vmatprep.subr.mxu0 %v3582
    %8442 = vmatpush1.msra.mxu0 %v3581
    %8443 = vmatprep.subr.mxu0 %v3597
    %8444 = vmatpush1.msra.mxu0 %v3594
    %8445 = vmatprep.subr.mxu0 0.0
    %8446 = vmatpush1.msra.mxu0 0.0
    %8447 = vmatprep.subr.mxu0 0.0
    %8448 = vmatpush1.msra.mxu0 0.0
    %8449 = vmatprep.subr.mxu0 0.0
    %8450 = vmatpush1.msra.mxu0 0.0
    %8451 = vmatprep.subr.mxu0 0.0
    %8452 = vmatpush1.msra.mxu0 0.0
    %8453 = vmatprep.subr.mxu0 0.0
    %8454 = vmatpush1.msra.mxu0 0.0
    %8455 = vmatprep.subr.mxu0 0.0
    %8456 = vmatpush1.msra.mxu0 0.0
    %8457 = vmatprep.subr.mxu0 0.0
    %8458 = vmatpush1.msra.mxu0 0.0
    %8459 = vmatprep.subr.mxu0 0.0
    %8460 = vmatpush1.msra.mxu0 0.0
    %8461 = vmatprep.subr.mxu0 0.0
    %8462 = vmatpush1.msra.mxu0 0.0
    %8463 = vmatprep.subr.mxu0 0.0
    %8464 = vmatpush1.msra.mxu0 0.0
    %8465 = vmatprep.subr.mxu0 0.0
    %8466 = vmatpush1.msra.mxu0 0.0
    %8467 = vmatprep.subr.mxu0 0.0
    %8468 = vmatpush1.msra.mxu0 0.0
    %8469 = vmatprep.subr.mxu0 0.0
    %8470 = vmatpush1.msra.mxu0 0.0
    %8471 = vmatprep.subr.mxu0 0.0
    %8472 = vmatpush1.msra.mxu0 0.0
    %8473 = vmatprep.subr.mxu0 0.0
    %8474 = vmatpush1.msra.mxu0 0.0
    %8475 = vmatprep.subr.mxu0 0.0
    %8476 = vmatpush1.msra.mxu0 0.0
    %8477 = vmatprep.subr.mxu0 0.0
    %8478 = vmatpush1.msra.mxu0 0.0
    %8479 = vmatprep.subr.mxu0 0.0
    %8480 = vmatpush1.msra.mxu0 0.0
    %8481 = vmatprep.subr.mxu0 0.0
    %8482 = vmatpush1.msra.mxu0 0.0
    %8483 = vmatprep.subr.mxu0 0.0
    %8484 = vmatpush1.msra.mxu0 0.0
    %8485 = vmatprep.subr.mxu0 0.0
    %8486 = vmatpush1.msra.mxu0 0.0
    %8487 = vmatprep.subr.mxu0 0.0
    %8488 = vmatpush1.msra.mxu0 0.0
    %8489 = vmatprep.subr.mxu0 0.0
    %8490 = vmatpush1.msra.mxu0 0.0
    %8491 = vmatprep.subr.mxu0 0.0
    %8492 = vmatpush1.msra.mxu0 0.0
    %8493 = vmatprep.subr.mxu0 0.0
    %8494 = vmatpush1.msra.mxu0 0.0
    %8495 = vmatprep.subr.mxu0 0.0
    %8496 = vmatpush1.msra.mxu0 0.0
    %8497 = vmatprep.subr.mxu0 0.0
    %8498 = vmatpush1.msra.mxu0 0.0
    %8499 = vmatprep.subr.mxu0 0.0
    %8500 = vmatpush1.msra.mxu0 0.0
    %8501 = vmatprep.subr.mxu0 0.0
    %8502 = vmatpush1.msra.mxu0 0.0
    %8503 = vmatprep.subr.mxu0 0.0
    %8504 = vmatpush1.msra.mxu0 0.0
    %8505 = vmatprep.mubr.f32.mxu0 0.0
    %8506 = vmatmul.mubr.f32.gmra.mrb[0].mxu0 %v8439
    %v8507 = vpop.f32.mrb[0].mxu0
    %v8508 = vadd.f32 0.0, %v8507
    %v8509 = vpop.f32.mrb[0].mxu0
    %v8510 = vadd.f32 0.0, %v8509
    %8511 = vdwg.mxu0
    %s8512 = scalar_lea.vmem [#allocation14], 11520
    %v8513 = vld [vmem:[%s8512] sm:$0xff]
    %v8514 = vld [vmem:[%s8512 + $0x8] sm:$0xff]
    %v8515 = vld [vmem:[%s8512 + $0x10] sm:$0xff]
    %v8516 = vld [vmem:[%s8512 + $0x18] sm:$0xff]
    %v8517 = vld [vmem:[%s8512 + $0x20] sm:$0xff]
    %v8518 = vld [vmem:[%s8512 + $0x28] sm:$0xff]
    %v8519 = vld [vmem:[%s8512 + $0x30] sm:$0xff]
    %v8520 = vld [vmem:[%s8512 + $0x38] sm:$0xff]
    %v8521 = vld [vmem:[%s8512 + $0x40] sm:$0xff]
    %v8522 = vld [vmem:[%s8512 + $0x48] sm:$0xff]
    %v8523 = vld [vmem:[%s8512 + $0x50] sm:$0xff]
    %v8524 = vld [vmem:[%s8512 + $0x58] sm:$0xff]
    %v8525 = vld [vmem:[%s8512 + $0x60] sm:$0xff]
    %v8526 = vld [vmem:[%s8512 + $0x68] sm:$0xff]
    %v8527 = vld [vmem:[%s8512 + $0x70] sm:$0xff]
    %v8528 = vld [vmem:[%s8512 + $0x78] sm:$0xff]
    %v8529 = vld [vmem:[%s8512 + $0x80] sm:$0xff]
    %v8530 = vld [vmem:[%s8512 + $0x88] sm:$0xff]
    %v8531 = vld [vmem:[%s8512 + $0x90] sm:$0xff]
    %v8532 = vld [vmem:[%s8512 + $0x98] sm:$0xff]
    %v8533 = vld [vmem:[%s8512 + $0xa0] sm:$0xff]
    %v8534 = vld [vmem:[%s8512 + $0xa8] sm:$0xff]
    %v8535 = vld [vmem:[%s8512 + $0xb0] sm:$0xff]
    %v8536 = vld [vmem:[%s8512 + $0xb8] sm:$0xff]
    %v8537 = vld [vmem:[%s8512 + $0xc0] sm:$0xff]
    %v8538 = vld [vmem:[%s8512 + $0xc8] sm:$0xff]
    %v8539 = vld [vmem:[%s8512 + $0xd0] sm:$0xff]
    %v8540 = vld [vmem:[%s8512 + $0xd8] sm:$0xff]
    %v8541 = vld [vmem:[%s8512 + $0xe0] sm:$0xff]
    %v8542 = vld [vmem:[%s8512 + $0xe8] sm:$0xff]
    %v8543 = vld [vmem:[%s8512 + $0xf0] sm:$0xff]
    %v8544 = vld [vmem:[%s8512 + $0xf8] sm:$0xff]
    %v8545 = vld [vmem:[%s8512 + $0x100] sm:$0xff]
    %v8546 = vld [vmem:[%s8512 + $0x108] sm:$0xff]
    %v8547 = vld [vmem:[%s8512 + $0x110] sm:$0xff]
    %v8548 = vld [vmem:[%s8512 + $0x118] sm:$0xff]
    %v8549 = vld [vmem:[%s8512 + $0x120] sm:$0xff]
    %v8550 = vld [vmem:[%s8512 + $0x128] sm:$0xff]
    %v8551 = vld [vmem:[%s8512 + $0x130] sm:$0xff]
    %v8552 = vld [vmem:[%s8512 + $0x138] sm:$0xff]
    %v8553 = vld [vmem:[%s8512 + $0x140] sm:$0xff]
    %v8554 = vld [vmem:[%s8512 + $0x148] sm:$0xff]
    %v8555 = vld [vmem:[%s8512 + $0x150] sm:$0xff]
    %v8556 = vld [vmem:[%s8512 + $0x158] sm:$0xff]
    %v8557 = vld [vmem:[%s8512 + $0x160] sm:$0xff]
    %v8558 = vld [vmem:[%s8512 + $0x168] sm:$0xff]
    %v8559 = vld [vmem:[%s8512 + $0x170] sm:$0xff]
    %v8560 = vld [vmem:[%s8512 + $0x178] sm:$0xff]
    %v8561 = vld [vmem:[%s8512 + $0x180] sm:$0xff]
    %v8562 = vld [vmem:[%s8512 + $0x188] sm:$0xff]
    %v8563 = vld [vmem:[%s8512 + $0x190] sm:$0xff]
    %v8564 = vld [vmem:[%s8512 + $0x198] sm:$0xff]
    %v8565 = vld [vmem:[%s8512 + $0x1a0] sm:$0xff]
    %v8566 = vld [vmem:[%s8512 + $0x1a8] sm:$0xff]
    %v8567 = vld [vmem:[%s8512 + $0x1b0] sm:$0xff]
    %v8568 = vld [vmem:[%s8512 + $0x1b8] sm:$0xff]
    %v8569 = vld [vmem:[%s8512 + $0x1c0] sm:$0xff]
    %v8570 = vld [vmem:[%s8512 + $0x1c8] sm:$0xff]
    %v8571 = vld [vmem:[%s8512 + $0x1d0] sm:$0xff]
    %v8572 = vld [vmem:[%s8512 + $0x1d8] sm:$0xff]
    %v8573 = vld [vmem:[%s8512 + $0x1e0] sm:$0xff]
    %v8574 = vld [vmem:[%s8512 + $0x1e8] sm:$0xff]
    %v8575 = vld [vmem:[%s8512 + $0x1f0] sm:$0xff]
    %v8576 = vld [vmem:[%s8512 + $0x1f8] sm:$0xff]
    %v8577 = vld [vmem:[%s8512 + $0x200] sm:$0xff]
    %v8578 = vld [vmem:[%s8512 + $0x208] sm:$0xff]
    %v8579 = vld [vmem:[%s8512 + $0x210] sm:$0xff]
    %v8580 = vld [vmem:[%s8512 + $0x218] sm:$0xff]
    %v8581 = vld [vmem:[%s8512 + $0x220] sm:$0xff]
    %v8582 = vld [vmem:[%s8512 + $0x228] sm:$0xff]
    %v8583 = vld [vmem:[%s8512 + $0x230] sm:$0xff]
    %v8584 = vld [vmem:[%s8512 + $0x238] sm:$0xff]
    %v8585 = vld [vmem:[%s8512 + $0x240] sm:$0xff]
    %v8586 = vld [vmem:[%s8512 + $0x248] sm:$0xff]
    %v8587 = vld [vmem:[%s8512 + $0x250] sm:$0xff]
    %v8588 = vld [vmem:[%s8512 + $0x258] sm:$0xff]
    %v8589 = vld [vmem:[%s8512 + $0x260] sm:$0xff]
    %v8590 = vld [vmem:[%s8512 + $0x268] sm:$0xff]
    %v8591 = vld [vmem:[%s8512 + $0x270] sm:$0xff]
    %v8592 = vld [vmem:[%s8512 + $0x278] sm:$0xff]
    %v8593 = vld [vmem:[%s8512 + $0x280] sm:$0xff]
    %v8594 = vld [vmem:[%s8512 + $0x288] sm:$0xff]
    %v8595 = vld [vmem:[%s8512 + $0x290] sm:$0xff]
    %v8596 = vld [vmem:[%s8512 + $0x298] sm:$0xff]
    %v8597 = vld [vmem:[%s8512 + $0x2a0] sm:$0xff]
    %v8598 = vld [vmem:[%s8512 + $0x2a8] sm:$0xff]
    %v8599 = vld [vmem:[%s8512 + $0x2b0] sm:$0xff]
    %v8600 = vld [vmem:[%s8512 + $0x2b8] sm:$0xff]
    %v8601 = vld [vmem:[%s8512 + $0x2c0] sm:$0xff]
    %v8602 = vld [vmem:[%s8512 + $0x2c8] sm:$0xff]
    %v8603 = vld [vmem:[%s8512 + $0x2d0] sm:$0xff]
    %v8604 = vld [vmem:[%s8512 + $0x2d8] sm:$0xff]
    %v8605 = vld [vmem:[%s8512 + $0x2e0] sm:$0xff]
    %v8606 = vld [vmem:[%s8512 + $0x2e8] sm:$0xff]
    %v8607 = vld [vmem:[%s8512 + $0x2f0] sm:$0xff]
    %v8608 = vld [vmem:[%s8512 + $0x2f8] sm:$0xff]
    %v8609 = vld [vmem:[%s8512 + $0x300] sm:$0xff]
    %v8610 = vld [vmem:[%s8512 + $0x308] sm:$0xff]
    %v8611 = vld [vmem:[%s8512 + $0x310] sm:$0xff]
    %v8612 = vld [vmem:[%s8512 + $0x318] sm:$0xff]
    %v8613 = vld [vmem:[%s8512 + $0x320] sm:$0xff]
    %v8614 = vld [vmem:[%s8512 + $0x328] sm:$0xff]
    %v8615 = vld [vmem:[%s8512 + $0x330] sm:$0xff]
    %v8616 = vld [vmem:[%s8512 + $0x338] sm:$0xff]
    %v8617 = vld [vmem:[%s8512 + $0x340] sm:$0xff]
    %v8618 = vld [vmem:[%s8512 + $0x348] sm:$0xff]
    %v8619 = vld [vmem:[%s8512 + $0x350] sm:$0xff]
    %v8620 = vld [vmem:[%s8512 + $0x358] sm:$0xff]
    %v8621 = vld [vmem:[%s8512 + $0x360] sm:$0xff]
    %v8622 = vld [vmem:[%s8512 + $0x368] sm:$0xff]
    %v8623 = vld [vmem:[%s8512 + $0x370] sm:$0xff]
    %v8624 = vld [vmem:[%s8512 + $0x378] sm:$0xff]
    %v8625 = vld [vmem:[%s8512 + $0x380] sm:$0xff]
    %v8626 = vld [vmem:[%s8512 + $0x388] sm:$0xff]
    %v8627 = vld [vmem:[%s8512 + $0x390] sm:$0xff]
    %v8628 = vld [vmem:[%s8512 + $0x398] sm:$0xff]
    %v8629 = vld [vmem:[%s8512 + $0x3a0] sm:$0xff]
    %v8630 = vld [vmem:[%s8512 + $0x3a8] sm:$0xff]
    %v8631 = vld [vmem:[%s8512 + $0x3b0] sm:$0xff]
    %v8632 = vld [vmem:[%s8512 + $0x3b8] sm:$0xff]
    %v8633 = vld [vmem:[%s8512 + $0x3c0] sm:$0xff]
    %v8634 = vld [vmem:[%s8512 + $0x3c8] sm:$0xff]
    %v8635 = vld [vmem:[%s8512 + $0x3d0] sm:$0xff]
    %v8636 = vld [vmem:[%s8512 + $0x3d8] sm:$0xff]
    %v8637 = vld [vmem:[%s8512 + $0x3e0] sm:$0xff]
    %v8638 = vld [vmem:[%s8512 + $0x3e8] sm:$0xff]
    %v8639 = vld [vmem:[%s8512 + $0x3f0] sm:$0xff]
    %v8640 = vld [vmem:[%s8512 + $0x3f8] sm:$0xff]
    %v8641 = vld [vmem:[%s8512 + $0x400] sm:$0xff]
    %v8642 = vld [vmem:[%s8512 + $0x408] sm:$0xff]
    %v8643 = vld [vmem:[%s8512 + $0x410] sm:$0xff]
    %v8644 = vld [vmem:[%s8512 + $0x418] sm:$0xff]
    %v8645 = vld [vmem:[%s8512 + $0x420] sm:$0xff]
    %v8646 = vld [vmem:[%s8512 + $0x428] sm:$0xff]
    %v8647 = vld [vmem:[%s8512 + $0x430] sm:$0xff]
    %v8648 = vld [vmem:[%s8512 + $0x438] sm:$0xff]
    %v8649 = vld [vmem:[%s8512 + $0x440] sm:$0xff]
    %v8650 = vld [vmem:[%s8512 + $0x448] sm:$0xff]
    %v8651 = vld [vmem:[%s8512 + $0x450] sm:$0xff]
    %v8652 = vld [vmem:[%s8512 + $0x458] sm:$0xff]
    %v8653 = vld [vmem:[%s8512 + $0x460] sm:$0xff]
    %v8654 = vld [vmem:[%s8512 + $0x468] sm:$0xff]
    %v8655 = vld [vmem:[%s8512 + $0x470] sm:$0xff]
    %v8656 = vld [vmem:[%s8512 + $0x478] sm:$0xff]
    %v8657 = vld [vmem:[%s8512 + $0x480] sm:$0xff]
    %v8658 = vld [vmem:[%s8512 + $0x488] sm:$0xff]
    %v8659 = vld [vmem:[%s8512 + $0x490] sm:$0xff]
    %v8660 = vld [vmem:[%s8512 + $0x498] sm:$0xff]
    %v8661 = vld [vmem:[%s8512 + $0x4a0] sm:$0xff]
    %v8662 = vld [vmem:[%s8512 + $0x4a8] sm:$0xff]
    %v8663 = vld [vmem:[%s8512 + $0x4b0] sm:$0xff]
    %v8664 = vld [vmem:[%s8512 + $0x4b8] sm:$0xff]
    %v8665 = vld [vmem:[%s8512 + $0x4c0] sm:$0xff]
    %v8666 = vld [vmem:[%s8512 + $0x4c8] sm:$0xff]
    %v8667 = vld [vmem:[%s8512 + $0x4d0] sm:$0xff]
    %v8668 = vld [vmem:[%s8512 + $0x4d8] sm:$0xff]
    %v8669 = vld [vmem:[%s8512 + $0x4e0] sm:$0xff]
    %v8670 = vld [vmem:[%s8512 + $0x4e8] sm:$0xff]
    %v8671 = vld [vmem:[%s8512 + $0x4f0] sm:$0xff]
    %v8672 = vld [vmem:[%s8512 + $0x4f8] sm:$0xff]
    %v8673 = vld [vmem:[%s8512 + $0x500] sm:$0xff]
    %v8674 = vld [vmem:[%s8512 + $0x508] sm:$0xff]
    %v8675 = vld [vmem:[%s8512 + $0x510] sm:$0xff]
    %v8676 = vld [vmem:[%s8512 + $0x518] sm:$0xff]
    %v8677 = vld [vmem:[%s8512 + $0x520] sm:$0xff]
    %v8678 = vld [vmem:[%s8512 + $0x528] sm:$0xff]
    %v8679 = vld [vmem:[%s8512 + $0x530] sm:$0xff]
    %v8680 = vld [vmem:[%s8512 + $0x538] sm:$0xff]
    %v8681 = vld [vmem:[%s8512 + $0x540] sm:$0xff]
    %v8682 = vld [vmem:[%s8512 + $0x548] sm:$0xff]
    %v8683 = vld [vmem:[%s8512 + $0x550] sm:$0xff]
    %v8684 = vld [vmem:[%s8512 + $0x558] sm:$0xff]
    %v8685 = vld [vmem:[%s8512 + $0x560] sm:$0xff]
    %v8686 = vld [vmem:[%s8512 + $0x568] sm:$0xff]
    %v8687 = vld [vmem:[%s8512 + $0x570] sm:$0xff]
    %v8688 = vld [vmem:[%s8512 + $0x578] sm:$0xff]
    %v8689 = vld [vmem:[%s8512 + $0x580] sm:$0xff]
    %v8690 = vld [vmem:[%s8512 + $0x588] sm:$0xff]
    %v8691 = vld [vmem:[%s8512 + $0x590] sm:$0xff]
    %v8692 = vld [vmem:[%s8512 + $0x598] sm:$0xff]
    %v8693 = vld [vmem:[%s8512 + $0x5a0] sm:$0xff]
    %v8694 = vld [vmem:[%s8512 + $0x5a8] sm:$0xff]
    %v8695 = vld [vmem:[%s8512 + $0x5b0] sm:$0xff]
    %v8696 = vld [vmem:[%s8512 + $0x5b8] sm:$0xff]
    %v8697 = vld [vmem:[%s8512 + $0x5c0] sm:$0xff]
    %v8698 = vld [vmem:[%s8512 + $0x5c8] sm:$0xff]
    %v8699 = vld [vmem:[%s8512 + $0x5d0] sm:$0xff]
    %v8700 = vld [vmem:[%s8512 + $0x5d8] sm:$0xff]
    %v8701 = vld [vmem:[%s8512 + $0x5e0] sm:$0xff]
    %v8702 = vld [vmem:[%s8512 + $0x5e8] sm:$0xff]
    %v8703 = vld [vmem:[%s8512 + $0x5f0] sm:$0xff]
    %v8704 = vld [vmem:[%s8512 + $0x5f8] sm:$0xff]
    %v8705 = vld [vmem:[%s8512 + $0x600] sm:$0xff]
    %v8706 = vld [vmem:[%s8512 + $0x608] sm:$0xff]
    %v8707 = vld [vmem:[%s8512 + $0x610] sm:$0xff]
    %v8708 = vld [vmem:[%s8512 + $0x618] sm:$0xff]
    %v8709 = vld [vmem:[%s8512 + $0x620] sm:$0xff]
    %v8710 = vld [vmem:[%s8512 + $0x628] sm:$0xff]
    %v8711 = vld [vmem:[%s8512 + $0x630] sm:$0xff]
    %v8712 = vld [vmem:[%s8512 + $0x638] sm:$0xff]
    %v8713 = vld [vmem:[%s8512 + $0x640] sm:$0xff]
    %v8714 = vld [vmem:[%s8512 + $0x648] sm:$0xff]
    %v8715 = vld [vmem:[%s8512 + $0x650] sm:$0xff]
    %v8716 = vld [vmem:[%s8512 + $0x658] sm:$0xff]
    %v8717 = vld [vmem:[%s8512 + $0x660] sm:$0xff]
    %v8718 = vld [vmem:[%s8512 + $0x668] sm:$0xff]
    %v8719 = vld [vmem:[%s8512 + $0x670] sm:$0xff]
    %v8720 = vld [vmem:[%s8512 + $0x678] sm:$0xff]
    %v8721 = vld [vmem:[%s8512 + $0x680] sm:$0xff]
    %v8722 = vld [vmem:[%s8512 + $0x688] sm:$0xff]
    %v8723 = vld [vmem:[%s8512 + $0x690] sm:$0xff]
    %v8724 = vld [vmem:[%s8512 + $0x698] sm:$0xff]
    %v8725 = vld [vmem:[%s8512 + $0x6a0] sm:$0xff]
    %v8726 = vld [vmem:[%s8512 + $0x6a8] sm:$0xff]
    %v8727 = vld [vmem:[%s8512 + $0x6b0] sm:$0xff]
    %v8728 = vld [vmem:[%s8512 + $0x6b8] sm:$0xff]
    %v8729 = vld [vmem:[%s8512 + $0x6c0] sm:$0xff]
    %v8730 = vld [vmem:[%s8512 + $0x6c8] sm:$0xff]
    %v8731 = vld [vmem:[%s8512 + $0x6d0] sm:$0xff]
    %v8732 = vld [vmem:[%s8512 + $0x6d8] sm:$0xff]
    %v8733 = vld [vmem:[%s8512 + $0x6e0] sm:$0xff]
    %v8734 = vld [vmem:[%s8512 + $0x6e8] sm:$0xff]
    %v8735 = vld [vmem:[%s8512 + $0x6f0] sm:$0xff]
    %v8736 = vld [vmem:[%s8512 + $0x6f8] sm:$0xff]
    %v8737 = vld [vmem:[%s8512 + $0x700] sm:$0xff]
    %v8738 = vld [vmem:[%s8512 + $0x708] sm:$0xff]
    %v8739 = vld [vmem:[%s8512 + $0x710] sm:$0xff]
    %v8740 = vld [vmem:[%s8512 + $0x718] sm:$0xff]
    %v8741 = vld [vmem:[%s8512 + $0x720] sm:$0xff]
    %v8742 = vld [vmem:[%s8512 + $0x728] sm:$0xff]
    %v8743 = vld [vmem:[%s8512 + $0x730] sm:$0xff]
    %v8744 = vld [vmem:[%s8512 + $0x738] sm:$0xff]
    %v8745 = vld [vmem:[%s8512 + $0x740] sm:$0xff]
    %v8746 = vld [vmem:[%s8512 + $0x748] sm:$0xff]
    %v8747 = vld [vmem:[%s8512 + $0x750] sm:$0xff]
    %v8748 = vld [vmem:[%s8512 + $0x758] sm:$0xff]
    %v8749 = vld [vmem:[%s8512 + $0x760] sm:$0xff]
    %v8750 = vld [vmem:[%s8512 + $0x768] sm:$0xff]
    %v8751 = vld [vmem:[%s8512 + $0x770] sm:$0xff]
    %v8752 = vld [vmem:[%s8512 + $0x778] sm:$0xff]
    %v8753 = vld [vmem:[%s8512 + $0x780] sm:$0xff]
    %v8754 = vld [vmem:[%s8512 + $0x788] sm:$0xff]
    %v8755 = vld [vmem:[%s8512 + $0x790] sm:$0xff]
    %v8756 = vld [vmem:[%s8512 + $0x798] sm:$0xff]
    %v8757 = vld [vmem:[%s8512 + $0x7a0] sm:$0xff]
    %v8758 = vld [vmem:[%s8512 + $0x7a8] sm:$0xff]
    %v8759 = vld [vmem:[%s8512 + $0x7b0] sm:$0xff]
    %v8760 = vld [vmem:[%s8512 + $0x7b8] sm:$0xff]
    %v8761 = vld [vmem:[%s8512 + $0x7c0] sm:$0xff]
    %v8762 = vld [vmem:[%s8512 + $0x7c8] sm:$0xff]
    %v8763 = vld [vmem:[%s8512 + $0x7d0] sm:$0xff]
    %v8764 = vld [vmem:[%s8512 + $0x7d8] sm:$0xff]
    %v8765 = vld [vmem:[%s8512 + $0x7e0] sm:$0xff]
    %v8766 = vld [vmem:[%s8512 + $0x7e8] sm:$0xff]
    %v8767 = vld [vmem:[%s8512 + $0x7f0] sm:$0xff]
    %v8768 = vld [vmem:[%s8512 + $0x7f8] sm:$0xff]
    %v8769 = vld [vmem:[%s8512 + $0x800] sm:$0xff]
    %v8770 = vld [vmem:[%s8512 + $0x808] sm:$0xff]
    %v8771 = vld [vmem:[%s8512 + $0x810] sm:$0xff]
    %v8772 = vld [vmem:[%s8512 + $0x818] sm:$0xff]
    %v8773 = vld [vmem:[%s8512 + $0x820] sm:$0xff]
    %v8774 = vld [vmem:[%s8512 + $0x828] sm:$0xff]
    %v8775 = vld [vmem:[%s8512 + $0x830] sm:$0xff]
    %v8776 = vld [vmem:[%s8512 + $0x838] sm:$0xff]
    %v8777 = vld [vmem:[%s8512 + $0x840] sm:$0xff]
    %v8778 = vld [vmem:[%s8512 + $0x848] sm:$0xff]
    %v8779 = vld [vmem:[%s8512 + $0x850] sm:$0xff]
    %v8780 = vld [vmem:[%s8512 + $0x858] sm:$0xff]
    %v8781 = vld [vmem:[%s8512 + $0x860] sm:$0xff]
    %v8782 = vld [vmem:[%s8512 + $0x868] sm:$0xff]
    %v8783 = vld [vmem:[%s8512 + $0x870] sm:$0xff]
    %v8784 = vld [vmem:[%s8512 + $0x878] sm:$0xff]
    %v8785 = vld [vmem:[%s8512 + $0x880] sm:$0xff]
    %v8786 = vld [vmem:[%s8512 + $0x888] sm:$0xff]
    %v8787 = vld [vmem:[%s8512 + $0x890] sm:$0xff]
    %v8788 = vld [vmem:[%s8512 + $0x898] sm:$0xff]
    %v8789 = vld [vmem:[%s8512 + $0x8a0] sm:$0xff]
    %v8790 = vld [vmem:[%s8512 + $0x8a8] sm:$0xff]
    %v8791 = vld [vmem:[%s8512 + $0x8b0] sm:$0xff]
    %v8792 = vld [vmem:[%s8512 + $0x8b8] sm:$0xff]
    %v8793 = vld [vmem:[%s8512 + $0x8c0] sm:$0xff]
    %v8794 = vld [vmem:[%s8512 + $0x8c8] sm:$0xff]
    %v8795 = vld [vmem:[%s8512 + $0x8d0] sm:$0xff]
    %v8796 = vld [vmem:[%s8512 + $0x8d8] sm:$0xff]
    %v8797 = vld [vmem:[%s8512 + $0x8e0] sm:$0xff]
    %v8798 = vld [vmem:[%s8512 + $0x8e8] sm:$0xff]
    %v8799 = vld [vmem:[%s8512 + $0x8f0] sm:$0xff]
    %v8800 = vld [vmem:[%s8512 + $0x8f8] sm:$0xff]
    %v8802 = vsel %vm3958, %v8510, 0
    %8804 = vmatprep.subr.mxu0 %v8514
    %8805 = vmatpush1.msra.mxu0 %v8513
    %8806 = vmatprep.subr.mxu0 %v8530
    %8807 = vmatpush1.msra.mxu0 %v8529
    %8808 = vmatprep.subr.mxu0 %v8546
    %8809 = vmatpush1.msra.mxu0 %v8545
    %8810 = vmatprep.subr.mxu0 %v8562
    %8811 = vmatpush1.msra.mxu0 %v8561
    %8812 = vmatprep.subr.mxu0 %v8578
    %8813 = vmatpush1.msra.mxu0 %v8577
    %8814 = vmatprep.subr.mxu0 %v8594
    %8815 = vmatpush1.msra.mxu0 %v8593
    %8816 = vmatprep.subr.mxu0 %v8610
    %8817 = vmatpush1.msra.mxu0 %v8609
    %8818 = vmatprep.subr.mxu0 %v8626
    %8819 = vmatpush1.msra.mxu0 %v8625
    %8820 = vmatprep.subr.mxu0 %v8642
    %8821 = vmatpush1.msra.mxu0 %v8641
    %8822 = vmatprep.subr.mxu0 %v8658
    %8823 = vmatpush1.msra.mxu0 %v8657
    %8824 = vmatprep.subr.mxu0 %v8674
    %8825 = vmatpush1.msra.mxu0 %v8673
    %8826 = vmatprep.subr.mxu0 %v8690
    %8827 = vmatpush1.msra.mxu0 %v8689
    %8828 = vmatprep.subr.mxu0 %v8706
    %8829 = vmatpush1.msra.mxu0 %v8705
    %8830 = vmatprep.subr.mxu0 %v8722
    %8831 = vmatpush1.msra.mxu0 %v8721
    %8832 = vmatprep.subr.mxu0 %v8738
    %8833 = vmatpush1.msra.mxu0 %v8737
    %8834 = vmatprep.subr.mxu0 %v8754
    %8835 = vmatpush1.msra.mxu0 %v8753
    %8836 = vmatprep.subr.mxu0 %v8770
    %8837 = vmatpush1.msra.mxu0 %v8769
    %8838 = vmatprep.subr.mxu0 %v8786
    %8839 = vmatpush1.msra.mxu0 %v8785
    %8840 = vmatprep.subr.mxu0 0.0
    %8841 = vmatpush1.msra.mxu0 0.0
    %8842 = vmatprep.subr.mxu0 0.0
    %8843 = vmatpush1.msra.mxu0 0.0
    %8844 = vmatprep.subr.mxu0 0.0
    %8845 = vmatpush1.msra.mxu0 0.0
    %8846 = vmatprep.subr.mxu0 0.0
    %8847 = vmatpush1.msra.mxu0 0.0
    %8848 = vmatprep.subr.mxu0 0.0
    %8849 = vmatpush1.msra.mxu0 0.0
    %8850 = vmatprep.subr.mxu0 0.0
    %8851 = vmatpush1.msra.mxu0 0.0
    %8852 = vmatprep.subr.mxu0 0.0
    %8853 = vmatpush1.msra.mxu0 0.0
    %8854 = vmatprep.subr.mxu0 0.0
    %8855 = vmatpush1.msra.mxu0 0.0
    %8856 = vmatprep.subr.mxu0 0.0
    %8857 = vmatpush1.msra.mxu0 0.0
    %8858 = vmatprep.subr.mxu0 0.0
    %8859 = vmatpush1.msra.mxu0 0.0
    %8860 = vmatprep.subr.mxu0 0.0
    %8861 = vmatpush1.msra.mxu0 0.0
    %8862 = vmatprep.subr.mxu0 0.0
    %8863 = vmatpush1.msra.mxu0 0.0
    %8864 = vmatprep.subr.mxu0 0.0
    %8865 = vmatpush1.msra.mxu0 0.0
    %8866 = vmatprep.subr.mxu0 0.0
    %8867 = vmatpush1.msra.mxu0 0.0
    %8868 = vmatprep.mubr.f32.mxu0 %v8802
    %8869 = vmatmul.mubr.f32.gmra.mrb[0].mxu0 %v8508
    %v8870 = vpop.f32.mrb[0].mxu0
    %v8871 = vadd.f32 0.0, %v8870
    %v8872 = vpop.f32.mrb[0].mxu0
    %v8873 = vadd.f32 0.0, %v8872
    %8874 = vdwg.mxu0
    %8875 = vmatprep.subr.mxu0 %v8516
    %8876 = vmatpush1.msra.mxu0 %v8515
    %8877 = vmatprep.subr.mxu0 %v8532
    %8878 = vmatpush1.msra.mxu0 %v8531
    %8879 = vmatprep.subr.mxu0 %v8548
    %8880 = vmatpush1.msra.mxu0 %v8547
    %8881 = vmatprep.subr.mxu0 %v8564
    %8882 = vmatpush1.msra.mxu0 %v8563
    %8883 = vmatprep.subr.mxu0 %v8580
    %8884 = vmatpush1.msra.mxu0 %v8579
    %8885 = vmatprep.subr.mxu0 %v8596
    %8886 = vmatpush1.msra.mxu0 %v8595
    %8887 = vmatprep.subr.mxu0 %v8612
    %8888 = vmatpush1.msra.mxu0 %v8611
    %8889 = vmatprep.subr.mxu0 %v8628
    %8890 = vmatpush1.msra.mxu0 %v8627
    %8891 = vmatprep.subr.mxu0 %v8644
    %8892 = vmatpush1.msra.mxu0 %v8643
    %8893 = vmatprep.subr.mxu0 %v8660
    %8894 = vmatpush1.msra.mxu0 %v8659
    %8895 = vmatprep.subr.mxu0 %v8676
    %8896 = vmatpush1.msra.mxu0 %v8675
    %8897 = vmatprep.subr.mxu0 %v8692
    %8898 = vmatpush1.msra.mxu0 %v8691
    %8899 = vmatprep.subr.mxu0 %v8708
    %8900 = vmatpush1.msra.mxu0 %v8707
    %8901 = vmatprep.subr.mxu0 %v8724
    %8902 = vmatpush1.msra.mxu0 %v8723
    %8903 = vmatprep.subr.mxu0 %v8740
    %8904 = vmatpush1.msra.mxu0 %v8739
    %8905 = vmatprep.subr.mxu0 %v8756
    %8906 = vmatpush1.msra.mxu0 %v8755
    %8907 = vmatprep.subr.mxu0 %v8772
    %8908 = vmatpush1.msra.mxu0 %v8771
    %8909 = vmatprep.subr.mxu0 %v8788
    %8910 = vmatpush1.msra.mxu0 %v8787
    %8911 = vmatprep.subr.mxu0 0.0
    %8912 = vmatpush1.msra.mxu0 0.0
    %8913 = vmatprep.subr.mxu0 0.0
    %8914 = vmatpush1.msra.mxu0 0.0
    %8915 = vmatprep.subr.mxu0 0.0
    %8916 = vmatpush1.msra.mxu0 0.0
    %8917 = vmatprep.subr.mxu0 0.0
    %8918 = vmatpush1.msra.mxu0 0.0
    %8919 = vmatprep.subr.mxu0 0.0
    %8920 = vmatpush1.msra.mxu0 0.0
    %8921 = vmatprep.subr.mxu0 0.0
    %8922 = vmatpush1.msra.mxu0 0.0
    %8923 = vmatprep.subr.mxu0 0.0
    %8924 = vmatpush1.msra.mxu0 0.0
    %8925 = vmatprep.subr.mxu0 0.0
    %8926 = vmatpush1.msra.mxu0 0.0
    %8927 = vmatprep.subr.mxu0 0.0
    %8928 = vmatpush1.msra.mxu0 0.0
    %8929 = vmatprep.subr.mxu0 0.0
    %8930 = vmatpush1.msra.mxu0 0.0
    %8931 = vmatprep.subr.mxu0 0.0
    %8932 = vmatpush1.msra.mxu0 0.0
    %8933 = vmatprep.subr.mxu0 0.0
    %8934 = vmatpush1.msra.mxu0 0.0
    %8935 = vmatprep.subr.mxu0 0.0
    %8936 = vmatpush1.msra.mxu0 0.0
    %8937 = vmatprep.subr.mxu0 0.0
    %8938 = vmatpush1.msra.mxu0 0.0
    %8939 = vmatprep.mubr.f32.mxu0 %v8802
    %8940 = vmatmul.mubr.f32.gmra.mrb[0].mxu0 %v8508
    %v8941 = vpop.f32.mrb[0].mxu0
    %v8942 = vadd.f32 0.0, %v8941
    %v8943 = vpop.f32.mrb[0].mxu0
    %v8944 = vadd.f32 0.0, %v8943
    %8945 = vdwg.mxu0
    %8946 = vmatprep.subr.mxu0 %v8518
    %8947 = vmatpush1.msra.mxu0 %v8517
    %8948 = vmatprep.subr.mxu0 %v8534
    %8949 = vmatpush1.msra.mxu0 %v8533
    %8950 = vmatprep.subr.mxu0 %v8550
    %8951 = vmatpush1.msra.mxu0 %v8549
    %8952 = vmatprep.subr.mxu0 %v8566
    %8953 = vmatpush1.msra.mxu0 %v8565
    %8954 = vmatprep.subr.mxu0 %v8582
    %8955 = vmatpush1.msra.mxu0 %v8581
    %8956 = vmatprep.subr.mxu0 %v8598
    %8957 = vmatpush1.msra.mxu0 %v8597
    %8958 = vmatprep.subr.mxu0 %v8614
    %8959 = vmatpush1.msra.mxu0 %v8613
    %8960 = vmatprep.subr.mxu0 %v8630
    %8961 = vmatpush1.msra.mxu0 %v8629
    %8962 = vmatprep.subr.mxu0 %v8646
    %8963 = vmatpush1.msra.mxu0 %v8645
    %8964 = vmatprep.subr.mxu0 %v8662
    %8965 = vmatpush1.msra.mxu0 %v8661
    %8966 = vmatprep.subr.mxu0 %v8678
    %8967 = vmatpush1.msra.mxu0 %v8677
    %8968 = vmatprep.subr.mxu0 %v8694
    %8969 = vmatpush1.msra.mxu0 %v8693
    %8970 = vmatprep.subr.mxu0 %v8710
    %8971 = vmatpush1.msra.mxu0 %v8709
    %8972 = vmatprep.subr.mxu0 %v8726
    %8973 = vmatpush1.msra.mxu0 %v8725
    %8974 = vmatprep.subr.mxu0 %v8742
    %8975 = vmatpush1.msra.mxu0 %v8741
    %8976 = vmatprep.subr.mxu0 %v8758
    %8977 = vmatpush1.msra.mxu0 %v8757
    %8978 = vmatprep.subr.mxu0 %v8774
    %8979 = vmatpush1.msra.mxu0 %v8773
    %8980 = vmatprep.subr.mxu0 %v8790
    %8981 = vmatpush1.msra.mxu0 %v8789
    %8982 = vmatprep.subr.mxu0 0.0
    %8983 = vmatpush1.msra.mxu0 0.0
    %8984 = vmatprep.subr.mxu0 0.0
    %8985 = vmatpush1.msra.mxu0 0.0
    %8986 = vmatprep.subr.mxu0 0.0
    %8987 = vmatpush1.msra.mxu0 0.0
    %8988 = vmatprep.subr.mxu0 0.0
    %8989 = vmatpush1.msra.mxu0 0.0
    %8990 = vmatprep.subr.mxu0 0.0
    %8991 = vmatpush1.msra.mxu0 0.0
    %8992 = vmatprep.subr.mxu0 0.0
    %8993 = vmatpush1.msra.mxu0 0.0
    %8994 = vmatprep.subr.mxu0 0.0
    %8995 = vmatpush1.msra.mxu0 0.0
    %8996 = vmatprep.subr.mxu0 0.0
    %8997 = vmatpush1.msra.mxu0 0.0
    %8998 = vmatprep.subr.mxu0 0.0
    %8999 = vmatpush1.msra.mxu0 0.0
    %9000 = vmatprep.subr.mxu0 0.0
    %9001 = vmatpush1.msra.mxu0 0.0
    %9002 = vmatprep.subr.mxu0 0.0
    %9003 = vmatpush1.msra.mxu0 0.0
    %9004 = vmatprep.subr.mxu0 0.0
    %9005 = vmatpush1.msra.mxu0 0.0
    %9006 = vmatprep.subr.mxu0 0.0
    %9007 = vmatpush1.msra.mxu0 0.0
    %9008 = vmatprep.subr.mxu0 0.0
    %9009 = vmatpush1.msra.mxu0 0.0
    %9010 = vmatprep.mubr.f32.mxu0 %v8802
    %9011 = vmatmul.mubr.f32.gmra.mrb[0].mxu0 %v8508
    %v9012 = vpop.f32.mrb[0].mxu0
    %v9013 = vadd.f32 0.0, %v9012
    %v9014 = vpop.f32.mrb[0].mxu0
    %v9015 = vadd.f32 0.0, %v9014
    %9016 = vdwg.mxu0
    %9017 = vmatprep.subr.mxu0 %v8520
    %9018 = vmatpush1.msra.mxu0 %v8519
    %9019 = vmatprep.subr.mxu0 %v8536
    %9020 = vmatpush1.msra.mxu0 %v8535
    %9021 = vmatprep.subr.mxu0 %v8552
    %9022 = vmatpush1.msra.mxu0 %v8551
    %9023 = vmatprep.subr.mxu0 %v8568
    %9024 = vmatpush1.msra.mxu0 %v8567
    %9025 = vmatprep.subr.mxu0 %v8584
    %9026 = vmatpush1.msra.mxu0 %v8583
    %9027 = vmatprep.subr.mxu0 %v8600
    %9028 = vmatpush1.msra.mxu0 %v8599
    %9029 = vmatprep.subr.mxu0 %v8616
    %9030 = vmatpush1.msra.mxu0 %v8615
    %9031 = vmatprep.subr.mxu0 %v8632
    %9032 = vmatpush1.msra.mxu0 %v8631
    %9033 = vmatprep.subr.mxu0 %v8648
    %9034 = vmatpush1.msra.mxu0 %v8647
    %9035 = vmatprep.subr.mxu0 %v8664
    %9036 = vmatpush1.msra.mxu0 %v8663
    %9037 = vmatprep.subr.mxu0 %v8680
    %9038 = vmatpush1.msra.mxu0 %v8679
    %9039 = vmatprep.subr.mxu0 %v8696
    %9040 = vmatpush1.msra.mxu0 %v8695
    %9041 = vmatprep.subr.mxu0 %v8712
    %9042 = vmatpush1.msra.mxu0 %v8711
    %9043 = vmatprep.subr.mxu0 %v8728
    %9044 = vmatpush1.msra.mxu0 %v8727
    %9045 = vmatprep.subr.mxu0 %v8744
    %9046 = vmatpush1.msra.mxu0 %v8743
    %9047 = vmatprep.subr.mxu0 %v8760
    %9048 = vmatpush1.msra.mxu0 %v8759
    %9049 = vmatprep.subr.mxu0 %v8776
    %9050 = vmatpush1.msra.mxu0 %v8775
    %9051 = vmatprep.subr.mxu0 %v8792
    %9052 = vmatpush1.msra.mxu0 %v8791
    %9053 = vmatprep.subr.mxu0 0.0
    %9054 = vmatpush1.msra.mxu0 0.0
    %9055 = vmatprep.subr.mxu0 0.0
    %9056 = vmatpush1.msra.mxu0 0.0
    %9057 = vmatprep.subr.mxu0 0.0
    %9058 = vmatpush1.msra.mxu0 0.0
    %9059 = vmatprep.subr.mxu0 0.0
    %9060 = vmatpush1.msra.mxu0 0.0
    %9061 = vmatprep.subr.mxu0 0.0
    %9062 = vmatpush1.msra.mxu0 0.0
    %9063 = vmatprep.subr.mxu0 0.0
    %9064 = vmatpush1.msra.mxu0 0.0
    %9065 = vmatprep.subr.mxu0 0.0
    %9066 = vmatpush1.msra.mxu0 0.0
    %9067 = vmatprep.subr.mxu0 0.0
    %9068 = vmatpush1.msra.mxu0 0.0
    %9069 = vmatprep.subr.mxu0 0.0
    %9070 = vmatpush1.msra.mxu0 0.0
    %9071 = vmatprep.subr.mxu0 0.0
    %9072 = vmatpush1.msra.mxu0 0.0
    %9073 = vmatprep.subr.mxu0 0.0
    %9074 = vmatpush1.msra.mxu0 0.0
    %9075 = vmatprep.subr.mxu0 0.0
    %9076 = vmatpush1.msra.mxu0 0.0
    %9077 = vmatprep.subr.mxu0 0.0
    %9078 = vmatpush1.msra.mxu0 0.0
    %9079 = vmatprep.subr.mxu0 0.0
    %9080 = vmatpush1.msra.mxu0 0.0
    %9081 = vmatprep.mubr.f32.mxu0 %v8802
    %9082 = vmatmul.mubr.f32.gmra.mrb[0].mxu0 %v8508
    %v9083 = vpop.f32.mrb[0].mxu0
    %v9084 = vadd.f32 0.0, %v9083
    %v9085 = vpop.f32.mrb[0].mxu0
    %v9086 = vadd.f32 0.0, %v9085
    %9087 = vdwg.mxu0
    %9088 = vmatprep.subr.mxu0 %v8522
    %9089 = vmatpush1.msra.mxu0 %v8521
    %9090 = vmatprep.subr.mxu0 %v8538
    %9091 = vmatpush1.msra.mxu0 %v8537
    %9092 = vmatprep.subr.mxu0 %v8554
    %9093 = vmatpush1.msra.mxu0 %v8553
    %9094 = vmatprep.subr.mxu0 %v8570
    %9095 = vmatpush1.msra.mxu0 %v8569
    %9096 = vmatprep.subr.mxu0 %v8586
    %9097 = vmatpush1.msra.mxu0 %v8585
    %9098 = vmatprep.subr.mxu0 %v8602
    %9099 = vmatpush1.msra.mxu0 %v8601
    %9100 = vmatprep.subr.mxu0 %v8618
    %9101 = vmatpush1.msra.mxu0 %v8617
    %9102 = vmatprep.subr.mxu0 %v8634
    %9103 = vmatpush1.msra.mxu0 %v8633
    %9104 = vmatprep.subr.mxu0 %v8650
    %9105 = vmatpush1.msra.mxu0 %v8649
    %9106 = vmatprep.subr.mxu0 %v8666
    %9107 = vmatpush1.msra.mxu0 %v8665
    %9108 = vmatprep.subr.mxu0 %v8682
    %9109 = vmatpush1.msra.mxu0 %v8681
    %9110 = vmatprep.subr.mxu0 %v8698
    %9111 = vmatpush1.msra.mxu0 %v8697
    %9112 = vmatprep.subr.mxu0 %v8714
    %9113 = vmatpush1.msra.mxu0 %v8713
    %9114 = vmatprep.subr.mxu0 %v8730
    %9115 = vmatpush1.msra.mxu0 %v8729
    %9116 = vmatprep.subr.mxu0 %v8746
    %9117 = vmatpush1.msra.mxu0 %v8745
    %9118 = vmatprep.subr.mxu0 %v8762
    %9119 = vmatpush1.msra.mxu0 %v8761
    %9120 = vmatprep.subr.mxu0 %v8778
    %9121 = vmatpush1.msra.mxu0 %v8777
    %9122 = vmatprep.subr.mxu0 %v8794
    %9123 = vmatpush1.msra.mxu0 %v8793
    %9124 = vmatprep.subr.mxu0 0.0
    %9125 = vmatpush1.msra.mxu0 0.0
    %9126 = vmatprep.subr.mxu0 0.0
    %9127 = vmatpush1.msra.mxu0 0.0
    %9128 = vmatprep.subr.mxu0 0.0
    %9129 = vmatpush1.msra.mxu0 0.0
    %9130 = vmatprep.subr.mxu0 0.0
    %9131 = vmatpush1.msra.mxu0 0.0
    %9132 = vmatprep.subr.mxu0 0.0
    %9133 = vmatpush1.msra.mxu0 0.0
    %9134 = vmatprep.subr.mxu0 0.0
    %9135 = vmatpush1.msra.mxu0 0.0
    %9136 = vmatprep.subr.mxu0 0.0
    %9137 = vmatpush1.msra.mxu0 0.0
    %9138 = vmatprep.subr.mxu0 0.0
    %9139 = vmatpush1.msra.mxu0 0.0
    %9140 = vmatprep.subr.mxu0 0.0
    %9141 = vmatpush1.msra.mxu0 0.0
    %9142 = vmatprep.subr.mxu0 0.0
    %9143 = vmatpush1.msra.mxu0 0.0
    %9144 = vmatprep.subr.mxu0 0.0
    %9145 = vmatpush1.msra.mxu0 0.0
    %9146 = vmatprep.subr.mxu0 0.0
    %9147 = vmatpush1.msra.mxu0 0.0
    %9148 = vmatprep.subr.mxu0 0.0
    %9149 = vmatpush1.msra.mxu0 0.0
    %9150 = vmatprep.subr.mxu0 0.0
    %9151 = vmatpush1.msra.mxu0 0.0
    %9152 = vmatprep.mubr.f32.mxu0 %v8802
    %9153 = vmatmul.mubr.f32.gmra.mrb[0].mxu0 %v8508
    %v9154 = vpop.f32.mrb[0].mxu0
    %v9155 = vadd.f32 0.0, %v9154
    %v9156 = vpop.f32.mrb[0].mxu0
    %v9157 = vadd.f32 0.0, %v9156
    %9158 = vdwg.mxu0
    %9159 = vmatprep.subr.mxu0 %v8524
    %9160 = vmatpush1.msra.mxu0 %v8523
    %9161 = vmatprep.subr.mxu0 %v8540
    %9162 = vmatpush1.msra.mxu0 %v8539
    %9163 = vmatprep.subr.mxu0 %v8556
    %9164 = vmatpush1.msra.mxu0 %v8555
    %9165 = vmatprep.subr.mxu0 %v8572
    %9166 = vmatpush1.msra.mxu0 %v8571
    %9167 = vmatprep.subr.mxu0 %v8588
    %9168 = vmatpush1.msra.mxu0 %v8587
    %9169 = vmatprep.subr.mxu0 %v8604
    %9170 = vmatpush1.msra.mxu0 %v8603
    %9171 = vmatprep.subr.mxu0 %v8620
    %9172 = vmatpush1.msra.mxu0 %v8619
    %9173 = vmatprep.subr.mxu0 %v8636
    %9174 = vmatpush1.msra.mxu0 %v8635
    %9175 = vmatprep.subr.mxu0 %v8652
    %9176 = vmatpush1.msra.mxu0 %v8651
    %9177 = vmatprep.subr.mxu0 %v8668
    %9178 = vmatpush1.msra.mxu0 %v8667
    %9179 = vmatprep.subr.mxu0 %v8684
    %9180 = vmatpush1.msra.mxu0 %v8683
    %9181 = vmatprep.subr.mxu0 %v8700
    %9182 = vmatpush1.msra.mxu0 %v8699
    %9183 = vmatprep.subr.mxu0 %v8716
    %9184 = vmatpush1.msra.mxu0 %v8715
    %9185 = vmatprep.subr.mxu0 %v8732
    %9186 = vmatpush1.msra.mxu0 %v8731
    %9187 = vmatprep.subr.mxu0 %v8748
    %9188 = vmatpush1.msra.mxu0 %v8747
    %9189 = vmatprep.subr.mxu0 %v8764
    %9190 = vmatpush1.msra.mxu0 %v8763
    %9191 = vmatprep.subr.mxu0 %v8780
    %9192 = vmatpush1.msra.mxu0 %v8779
    %9193 = vmatprep.subr.mxu0 %v8796
    %9194 = vmatpush1.msra.mxu0 %v8795
    %9195 = vmatprep.subr.mxu0 0.0
    %9196 = vmatpush1.msra.mxu0 0.0
    %9197 = vmatprep.subr.mxu0 0.0
    %9198 = vmatpush1.msra.mxu0 0.0
    %9199 = vmatprep.subr.mxu0 0.0
    %9200 = vmatpush1.msra.mxu0 0.0
    %9201 = vmatprep.subr.mxu0 0.0
    %9202 = vmatpush1.msra.mxu0 0.0
    %9203 = vmatprep.subr.mxu0 0.0
    %9204 = vmatpush1.msra.mxu0 0.0
    %9205 = vmatprep.subr.mxu0 0.0
    %9206 = vmatpush1.msra.mxu0 0.0
    %9207 = vmatprep.subr.mxu0 0.0
    %9208 = vmatpush1.msra.mxu0 0.0
    %9209 = vmatprep.subr.mxu0 0.0
    %9210 = vmatpush1.msra.mxu0 0.0
    %9211 = vmatprep.subr.mxu0 0.0
    %9212 = vmatpush1.msra.mxu0 0.0
    %9213 = vmatprep.subr.mxu0 0.0
    %9214 = vmatpush1.msra.mxu0 0.0
    %9215 = vmatprep.subr.mxu0 0.0
    %9216 = vmatpush1.msra.mxu0 0.0
    %9217 = vmatprep.subr.mxu0 0.0
    %9218 = vmatpush1.msra.mxu0 0.0
    %9219 = vmatprep.subr.mxu0 0.0
    %9220 = vmatpush1.msra.mxu0 0.0
    %9221 = vmatprep.subr.mxu0 0.0
    %9222 = vmatpush1.msra.mxu0 0.0
    %9223 = vmatprep.mubr.f32.mxu0 %v8802
    %9224 = vmatmul.mubr.f32.gmra.mrb[0].mxu0 %v8508
    %v9225 = vpop.f32.mrb[0].mxu0
    %v9226 = vadd.f32 0.0, %v9225
    %v9227 = vpop.f32.mrb[0].mxu0
    %v9228 = vadd.f32 0.0, %v9227
    %9229 = vdwg.mxu0
    %9230 = vmatprep.subr.mxu0 %v8526
    %9231 = vmatpush1.msra.mxu0 %v8525
    %9232 = vmatprep.subr.mxu0 %v8542
    %9233 = vmatpush1.msra.mxu0 %v8541
    %9234 = vmatprep.subr.mxu0 %v8558
    %9235 = vmatpush1.msra.mxu0 %v8557
    %9236 = vmatprep.subr.mxu0 %v8574
    %9237 = vmatpush1.msra.mxu0 %v8573
    %9238 = vmatprep.subr.mxu0 %v8590
    %9239 = vmatpush1.msra.mxu0 %v8589
    %9240 = vmatprep.subr.mxu0 %v8606
    %9241 = vmatpush1.msra.mxu0 %v8605
    %9242 = vmatprep.subr.mxu0 %v8622
    %9243 = vmatpush1.msra.mxu0 %v8621
    %9244 = vmatprep.subr.mxu0 %v8638
    %9245 = vmatpush1.msra.mxu0 %v8637
    %9246 = vmatprep.subr.mxu0 %v8654
    %9247 = vmatpush1.msra.mxu0 %v8653
    %9248 = vmatprep.subr.mxu0 %v8670
    %9249 = vmatpush1.msra.mxu0 %v8669
    %9250 = vmatprep.subr.mxu0 %v8686
    %9251 = vmatpush1.msra.mxu0 %v8685
    %9252 = vmatprep.subr.mxu0 %v8702
    %9253 = vmatpush1.msra.mxu0 %v8701
    %9254 = vmatprep.subr.mxu0 %v8718
    %9255 = vmatpush1.msra.mxu0 %v8717
    %9256 = vmatprep.subr.mxu0 %v8734
    %9257 = vmatpush1.msra.mxu0 %v8733
    %9258 = vmatprep.subr.mxu0 %v8750
    %9259 = vmatpush1.msra.mxu0 %v8749
    %9260 = vmatprep.subr.mxu0 %v8766
    %9261 = vmatpush1.msra.mxu0 %v8765
    %9262 = vmatprep.subr.mxu0 %v8782
    %9263 = vmatpush1.msra.mxu0 %v8781
    %9264 = vmatprep.subr.mxu0 %v8798
    %9265 = vmatpush1.msra.mxu0 %v8797
    %9266 = vmatprep.subr.mxu0 0.0
    %9267 = vmatpush1.msra.mxu0 0.0
    %9268 = vmatprep.subr.mxu0 0.0
    %9269 = vmatpush1.msra.mxu0 0.0
    %9270 = vmatprep.subr.mxu0 0.0
    %9271 = vmatpush1.msra.mxu0 0.0
    %9272 = vmatprep.subr.mxu0 0.0
    %9273 = vmatpush1.msra.mxu0 0.0
    %9274 = vmatprep.subr.mxu0 0.0
    %9275 = vmatpush1.msra.mxu0 0.0
    %9276 = vmatprep.subr.mxu0 0.0
    %9277 = vmatpush1.msra.mxu0 0.0
    %9278 = vmatprep.subr.mxu0 0.0
    %9279 = vmatpush1.msra.mxu0 0.0
    %9280 = vmatprep.subr.mxu0 0.0
    %9281 = vmatpush1.msra.mxu0 0.0
    %9282 = vmatprep.subr.mxu0 0.0
    %9283 = vmatpush1.msra.mxu0 0.0
    %9284 = vmatprep.subr.mxu0 0.0
    %9285 = vmatpush1.msra.mxu0 0.0
    %9286 = vmatprep.subr.mxu0 0.0
    %9287 = vmatpush1.msra.mxu0 0.0
    %9288 = vmatprep.subr.mxu0 0.0
    %9289 = vmatpush1.msra.mxu0 0.0
    %9290 = vmatprep.subr.mxu0 0.0
    %9291 = vmatpush1.msra.mxu0 0.0
    %9292 = vmatprep.subr.mxu0 0.0
    %9293 = vmatpush1.msra.mxu0 0.0
    %9294 = vmatprep.mubr.f32.mxu0 %v8802
    %9295 = vmatmul.mubr.f32.gmra.mrb[0].mxu0 %v8508
    %v9296 = vpop.f32.mrb[0].mxu0
    %v9297 = vadd.f32 0.0, %v9296
    %v9298 = vpop.f32.mrb[0].mxu0
    %v9299 = vadd.f32 0.0, %v9298
    %9300 = vdwg.mxu0
    %9301 = vmatprep.subr.mxu0 %v8528
    %9302 = vmatpush1.msra.mxu0 %v8527
    %9303 = vmatprep.subr.mxu0 %v8544
    %9304 = vmatpush1.msra.mxu0 %v8543
    %9305 = vmatprep.subr.mxu0 %v8560
    %9306 = vmatpush1.msra.mxu0 %v8559
    %9307 = vmatprep.subr.mxu0 %v8576
    %9308 = vmatpush1.msra.mxu0 %v8575
    %9309 = vmatprep.subr.mxu0 %v8592
    %9310 = vmatpush1.msra.mxu0 %v8591
    %9311 = vmatprep.subr.mxu0 %v8608
    %9312 = vmatpush1.msra.mxu0 %v8607
    %9313 = vmatprep.subr.mxu0 %v8624
    %9314 = vmatpush1.msra.mxu0 %v8623
    %9315 = vmatprep.subr.mxu0 %v8640
    %9316 = vmatpush1.msra.mxu0 %v8639
    %9317 = vmatprep.subr.mxu0 %v8656
    %9318 = vmatpush1.msra.mxu0 %v8655
    %9319 = vmatprep.subr.mxu0 %v8672
    %9320 = vmatpush1.msra.mxu0 %v8671
    %9321 = vmatprep.subr.mxu0 %v8688
    %9322 = vmatpush1.msra.mxu0 %v8687
    %9323 = vmatprep.subr.mxu0 %v8704
    %9324 = vmatpush1.msra.mxu0 %v8703
    %9325 = vmatprep.subr.mxu0 %v8720
    %9326 = vmatpush1.msra.mxu0 %v8719
    %9327 = vmatprep.subr.mxu0 %v8736
    %9328 = vmatpush1.msra.mxu0 %v8735
    %9329 = vmatprep.subr.mxu0 %v8752
    %9330 = vmatpush1.msra.mxu0 %v8751
    %9331 = vmatprep.subr.mxu0 %v8768
    %9332 = vmatpush1.msra.mxu0 %v8767
    %9333 = vmatprep.subr.mxu0 %v8784
    %9334 = vmatpush1.msra.mxu0 %v8783
    %9335 = vmatprep.subr.mxu0 %v8800
    %9336 = vmatpush1.msra.mxu0 %v8799
    %9337 = vmatprep.subr.mxu0 0.0
    %9338 = vmatpush1.msra.mxu0 0.0
    %9339 = vmatprep.subr.mxu0 0.0
    %9340 = vmatpush1.msra.mxu0 0.0
    %9341 = vmatprep.subr.mxu0 0.0
    %9342 = vmatpush1.msra.mxu0 0.0
    %9343 = vmatprep.subr.mxu0 0.0
    %9344 = vmatpush1.msra.mxu0 0.0
    %9345 = vmatprep.subr.mxu0 0.0
    %9346 = vmatpush1.msra.mxu0 0.0
    %9347 = vmatprep.subr.mxu0 0.0
    %9348 = vmatpush1.msra.mxu0 0.0
    %9349 = vmatprep.subr.mxu0 0.0
    %9350 = vmatpush1.msra.mxu0 0.0
    %9351 = vmatprep.subr.mxu0 0.0
    %9352 = vmatpush1.msra.mxu0 0.0
    %9353 = vmatprep.subr.mxu0 0.0
    %9354 = vmatpush1.msra.mxu0 0.0
    %9355 = vmatprep.subr.mxu0 0.0
    %9356 = vmatpush1.msra.mxu0 0.0
    %9357 = vmatprep.subr.mxu0 0.0
    %9358 = vmatpush1.msra.mxu0 0.0
    %9359 = vmatprep.subr.mxu0 0.0
    %9360 = vmatpush1.msra.mxu0 0.0
    %9361 = vmatprep.subr.mxu0 0.0
    %9362 = vmatpush1.msra.mxu0 0.0
    %9363 = vmatprep.subr.mxu0 0.0
    %9364 = vmatpush1.msra.mxu0 0.0
    %9365 = vmatprep.mubr.f32.mxu0 %v8802
    %9366 = vmatmul.mubr.f32.gmra.mrb[0].mxu0 %v8508
    %v9367 = vpop.f32.mrb[0].mxu0
    %v9368 = vadd.f32 0.0, %v9367
    %v9369 = vpop.f32.mrb[0].mxu0
    %v9370 = vadd.f32 0.0, %v9369
    %9371 = vdwg.mxu0
    %v9372 = vadd.f32 %v8420, %v8871
    %v9373 = vadd.f32 %v8421, %v8873
    %v9374 = vadd.f32 %v8422, %v8942
    %v9375 = vadd.f32 %v8423, %v8944
    %v9376 = vadd.f32 %v8424, %v9013
    %v9377 = vadd.f32 %v8425, %v9015
    %v9378 = vadd.f32 %v8426, %v9084
    %v9379 = vadd.f32 %v8427, %v9086
    %v9380 = vadd.f32 %v8428, %v9155
    %v9381 = vadd.f32 %v8429, %v9157
    %v9382 = vadd.f32 %v8430, %v9226
    %v9383 = vadd.f32 %v8431, %v9228
    %v9384 = vadd.f32 %v8432, %v9297
    %v9385 = vadd.f32 %v8433, %v9299
    %v9386 = vadd.f32 %v8434, %v9368
    %v9387 = vadd.f32 %v8435, %v9370
    %v9388 = vmax.f32 %v9372, 0.0
    %v9389 = vmax.f32 %v9373, 0.0
    %v9390 = vmax.f32 %v9374, 0.0
    %v9391 = vmax.f32 %v9375, 0.0
    %v9392 = vmax.f32 %v9376, 0.0
    %v9393 = vmax.f32 %v9377, 0.0
    %v9394 = vmax.f32 %v9378, 0.0
    %v9395 = vmax.f32 %v9379, 0.0
    %v9396 = vmax.f32 %v9380, 0.0
    %v9397 = vmax.f32 %v9381, 0.0
    %v9398 = vmax.f32 %v9382, 0.0
    %v9399 = vmax.f32 %v9383, 0.0
    %v9400 = vmax.f32 %v9384, 0.0
    %v9401 = vmax.f32 %v9385, 0.0
    %v9402 = vmax.f32 %v9386, 0.0
    %v9403 = vmax.f32 %v9387, 0.0
    %v9420 = vcombine.low %v9388, %v9389
    %v9421 = vcombine.low %v9390, %v9391
    %v9423 = vunpack.c.l.s4 1983009808
    %v9424 = vunpack.c.0.s8 %v9423
    %v9425 = vlaneseq
    %v9426 = vshrl.u32 %v9425, 7
    %v9427 = vsub.s32 %v9424, %v9426
    %v9428 = vrot.slane %v9420, %v9427
    %v9430 = vunpack.c.l.s4 1983009808
    %v9431 = vunpack.c.0.s8 %v9430
    %v9432 = vlaneseq
    %v9433 = vshrl.u32 %v9432, 7
    %v9434 = vsub.s32 %v9431, %v9433
    %v9435 = vrot.slane %v9421, %v9434
    %v9436 = vcombine.low %v9428, %v9435
    %v9437 = vcombine.low %v9392, %v9393
    %v9438 = vcombine.low %v9394, %v9395
    %v9440 = vunpack.c.l.s4 1983009808
    %v9441 = vunpack.c.0.s8 %v9440
    %v9442 = vlaneseq
    %v9443 = vshrl.u32 %v9442, 7
    %v9444 = vsub.s32 %v9441, %v9443
    %v9445 = vrot.slane %v9437, %v9444
    %v9447 = vunpack.c.l.s4 1983009808
    %v9448 = vunpack.c.0.s8 %v9447
    %v9449 = vlaneseq
    %v9450 = vshrl.u32 %v9449, 7
    %v9451 = vsub.s32 %v9448, %v9450
    %v9452 = vrot.slane %v9438, %v9451
    %v9453 = vcombine.low %v9445, %v9452
    %v9454 = vcombine.low %v9396, %v9397
    %v9455 = vcombine.low %v9398, %v9399
    %v9457 = vunpack.c.l.s4 1983009808
    %v9458 = vunpack.c.0.s8 %v9457
    %v9459 = vlaneseq
    %v9460 = vshrl.u32 %v9459, 7
    %v9461 = vsub.s32 %v9458, %v9460
    %v9462 = vrot.slane %v9454, %v9461
    %v9464 = vunpack.c.l.s4 1983009808
    %v9465 = vunpack.c.0.s8 %v9464
    %v9466 = vlaneseq
    %v9467 = vshrl.u32 %v9466, 7
    %v9468 = vsub.s32 %v9465, %v9467
    %v9469 = vrot.slane %v9455, %v9468
    %v9470 = vcombine.low %v9462, %v9469
    %v9471 = vcombine.low %v9400, %v9401
    %v9472 = vcombine.low %v9402, %v9403
    %v9474 = vunpack.c.l.s4 1983009808
    %v9475 = vunpack.c.0.s8 %v9474
    %v9476 = vlaneseq
    %v9477 = vshrl.u32 %v9476, 7
    %v9478 = vsub.s32 %v9475, %v9477
    %v9479 = vrot.slane %v9471, %v9478
    %v9481 = vunpack.c.l.s4 1983009808
    %v9482 = vunpack.c.0.s8 %v9481
    %v9483 = vlaneseq
    %v9484 = vshrl.u32 %v9483, 7
    %v9485 = vsub.s32 %v9482, %v9484
    %v9486 = vrot.slane %v9472, %v9485
    %v9487 = vcombine.low %v9479, %v9486
    %9492 = vst [vmem:[#allocation20] sm:$0xff] %v9436
    %9493 = vst [vmem:[#allocation20 + $0x8] sm:$0xff] %v9453
    %9494 = vst [vmem:[#allocation20 + $0x10] sm:$0xff] %v9470
    %9495 = vst [vmem:[#allocation20 + $0x18] sm:$0xff] %v9487
    %v9496 = vld [vmem:[%s14] sm:$0xff]
    %v9497 = vld [vmem:[%s14 + $0x8] sm:$0xff]
    %v9498 = vld [vmem:[%s14 + $0x10] sm:$0xff]
    %v9499 = vld [vmem:[%s14 + $0x18] sm:$0xff]
    %v9500 = vld [vmem:[%s14 + $0x20] sm:$0xff]
    %v9501 = vld [vmem:[%s14 + $0x28] sm:$0xff]
    %v9502 = vld [vmem:[%s14 + $0x30] sm:$0xff]
    %v9503 = vld [vmem:[%s14 + $0x38] sm:$0xff]
    %v9504 = vld [vmem:[%s14 + $0x40] sm:$0xff]
    %v9505 = vld [vmem:[%s14 + $0x48] sm:$0xff]
    %v9506 = vld [vmem:[%s14 + $0x50] sm:$0xff]
    %v9507 = vld [vmem:[%s14 + $0x58] sm:$0xff]
    %v9508 = vld [vmem:[%s14 + $0x60] sm:$0xff]
    %v9509 = vld [vmem:[%s14 + $0x68] sm:$0xff]
    %v9510 = vld [vmem:[%s14 + $0x70] sm:$0xff]
    %v9511 = vld [vmem:[%s14 + $0x78] sm:$0xff]
    %v9512 = vld [vmem:[%s14 + $0x80] sm:$0xff]
    %v9513 = vld [vmem:[%s14 + $0x88] sm:$0xff]
    %v9514 = vld [vmem:[%s14 + $0x90] sm:$0xff]
    %v9515 = vld [vmem:[%s14 + $0x98] sm:$0xff]
    %v9516 = vld [vmem:[%s14 + $0xa0] sm:$0xff]
    %v9517 = vld [vmem:[%s14 + $0xa8] sm:$0xff]
    %v9518 = vld [vmem:[%s14 + $0xb0] sm:$0xff]
    %v9519 = vld [vmem:[%s14 + $0xb8] sm:$0xff]
    %v9520 = vld [vmem:[%s14 + $0xc0] sm:$0xff]
    %v9521 = vld [vmem:[%s14 + $0xc8] sm:$0xff]
    %v9522 = vld [vmem:[%s14 + $0xd0] sm:$0xff]
    %v9523 = vld [vmem:[%s14 + $0xd8] sm:$0xff]
    %v9524 = vld [vmem:[%s14 + $0xe0] sm:$0xff]
    %v9525 = vld [vmem:[%s14 + $0xe8] sm:$0xff]
    %v9526 = vld [vmem:[%s14 + $0xf0] sm:$0xff]
    %v9527 = vld [vmem:[%s14 + $0xf8] sm:$0xff]
    %v9528 = vld [vmem:[%s14 + $0x100] sm:$0xff]
    %v9529 = vld [vmem:[%s14 + $0x108] sm:$0xff]
    %v9530 = vld [vmem:[%s14 + $0x110] sm:$0xff]
    %v9531 = vld [vmem:[%s14 + $0x118] sm:$0xff]
    %v9532 = vld [vmem:[%s14 + $0x120] sm:$0xff]
    %v9533 = vld [vmem:[%s14 + $0x128] sm:$0xff]
    %v9534 = vld [vmem:[%s14 + $0x130] sm:$0xff]
    %v9535 = vld [vmem:[%s14 + $0x138] sm:$0xff]
    %v9536 = vld [vmem:[%s14 + $0x140] sm:$0xff]
    %v9537 = vld [vmem:[%s14 + $0x148] sm:$0xff]
    %v9538 = vld [vmem:[%s14 + $0x150] sm:$0xff]
    %v9539 = vld [vmem:[%s14 + $0x158] sm:$0xff]
    %v9540 = vld [vmem:[%s14 + $0x160] sm:$0xff]
    %v9541 = vld [vmem:[%s14 + $0x168] sm:$0xff]
    %v9542 = vld [vmem:[%s14 + $0x170] sm:$0xff]
    %v9543 = vld [vmem:[%s14 + $0x178] sm:$0xff]
    %v9544 = vld [vmem:[%s14 + $0x180] sm:$0xff]
    %v9545 = vld [vmem:[%s14 + $0x188] sm:$0xff]
    %v9546 = vld [vmem:[%s14 + $0x190] sm:$0xff]
    %v9547 = vld [vmem:[%s14 + $0x198] sm:$0xff]
    %v9548 = vld [vmem:[%s14 + $0x1a0] sm:$0xff]
    %v9549 = vld [vmem:[%s14 + $0x1a8] sm:$0xff]
    %v9550 = vld [vmem:[%s14 + $0x1b0] sm:$0xff]
    %v9551 = vld [vmem:[%s14 + $0x1b8] sm:$0xff]
    %v9552 = vld [vmem:[%s14 + $0x1c0] sm:$0xff]
    %v9553 = vld [vmem:[%s14 + $0x1c8] sm:$0xff]
    %v9554 = vld [vmem:[%s14 + $0x1d0] sm:$0xff]
    %v9555 = vld [vmem:[%s14 + $0x1d8] sm:$0xff]
    %v9556 = vld [vmem:[%s14 + $0x1e0] sm:$0xff]
    %v9557 = vld [vmem:[%s14 + $0x1e8] sm:$0xff]
    %v9558 = vld [vmem:[%s14 + $0x1f0] sm:$0xff]
    %v9559 = vld [vmem:[%s14 + $0x1f8] sm:$0xff]
    %v9560 = vld [vmem:[%s14 + $0x200] sm:$0xff]
    %v9561 = vld [vmem:[%s14 + $0x208] sm:$0xff]
    %v9562 = vld [vmem:[%s14 + $0x210] sm:$0xff]
    %v9563 = vld [vmem:[%s14 + $0x218] sm:$0xff]
    %v9564 = vld [vmem:[%s14 + $0x220] sm:$0xff]
    %v9565 = vld [vmem:[%s14 + $0x228] sm:$0xff]
    %v9566 = vld [vmem:[%s14 + $0x230] sm:$0xff]
    %v9567 = vld [vmem:[%s14 + $0x238] sm:$0xff]
    %v9568 = vld [vmem:[%s14 + $0x240] sm:$0xff]
    %v9569 = vld [vmem:[%s14 + $0x248] sm:$0xff]
    %v9570 = vld [vmem:[%s14 + $0x250] sm:$0xff]
    %v9571 = vld [vmem:[%s14 + $0x258] sm:$0xff]
    %v9572 = vld [vmem:[%s14 + $0x260] sm:$0xff]
    %v9573 = vld [vmem:[%s14 + $0x268] sm:$0xff]
    %v9574 = vld [vmem:[%s14 + $0x270] sm:$0xff]
    %v9575 = vld [vmem:[%s14 + $0x278] sm:$0xff]
    %v9576 = vld [vmem:[%s14 + $0x280] sm:$0xff]
    %v9577 = vld [vmem:[%s14 + $0x288] sm:$0xff]
    %v9578 = vld [vmem:[%s14 + $0x290] sm:$0xff]
    %v9579 = vld [vmem:[%s14 + $0x298] sm:$0xff]
    %v9580 = vld [vmem:[%s14 + $0x2a0] sm:$0xff]
    %v9581 = vld [vmem:[%s14 + $0x2a8] sm:$0xff]
    %v9582 = vld [vmem:[%s14 + $0x2b0] sm:$0xff]
    %v9583 = vld [vmem:[%s14 + $0x2b8] sm:$0xff]
    %v9584 = vld [vmem:[%s14 + $0x2c0] sm:$0xff]
    %v9585 = vld [vmem:[%s14 + $0x2c8] sm:$0xff]
    %v9586 = vld [vmem:[%s14 + $0x2d0] sm:$0xff]
    %v9587 = vld [vmem:[%s14 + $0x2d8] sm:$0xff]
    %v9588 = vld [vmem:[%s14 + $0x2e0] sm:$0xff]
    %v9589 = vld [vmem:[%s14 + $0x2e8] sm:$0xff]
    %v9590 = vld [vmem:[%s14 + $0x2f0] sm:$0xff]
    %v9591 = vld [vmem:[%s14 + $0x2f8] sm:$0xff]
    %v9592 = vld [vmem:[%s14 + $0x300] sm:$0xff]
    %v9593 = vld [vmem:[%s14 + $0x308] sm:$0xff]
    %v9594 = vld [vmem:[%s14 + $0x310] sm:$0xff]
    %v9595 = vld [vmem:[%s14 + $0x318] sm:$0xff]
    %v9596 = vld [vmem:[%s14 + $0x320] sm:$0xff]
    %v9597 = vld [vmem:[%s14 + $0x328] sm:$0xff]
    %v9598 = vld [vmem:[%s14 + $0x330] sm:$0xff]
    %v9599 = vld [vmem:[%s14 + $0x338] sm:$0xff]
    %v9600 = vld [vmem:[%s14 + $0x340] sm:$0xff]
    %v9601 = vld [vmem:[%s14 + $0x348] sm:$0xff]
    %v9602 = vld [vmem:[%s14 + $0x350] sm:$0xff]
    %v9603 = vld [vmem:[%s14 + $0x358] sm:$0xff]
    %v9604 = vld [vmem:[%s14 + $0x360] sm:$0xff]
    %v9605 = vld [vmem:[%s14 + $0x368] sm:$0xff]
    %v9606 = vld [vmem:[%s14 + $0x370] sm:$0xff]
    %v9607 = vld [vmem:[%s14 + $0x378] sm:$0xff]
    %v9608 = vld [vmem:[%s14 + $0x380] sm:$0xff]
    %v9609 = vld [vmem:[%s14 + $0x388] sm:$0xff]
    %v9610 = vld [vmem:[%s14 + $0x390] sm:$0xff]
    %v9611 = vld [vmem:[%s14 + $0x398] sm:$0xff]
    %v9612 = vld [vmem:[%s14 + $0x3a0] sm:$0xff]
    %v9613 = vld [vmem:[%s14 + $0x3a8] sm:$0xff]
    %v9614 = vld [vmem:[%s14 + $0x3b0] sm:$0xff]
    %v9615 = vld [vmem:[%s14 + $0x3b8] sm:$0xff]
    %v9616 = vld [vmem:[%s14 + $0x3c0] sm:$0xff]
    %v9617 = vld [vmem:[%s14 + $0x3c8] sm:$0xff]
    %v9618 = vld [vmem:[%s14 + $0x3d0] sm:$0xff]
    %v9619 = vld [vmem:[%s14 + $0x3d8] sm:$0xff]
    %v9620 = vld [vmem:[%s14 + $0x3e0] sm:$0xff]
    %v9621 = vld [vmem:[%s14 + $0x3e8] sm:$0xff]
    %v9622 = vld [vmem:[%s14 + $0x3f0] sm:$0xff]
    %v9623 = vld [vmem:[%s14 + $0x3f8] sm:$0xff]
    %v9624 = vld [vmem:[%s14 + $0x400] sm:$0xff]
    %v9625 = vld [vmem:[%s14 + $0x408] sm:$0xff]
    %v9626 = vld [vmem:[%s14 + $0x410] sm:$0xff]
    %v9627 = vld [vmem:[%s14 + $0x418] sm:$0xff]
    %v9628 = vld [vmem:[%s14 + $0x420] sm:$0xff]
    %v9629 = vld [vmem:[%s14 + $0x428] sm:$0xff]
    %v9630 = vld [vmem:[%s14 + $0x430] sm:$0xff]
    %v9631 = vld [vmem:[%s14 + $0x438] sm:$0xff]
    %v9632 = vld [vmem:[%s14 + $0x440] sm:$0xff]
    %v9633 = vld [vmem:[%s14 + $0x448] sm:$0xff]
    %v9634 = vld [vmem:[%s14 + $0x450] sm:$0xff]
    %v9635 = vld [vmem:[%s14 + $0x458] sm:$0xff]
    %v9636 = vld [vmem:[%s14 + $0x460] sm:$0xff]
    %v9637 = vld [vmem:[%s14 + $0x468] sm:$0xff]
    %v9638 = vld [vmem:[%s14 + $0x470] sm:$0xff]
    %v9639 = vld [vmem:[%s14 + $0x478] sm:$0xff]
    %v9640 = vld [vmem:[%s14 + $0x480] sm:$0xff]
    %v9641 = vld [vmem:[%s14 + $0x488] sm:$0xff]
    %v9642 = vld [vmem:[%s14 + $0x490] sm:$0xff]
    %v9643 = vld [vmem:[%s14 + $0x498] sm:$0xff]
    %v9644 = vld [vmem:[%s14 + $0x4a0] sm:$0xff]
    %v9645 = vld [vmem:[%s14 + $0x4a8] sm:$0xff]
    %v9646 = vld [vmem:[%s14 + $0x4b0] sm:$0xff]
    %v9647 = vld [vmem:[%s14 + $0x4b8] sm:$0xff]
    %v9648 = vld [vmem:[%s14 + $0x4c0] sm:$0xff]
    %v9649 = vld [vmem:[%s14 + $0x4c8] sm:$0xff]
    %v9650 = vld [vmem:[%s14 + $0x4d0] sm:$0xff]
    %v9651 = vld [vmem:[%s14 + $0x4d8] sm:$0xff]
    %v9652 = vld [vmem:[%s14 + $0x4e0] sm:$0xff]
    %v9653 = vld [vmem:[%s14 + $0x4e8] sm:$0xff]
    %v9654 = vld [vmem:[%s14 + $0x4f0] sm:$0xff]
    %v9655 = vld [vmem:[%s14 + $0x4f8] sm:$0xff]
    %v9656 = vld [vmem:[%s14 + $0x500] sm:$0xff]
    %v9657 = vld [vmem:[%s14 + $0x508] sm:$0xff]
    %v9658 = vld [vmem:[%s14 + $0x510] sm:$0xff]
    %v9659 = vld [vmem:[%s14 + $0x518] sm:$0xff]
    %v9660 = vld [vmem:[%s14 + $0x520] sm:$0xff]
    %v9661 = vld [vmem:[%s14 + $0x528] sm:$0xff]
    %v9662 = vld [vmem:[%s14 + $0x530] sm:$0xff]
    %v9663 = vld [vmem:[%s14 + $0x538] sm:$0xff]
    %v9664 = vld [vmem:[%s14 + $0x540] sm:$0xff]
    %v9665 = vld [vmem:[%s14 + $0x548] sm:$0xff]
    %v9666 = vld [vmem:[%s14 + $0x550] sm:$0xff]
    %v9667 = vld [vmem:[%s14 + $0x558] sm:$0xff]
    %v9668 = vld [vmem:[%s14 + $0x560] sm:$0xff]
    %v9669 = vld [vmem:[%s14 + $0x568] sm:$0xff]
    %v9670 = vld [vmem:[%s14 + $0x570] sm:$0xff]
    %v9671 = vld [vmem:[%s14 + $0x578] sm:$0xff]
    %v9672 = vld [vmem:[%s14 + $0x580] sm:$0xff]
    %v9673 = vld [vmem:[%s14 + $0x588] sm:$0xff]
    %v9674 = vld [vmem:[%s14 + $0x590] sm:$0xff]
    %v9675 = vld [vmem:[%s14 + $0x598] sm:$0xff]
    %v9676 = vld [vmem:[%s14 + $0x5a0] sm:$0xff]
    %v9677 = vld [vmem:[%s14 + $0x5a8] sm:$0xff]
    %v9678 = vld [vmem:[%s14 + $0x5b0] sm:$0xff]
    %v9679 = vld [vmem:[%s14 + $0x5b8] sm:$0xff]
    %v9680 = vld [vmem:[%s14 + $0x5c0] sm:$0xff]
    %v9681 = vld [vmem:[%s14 + $0x5c8] sm:$0xff]
    %v9682 = vld [vmem:[%s14 + $0x5d0] sm:$0xff]
    %v9683 = vld [vmem:[%s14 + $0x5d8] sm:$0xff]
    %v9684 = vld [vmem:[%s14 + $0x5e0] sm:$0xff]
    %v9685 = vld [vmem:[%s14 + $0x5e8] sm:$0xff]
    %v9686 = vld [vmem:[%s14 + $0x5f0] sm:$0xff]
    %v9687 = vld [vmem:[%s14 + $0x5f8] sm:$0xff]
    %v9688 = vld [vmem:[%s14 + $0x600] sm:$0xff]
    %v9689 = vld [vmem:[%s14 + $0x608] sm:$0xff]
    %v9690 = vld [vmem:[%s14 + $0x610] sm:$0xff]
    %v9691 = vld [vmem:[%s14 + $0x618] sm:$0xff]
    %v9692 = vld [vmem:[%s14 + $0x620] sm:$0xff]
    %v9693 = vld [vmem:[%s14 + $0x628] sm:$0xff]
    %v9694 = vld [vmem:[%s14 + $0x630] sm:$0xff]
    %v9695 = vld [vmem:[%s14 + $0x638] sm:$0xff]
    %v9696 = vld [vmem:[%s14 + $0x640] sm:$0xff]
    %v9697 = vld [vmem:[%s14 + $0x648] sm:$0xff]
    %v9698 = vld [vmem:[%s14 + $0x650] sm:$0xff]
    %v9699 = vld [vmem:[%s14 + $0x658] sm:$0xff]
    %v9700 = vld [vmem:[%s14 + $0x660] sm:$0xff]
    %v9701 = vld [vmem:[%s14 + $0x668] sm:$0xff]
    %v9702 = vld [vmem:[%s14 + $0x670] sm:$0xff]
    %v9703 = vld [vmem:[%s14 + $0x678] sm:$0xff]
    %v9704 = vld [vmem:[%s14 + $0x680] sm:$0xff]
    %v9705 = vld [vmem:[%s14 + $0x688] sm:$0xff]
    %v9706 = vld [vmem:[%s14 + $0x690] sm:$0xff]
    %v9707 = vld [vmem:[%s14 + $0x698] sm:$0xff]
    %v9708 = vld [vmem:[%s14 + $0x6a0] sm:$0xff]
    %v9709 = vld [vmem:[%s14 + $0x6a8] sm:$0xff]
    %v9710 = vld [vmem:[%s14 + $0x6b0] sm:$0xff]
    %v9711 = vld [vmem:[%s14 + $0x6b8] sm:$0xff]
    %v9712 = vld [vmem:[%s14 + $0x6c0] sm:$0xff]
    %v9713 = vld [vmem:[%s14 + $0x6c8] sm:$0xff]
    %v9714 = vld [vmem:[%s14 + $0x6d0] sm:$0xff]
    %v9715 = vld [vmem:[%s14 + $0x6d8] sm:$0xff]
    %v9716 = vld [vmem:[%s14 + $0x6e0] sm:$0xff]
    %v9717 = vld [vmem:[%s14 + $0x6e8] sm:$0xff]
    %v9718 = vld [vmem:[%s14 + $0x6f0] sm:$0xff]
    %v9719 = vld [vmem:[%s14 + $0x6f8] sm:$0xff]
    %v9720 = vld [vmem:[%s14 + $0x700] sm:$0xff]
    %v9721 = vld [vmem:[%s14 + $0x708] sm:$0xff]
    %v9722 = vld [vmem:[%s14 + $0x710] sm:$0xff]
    %v9723 = vld [vmem:[%s14 + $0x718] sm:$0xff]
    %v9724 = vld [vmem:[%s14 + $0x720] sm:$0xff]
    %v9725 = vld [vmem:[%s14 + $0x728] sm:$0xff]
    %v9726 = vld [vmem:[%s14 + $0x730] sm:$0xff]
    %v9727 = vld [vmem:[%s14 + $0x738] sm:$0xff]
    %v9728 = vld [vmem:[%s14 + $0x740] sm:$0xff]
    %v9729 = vld [vmem:[%s14 + $0x748] sm:$0xff]
    %v9730 = vld [vmem:[%s14 + $0x750] sm:$0xff]
    %v9731 = vld [vmem:[%s14 + $0x758] sm:$0xff]
    %v9732 = vld [vmem:[%s14 + $0x760] sm:$0xff]
    %v9733 = vld [vmem:[%s14 + $0x768] sm:$0xff]
    %v9734 = vld [vmem:[%s14 + $0x770] sm:$0xff]
    %v9735 = vld [vmem:[%s14 + $0x778] sm:$0xff]
    %v9736 = vld [vmem:[%s14 + $0x780] sm:$0xff]
    %v9737 = vld [vmem:[%s14 + $0x788] sm:$0xff]
    %v9738 = vld [vmem:[%s14 + $0x790] sm:$0xff]
    %v9739 = vld [vmem:[%s14 + $0x798] sm:$0xff]
    %v9740 = vld [vmem:[%s14 + $0x7a0] sm:$0xff]
    %v9741 = vld [vmem:[%s14 + $0x7a8] sm:$0xff]
    %v9742 = vld [vmem:[%s14 + $0x7b0] sm:$0xff]
    %v9743 = vld [vmem:[%s14 + $0x7b8] sm:$0xff]
    %v9744 = vld [vmem:[%s14 + $0x7c0] sm:$0xff]
    %v9745 = vld [vmem:[%s14 + $0x7c8] sm:$0xff]
    %v9746 = vld [vmem:[%s14 + $0x7d0] sm:$0xff]
    %v9747 = vld [vmem:[%s14 + $0x7d8] sm:$0xff]
    %v9748 = vld [vmem:[%s14 + $0x7e0] sm:$0xff]
    %v9749 = vld [vmem:[%s14 + $0x7e8] sm:$0xff]
    %v9750 = vld [vmem:[%s14 + $0x7f0] sm:$0xff]
    %v9751 = vld [vmem:[%s14 + $0x7f8] sm:$0xff]
    %v9752 = vld [vmem:[#allocation17] sm:$0x1]
    %v9754 = vlaneseq
    %v9755 = vshrl.u32 %v9754, 7
    %v9756 = vsub.s32 0, %v9755
    %v9757 = vrot.slane %v9752, %v9756
    %9759 = vmatprep.subr.mxu0 0.0
    %9760 = vmatpush1.msra.mxu0 %v9496
    %9761 = vmatprep.subr.mxu0 0.0
    %9762 = vmatpush1.msra.mxu0 %v9497
    %9763 = vmatprep.subr.mxu0 0.0
    %9764 = vmatpush1.msra.mxu0 %v9498
    %9765 = vmatprep.subr.mxu0 0.0
    %9766 = vmatpush1.msra.mxu0 %v9499
    %9767 = vmatprep.subr.mxu0 0.0
    %9768 = vmatpush1.msra.mxu0 %v9500
    %9769 = vmatprep.subr.mxu0 0.0
    %9770 = vmatpush1.msra.mxu0 %v9501
    %9771 = vmatprep.subr.mxu0 0.0
    %9772 = vmatpush1.msra.mxu0 %v9502
    %9773 = vmatprep.subr.mxu0 0.0
    %9774 = vmatpush1.msra.mxu0 %v9503
    %9775 = vmatprep.subr.mxu0 0.0
    %9776 = vmatpush1.msra.mxu0 %v9504
    %9777 = vmatprep.subr.mxu0 0.0
    %9778 = vmatpush1.msra.mxu0 %v9505
    %9779 = vmatprep.subr.mxu0 0.0
    %9780 = vmatpush1.msra.mxu0 %v9506
    %9781 = vmatprep.subr.mxu0 0.0
    %9782 = vmatpush1.msra.mxu0 %v9507
    %9783 = vmatprep.subr.mxu0 0.0
    %9784 = vmatpush1.msra.mxu0 %v9508
    %9785 = vmatprep.subr.mxu0 0.0
    %9786 = vmatpush1.msra.mxu0 %v9509
    %9787 = vmatprep.subr.mxu0 0.0
    %9788 = vmatpush1.msra.mxu0 %v9510
    %9789 = vmatprep.subr.mxu0 0.0
    %9790 = vmatpush1.msra.mxu0 %v9511
    %9791 = vmatprep.subr.mxu0 0.0
    %9792 = vmatpush1.msra.mxu0 %v9512
    %9793 = vmatprep.subr.mxu0 0.0
    %9794 = vmatpush1.msra.mxu0 %v9513
    %9795 = vmatprep.subr.mxu0 0.0
    %9796 = vmatpush1.msra.mxu0 %v9514
    %9797 = vmatprep.subr.mxu0 0.0
    %9798 = vmatpush1.msra.mxu0 %v9515
    %9799 = vmatprep.subr.mxu0 0.0
    %9800 = vmatpush1.msra.mxu0 %v9516
    %9801 = vmatprep.subr.mxu0 0.0
    %9802 = vmatpush1.msra.mxu0 %v9517
    %9803 = vmatprep.subr.mxu0 0.0
    %9804 = vmatpush1.msra.mxu0 %v9518
    %9805 = vmatprep.subr.mxu0 0.0
    %9806 = vmatpush1.msra.mxu0 %v9519
    %9807 = vmatprep.subr.mxu0 0.0
    %9808 = vmatpush1.msra.mxu0 %v9520
    %9809 = vmatprep.subr.mxu0 0.0
    %9810 = vmatpush1.msra.mxu0 %v9521
    %9811 = vmatprep.subr.mxu0 0.0
    %9812 = vmatpush1.msra.mxu0 %v9522
    %9813 = vmatprep.subr.mxu0 0.0
    %9814 = vmatpush1.msra.mxu0 %v9523
    %9815 = vmatprep.subr.mxu0 0.0
    %9816 = vmatpush1.msra.mxu0 %v9524
    %9817 = vmatprep.subr.mxu0 0.0
    %9818 = vmatpush1.msra.mxu0 %v9525
    %9819 = vmatprep.subr.mxu0 0.0
    %9820 = vmatpush1.msra.mxu0 %v9526
    %9821 = vmatprep.subr.mxu0 0.0
    %9822 = vmatpush1.msra.mxu0 %v9527
    %9823 = vmatprep.mubr.f32.mxu0 %v9373
    %9824 = vmatmul.mubr.f32.gmra.mrb[0].mxu0 %v9372
    %v9825 = vpop.f32.mrb[0].mxu0
    %v9826 = vadd.f32 %v9757, %v9825
    %v9827 = vpop.f32.mrb[0].mxu0
    %9828 = vdwg.mxu0
    %9829 = vmatprep.subr.mxu0 0.0
    %9830 = vmatpush1.msra.mxu0 %v9528
    %9831 = vmatprep.subr.mxu0 0.0
    %9832 = vmatpush1.msra.mxu0 %v9529
    %9833 = vmatprep.subr.mxu0 0.0
    %9834 = vmatpush1.msra.mxu0 %v9530
    %9835 = vmatprep.subr.mxu0 0.0
    %9836 = vmatpush1.msra.mxu0 %v9531
    %9837 = vmatprep.subr.mxu0 0.0
    %9838 = vmatpush1.msra.mxu0 %v9532
    %9839 = vmatprep.subr.mxu0 0.0
    %9840 = vmatpush1.msra.mxu0 %v9533
    %9841 = vmatprep.subr.mxu0 0.0
    %9842 = vmatpush1.msra.mxu0 %v9534
    %9843 = vmatprep.subr.mxu0 0.0
    %9844 = vmatpush1.msra.mxu0 %v9535
    %9845 = vmatprep.subr.mxu0 0.0
    %9846 = vmatpush1.msra.mxu0 %v9536
    %9847 = vmatprep.subr.mxu0 0.0
    %9848 = vmatpush1.msra.mxu0 %v9537
    %9849 = vmatprep.subr.mxu0 0.0
    %9850 = vmatpush1.msra.mxu0 %v9538
    %9851 = vmatprep.subr.mxu0 0.0
    %9852 = vmatpush1.msra.mxu0 %v9539
    %9853 = vmatprep.subr.mxu0 0.0
    %9854 = vmatpush1.msra.mxu0 %v9540
    %9855 = vmatprep.subr.mxu0 0.0
    %9856 = vmatpush1.msra.mxu0 %v9541
    %9857 = vmatprep.subr.mxu0 0.0
    %9858 = vmatpush1.msra.mxu0 %v9542
    %9859 = vmatprep.subr.mxu0 0.0
    %9860 = vmatpush1.msra.mxu0 %v9543
    %9861 = vmatprep.subr.mxu0 0.0
    %9862 = vmatpush1.msra.mxu0 %v9544
    %9863 = vmatprep.subr.mxu0 0.0
    %9864 = vmatpush1.msra.mxu0 %v9545
    %9865 = vmatprep.subr.mxu0 0.0
    %9866 = vmatpush1.msra.mxu0 %v9546
    %9867 = vmatprep.subr.mxu0 0.0
    %9868 = vmatpush1.msra.mxu0 %v9547
    %9869 = vmatprep.subr.mxu0 0.0
    %9870 = vmatpush1.msra.mxu0 %v9548
    %9871 = vmatprep.subr.mxu0 0.0
    %9872 = vmatpush1.msra.mxu0 %v9549
    %9873 = vmatprep.subr.mxu0 0.0
    %9874 = vmatpush1.msra.mxu0 %v9550
    %9875 = vmatprep.subr.mxu0 0.0
    %9876 = vmatpush1.msra.mxu0 %v9551
    %9877 = vmatprep.subr.mxu0 0.0
    %9878 = vmatpush1.msra.mxu0 %v9552
    %9879 = vmatprep.subr.mxu0 0.0
    %9880 = vmatpush1.msra.mxu0 %v9553
    %9881 = vmatprep.subr.mxu0 0.0
    %9882 = vmatpush1.msra.mxu0 %v9554
    %9883 = vmatprep.subr.mxu0 0.0
    %9884 = vmatpush1.msra.mxu0 %v9555
    %9885 = vmatprep.subr.mxu0 0.0
    %9886 = vmatpush1.msra.mxu0 %v9556
    %9887 = vmatprep.subr.mxu0 0.0
    %9888 = vmatpush1.msra.mxu0 %v9557
    %9889 = vmatprep.subr.mxu0 0.0
    %9890 = vmatpush1.msra.mxu0 %v9558
    %9891 = vmatprep.subr.mxu0 0.0
    %9892 = vmatpush1.msra.mxu0 %v9559
    %9893 = vmatprep.mubr.f32.mxu0 %v9375
    %9894 = vmatmul.mubr.f32.gmra.mrb[0].mxu0 %v9374
    %v9895 = vpop.f32.mrb[0].mxu0
    %v9896 = vadd.f32 %v9826, %v9895
    %v9897 = vpop.f32.mrb[0].mxu0
    %9898 = vdwg.mxu0
    %9899 = vmatprep.subr.mxu0 0.0
    %9900 = vmatpush1.msra.mxu0 %v9560
    %9901 = vmatprep.subr.mxu0 0.0
    %9902 = vmatpush1.msra.mxu0 %v9561
    %9903 = vmatprep.subr.mxu0 0.0
    %9904 = vmatpush1.msra.mxu0 %v9562
    %9905 = vmatprep.subr.mxu0 0.0
    %9906 = vmatpush1.msra.mxu0 %v9563
    %9907 = vmatprep.subr.mxu0 0.0
    %9908 = vmatpush1.msra.mxu0 %v9564
    %9909 = vmatprep.subr.mxu0 0.0
    %9910 = vmatpush1.msra.mxu0 %v9565
    %9911 = vmatprep.subr.mxu0 0.0
    %9912 = vmatpush1.msra.mxu0 %v9566
    %9913 = vmatprep.subr.mxu0 0.0
    %9914 = vmatpush1.msra.mxu0 %v9567
    %9915 = vmatprep.subr.mxu0 0.0
    %9916 = vmatpush1.msra.mxu0 %v9568
    %9917 = vmatprep.subr.mxu0 0.0
    %9918 = vmatpush1.msra.mxu0 %v9569
    %9919 = vmatprep.subr.mxu0 0.0
    %9920 = vmatpush1.msra.mxu0 %v9570
    %9921 = vmatprep.subr.mxu0 0.0
    %9922 = vmatpush1.msra.mxu0 %v9571
    %9923 = vmatprep.subr.mxu0 0.0
    %9924 = vmatpush1.msra.mxu0 %v9572
    %9925 = vmatprep.subr.mxu0 0.0
    %9926 = vmatpush1.msra.mxu0 %v9573
    %9927 = vmatprep.subr.mxu0 0.0
    %9928 = vmatpush1.msra.mxu0 %v9574
    %9929 = vmatprep.subr.mxu0 0.0
    %9930 = vmatpush1.msra.mxu0 %v9575
    %9931 = vmatprep.subr.mxu0 0.0
    %9932 = vmatpush1.msra.mxu0 %v9576
    %9933 = vmatprep.subr.mxu0 0.0
    %9934 = vmatpush1.msra.mxu0 %v9577
    %9935 = vmatprep.subr.mxu0 0.0
    %9936 = vmatpush1.msra.mxu0 %v9578
    %9937 = vmatprep.subr.mxu0 0.0
    %9938 = vmatpush1.msra.mxu0 %v9579
    %9939 = vmatprep.subr.mxu0 0.0
    %9940 = vmatpush1.msra.mxu0 %v9580
    %9941 = vmatprep.subr.mxu0 0.0
    %9942 = vmatpush1.msra.mxu0 %v9581
    %9943 = vmatprep.subr.mxu0 0.0
    %9944 = vmatpush1.msra.mxu0 %v9582
    %9945 = vmatprep.subr.mxu0 0.0
    %9946 = vmatpush1.msra.mxu0 %v9583
    %9947 = vmatprep.subr.mxu0 0.0
    %9948 = vmatpush1.msra.mxu0 %v9584
    %9949 = vmatprep.subr.mxu0 0.0
    %9950 = vmatpush1.msra.mxu0 %v9585
    %9951 = vmatprep.subr.mxu0 0.0
    %9952 = vmatpush1.msra.mxu0 %v9586
    %9953 = vmatprep.subr.mxu0 0.0
    %9954 = vmatpush1.msra.mxu0 %v9587
    %9955 = vmatprep.subr.mxu0 0.0
    %9956 = vmatpush1.msra.mxu0 %v9588
    %9957 = vmatprep.subr.mxu0 0.0
    %9958 = vmatpush1.msra.mxu0 %v9589
    %9959 = vmatprep.subr.mxu0 0.0
    %9960 = vmatpush1.msra.mxu0 %v9590
    %9961 = vmatprep.subr.mxu0 0.0
    %9962 = vmatpush1.msra.mxu0 %v9591
    %9963 = vmatprep.mubr.f32.mxu0 %v9377
    %9964 = vmatmul.mubr.f32.gmra.mrb[0].mxu0 %v9376
    %v9965 = vpop.f32.mrb[0].mxu0
    %v9966 = vadd.f32 %v9896, %v9965
    %v9967 = vpop.f32.mrb[0].mxu0
    %9968 = vdwg.mxu0
    %9969 = vmatprep.subr.mxu0 0.0
    %9970 = vmatpush1.msra.mxu0 %v9592
    %9971 = vmatprep.subr.mxu0 0.0
    %9972 = vmatpush1.msra.mxu0 %v9593
    %9973 = vmatprep.subr.mxu0 0.0
    %9974 = vmatpush1.msra.mxu0 %v9594
    %9975 = vmatprep.subr.mxu0 0.0
    %9976 = vmatpush1.msra.mxu0 %v9595
    %9977 = vmatprep.subr.mxu0 0.0
    %9978 = vmatpush1.msra.mxu0 %v9596
    %9979 = vmatprep.subr.mxu0 0.0
    %9980 = vmatpush1.msra.mxu0 %v9597
    %9981 = vmatprep.subr.mxu0 0.0
    %9982 = vmatpush1.msra.mxu0 %v9598
    %9983 = vmatprep.subr.mxu0 0.0
    %9984 = vmatpush1.msra.mxu0 %v9599
    %9985 = vmatprep.subr.mxu0 0.0
    %9986 = vmatpush1.msra.mxu0 %v9600
    %9987 = vmatprep.subr.mxu0 0.0
    %9988 = vmatpush1.msra.mxu0 %v9601
    %9989 = vmatprep.subr.mxu0 0.0
    %9990 = vmatpush1.msra.mxu0 %v9602
    %9991 = vmatprep.subr.mxu0 0.0
    %9992 = vmatpush1.msra.mxu0 %v9603
    %9993 = vmatprep.subr.mxu0 0.0
    %9994 = vmatpush1.msra.mxu0 %v9604
    %9995 = vmatprep.subr.mxu0 0.0
    %9996 = vmatpush1.msra.mxu0 %v9605
    %9997 = vmatprep.subr.mxu0 0.0
    %9998 = vmatpush1.msra.mxu0 %v9606
    %9999 = vmatprep.subr.mxu0 0.0
    %10000 = vmatpush1.msra.mxu0 %v9607
    %10001 = vmatprep.subr.mxu0 0.0
    %10002 = vmatpush1.msra.mxu0 %v9608
    %10003 = vmatprep.subr.mxu0 0.0
    %10004 = vmatpush1.msra.mxu0 %v9609
    %10005 = vmatprep.subr.mxu0 0.0
    %10006 = vmatpush1.msra.mxu0 %v9610
    %10007 = vmatprep.subr.mxu0 0.0
    %10008 = vmatpush1.msra.mxu0 %v9611
    %10009 = vmatprep.subr.mxu0 0.0
    %10010 = vmatpush1.msra.mxu0 %v9612
    %10011 = vmatprep.subr.mxu0 0.0
    %10012 = vmatpush1.msra.mxu0 %v9613
    %10013 = vmatprep.subr.mxu0 0.0
    %10014 = vmatpush1.msra.mxu0 %v9614
    %10015 = vmatprep.subr.mxu0 0.0
    %10016 = vmatpush1.msra.mxu0 %v9615
    %10017 = vmatprep.subr.mxu0 0.0
    %10018 = vmatpush1.msra.mxu0 %v9616
    %10019 = vmatprep.subr.mxu0 0.0
    %10020 = vmatpush1.msra.mxu0 %v9617
    %10021 = vmatprep.subr.mxu0 0.0
    %10022 = vmatpush1.msra.mxu0 %v9618
    %10023 = vmatprep.subr.mxu0 0.0
    %10024 = vmatpush1.msra.mxu0 %v9619
    %10025 = vmatprep.subr.mxu0 0.0
    %10026 = vmatpush1.msra.mxu0 %v9620
    %10027 = vmatprep.subr.mxu0 0.0
    %10028 = vmatpush1.msra.mxu0 %v9621
    %10029 = vmatprep.subr.mxu0 0.0
    %10030 = vmatpush1.msra.mxu0 %v9622
    %10031 = vmatprep.subr.mxu0 0.0
    %10032 = vmatpush1.msra.mxu0 %v9623
    %10033 = vmatprep.mubr.f32.mxu0 %v9379
    %10034 = vmatmul.mubr.f32.gmra.mrb[0].mxu0 %v9378
    %v10035 = vpop.f32.mrb[0].mxu0
    %v10036 = vadd.f32 %v9966, %v10035
    %v10037 = vpop.f32.mrb[0].mxu0
    %10038 = vdwg.mxu0
    %10039 = vmatprep.subr.mxu0 0.0
    %10040 = vmatpush1.msra.mxu0 %v9624
    %10041 = vmatprep.subr.mxu0 0.0
    %10042 = vmatpush1.msra.mxu0 %v9625
    %10043 = vmatprep.subr.mxu0 0.0
    %10044 = vmatpush1.msra.mxu0 %v9626
    %10045 = vmatprep.subr.mxu0 0.0
    %10046 = vmatpush1.msra.mxu0 %v9627
    %10047 = vmatprep.subr.mxu0 0.0
    %10048 = vmatpush1.msra.mxu0 %v9628
    %10049 = vmatprep.subr.mxu0 0.0
    %10050 = vmatpush1.msra.mxu0 %v9629
    %10051 = vmatprep.subr.mxu0 0.0
    %10052 = vmatpush1.msra.mxu0 %v9630
    %10053 = vmatprep.subr.mxu0 0.0
    %10054 = vmatpush1.msra.mxu0 %v9631
    %10055 = vmatprep.subr.mxu0 0.0
    %10056 = vmatpush1.msra.mxu0 %v9632
    %10057 = vmatprep.subr.mxu0 0.0
    %10058 = vmatpush1.msra.mxu0 %v9633
    %10059 = vmatprep.subr.mxu0 0.0
    %10060 = vmatpush1.msra.mxu0 %v9634
    %10061 = vmatprep.subr.mxu0 0.0
    %10062 = vmatpush1.msra.mxu0 %v9635
    %10063 = vmatprep.subr.mxu0 0.0
    %10064 = vmatpush1.msra.mxu0 %v9636
    %10065 = vmatprep.subr.mxu0 0.0
    %10066 = vmatpush1.msra.mxu0 %v9637
    %10067 = vmatprep.subr.mxu0 0.0
    %10068 = vmatpush1.msra.mxu0 %v9638
    %10069 = vmatprep.subr.mxu0 0.0
    %10070 = vmatpush1.msra.mxu0 %v9639
    %10071 = vmatprep.subr.mxu0 0.0
    %10072 = vmatpush1.msra.mxu0 %v9640
    %10073 = vmatprep.subr.mxu0 0.0
    %10074 = vmatpush1.msra.mxu0 %v9641
    %10075 = vmatprep.subr.mxu0 0.0
    %10076 = vmatpush1.msra.mxu0 %v9642
    %10077 = vmatprep.subr.mxu0 0.0
    %10078 = vmatpush1.msra.mxu0 %v9643
    %10079 = vmatprep.subr.mxu0 0.0
    %10080 = vmatpush1.msra.mxu0 %v9644
    %10081 = vmatprep.subr.mxu0 0.0
    %10082 = vmatpush1.msra.mxu0 %v9645
    %10083 = vmatprep.subr.mxu0 0.0
    %10084 = vmatpush1.msra.mxu0 %v9646
    %10085 = vmatprep.subr.mxu0 0.0
    %10086 = vmatpush1.msra.mxu0 %v9647
    %10087 = vmatprep.subr.mxu0 0.0
    %10088 = vmatpush1.msra.mxu0 %v9648
    %10089 = vmatprep.subr.mxu0 0.0
    %10090 = vmatpush1.msra.mxu0 %v9649
    %10091 = vmatprep.subr.mxu0 0.0
    %10092 = vmatpush1.msra.mxu0 %v9650
    %10093 = vmatprep.subr.mxu0 0.0
    %10094 = vmatpush1.msra.mxu0 %v9651
    %10095 = vmatprep.subr.mxu0 0.0
    %10096 = vmatpush1.msra.mxu0 %v9652
    %10097 = vmatprep.subr.mxu0 0.0
    %10098 = vmatpush1.msra.mxu0 %v9653
    %10099 = vmatprep.subr.mxu0 0.0
    %10100 = vmatpush1.msra.mxu0 %v9654
    %10101 = vmatprep.subr.mxu0 0.0
    %10102 = vmatpush1.msra.mxu0 %v9655
    %10103 = vmatprep.mubr.f32.mxu0 %v9381
    %10104 = vmatmul.mubr.f32.gmra.mrb[0].mxu0 %v9380
    %v10105 = vpop.f32.mrb[0].mxu0
    %v10106 = vadd.f32 %v10036, %v10105
    %v10107 = vpop.f32.mrb[0].mxu0
    %10108 = vdwg.mxu0
    %10109 = vmatprep.subr.mxu0 0.0
    %10110 = vmatpush1.msra.mxu0 %v9656
    %10111 = vmatprep.subr.mxu0 0.0
    %10112 = vmatpush1.msra.mxu0 %v9657
    %10113 = vmatprep.subr.mxu0 0.0
    %10114 = vmatpush1.msra.mxu0 %v9658
    %10115 = vmatprep.subr.mxu0 0.0
    %10116 = vmatpush1.msra.mxu0 %v9659
    %10117 = vmatprep.subr.mxu0 0.0
    %10118 = vmatpush1.msra.mxu0 %v9660
    %10119 = vmatprep.subr.mxu0 0.0
    %10120 = vmatpush1.msra.mxu0 %v9661
    %10121 = vmatprep.subr.mxu0 0.0
    %10122 = vmatpush1.msra.mxu0 %v9662
    %10123 = vmatprep.subr.mxu0 0.0
    %10124 = vmatpush1.msra.mxu0 %v9663
    %10125 = vmatprep.subr.mxu0 0.0
    %10126 = vmatpush1.msra.mxu0 %v9664
    %10127 = vmatprep.subr.mxu0 0.0
    %10128 = vmatpush1.msra.mxu0 %v9665
    %10129 = vmatprep.subr.mxu0 0.0
    %10130 = vmatpush1.msra.mxu0 %v9666
    %10131 = vmatprep.subr.mxu0 0.0
    %10132 = vmatpush1.msra.mxu0 %v9667
    %10133 = vmatprep.subr.mxu0 0.0
    %10134 = vmatpush1.msra.mxu0 %v9668
    %10135 = vmatprep.subr.mxu0 0.0
    %10136 = vmatpush1.msra.mxu0 %v9669
    %10137 = vmatprep.subr.mxu0 0.0
    %10138 = vmatpush1.msra.mxu0 %v9670
    %10139 = vmatprep.subr.mxu0 0.0
    %10140 = vmatpush1.msra.mxu0 %v9671
    %10141 = vmatprep.subr.mxu0 0.0
    %10142 = vmatpush1.msra.mxu0 %v9672
    %10143 = vmatprep.subr.mxu0 0.0
    %10144 = vmatpush1.msra.mxu0 %v9673
    %10145 = vmatprep.subr.mxu0 0.0
    %10146 = vmatpush1.msra.mxu0 %v9674
    %10147 = vmatprep.subr.mxu0 0.0
    %10148 = vmatpush1.msra.mxu0 %v9675
    %10149 = vmatprep.subr.mxu0 0.0
    %10150 = vmatpush1.msra.mxu0 %v9676
    %10151 = vmatprep.subr.mxu0 0.0
    %10152 = vmatpush1.msra.mxu0 %v9677
    %10153 = vmatprep.subr.mxu0 0.0
    %10154 = vmatpush1.msra.mxu0 %v9678
    %10155 = vmatprep.subr.mxu0 0.0
    %10156 = vmatpush1.msra.mxu0 %v9679
    %10157 = vmatprep.subr.mxu0 0.0
    %10158 = vmatpush1.msra.mxu0 %v9680
    %10159 = vmatprep.subr.mxu0 0.0
    %10160 = vmatpush1.msra.mxu0 %v9681
    %10161 = vmatprep.subr.mxu0 0.0
    %10162 = vmatpush1.msra.mxu0 %v9682
    %10163 = vmatprep.subr.mxu0 0.0
    %10164 = vmatpush1.msra.mxu0 %v9683
    %10165 = vmatprep.subr.mxu0 0.0
    %10166 = vmatpush1.msra.mxu0 %v9684
    %10167 = vmatprep.subr.mxu0 0.0
    %10168 = vmatpush1.msra.mxu0 %v9685
    %10169 = vmatprep.subr.mxu0 0.0
    %10170 = vmatpush1.msra.mxu0 %v9686
    %10171 = vmatprep.subr.mxu0 0.0
    %10172 = vmatpush1.msra.mxu0 %v9687
    %10173 = vmatprep.mubr.f32.mxu0 %v9383
    %10174 = vmatmul.mubr.f32.gmra.mrb[0].mxu0 %v9382
    %v10175 = vpop.f32.mrb[0].mxu0
    %v10176 = vadd.f32 %v10106, %v10175
    %v10177 = vpop.f32.mrb[0].mxu0
    %10178 = vdwg.mxu0
    %10179 = vmatprep.subr.mxu0 0.0
    %10180 = vmatpush1.msra.mxu0 %v9688
    %10181 = vmatprep.subr.mxu0 0.0
    %10182 = vmatpush1.msra.mxu0 %v9689
    %10183 = vmatprep.subr.mxu0 0.0
    %10184 = vmatpush1.msra.mxu0 %v9690
    %10185 = vmatprep.subr.mxu0 0.0
    %10186 = vmatpush1.msra.mxu0 %v9691
    %10187 = vmatprep.subr.mxu0 0.0
    %10188 = vmatpush1.msra.mxu0 %v9692
    %10189 = vmatprep.subr.mxu0 0.0
    %10190 = vmatpush1.msra.mxu0 %v9693
    %10191 = vmatprep.subr.mxu0 0.0
    %10192 = vmatpush1.msra.mxu0 %v9694
    %10193 = vmatprep.subr.mxu0 0.0
    %10194 = vmatpush1.msra.mxu0 %v9695
    %10195 = vmatprep.subr.mxu0 0.0
    %10196 = vmatpush1.msra.mxu0 %v9696
    %10197 = vmatprep.subr.mxu0 0.0
    %10198 = vmatpush1.msra.mxu0 %v9697
    %10199 = vmatprep.subr.mxu0 0.0
    %10200 = vmatpush1.msra.mxu0 %v9698
    %10201 = vmatprep.subr.mxu0 0.0
    %10202 = vmatpush1.msra.mxu0 %v9699
    %10203 = vmatprep.subr.mxu0 0.0
    %10204 = vmatpush1.msra.mxu0 %v9700
    %10205 = vmatprep.subr.mxu0 0.0
    %10206 = vmatpush1.msra.mxu0 %v9701
    %10207 = vmatprep.subr.mxu0 0.0
    %10208 = vmatpush1.msra.mxu0 %v9702
    %10209 = vmatprep.subr.mxu0 0.0
    %10210 = vmatpush1.msra.mxu0 %v9703
    %10211 = vmatprep.subr.mxu0 0.0
    %10212 = vmatpush1.msra.mxu0 %v9704
    %10213 = vmatprep.subr.mxu0 0.0
    %10214 = vmatpush1.msra.mxu0 %v9705
    %10215 = vmatprep.subr.mxu0 0.0
    %10216 = vmatpush1.msra.mxu0 %v9706
    %10217 = vmatprep.subr.mxu0 0.0
    %10218 = vmatpush1.msra.mxu0 %v9707
    %10219 = vmatprep.subr.mxu0 0.0
    %10220 = vmatpush1.msra.mxu0 %v9708
    %10221 = vmatprep.subr.mxu0 0.0
    %10222 = vmatpush1.msra.mxu0 %v9709
    %10223 = vmatprep.subr.mxu0 0.0
    %10224 = vmatpush1.msra.mxu0 %v9710
    %10225 = vmatprep.subr.mxu0 0.0
    %10226 = vmatpush1.msra.mxu0 %v9711
    %10227 = vmatprep.subr.mxu0 0.0
    %10228 = vmatpush1.msra.mxu0 %v9712
    %10229 = vmatprep.subr.mxu0 0.0
    %10230 = vmatpush1.msra.mxu0 %v9713
    %10231 = vmatprep.subr.mxu0 0.0
    %10232 = vmatpush1.msra.mxu0 %v9714
    %10233 = vmatprep.subr.mxu0 0.0
    %10234 = vmatpush1.msra.mxu0 %v9715
    %10235 = vmatprep.subr.mxu0 0.0
    %10236 = vmatpush1.msra.mxu0 %v9716
    %10237 = vmatprep.subr.mxu0 0.0
    %10238 = vmatpush1.msra.mxu0 %v9717
    %10239 = vmatprep.subr.mxu0 0.0
    %10240 = vmatpush1.msra.mxu0 %v9718
    %10241 = vmatprep.subr.mxu0 0.0
    %10242 = vmatpush1.msra.mxu0 %v9719
    %10243 = vmatprep.mubr.f32.mxu0 %v9385
    %10244 = vmatmul.mubr.f32.gmra.mrb[0].mxu0 %v9384
    %v10245 = vpop.f32.mrb[0].mxu0
    %v10246 = vadd.f32 %v10176, %v10245
    %v10247 = vpop.f32.mrb[0].mxu0
    %10248 = vdwg.mxu0
    %10249 = vmatprep.subr.mxu0 0.0
    %10250 = vmatpush1.msra.mxu0 %v9720
    %10251 = vmatprep.subr.mxu0 0.0
    %10252 = vmatpush1.msra.mxu0 %v9721
    %10253 = vmatprep.subr.mxu0 0.0
    %10254 = vmatpush1.msra.mxu0 %v9722
    %10255 = vmatprep.subr.mxu0 0.0
    %10256 = vmatpush1.msra.mxu0 %v9723
    %10257 = vmatprep.subr.mxu0 0.0
    %10258 = vmatpush1.msra.mxu0 %v9724
    %10259 = vmatprep.subr.mxu0 0.0
    %10260 = vmatpush1.msra.mxu0 %v9725
    %10261 = vmatprep.subr.mxu0 0.0
    %10262 = vmatpush1.msra.mxu0 %v9726
    %10263 = vmatprep.subr.mxu0 0.0
    %10264 = vmatpush1.msra.mxu0 %v9727
    %10265 = vmatprep.subr.mxu0 0.0
    %10266 = vmatpush1.msra.mxu0 %v9728
    %10267 = vmatprep.subr.mxu0 0.0
    %10268 = vmatpush1.msra.mxu0 %v9729
    %10269 = vmatprep.subr.mxu0 0.0
    %10270 = vmatpush1.msra.mxu0 %v9730
    %10271 = vmatprep.subr.mxu0 0.0
    %10272 = vmatpush1.msra.mxu0 %v9731
    %10273 = vmatprep.subr.mxu0 0.0
    %10274 = vmatpush1.msra.mxu0 %v9732
    %10275 = vmatprep.subr.mxu0 0.0
    %10276 = vmatpush1.msra.mxu0 %v9733
    %10277 = vmatprep.subr.mxu0 0.0
    %10278 = vmatpush1.msra.mxu0 %v9734
    %10279 = vmatprep.subr.mxu0 0.0
    %10280 = vmatpush1.msra.mxu0 %v9735
    %10281 = vmatprep.subr.mxu0 0.0
    %10282 = vmatpush1.msra.mxu0 %v9736
    %10283 = vmatprep.subr.mxu0 0.0
    %10284 = vmatpush1.msra.mxu0 %v9737
    %10285 = vmatprep.subr.mxu0 0.0
    %10286 = vmatpush1.msra.mxu0 %v9738
    %10287 = vmatprep.subr.mxu0 0.0
    %10288 = vmatpush1.msra.mxu0 %v9739
    %10289 = vmatprep.subr.mxu0 0.0
    %10290 = vmatpush1.msra.mxu0 %v9740
    %10291 = vmatprep.subr.mxu0 0.0
    %10292 = vmatpush1.msra.mxu0 %v9741
    %10293 = vmatprep.subr.mxu0 0.0
    %10294 = vmatpush1.msra.mxu0 %v9742
    %10295 = vmatprep.subr.mxu0 0.0
    %10296 = vmatpush1.msra.mxu0 %v9743
    %10297 = vmatprep.subr.mxu0 0.0
    %10298 = vmatpush1.msra.mxu0 %v9744
    %10299 = vmatprep.subr.mxu0 0.0
    %10300 = vmatpush1.msra.mxu0 %v9745
    %10301 = vmatprep.subr.mxu0 0.0
    %10302 = vmatpush1.msra.mxu0 %v9746
    %10303 = vmatprep.subr.mxu0 0.0
    %10304 = vmatpush1.msra.mxu0 %v9747
    %10305 = vmatprep.subr.mxu0 0.0
    %10306 = vmatpush1.msra.mxu0 %v9748
    %10307 = vmatprep.subr.mxu0 0.0
    %10308 = vmatpush1.msra.mxu0 %v9749
    %10309 = vmatprep.subr.mxu0 0.0
    %10310 = vmatpush1.msra.mxu0 %v9750
    %10311 = vmatprep.subr.mxu0 0.0
    %10312 = vmatpush1.msra.mxu0 %v9751
    %10313 = vmatprep.mubr.f32.mxu0 %v9387
    %10314 = vmatmul.mubr.f32.gmra.mrb[0].mxu0 %v9386
    %v10315 = vpop.f32.mrb[0].mxu0
    %v10316 = vadd.f32 %v10246, %v10315
    %v10317 = vpop.f32.mrb[0].mxu0
    %10318 = vdwg.mxu0
    %vm10319 = vcmask 9216
    %10320 = vst.msk [vmem:[#allocation19] sm:$0x3] %vm10319, %v10316
    // Predicated region
    $region106: #{cnn_forward.1} parent=1 // pred_check
      _
    $region107: #{cnn_forward.1} parent=1 // pred_check_branch
      %10322 = sbr.rel (0) target = $region109
    $region108: #{cnn_forward.1} parent=1 // pred_region
      %s10324 = ssub.s32 32, 32
      %10325 = vsyncadd [#allocation4], %s10324
      %s10327 = sshll.u32 [#allocation19], 4
      %s10328 = int_to_ptr.vmem [resolvable:$true] %s10327
      %10330 = dma.vmem_to_hbm [thread:$0]  %s10328, 32, %s16, [#allocation4]
    $region109: #{cnn_forward.1} parent=1 // pred_fallthru
      _
    // Predicated region
    $region110: #{cnn_forward.1} parent=1 // pred_check
      _
    $region111: #{cnn_forward.1} parent=1 // pred_check_branch
      %10332 = sbr.rel (0) target = $region113
    $region112: #{cnn_forward.1} parent=1 // pred_region
      %s10334 = ssub.s32 512, 512
      %10335 = vsyncadd [#allocation21], %s10334
      %s10337 = sshll.u32 [#allocation20], 4
      %s10338 = int_to_ptr.vmem [resolvable:$true] %s10337
      %10340 = dma.vmem_to_hbm [thread:$0]  %s10338, 512, %s17, [#allocation21]
    $region113: #{cnn_forward.1} parent=1 // pred_fallthru
      _
    // Predicated region
    $region114: #{cnn_forward.1} parent=1 // pred_check
      _
    $region115: #{cnn_forward.1} parent=1 // pred_check_branch
      %10342 = sbr.rel (0) target = $region117
    $region116: #{cnn_forward.1} parent=1 // pred_region
      %10343 = dma.done [#allocation4], 32
    $region117: #{cnn_forward.1} parent=1 // pred_fallthru
      _
    // Predicated region
    $region118: #{cnn_forward.1} parent=1 // pred_check
      _
    $region119: #{cnn_forward.1} parent=1 // pred_check_branch
      %10345 = sbr.rel (0) target = $region121
    $region120: #{cnn_forward.1} parent=1 // pred_region
      %10346 = dma.done [#allocation21], 512
    $region121: #{cnn_forward.1} parent=1 // pred_fallthru
      _
    %10347 = vsyncpa [#allocation3], 1
    %10348 = vsyncpa [#allocation6], 1
    %10349 = vsyncpa [#allocation9], 1
    %10350 = vsyncpa [#allocation12], 1
    %10351 = vsyncpa [#allocation15], 1
    %10352 = vsyncpa [#allocation18], 1
    %10353 = vsyncpa [#allocation4], 1
    %10354 = vsyncpa [#allocation21], 1

</llo_original>
